<compile_context>
chip_gen: v7x
topology: tpu7x:2x2x1
jax: 0.10.0
libtpu: 0.0.40
codegen_flags: <defaults>
</compile_context>

<pallas_src>
import jax
import jax.numpy as jnp
from jax import lax
from jax.experimental import pallas as pl
from jax.experimental.pallas import tpu as pltpu


def _make_bilstm_tag_kernel(fuse_dirs: bool):
    """fuse_dirs=True  -> whh_ref is (2*Hp, 6*Hp) block-diag, one GEMM/step.
       fuse_dirs=False -> whh_ref is (2, Hp, 3*Hp), two GEMMs/step (v5e path)."""

    def kernel(x_ref,                    # (T, Bp, Ep)          bf16
               wih_ref,                  # (Ep, 6*Hp)           bf16  [fwd | bwd]
               bih_ref,                  # (1, 6*Hp)            f32
               whh_ref,                  # see above            bf16
               wtag_ref,                 # (2, Hp, Np)          bf16  [fwd half | bwd half]
               btag_ref,                 # (1, Np)              f32
               out_ref,                  # (T, Bp, Np)          bf16
               xg_f_ref, xg_b_ref,       # (T, Bp, 3*Hp)        bf16 scratch
               hall_f_ref, hall_b_ref):  # (T, Bp, Hp)          f32  scratch
        T, Bp, Ep = x_ref.shape
        Np = out_ref.shape[-1]
        Hp = (whh_ref.shape[0] // 2) if fuse_dirs else whh_ref.shape[1]
        G = 3 * Hp

        # ---- (1) hoisted input projection: ONE big GEMM, biases folded ------
        x2d = x_ref[...].reshape(T * Bp, Ep)                          # bf16
        xg = jnp.dot(x2d, wih_ref[...], preferred_element_type=jnp.float32)
        xg = (xg + bih_ref[...]).astype(jnp.bfloat16)                 # (T*Bp, 6G)
        xg_f_ref[...] = xg[:, 0:G].reshape(T, Bp, G)
        xg_b_ref[...] = xg[:, G:2 * G].reshape(T, Bp, G)

        def gates_to_hc(gates, c_prev):
            # MultiInputLSTMCell w/o word (gaz) cells: coupled gates, f = 1 - i
            i = jax.nn.sigmoid(gates[:, 0:Hp])
            o = jax.nn.sigmoid(gates[:, Hp:2 * Hp])
            g = jnp.tanh(gates[:, 2 * Hp:3 * Hp])
            c = (1.0 - i) * c_prev + i * g
            h = o * jnp.tanh(c)
            return h, c

        # ---- (2) fused forward/backward recurrence ---------------------------
        def body(t, carry):
            h_f, c_f, h_b, c_b = carry
            tb = T - 1 - t
            if fuse_dirs:
                hcat = jnp.concatenate([h_f, h_b], axis=-1).astype(jnp.bfloat16)
                g_all = jnp.dot(hcat, whh_ref[...],
                                preferred_element_type=jnp.float32)
                gf = xg_f_ref[t].astype(jnp.float32) + g_all[:, 0:G]
                gb = xg_b_ref[tb].astype(jnp.float32) + g_all[:, G:2 * G]
            else:
                gf = xg_f_ref[t].astype(jnp.float32) + jnp.dot(
                    h_f.astype(jnp.bfloat16), whh_ref[0],
                    preferred_element_type=jnp.float32)
                gb = xg_b_ref[tb].astype(jnp.float32) + jnp.dot(
                    h_b.astype(jnp.bfloat16), whh_ref[1],
                    preferred_element_type=jnp.float32)
            h_f, c_f = gates_to_hc(gf, c_f)
            h_b, c_b = gates_to_hc(gb, c_b)
            hall_f_ref[t] = h_f           # full (Bp, Hp) tile stores
            hall_b_ref[tb] = h_b          # backward output aligned to original t
            return h_f, c_f, h_b, c_b

        z = jnp.zeros((Bp, Hp), jnp.float32)
        unroll = T if T <= 16 else 4      # bounded unroll: avoid spills at big T
        lax.fori_loop(0, T, body, (z, z, z, z), unroll=unroll)

        # ---- (3) hidden2tag: split-weight GEMMs, no lane concat --------------
        hf2d = hall_f_ref[...].reshape(T * Bp, Hp).astype(jnp.bfloat16)
        hb2d = hall_b_ref[...].reshape(T * Bp, Hp).astype(jnp.bfloat16)
        tag = jnp.dot(hf2d, wtag_ref[0], preferred_element_type=jnp.float32)
        tag = tag + jnp.dot(hb2d, wtag_ref[1], preferred_element_type=jnp.float32)
        out_ref[...] = (tag + btag_ref[...]).astype(out_ref.dtype).reshape(T, Bp, Np)

    return kernel


def _round_up(v, m):
    return ((v + m - 1) // m) * m


def _fuse_directions_default():
    # Fuse fwd/bwd recurrent GEMMs only on 256-deep-MXU generations (v6e/v7x).
    try:
        kind = jax.devices()[0].device_kind.lower()
    except Exception:
        kind = ""
    return ("v6" in kind) or ("v7" in kind)


def lattice_forward(inputs, params, fuse_dirs=None):
    """inputs: int32 (B, T) token ids  ->  (B, T, ntag) emission scores (f32)."""
    if fuse_dirs is None:
        fuse_dirs = _fuse_directions_default()

    B, T = inputs.shape
    E = params['embedding'].shape[1]
    H = params['whh_f'].shape[0]
    ntag = params['wtag'].shape[1]

    Bp = _round_up(B, 16)         # bf16 sublane packing (16,128) -> fully packed vregs
    Hp = _round_up(H, 128)        # lane tile -> gate slices lane-aligned
    Ep = _round_up(E, 128)
    Np = _round_up(ntag, 128)     # lane-dense output stores
    G = 3 * Hp

    # ----- repack / pad parameters (cheap one-time glue) ---------------------
    def pad_gate_cols(w, h_src, h_pad):
        # (rows, 3*h_src) -> (rows, 3*h_pad), each gate block zero-padded
        parts = [jnp.pad(w[:, k * h_src:(k + 1) * h_src],
                         ((0, 0), (0, h_pad - h_src))) for k in range(3)]
        return jnp.concatenate(parts, axis=1)

    def pad_rows(w, rows_pad):
        return jnp.pad(w, ((0, rows_pad - w.shape[0]), (0, 0)))

    wih_f = pad_rows(pad_gate_cols(params['wih_f'], H, Hp), Ep)
    wih_b = pad_rows(pad_gate_cols(params['wih_b'], H, Hp), Ep)
    wih = jnp.concatenate([wih_f, wih_b], axis=1).astype(jnp.bfloat16)   # (Ep, 6Hp)
    bih = jnp.concatenate([pad_gate_cols(params['b_f'], H, Hp),
                           pad_gate_cols(params['b_b'], H, Hp)], axis=1)  # (1, 6Hp) f32

    whh_f_p = pad_rows(pad_gate_cols(params['whh_f'], H, Hp), Hp)         # (Hp, 3Hp)
    whh_b_p = pad_rows(pad_gate_cols(params['whh_b'], H, Hp), Hp)
    if fuse_dirs:
        zblk = jnp.zeros((Hp, G), jnp.float32)
        whh = jnp.concatenate(
            [jnp.concatenate([whh_f_p, zblk], axis=1),
             jnp.concatenate([zblk, whh_b_p], axis=1)], axis=0)           # (2Hp, 6Hp)
    else:
        whh = jnp.stack([whh_f_p, whh_b_p], axis=0)                       # (2, Hp, 3Hp)
    whh = whh.astype(jnp.bfloat16)

    # hidden2tag split per direction: no lane concat in the kernel
    wtag_f = jnp.zeros((Hp, Np), jnp.float32).at[0:H, 0:ntag].set(params['wtag'][0:H])
    wtag_b = jnp.zeros((Hp, Np), jnp.float32).at[0:H, 0:ntag].set(params['wtag'][H:2 * H])
    wtag = jnp.stack([wtag_f, wtag_b], axis=0).astype(jnp.bfloat16)       # (2, Hp, Np)
    btag = jnp.pad(params['btag'], ((0, 0), (0, Np - ntag)))              # (1, Np) f32

    # ----- time-major embedding gather (no big activation transpose) --------
    emb = jnp.pad(params['embedding'], ((0, 0), (0, Ep - E)))
    x = jnp.take(emb, inputs.T, axis=0)                                   # (T, B, Ep)
    x = jnp.pad(x, ((0, 0), (0, Bp - B), (0, 0))).astype(jnp.bfloat16)    # (T, Bp, Ep)

    # ----- cost estimate / VMEM budget ---------------------------------------
    k_rec = (2 * Hp) if fuse_dirs else Hp
    flops = (2 * T * Bp * Ep * 6 * Hp            # input projection GEMM
             + 2 * T * Bp * k_rec * 6 * Hp       # recurrent matmul(s)
             + 2 * T * Bp * 2 * Hp * Np)         # hidden2tag GEMMs
    transcendentals = 2 * 4 * T * Bp * Hp        # 2 sigmoid + 2 tanh per dir/step
    bytes_accessed = (T * Bp * Ep * 2 + Ep * 6 * Hp * 2 + 6 * Hp * 4
                      + int(whh.size) * 2 + 2 * Hp * Np * 2 + Np * 4
                      + T * Bp * Np * 2)

    scratch_bytes = 2 * T * Bp * G * 2 + 2 * T * Bp * Hp * 4
    approx_vmem = bytes_accessed + scratch_bytes + T * Bp * 6 * Hp * 4
    vmem_limit = int(min(max(4 * approx_vmem, 16 * 1024 * 1024),
                         60 * 1024 * 1024))     # stay under v7x's 64 MiB VMEM

    vmem = pl.BlockSpec(memory_space=pltpu.MemorySpace.VMEM)
    out_pad = pl.pallas_call(
        _make_bilstm_tag_kernel(fuse_dirs),
        out_shape=jax.ShapeDtypeStruct((T, Bp, Np), jnp.bfloat16),
        in_specs=[vmem] * 6,
        out_specs=vmem,
        scratch_shapes=[
            pltpu.VMEM((T, Bp, G), jnp.bfloat16),    # xg_f (pre-activations, fwd)
            pltpu.VMEM((T, Bp, G), jnp.bfloat16),    # xg_b (pre-activations, bwd)
            pltpu.VMEM((T, Bp, Hp), jnp.float32),    # hall_f
            pltpu.VMEM((T, Bp, Hp), jnp.float32),    # hall_b
        ],
        compiler_params=pltpu.CompilerParams(vmem_limit_bytes=vmem_limit),
        cost_estimate=pl.CostEstimate(flops=flops,
                                      transcendentals=transcendentals,
                                      bytes_accessed=bytes_accessed),
    )(x, wih, bih, whh, wtag, btag)

    out = out_pad[:, 0:B, 0:ntag].astype(jnp.float32)   # strip padding (tiny), f32 out
    return jnp.transpose(out, (1, 0, 2))                # (B, T, ntag)


def init_params(key, vocab_size, embedding_dim, hidden_size, out_number, add):
    H = hidden_size // 2
    ntag = out_number + add
    ks = jax.random.split(key, 6)

    def xavier(k, shape):
        bound = jnp.sqrt(6.0 / (shape[0] + shape[1]))
        return jax.random.uniform(k, shape, jnp.float32, -bound, bound)

    return {
        'embedding': 0.1 * jax.random.normal(ks[0], (vocab_size, embedding_dim),
                                             jnp.float32),
        # forward LatticeLSTM char cell (gate layout: [i | o | g], each width H)
        'wih_f': xavier(ks[1], (embedding_dim, 3 * H)),
        'whh_f': xavier(ks[2], (H, 3 * H)),
        'b_f': jnp.zeros((1, 3 * H), jnp.float32),       # reset_parameters -> 0
        # backward LatticeLSTM char cell
        'wih_b': xavier(ks[3], (embedding_dim, 3 * H)),
        'whh_b': xavier(ks[4], (H, 3 * H)),
        'b_b': jnp.zeros((1, 3 * H), jnp.float32),
        # hidden2tag linear (stored transposed: (hidden_size, ntag))
        'wtag': xavier(ks[5], (hidden_size, ntag)),
        'btag': jnp.zeros((1, ntag), jnp.float32),
    }


if __name__ == "__main__":
    # Small shapes consistent with the module:
    batch, seq = 2, 8
    vocab_size = 50
    embedding_dim = 32
    hidden_size = 32          # model_config['hidden_size']; per-direction H = 16
    out_number = 5
    add = 2                   # model_config['crf'] == True

    key = jax.random.PRNGKey(0)
    k_inp, k_par = jax.random.split(key)
    inputs = jax.random.randint(k_inp, (batch, seq), 0, vocab_size, dtype=jnp.int32)
    params = init_params(k_par, vocab_size, embedding_dim, hidden_size,
                         out_number, add)

    fwd = jax.jit(lattice_forward, static_argnames=('fuse_dirs',))
    out = fwd(inputs, params, fuse_dirs=_fuse_directions_default())
    out = jax.block_until_ready(out)

    assert out.shape == (batch, seq, out_number + add), out.shape
    assert jnp.all(jnp.isfinite(out))
    print("KERNEL_OK")
</pallas_src>

<mosaic_0001>
module attributes {stable_mosaic.version = 11 : i64} {
  func.func @kernel(%arg0: memref<8x16x128xbf16, #tpu.memory_space<vmem>>, %arg1: memref<128x768xbf16, #tpu.memory_space<vmem>>, %arg2: memref<1x768xf32, #tpu.memory_space<vmem>>, %arg3: memref<2x128x384xbf16, #tpu.memory_space<vmem>>, %arg4: memref<2x128x128xbf16, #tpu.memory_space<vmem>>, %arg5: memref<1x128xf32, #tpu.memory_space<vmem>>, %arg6: memref<8x16x128xbf16, #tpu.memory_space<vmem>>, %arg7: memref<8x16x384xbf16, #tpu.memory_space<vmem>>, %arg8: memref<8x16x384xbf16, #tpu.memory_space<vmem>>, %arg9: memref<8x16x128xf32, #tpu.memory_space<vmem>>, %arg10: memref<8x16x128xf32, #tpu.memory_space<vmem>>) attributes {dimension_semantics = [], scalar_prefetch = 0 : i64, scratch_operands = 4 : i64, tpu.core_type = #tpu.core_type<tc>} {
    %c0 = arith.constant 0 : index
    %c0_0 = arith.constant 0 : index
    %c0_1 = arith.constant 0 : index
    %0 = vector.load %arg0[%c0, %c0_0, %c0_1] : memref<8x16x128xbf16, #tpu.memory_space<vmem>>, vector<8x16x128xbf16>
    %1 = vector.shape_cast %0 : vector<8x16x128xbf16> to vector<128x128xbf16>
    %c0_2 = arith.constant 0 : index
    %c0_3 = arith.constant 0 : index
    %2 = vector.load %arg1[%c0_2, %c0_3] : memref<128x768xbf16, #tpu.memory_space<vmem>>, vector<128x768xbf16>
    %cst = arith.constant dense<0.000000e+00> : vector<128x768xf32>
    %3 = tpu.matmul %1, %2, %cst {dimension_numbers = #tpu.dot_dimension_numbers<[1], [0], [0], [1], [0, 0, 1, 1], [], []>} : vector<128x128xbf16>, vector<128x768xbf16>, vector<128x768xf32> -> vector<128x768xf32>
    %c0_4 = arith.constant 0 : index
    %c0_5 = arith.constant 0 : index
    %4 = vector.load %arg2[%c0_4, %c0_5] : memref<1x768xf32, #tpu.memory_space<vmem>>, vector<1x768xf32>
    %5 = vector.broadcast %4 : vector<1x768xf32> to vector<128x768xf32>
    %6 = arith.addf %3, %5 : vector<128x768xf32>
    %7 = arith.truncf %6 : vector<128x768xf32> to vector<128x768xbf16>
    %8 = vector.extract_strided_slice %7 {offsets = [0, 0], sizes = [128, 384], strides = [1, 1]} : vector<128x768xbf16> to vector<128x384xbf16>
    %9 = vector.shape_cast %8 : vector<128x384xbf16> to vector<8x16x384xbf16>
    %c0_6 = arith.constant 0 : index
    %c0_7 = arith.constant 0 : index
    %c0_8 = arith.constant 0 : index
    %10 = vector.load %arg7[%c0_6, %c0_7, %c0_8] : memref<8x16x384xbf16, #tpu.memory_space<vmem>>, vector<8x16x384xbf16>
    tpu.vector_store %arg7[%c0_6, %c0_7, %c0_8], %9 {strides = array<i32>} : memref<8x16x384xbf16, #tpu.memory_space<vmem>>, vector<8x16x384xbf16>,
    %11 = vector.extract_strided_slice %7 {offsets = [0, 384], sizes = [128, 384], strides = [1, 1]} : vector<128x768xbf16> to vector<128x384xbf16>
    %12 = vector.shape_cast %11 : vector<128x384xbf16> to vector<8x16x384xbf16>
    %c0_9 = arith.constant 0 : index
    %c0_10 = arith.constant 0 : index
    %c0_11 = arith.constant 0 : index
    %13 = vector.load %arg8[%c0_9, %c0_10, %c0_11] : memref<8x16x384xbf16, #tpu.memory_space<vmem>>, vector<8x16x384xbf16>
    tpu.vector_store %arg8[%c0_9, %c0_10, %c0_11], %12 {strides = array<i32>} : memref<8x16x384xbf16, #tpu.memory_space<vmem>>, vector<8x16x384xbf16>,
    %cst_12 = arith.constant 0.000000e+00 : f32
    %14 = vector.broadcast %cst_12 : f32 to vector<16x128xf32>
    %c0_i32 = arith.constant 0 : i32
    %c7_i32 = arith.constant 7 : i32
    %15 = arith.subi %c7_i32, %c0_i32 : i32
    %16 = arith.index_cast %c0_i32 : i32 to index
    %c0_13 = arith.constant 0 : index
    %c0_14 = arith.constant 0 : index
    %17 = vector.load %arg7[%16, %c0_13, %c0_14] : memref<8x16x384xbf16, #tpu.memory_space<vmem>>, vector<1x16x384xbf16>
    %18 = vector.shape_cast %17 : vector<1x16x384xbf16> to vector<16x384xbf16>
    %19 = arith.extf %18 : vector<16x384xbf16> to vector<16x384xf32>
    %20 = arith.truncf %14 : vector<16x128xf32> to vector<16x128xbf16>
    %c0_15 = arith.constant 0 : index
    %c0_16 = arith.constant 0 : index
    %c0_17 = arith.constant 0 : index
    %21 = vector.load %arg3[%c0_15, %c0_16, %c0_17] : memref<2x128x384xbf16, #tpu.memory_space<vmem>>, vector<1x128x384xbf16>
    %22 = vector.shape_cast %21 : vector<1x128x384xbf16> to vector<128x384xbf16>
    %cst_18 = arith.constant dense<0.000000e+00> : vector<16x384xf32>
    %23 = tpu.matmul %20, %22, %cst_18 {dimension_numbers = #tpu.dot_dimension_numbers<[1], [0], [0], [1], [0, 0, 1, 1], [], []>} : vector<16x128xbf16>, vector<128x384xbf16>, vector<16x384xf32> -> vector<16x384xf32>
    %24 = arith.addf %19, %23 : vector<16x384xf32>
    %25 = arith.index_cast %15 : i32 to index
    %c0_19 = arith.constant 0 : index
    %c0_20 = arith.constant 0 : index
    %26 = vector.load %arg8[%25, %c0_19, %c0_20] : memref<8x16x384xbf16, #tpu.memory_space<vmem>>, vector<1x16x384xbf16>
    %27 = vector.shape_cast %26 : vector<1x16x384xbf16> to vector<16x384xbf16>
    %28 = arith.extf %27 : vector<16x384xbf16> to vector<16x384xf32>
    %29 = arith.truncf %14 : vector<16x128xf32> to vector<16x128xbf16>
    %c1 = arith.constant 1 : index
    %c0_21 = arith.constant 0 : index
    %c0_22 = arith.constant 0 : index
    %30 = vector.load %arg3[%c1, %c0_21, %c0_22] : memref<2x128x384xbf16, #tpu.memory_space<vmem>>, vector<1x128x384xbf16>
    %31 = vector.shape_cast %30 : vector<1x128x384xbf16> to vector<128x384xbf16>
    %cst_23 = arith.constant dense<0.000000e+00> : vector<16x384xf32>
    %32 = tpu.matmul %29, %31, %cst_23 {dimension_numbers = #tpu.dot_dimension_numbers<[1], [0], [0], [1], [0, 0, 1, 1], [], []>} : vector<16x128xbf16>, vector<128x384xbf16>, vector<16x384xf32> -> vector<16x384xf32>
    %33 = arith.addf %28, %32 : vector<16x384xf32>
    %34 = vector.extract_strided_slice %24 {offsets = [0, 0], sizes = [16, 128], strides = [1, 1]} : vector<16x384xf32> to vector<16x128xf32>
    %35 = arith.negf %34 : vector<16x128xf32>
    %36 = math.exp %35 : vector<16x128xf32>
    %cst_24 = arith.constant 1.000000e+00 : f32
    %37 = vector.broadcast %cst_24 : f32 to vector<16x128xf32>
    %38 = arith.addf %37, %36 : vector<16x128xf32>
    %39 = arith.divf %37, %38 : vector<16x128xf32>
    %40 = vector.extract_strided_slice %24 {offsets = [0, 128], sizes = [16, 128], strides = [1, 1]} : vector<16x384xf32> to vector<16x128xf32>
    %41 = arith.negf %40 : vector<16x128xf32>
    %42 = math.exp %41 : vector<16x128xf32>
    %cst_25 = arith.constant 1.000000e+00 : f32
    %43 = vector.broadcast %cst_25 : f32 to vector<16x128xf32>
    %44 = arith.addf %43, %42 : vector<16x128xf32>
    %45 = arith.divf %43, %44 : vector<16x128xf32>
    %46 = vector.extract_strided_slice %24 {offsets = [0, 256], sizes = [16, 128], strides = [1, 1]} : vector<16x384xf32> to vector<16x128xf32>
    %47 = math.tanh %46 : vector<16x128xf32>
    %cst_26 = arith.constant 1.000000e+00 : f32
    %48 = vector.broadcast %cst_26 : f32 to vector<16x128xf32>
    %49 = arith.subf %48, %39 : vector<16x128xf32>
    %50 = arith.mulf %49, %14 : vector<16x128xf32>
    %51 = arith.mulf %39, %47 : vector<16x128xf32>
    %52 = arith.addf %50, %51 : vector<16x128xf32>
    %53 = math.tanh %52 : vector<16x128xf32>
    %54 = arith.mulf %45, %53 : vector<16x128xf32>
    %55 = vector.extract_strided_slice %33 {offsets = [0, 0], sizes = [16, 128], strides = [1, 1]} : vector<16x384xf32> to vector<16x128xf32>
    %56 = arith.negf %55 : vector<16x128xf32>
    %57 = math.exp %56 : vector<16x128xf32>
    %cst_27 = arith.constant 1.000000e+00 : f32
    %58 = vector.broadcast %cst_27 : f32 to vector<16x128xf32>
    %59 = arith.addf %58, %57 : vector<16x128xf32>
    %60 = arith.divf %58, %59 : vector<16x128xf32>
    %61 = vector.extract_strided_slice %33 {offsets = [0, 128], sizes = [16, 128], strides = [1, 1]} : vector<16x384xf32> to vector<16x128xf32>
    %62 = arith.negf %61 : vector<16x128xf32>
    %63 = math.exp %62 : vector<16x128xf32>
    %cst_28 = arith.constant 1.000000e+00 : f32
    %64 = vector.broadcast %cst_28 : f32 to vector<16x128xf32>
    %65 = arith.addf %64, %63 : vector<16x128xf32>
    %66 = arith.divf %64, %65 : vector<16x128xf32>
    %67 = vector.extract_strided_slice %33 {offsets = [0, 256], sizes = [16, 128], strides = [1, 1]} : vector<16x384xf32> to vector<16x128xf32>
    %68 = math.tanh %67 : vector<16x128xf32>
    %cst_29 = arith.constant 1.000000e+00 : f32
    %69 = vector.broadcast %cst_29 : f32 to vector<16x128xf32>
    %70 = arith.subf %69, %60 : vector<16x128xf32>
    %71 = arith.mulf %70, %14 : vector<16x128xf32>
    %72 = arith.mulf %60, %68 : vector<16x128xf32>
    %73 = arith.addf %71, %72 : vector<16x128xf32>
    %74 = math.tanh %73 : vector<16x128xf32>
    %75 = arith.mulf %66, %74 : vector<16x128xf32>
    %76 = arith.index_cast %c0_i32 : i32 to index
    %c0_30 = arith.constant 0 : index
    %c0_31 = arith.constant 0 : index
    %77 = vector.load %arg9[%76, %c0_30, %c0_31] : memref<8x16x128xf32, #tpu.memory_space<vmem>>, vector<1x16x128xf32>
    %78 = vector.shape_cast %77 : vector<1x16x128xf32> to vector<16x128xf32>
    %79 = vector.shape_cast %54 : vector<16x128xf32> to vector<1x16x128xf32>
    tpu.vector_store %arg9[%76, %c0_30, %c0_31], %79 {strides = array<i32>} : memref<8x16x128xf32, #tpu.memory_space<vmem>>, vector<1x16x128xf32>,
    %80 = arith.index_cast %15 : i32 to index
    %c0_32 = arith.constant 0 : index
    %c0_33 = arith.constant 0 : index
    %81 = vector.load %arg10[%80, %c0_32, %c0_33] : memref<8x16x128xf32, #tpu.memory_space<vmem>>, vector<1x16x128xf32>
    %82 = vector.shape_cast %81 : vector<1x16x128xf32> to vector<16x128xf32>
    %83 = vector.shape_cast %75 : vector<16x128xf32> to vector<1x16x128xf32>
    tpu.vector_store %arg10[%80, %c0_32, %c0_33], %83 {strides = array<i32>} : memref<8x16x128xf32, #tpu.memory_space<vmem>>, vector<1x16x128xf32>,
    %c1_i32 = arith.constant 1 : i32
    %c7_i32_34 = arith.constant 7 : i32
    %84 = arith.subi %c7_i32_34, %c1_i32 : i32
    %85 = arith.index_cast %c1_i32 : i32 to index
    %c0_35 = arith.constant 0 : index
    %c0_36 = arith.constant 0 : index
    %86 = vector.load %arg7[%85, %c0_35, %c0_36] : memref<8x16x384xbf16, #tpu.memory_space<vmem>>, vector<1x16x384xbf16>
    %87 = vector.shape_cast %86 : vector<1x16x384xbf16> to vector<16x384xbf16>
    %88 = arith.extf %87 : vector<16x384xbf16> to vector<16x384xf32>
    %89 = arith.truncf %54 : vector<16x128xf32> to vector<16x128xbf16>
    %c0_37 = arith.constant 0 : index
    %c0_38 = arith.constant 0 : index
    %c0_39 = arith.constant 0 : index
    %90 = vector.load %arg3[%c0_37, %c0_38, %c0_39] : memref<2x128x384xbf16, #tpu.memory_space<vmem>>, vector<1x128x384xbf16>
    %91 = vector.shape_cast %90 : vector<1x128x384xbf16> to vector<128x384xbf16>
    %cst_40 = arith.constant dense<0.000000e+00> : vector<16x384xf32>
    %92 = tpu.matmul %89, %91, %cst_40 {dimension_numbers = #tpu.dot_dimension_numbers<[1], [0], [0], [1], [0, 0, 1, 1], [], []>} : vector<16x128xbf16>, vector<128x384xbf16>, vector<16x384xf32> -> vector<16x384xf32>
    %93 = arith.addf %88, %92 : vector<16x384xf32>
    %94 = arith.index_cast %84 : i32 to index
    %c0_41 = arith.constant 0 : index
    %c0_42 = arith.constant 0 : index
    %95 = vector.load %arg8[%94, %c0_41, %c0_42] : memref<8x16x384xbf16, #tpu.memory_space<vmem>>, vector<1x16x384xbf16>
    %96 = vector.shape_cast %95 : vector<1x16x384xbf16> to vector<16x384xbf16>
    %97 = arith.extf %96 : vector<16x384xbf16> to vector<16x384xf32>
    %98 = arith.truncf %75 : vector<16x128xf32> to vector<16x128xbf16>
    %c1_43 = arith.constant 1 : index
    %c0_44 = arith.constant 0 : index
    %c0_45 = arith.constant 0 : index
    %99 = vector.load %arg3[%c1_43, %c0_44, %c0_45] : memref<2x128x384xbf16, #tpu.memory_space<vmem>>, vector<1x128x384xbf16>
    %100 = vector.shape_cast %99 : vector<1x128x384xbf16> to vector<128x384xbf16>
    %cst_46 = arith.constant dense<0.000000e+00> : vector<16x384xf32>
    %101 = tpu.matmul %98, %100, %cst_46 {dimension_numbers = #tpu.dot_dimension_numbers<[1], [0], [0], [1], [0, 0, 1, 1], [], []>} : vector<16x128xbf16>, vector<128x384xbf16>, vector<16x384xf32> -> vector<16x384xf32>
    %102 = arith.addf %97, %101 : vector<16x384xf32>
    %103 = vector.extract_strided_slice %93 {offsets = [0, 0], sizes = [16, 128], strides = [1, 1]} : vector<16x384xf32> to vector<16x128xf32>
    %104 = arith.negf %103 : vector<16x128xf32>
    %105 = math.exp %104 : vector<16x128xf32>
    %cst_47 = arith.constant 1.000000e+00 : f32
    %106 = vector.broadcast %cst_47 : f32 to vector<16x128xf32>
    %107 = arith.addf %106, %105 : vector<16x128xf32>
    %108 = arith.divf %106, %107 : vector<16x128xf32>
    %109 = vector.extract_strided_slice %93 {offsets = [0, 128], sizes = [16, 128], strides = [1, 1]} : vector<16x384xf32> to vector<16x128xf32>
    %110 = arith.negf %109 : vector<16x128xf32>
    %111 = math.exp %110 : vector<16x128xf32>
    %cst_48 = arith.constant 1.000000e+00 : f32
    %112 = vector.broadcast %cst_48 : f32 to vector<16x128xf32>
    %113 = arith.addf %112, %111 : vector<16x128xf32>
    %114 = arith.divf %112, %113 : vector<16x128xf32>
    %115 = vector.extract_strided_slice %93 {offsets = [0, 256], sizes = [16, 128], strides = [1, 1]} : vector<16x384xf32> to vector<16x128xf32>
    %116 = math.tanh %115 : vector<16x128xf32>
    %cst_49 = arith.constant 1.000000e+00 : f32
    %117 = vector.broadcast %cst_49 : f32 to vector<16x128xf32>
    %118 = arith.subf %117, %108 : vector<16x128xf32>
    %119 = arith.mulf %118, %52 : vector<16x128xf32>
    %120 = arith.mulf %108, %116 : vector<16x128xf32>
    %121 = arith.addf %119, %120 : vector<16x128xf32>
    %122 = math.tanh %121 : vector<16x128xf32>
    %123 = arith.mulf %114, %122 : vector<16x128xf32>
    %124 = vector.extract_strided_slice %102 {offsets = [0, 0], sizes = [16, 128], strides = [1, 1]} : vector<16x384xf32> to vector<16x128xf32>
    %125 = arith.negf %124 : vector<16x128xf32>
    %126 = math.exp %125 : vector<16x128xf32>
    %cst_50 = arith.constant 1.000000e+00 : f32
    %127 = vector.broadcast %cst_50 : f32 to vector<16x128xf32>
    %128 = arith.addf %127, %126 : vector<16x128xf32>
    %129 = arith.divf %127, %128 : vector<16x128xf32>
    %130 = vector.extract_strided_slice %102 {offsets = [0, 128], sizes = [16, 128], strides = [1, 1]} : vector<16x384xf32> to vector<16x128xf32>
    %131 = arith.negf %130 : vector<16x128xf32>
    %132 = math.exp %131 : vector<16x128xf32>
    %cst_51 = arith.constant 1.000000e+00 : f32
    %133 = vector.broadcast %cst_51 : f32 to vector<16x128xf32>
    %134 = arith.addf %133, %132 : vector<16x128xf32>
    %135 = arith.divf %133, %134 : vector<16x128xf32>
    %136 = vector.extract_strided_slice %102 {offsets = [0, 256], sizes = [16, 128], strides = [1, 1]} : vector<16x384xf32> to vector<16x128xf32>
    %137 = math.tanh %136 : vector<16x128xf32>
    %cst_52 = arith.constant 1.000000e+00 : f32
    %138 = vector.broadcast %cst_52 : f32 to vector<16x128xf32>
    %139 = arith.subf %138, %129 : vector<16x128xf32>
    %140 = arith.mulf %139, %73 : vector<16x128xf32>
    %141 = arith.mulf %129, %137 : vector<16x128xf32>
    %142 = arith.addf %140, %141 : vector<16x128xf32>
    %143 = math.tanh %142 : vector<16x128xf32>
    %144 = arith.mulf %135, %143 : vector<16x128xf32>
    %145 = arith.index_cast %c1_i32 : i32 to index
    %c0_53 = arith.constant 0 : index
    %c0_54 = arith.constant 0 : index
    %146 = vector.load %arg9[%145, %c0_53, %c0_54] : memref<8x16x128xf32, #tpu.memory_space<vmem>>, vector<1x16x128xf32>
    %147 = vector.shape_cast %146 : vector<1x16x128xf32> to vector<16x128xf32>
    %148 = vector.shape_cast %123 : vector<16x128xf32> to vector<1x16x128xf32>
    tpu.vector_store %arg9[%145, %c0_53, %c0_54], %148 {strides = array<i32>} : memref<8x16x128xf32, #tpu.memory_space<vmem>>, vector<1x16x128xf32>,
    %149 = arith.index_cast %84 : i32 to index
    %c0_55 = arith.constant 0 : index
    %c0_56 = arith.constant 0 : index
    %150 = vector.load %arg10[%149, %c0_55, %c0_56] : memref<8x16x128xf32, #tpu.memory_space<vmem>>, vector<1x16x128xf32>
    %151 = vector.shape_cast %150 : vector<1x16x128xf32> to vector<16x128xf32>
    %152 = vector.shape_cast %144 : vector<16x128xf32> to vector<1x16x128xf32>
    tpu.vector_store %arg10[%149, %c0_55, %c0_56], %152 {strides = array<i32>} : memref<8x16x128xf32, #tpu.memory_space<vmem>>, vector<1x16x128xf32>,
    %c2_i32 = arith.constant 2 : i32
    %c7_i32_57 = arith.constant 7 : i32
    %153 = arith.subi %c7_i32_57, %c2_i32 : i32
    %154 = arith.index_cast %c2_i32 : i32 to index
    %c0_58 = arith.constant 0 : index
    %c0_59 = arith.constant 0 : index
    %155 = vector.load %arg7[%154, %c0_58, %c0_59] : memref<8x16x384xbf16, #tpu.memory_space<vmem>>, vector<1x16x384xbf16>
    %156 = vector.shape_cast %155 : vector<1x16x384xbf16> to vector<16x384xbf16>
    %157 = arith.extf %156 : vector<16x384xbf16> to vector<16x384xf32>
    %158 = arith.truncf %123 : vector<16x128xf32> to vector<16x128xbf16>
    %c0_60 = arith.constant 0 : index
    %c0_61 = arith.constant 0 : index
    %c0_62 = arith.constant 0 : index
    %159 = vector.load %arg3[%c0_60, %c0_61, %c0_62] : memref<2x128x384xbf16, #tpu.memory_space<vmem>>, vector<1x128x384xbf16>
    %160 = vector.shape_cast %159 : vector<1x128x384xbf16> to vector<128x384xbf16>
    %cst_63 = arith.constant dense<0.000000e+00> : vector<16x384xf32>
    %161 = tpu.matmul %158, %160, %cst_63 {dimension_numbers = #tpu.dot_dimension_numbers<[1], [0], [0], [1], [0, 0, 1, 1], [], []>} : vector<16x128xbf16>, vector<128x384xbf16>, vector<16x384xf32> -> vector<16x384xf32>
    %162 = arith.addf %157, %161 : vector<16x384xf32>
    %163 = arith.index_cast %153 : i32 to index
    %c0_64 = arith.constant 0 : index
    %c0_65 = arith.constant 0 : index
    %164 = vector.load %arg8[%163, %c0_64, %c0_65] : memref<8x16x384xbf16, #tpu.memory_space<vmem>>, vector<1x16x384xbf16>
    %165 = vector.shape_cast %164 : vector<1x16x384xbf16> to vector<16x384xbf16>
    %166 = arith.extf %165 : vector<16x384xbf16> to vector<16x384xf32>
    %167 = arith.truncf %144 : vector<16x128xf32> to vector<16x128xbf16>
    %c1_66 = arith.constant 1 : index
    %c0_67 = arith.constant 0 : index
    %c0_68 = arith.constant 0 : index
    %168 = vector.load %arg3[%c1_66, %c0_67, %c0_68] : memref<2x128x384xbf16, #tpu.memory_space<vmem>>, vector<1x128x384xbf16>
    %169 = vector.shape_cast %168 : vector<1x128x384xbf16> to vector<128x384xbf16>
    %cst_69 = arith.constant dense<0.000000e+00> : vector<16x384xf32>
    %170 = tpu.matmul %167, %169, %cst_69 {dimension_numbers = #tpu.dot_dimension_numbers<[1], [0], [0], [1], [0, 0, 1, 1], [], []>} : vector<16x128xbf16>, vector<128x384xbf16>, vector<16x384xf32> -> vector<16x384xf32>
    %171 = arith.addf %166, %170 : vector<16x384xf32>
    %172 = vector.extract_strided_slice %162 {offsets = [0, 0], sizes = [16, 128], strides = [1, 1]} : vector<16x384xf32> to vector<16x128xf32>
    %173 = arith.negf %172 : vector<16x128xf32>
    %174 = math.exp %173 : vector<16x128xf32>
    %cst_70 = arith.constant 1.000000e+00 : f32
    %175 = vector.broadcast %cst_70 : f32 to vector<16x128xf32>
    %176 = arith.addf %175, %174 : vector<16x128xf32>
    %177 = arith.divf %175, %176 : vector<16x128xf32>
    %178 = vector.extract_strided_slice %162 {offsets = [0, 128], sizes = [16, 128], strides = [1, 1]} : vector<16x384xf32> to vector<16x128xf32>
    %179 = arith.negf %178 : vector<16x128xf32>
    %180 = math.exp %179 : vector<16x128xf32>
    %cst_71 = arith.constant 1.000000e+00 : f32
    %181 = vector.broadcast %cst_71 : f32 to vector<16x128xf32>
    %182 = arith.addf %181, %180 : vector<16x128xf32>
    %183 = arith.divf %181, %182 : vector<16x128xf32>
    %184 = vector.extract_strided_slice %162 {offsets = [0, 256], sizes = [16, 128], strides = [1, 1]} : vector<16x384xf32> to vector<16x128xf32>
    %185 = math.tanh %184 : vector<16x128xf32>
    %cst_72 = arith.constant 1.000000e+00 : f32
    %186 = vector.broadcast %cst_72 : f32 to vector<16x128xf32>
    %187 = arith.subf %186, %177 : vector<16x128xf32>
    %188 = arith.mulf %187, %121 : vector<16x128xf32>
    %189 = arith.mulf %177, %185 : vector<16x128xf32>
    %190 = arith.addf %188, %189 : vector<16x128xf32>
    %191 = math.tanh %190 : vector<16x128xf32>
    %192 = arith.mulf %183, %191 : vector<16x128xf32>
    %193 = vector.extract_strided_slice %171 {offsets = [0, 0], sizes = [16, 128], strides = [1, 1]} : vector<16x384xf32> to vector<16x128xf32>
    %194 = arith.negf %193 : vector<16x128xf32>
    %195 = math.exp %194 : vector<16x128xf32>
    %cst_73 = arith.constant 1.000000e+00 : f32
    %196 = vector.broadcast %cst_73 : f32 to vector<16x128xf32>
    %197 = arith.addf %196, %195 : vector<16x128xf32>
    %198 = arith.divf %196, %197 : vector<16x128xf32>
    %199 = vector.extract_strided_slice %171 {offsets = [0, 128], sizes = [16, 128], strides = [1, 1]} : vector<16x384xf32> to vector<16x128xf32>
    %200 = arith.negf %199 : vector<16x128xf32>
    %201 = math.exp %200 : vector<16x128xf32>
    %cst_74 = arith.constant 1.000000e+00 : f32
    %202 = vector.broadcast %cst_74 : f32 to vector<16x128xf32>
    %203 = arith.addf %202, %201 : vector<16x128xf32>
    %204 = arith.divf %202, %203 : vector<16x128xf32>
    %205 = vector.extract_strided_slice %171 {offsets = [0, 256], sizes = [16, 128], strides = [1, 1]} : vector<16x384xf32> to vector<16x128xf32>
    %206 = math.tanh %205 : vector<16x128xf32>
    %cst_75 = arith.constant 1.000000e+00 : f32
    %207 = vector.broadcast %cst_75 : f32 to vector<16x128xf32>
    %208 = arith.subf %207, %198 : vector<16x128xf32>
    %209 = arith.mulf %208, %142 : vector<16x128xf32>
    %210 = arith.mulf %198, %206 : vector<16x128xf32>
    %211 = arith.addf %209, %210 : vector<16x128xf32>
    %212 = math.tanh %211 : vector<16x128xf32>
    %213 = arith.mulf %204, %212 : vector<16x128xf32>
    %214 = arith.index_cast %c2_i32 : i32 to index
    %c0_76 = arith.constant 0 : index
    %c0_77 = arith.constant 0 : index
    %215 = vector.load %arg9[%214, %c0_76, %c0_77] : memref<8x16x128xf32, #tpu.memory_space<vmem>>, vector<1x16x128xf32>
    %216 = vector.shape_cast %215 : vector<1x16x128xf32> to vector<16x128xf32>
    %217 = vector.shape_cast %192 : vector<16x128xf32> to vector<1x16x128xf32>
    tpu.vector_store %arg9[%214, %c0_76, %c0_77], %217 {strides = array<i32>} : memref<8x16x128xf32, #tpu.memory_space<vmem>>, vector<1x16x128xf32>,
    %218 = arith.index_cast %153 : i32 to index
    %c0_78 = arith.constant 0 : index
    %c0_79 = arith.constant 0 : index
    %219 = vector.load %arg10[%218, %c0_78, %c0_79] : memref<8x16x128xf32, #tpu.memory_space<vmem>>, vector<1x16x128xf32>
    %220 = vector.shape_cast %219 : vector<1x16x128xf32> to vector<16x128xf32>
    %221 = vector.shape_cast %213 : vector<16x128xf32> to vector<1x16x128xf32>
    tpu.vector_store %arg10[%218, %c0_78, %c0_79], %221 {strides = array<i32>} : memref<8x16x128xf32, #tpu.memory_space<vmem>>, vector<1x16x128xf32>,
    %c3_i32 = arith.constant 3 : i32
    %c7_i32_80 = arith.constant 7 : i32
    %222 = arith.subi %c7_i32_80, %c3_i32 : i32
    %223 = arith.index_cast %c3_i32 : i32 to index
    %c0_81 = arith.constant 0 : index
    %c0_82 = arith.constant 0 : index
    %224 = vector.load %arg7[%223, %c0_81, %c0_82] : memref<8x16x384xbf16, #tpu.memory_space<vmem>>, vector<1x16x384xbf16>
    %225 = vector.shape_cast %224 : vector<1x16x384xbf16> to vector<16x384xbf16>
    %226 = arith.extf %225 : vector<16x384xbf16> to vector<16x384xf32>
    %227 = arith.truncf %192 : vector<16x128xf32> to vector<16x128xbf16>
    %c0_83 = arith.constant 0 : index
    %c0_84 = arith.constant 0 : index
    %c0_85 = arith.constant 0 : index
    %228 = vector.load %arg3[%c0_83, %c0_84, %c0_85] : memref<2x128x384xbf16, #tpu.memory_space<vmem>>, vector<1x128x384xbf16>
    %229 = vector.shape_cast %228 : vector<1x128x384xbf16> to vector<128x384xbf16>
    %cst_86 = arith.constant dense<0.000000e+00> : vector<16x384xf32>
    %230 = tpu.matmul %227, %229, %cst_86 {dimension_numbers = #tpu.dot_dimension_numbers<[1], [0], [0], [1], [0, 0, 1, 1], [], []>} : vector<16x128xbf16>, vector<128x384xbf16>, vector<16x384xf32> -> vector<16x384xf32>
    %231 = arith.addf %226, %230 : vector<16x384xf32>
    %232 = arith.index_cast %222 : i32 to index
    %c0_87 = arith.constant 0 : index
    %c0_88 = arith.constant 0 : index
    %233 = vector.load %arg8[%232, %c0_87, %c0_88] : memref<8x16x384xbf16, #tpu.memory_space<vmem>>, vector<1x16x384xbf16>
    %234 = vector.shape_cast %233 : vector<1x16x384xbf16> to vector<16x384xbf16>
    %235 = arith.extf %234 : vector<16x384xbf16> to vector<16x384xf32>
    %236 = arith.truncf %213 : vector<16x128xf32> to vector<16x128xbf16>
    %c1_89 = arith.constant 1 : index
    %c0_90 = arith.constant 0 : index
    %c0_91 = arith.constant 0 : index
    %237 = vector.load %arg3[%c1_89, %c0_90, %c0_91] : memref<2x128x384xbf16, #tpu.memory_space<vmem>>, vector<1x128x384xbf16>
    %238 = vector.shape_cast %237 : vector<1x128x384xbf16> to vector<128x384xbf16>
    %cst_92 = arith.constant dense<0.000000e+00> : vector<16x384xf32>
    %239 = tpu.matmul %236, %238, %cst_92 {dimension_numbers = #tpu.dot_dimension_numbers<[1], [0], [0], [1], [0, 0, 1, 1], [], []>} : vector<16x128xbf16>, vector<128x384xbf16>, vector<16x384xf32> -> vector<16x384xf32>
    %240 = arith.addf %235, %239 : vector<16x384xf32>
    %241 = vector.extract_strided_slice %231 {offsets = [0, 0], sizes = [16, 128], strides = [1, 1]} : vector<16x384xf32> to vector<16x128xf32>
    %242 = arith.negf %241 : vector<16x128xf32>
    %243 = math.exp %242 : vector<16x128xf32>
    %cst_93 = arith.constant 1.000000e+00 : f32
    %244 = vector.broadcast %cst_93 : f32 to vector<16x128xf32>
    %245 = arith.addf %244, %243 : vector<16x128xf32>
    %246 = arith.divf %244, %245 : vector<16x128xf32>
    %247 = vector.extract_strided_slice %231 {offsets = [0, 128], sizes = [16, 128], strides = [1, 1]} : vector<16x384xf32> to vector<16x128xf32>
    %248 = arith.negf %247 : vector<16x128xf32>
    %249 = math.exp %248 : vector<16x128xf32>
    %cst_94 = arith.constant 1.000000e+00 : f32
    %250 = vector.broadcast %cst_94 : f32 to vector<16x128xf32>
    %251 = arith.addf %250, %249 : vector<16x128xf32>
    %252 = arith.divf %250, %251 : vector<16x128xf32>
    %253 = vector.extract_strided_slice %231 {offsets = [0, 256], sizes = [16, 128], strides = [1, 1]} : vector<16x384xf32> to vector<16x128xf32>
    %254 = math.tanh %253 : vector<16x128xf32>
    %cst_95 = arith.constant 1.000000e+00 : f32
    %255 = vector.broadcast %cst_95 : f32 to vector<16x128xf32>
    %256 = arith.subf %255, %246 : vector<16x128xf32>
    %257 = arith.mulf %256, %190 : vector<16x128xf32>
    %258 = arith.mulf %246, %254 : vector<16x128xf32>
    %259 = arith.addf %257, %258 : vector<16x128xf32>
    %260 = math.tanh %259 : vector<16x128xf32>
    %261 = arith.mulf %252, %260 : vector<16x128xf32>
    %262 = vector.extract_strided_slice %240 {offsets = [0, 0], sizes = [16, 128], strides = [1, 1]} : vector<16x384xf32> to vector<16x128xf32>
    %263 = arith.negf %262 : vector<16x128xf32>
    %264 = math.exp %263 : vector<16x128xf32>
    %cst_96 = arith.constant 1.000000e+00 : f32
    %265 = vector.broadcast %cst_96 : f32 to vector<16x128xf32>
    %266 = arith.addf %265, %264 : vector<16x128xf32>
    %267 = arith.divf %265, %266 : vector<16x128xf32>
    %268 = vector.extract_strided_slice %240 {offsets = [0, 128], sizes = [16, 128], strides = [1, 1]} : vector<16x384xf32> to vector<16x128xf32>
    %269 = arith.negf %268 : vector<16x128xf32>
    %270 = math.exp %269 : vector<16x128xf32>
    %cst_97 = arith.constant 1.000000e+00 : f32
    %271 = vector.broadcast %cst_97 : f32 to vector<16x128xf32>
    %272 = arith.addf %271, %270 : vector<16x128xf32>
    %273 = arith.divf %271, %272 : vector<16x128xf32>
    %274 = vector.extract_strided_slice %240 {offsets = [0, 256], sizes = [16, 128], strides = [1, 1]} : vector<16x384xf32> to vector<16x128xf32>
    %275 = math.tanh %274 : vector<16x128xf32>
    %cst_98 = arith.constant 1.000000e+00 : f32
    %276 = vector.broadcast %cst_98 : f32 to vector<16x128xf32>
    %277 = arith.subf %276, %267 : vector<16x128xf32>
    %278 = arith.mulf %277, %211 : vector<16x128xf32>
    %279 = arith.mulf %267, %275 : vector<16x128xf32>
    %280 = arith.addf %278, %279 : vector<16x128xf32>
    %281 = math.tanh %280 : vector<16x128xf32>
    %282 = arith.mulf %273, %281 : vector<16x128xf32>
    %283 = arith.index_cast %c3_i32 : i32 to index
    %c0_99 = arith.constant 0 : index
    %c0_100 = arith.constant 0 : index
    %284 = vector.load %arg9[%283, %c0_99, %c0_100] : memref<8x16x128xf32, #tpu.memory_space<vmem>>, vector<1x16x128xf32>
    %285 = vector.shape_cast %284 : vector<1x16x128xf32> to vector<16x128xf32>
    %286 = vector.shape_cast %261 : vector<16x128xf32> to vector<1x16x128xf32>
    tpu.vector_store %arg9[%283, %c0_99, %c0_100], %286 {strides = array<i32>} : memref<8x16x128xf32, #tpu.memory_space<vmem>>, vector<1x16x128xf32>,
    %287 = arith.index_cast %222 : i32 to index
    %c0_101 = arith.constant 0 : index
    %c0_102 = arith.constant 0 : index
    %288 = vector.load %arg10[%287, %c0_101, %c0_102] : memref<8x16x128xf32, #tpu.memory_space<vmem>>, vector<1x16x128xf32>
    %289 = vector.shape_cast %288 : vector<1x16x128xf32> to vector<16x128xf32>
    %290 = vector.shape_cast %282 : vector<16x128xf32> to vector<1x16x128xf32>
    tpu.vector_store %arg10[%287, %c0_101, %c0_102], %290 {strides = array<i32>} : memref<8x16x128xf32, #tpu.memory_space<vmem>>, vector<1x16x128xf32>,
    %c4_i32 = arith.constant 4 : i32
    %c7_i32_103 = arith.constant 7 : i32
    %291 = arith.subi %c7_i32_103, %c4_i32 : i32
    %292 = arith.index_cast %c4_i32 : i32 to index
    %c0_104 = arith.constant 0 : index
    %c0_105 = arith.constant 0 : index
    %293 = vector.load %arg7[%292, %c0_104, %c0_105] : memref<8x16x384xbf16, #tpu.memory_space<vmem>>, vector<1x16x384xbf16>
    %294 = vector.shape_cast %293 : vector<1x16x384xbf16> to vector<16x384xbf16>
    %295 = arith.extf %294 : vector<16x384xbf16> to vector<16x384xf32>
    %296 = arith.truncf %261 : vector<16x128xf32> to vector<16x128xbf16>
    %c0_106 = arith.constant 0 : index
    %c0_107 = arith.constant 0 : index
    %c0_108 = arith.constant 0 : index
    %297 = vector.load %arg3[%c0_106, %c0_107, %c0_108] : memref<2x128x384xbf16, #tpu.memory_space<vmem>>, vector<1x128x384xbf16>
    %298 = vector.shape_cast %297 : vector<1x128x384xbf16> to vector<128x384xbf16>
    %cst_109 = arith.constant dense<0.000000e+00> : vector<16x384xf32>
    %299 = tpu.matmul %296, %298, %cst_109 {dimension_numbers = #tpu.dot_dimension_numbers<[1], [0], [0], [1], [0, 0, 1, 1], [], []>} : vector<16x128xbf16>, vector<128x384xbf16>, vector<16x384xf32> -> vector<16x384xf32>
    %300 = arith.addf %295, %299 : vector<16x384xf32>
    %301 = arith.index_cast %291 : i32 to index
    %c0_110 = arith.constant 0 : index
    %c0_111 = arith.constant 0 : index
    %302 = vector.load %arg8[%301, %c0_110, %c0_111] : memref<8x16x384xbf16, #tpu.memory_space<vmem>>, vector<1x16x384xbf16>
    %303 = vector.shape_cast %302 : vector<1x16x384xbf16> to vector<16x384xbf16>
    %304 = arith.extf %303 : vector<16x384xbf16> to vector<16x384xf32>
    %305 = arith.truncf %282 : vector<16x128xf32> to vector<16x128xbf16>
    %c1_112 = arith.constant 1 : index
    %c0_113 = arith.constant 0 : index
    %c0_114 = arith.constant 0 : index
    %306 = vector.load %arg3[%c1_112, %c0_113, %c0_114] : memref<2x128x384xbf16, #tpu.memory_space<vmem>>, vector<1x128x384xbf16>
    %307 = vector.shape_cast %306 : vector<1x128x384xbf16> to vector<128x384xbf16>
    %cst_115 = arith.constant dense<0.000000e+00> : vector<16x384xf32>
    %308 = tpu.matmul %305, %307, %cst_115 {dimension_numbers = #tpu.dot_dimension_numbers<[1], [0], [0], [1], [0, 0, 1, 1], [], []>} : vector<16x128xbf16>, vector<128x384xbf16>, vector<16x384xf32> -> vector<16x384xf32>
    %309 = arith.addf %304, %308 : vector<16x384xf32>
    %310 = vector.extract_strided_slice %300 {offsets = [0, 0], sizes = [16, 128], strides = [1, 1]} : vector<16x384xf32> to vector<16x128xf32>
    %311 = arith.negf %310 : vector<16x128xf32>
    %312 = math.exp %311 : vector<16x128xf32>
    %cst_116 = arith.constant 1.000000e+00 : f32
    %313 = vector.broadcast %cst_116 : f32 to vector<16x128xf32>
    %314 = arith.addf %313, %312 : vector<16x128xf32>
    %315 = arith.divf %313, %314 : vector<16x128xf32>
    %316 = vector.extract_strided_slice %300 {offsets = [0, 128], sizes = [16, 128], strides = [1, 1]} : vector<16x384xf32> to vector<16x128xf32>
    %317 = arith.negf %316 : vector<16x128xf32>
    %318 = math.exp %317 : vector<16x128xf32>
    %cst_117 = arith.constant 1.000000e+00 : f32
    %319 = vector.broadcast %cst_117 : f32 to vector<16x128xf32>
    %320 = arith.addf %319, %318 : vector<16x128xf32>
    %321 = arith.divf %319, %320 : vector<16x128xf32>
    %322 = vector.extract_strided_slice %300 {offsets = [0, 256], sizes = [16, 128], strides = [1, 1]} : vector<16x384xf32> to vector<16x128xf32>
    %323 = math.tanh %322 : vector<16x128xf32>
    %cst_118 = arith.constant 1.000000e+00 : f32
    %324 = vector.broadcast %cst_118 : f32 to vector<16x128xf32>
    %325 = arith.subf %324, %315 : vector<16x128xf32>
    %326 = arith.mulf %325, %259 : vector<16x128xf32>
    %327 = arith.mulf %315, %323 : vector<16x128xf32>
    %328 = arith.addf %326, %327 : vector<16x128xf32>
    %329 = math.tanh %328 : vector<16x128xf32>
    %330 = arith.mulf %321, %329 : vector<16x128xf32>
    %331 = vector.extract_strided_slice %309 {offsets = [0, 0], sizes = [16, 128], strides = [1, 1]} : vector<16x384xf32> to vector<16x128xf32>
    %332 = arith.negf %331 : vector<16x128xf32>
    %333 = math.exp %332 : vector<16x128xf32>
    %cst_119 = arith.constant 1.000000e+00 : f32
    %334 = vector.broadcast %cst_119 : f32 to vector<16x128xf32>
    %335 = arith.addf %334, %333 : vector<16x128xf32>
    %336 = arith.divf %334, %335 : vector<16x128xf32>
    %337 = vector.extract_strided_slice %309 {offsets = [0, 128], sizes = [16, 128], strides = [1, 1]} : vector<16x384xf32> to vector<16x128xf32>
    %338 = arith.negf %337 : vector<16x128xf32>
    %339 = math.exp %338 : vector<16x128xf32>
    %cst_120 = arith.constant 1.000000e+00 : f32
    %340 = vector.broadcast %cst_120 : f32 to vector<16x128xf32>
    %341 = arith.addf %340, %339 : vector<16x128xf32>
    %342 = arith.divf %340, %341 : vector<16x128xf32>
    %343 = vector.extract_strided_slice %309 {offsets = [0, 256], sizes = [16, 128], strides = [1, 1]} : vector<16x384xf32> to vector<16x128xf32>
    %344 = math.tanh %343 : vector<16x128xf32>
    %cst_121 = arith.constant 1.000000e+00 : f32
    %345 = vector.broadcast %cst_121 : f32 to vector<16x128xf32>
    %346 = arith.subf %345, %336 : vector<16x128xf32>
    %347 = arith.mulf %346, %280 : vector<16x128xf32>
    %348 = arith.mulf %336, %344 : vector<16x128xf32>
    %349 = arith.addf %347, %348 : vector<16x128xf32>
    %350 = math.tanh %349 : vector<16x128xf32>
    %351 = arith.mulf %342, %350 : vector<16x128xf32>
    %352 = arith.index_cast %c4_i32 : i32 to index
    %c0_122 = arith.constant 0 : index
    %c0_123 = arith.constant 0 : index
    %353 = vector.load %arg9[%352, %c0_122, %c0_123] : memref<8x16x128xf32, #tpu.memory_space<vmem>>, vector<1x16x128xf32>
    %354 = vector.shape_cast %353 : vector<1x16x128xf32> to vector<16x128xf32>
    %355 = vector.shape_cast %330 : vector<16x128xf32> to vector<1x16x128xf32>
    tpu.vector_store %arg9[%352, %c0_122, %c0_123], %355 {strides = array<i32>} : memref<8x16x128xf32, #tpu.memory_space<vmem>>, vector<1x16x128xf32>,
    %356 = arith.index_cast %291 : i32 to index
    %c0_124 = arith.constant 0 : index
    %c0_125 = arith.constant 0 : index
    %357 = vector.load %arg10[%356, %c0_124, %c0_125] : memref<8x16x128xf32, #tpu.memory_space<vmem>>, vector<1x16x128xf32>
    %358 = vector.shape_cast %357 : vector<1x16x128xf32> to vector<16x128xf32>
    %359 = vector.shape_cast %351 : vector<16x128xf32> to vector<1x16x128xf32>
    tpu.vector_store %arg10[%356, %c0_124, %c0_125], %359 {strides = array<i32>} : memref<8x16x128xf32, #tpu.memory_space<vmem>>, vector<1x16x128xf32>,
    %c5_i32 = arith.constant 5 : i32
    %c7_i32_126 = arith.constant 7 : i32
    %360 = arith.subi %c7_i32_126, %c5_i32 : i32
    %361 = arith.index_cast %c5_i32 : i32 to index
    %c0_127 = arith.constant 0 : index
    %c0_128 = arith.constant 0 : index
    %362 = vector.load %arg7[%361, %c0_127, %c0_128] : memref<8x16x384xbf16, #tpu.memory_space<vmem>>, vector<1x16x384xbf16>
    %363 = vector.shape_cast %362 : vector<1x16x384xbf16> to vector<16x384xbf16>
    %364 = arith.extf %363 : vector<16x384xbf16> to vector<16x384xf32>
    %365 = arith.truncf %330 : vector<16x128xf32> to vector<16x128xbf16>
    %c0_129 = arith.constant 0 : index
    %c0_130 = arith.constant 0 : index
    %c0_131 = arith.constant 0 : index
    %366 = vector.load %arg3[%c0_129, %c0_130, %c0_131] : memref<2x128x384xbf16, #tpu.memory_space<vmem>>, vector<1x128x384xbf16>
    %367 = vector.shape_cast %366 : vector<1x128x384xbf16> to vector<128x384xbf16>
    %cst_132 = arith.constant dense<0.000000e+00> : vector<16x384xf32>
    %368 = tpu.matmul %365, %367, %cst_132 {dimension_numbers = #tpu.dot_dimension_numbers<[1], [0], [0], [1], [0, 0, 1, 1], [], []>} : vector<16x128xbf16>, vector<128x384xbf16>, vector<16x384xf32> -> vector<16x384xf32>
    %369 = arith.addf %364, %368 : vector<16x384xf32>
    %370 = arith.index_cast %360 : i32 to index
    %c0_133 = arith.constant 0 : index
    %c0_134 = arith.constant 0 : index
    %371 = vector.load %arg8[%370, %c0_133, %c0_134] : memref<8x16x384xbf16, #tpu.memory_space<vmem>>, vector<1x16x384xbf16>
    %372 = vector.shape_cast %371 : vector<1x16x384xbf16> to vector<16x384xbf16>
    %373 = arith.extf %372 : vector<16x384xbf16> to vector<16x384xf32>
    %374 = arith.truncf %351 : vector<16x128xf32> to vector<16x128xbf16>
    %c1_135 = arith.constant 1 : index
    %c0_136 = arith.constant 0 : index
    %c0_137 = arith.constant 0 : index
    %375 = vector.load %arg3[%c1_135, %c0_136, %c0_137] : memref<2x128x384xbf16, #tpu.memory_space<vmem>>, vector<1x128x384xbf16>
    %376 = vector.shape_cast %375 : vector<1x128x384xbf16> to vector<128x384xbf16>
    %cst_138 = arith.constant dense<0.000000e+00> : vector<16x384xf32>
    %377 = tpu.matmul %374, %376, %cst_138 {dimension_numbers = #tpu.dot_dimension_numbers<[1], [0], [0], [1], [0, 0, 1, 1], [], []>} : vector<16x128xbf16>, vector<128x384xbf16>, vector<16x384xf32> -> vector<16x384xf32>
    %378 = arith.addf %373, %377 : vector<16x384xf32>
    %379 = vector.extract_strided_slice %369 {offsets = [0, 0], sizes = [16, 128], strides = [1, 1]} : vector<16x384xf32> to vector<16x128xf32>
    %380 = arith.negf %379 : vector<16x128xf32>
    %381 = math.exp %380 : vector<16x128xf32>
    %cst_139 = arith.constant 1.000000e+00 : f32
    %382 = vector.broadcast %cst_139 : f32 to vector<16x128xf32>
    %383 = arith.addf %382, %381 : vector<16x128xf32>
    %384 = arith.divf %382, %383 : vector<16x128xf32>
    %385 = vector.extract_strided_slice %369 {offsets = [0, 128], sizes = [16, 128], strides = [1, 1]} : vector<16x384xf32> to vector<16x128xf32>
    %386 = arith.negf %385 : vector<16x128xf32>
    %387 = math.exp %386 : vector<16x128xf32>
    %cst_140 = arith.constant 1.000000e+00 : f32
    %388 = vector.broadcast %cst_140 : f32 to vector<16x128xf32>
    %389 = arith.addf %388, %387 : vector<16x128xf32>
    %390 = arith.divf %388, %389 : vector<16x128xf32>
    %391 = vector.extract_strided_slice %369 {offsets = [0, 256], sizes = [16, 128], strides = [1, 1]} : vector<16x384xf32> to vector<16x128xf32>
    %392 = math.tanh %391 : vector<16x128xf32>
    %cst_141 = arith.constant 1.000000e+00 : f32
    %393 = vector.broadcast %cst_141 : f32 to vector<16x128xf32>
    %394 = arith.subf %393, %384 : vector<16x128xf32>
    %395 = arith.mulf %394, %328 : vector<16x128xf32>
    %396 = arith.mulf %384, %392 : vector<16x128xf32>
    %397 = arith.addf %395, %396 : vector<16x128xf32>
    %398 = math.tanh %397 : vector<16x128xf32>
    %399 = arith.mulf %390, %398 : vector<16x128xf32>
    %400 = vector.extract_strided_slice %378 {offsets = [0, 0], sizes = [16, 128], strides = [1, 1]} : vector<16x384xf32> to vector<16x128xf32>
    %401 = arith.negf %400 : vector<16x128xf32>
    %402 = math.exp %401 : vector<16x128xf32>
    %cst_142 = arith.constant 1.000000e+00 : f32
    %403 = vector.broadcast %cst_142 : f32 to vector<16x128xf32>
    %404 = arith.addf %403, %402 : vector<16x128xf32>
    %405 = arith.divf %403, %404 : vector<16x128xf32>
    %406 = vector.extract_strided_slice %378 {offsets = [0, 128], sizes = [16, 128], strides = [1, 1]} : vector<16x384xf32> to vector<16x128xf32>
    %407 = arith.negf %406 : vector<16x128xf32>
    %408 = math.exp %407 : vector<16x128xf32>
    %cst_143 = arith.constant 1.000000e+00 : f32
    %409 = vector.broadcast %cst_143 : f32 to vector<16x128xf32>
    %410 = arith.addf %409, %408 : vector<16x128xf32>
    %411 = arith.divf %409, %410 : vector<16x128xf32>
    %412 = vector.extract_strided_slice %378 {offsets = [0, 256], sizes = [16, 128], strides = [1, 1]} : vector<16x384xf32> to vector<16x128xf32>
    %413 = math.tanh %412 : vector<16x128xf32>
    %cst_144 = arith.constant 1.000000e+00 : f32
    %414 = vector.broadcast %cst_144 : f32 to vector<16x128xf32>
    %415 = arith.subf %414, %405 : vector<16x128xf32>
    %416 = arith.mulf %415, %349 : vector<16x128xf32>
    %417 = arith.mulf %405, %413 : vector<16x128xf32>
    %418 = arith.addf %416, %417 : vector<16x128xf32>
    %419 = math.tanh %418 : vector<16x128xf32>
    %420 = arith.mulf %411, %419 : vector<16x128xf32>
    %421 = arith.index_cast %c5_i32 : i32 to index
    %c0_145 = arith.constant 0 : index
    %c0_146 = arith.constant 0 : index
    %422 = vector.load %arg9[%421, %c0_145, %c0_146] : memref<8x16x128xf32, #tpu.memory_space<vmem>>, vector<1x16x128xf32>
    %423 = vector.shape_cast %422 : vector<1x16x128xf32> to vector<16x128xf32>
    %424 = vector.shape_cast %399 : vector<16x128xf32> to vector<1x16x128xf32>
    tpu.vector_store %arg9[%421, %c0_145, %c0_146], %424 {strides = array<i32>} : memref<8x16x128xf32, #tpu.memory_space<vmem>>, vector<1x16x128xf32>,
    %425 = arith.index_cast %360 : i32 to index
    %c0_147 = arith.constant 0 : index
    %c0_148 = arith.constant 0 : index
    %426 = vector.load %arg10[%425, %c0_147, %c0_148] : memref<8x16x128xf32, #tpu.memory_space<vmem>>, vector<1x16x128xf32>
    %427 = vector.shape_cast %426 : vector<1x16x128xf32> to vector<16x128xf32>
    %428 = vector.shape_cast %420 : vector<16x128xf32> to vector<1x16x128xf32>
    tpu.vector_store %arg10[%425, %c0_147, %c0_148], %428 {strides = array<i32>} : memref<8x16x128xf32, #tpu.memory_space<vmem>>, vector<1x16x128xf32>,
    %c6_i32 = arith.constant 6 : i32
    %c7_i32_149 = arith.constant 7 : i32
    %429 = arith.subi %c7_i32_149, %c6_i32 : i32
    %430 = arith.index_cast %c6_i32 : i32 to index
    %c0_150 = arith.constant 0 : index
    %c0_151 = arith.constant 0 : index
    %431 = vector.load %arg7[%430, %c0_150, %c0_151] : memref<8x16x384xbf16, #tpu.memory_space<vmem>>, vector<1x16x384xbf16>
    %432 = vector.shape_cast %431 : vector<1x16x384xbf16> to vector<16x384xbf16>
    %433 = arith.extf %432 : vector<16x384xbf16> to vector<16x384xf32>
    %434 = arith.truncf %399 : vector<16x128xf32> to vector<16x128xbf16>
    %c0_152 = arith.constant 0 : index
    %c0_153 = arith.constant 0 : index
    %c0_154 = arith.constant 0 : index
    %435 = vector.load %arg3[%c0_152, %c0_153, %c0_154] : memref<2x128x384xbf16, #tpu.memory_space<vmem>>, vector<1x128x384xbf16>
    %436 = vector.shape_cast %435 : vector<1x128x384xbf16> to vector<128x384xbf16>
    %cst_155 = arith.constant dense<0.000000e+00> : vector<16x384xf32>
    %437 = tpu.matmul %434, %436, %cst_155 {dimension_numbers = #tpu.dot_dimension_numbers<[1], [0], [0], [1], [0, 0, 1, 1], [], []>} : vector<16x128xbf16>, vector<128x384xbf16>, vector<16x384xf32> -> vector<16x384xf32>
    %438 = arith.addf %433, %437 : vector<16x384xf32>
    %439 = arith.index_cast %429 : i32 to index
    %c0_156 = arith.constant 0 : index
    %c0_157 = arith.constant 0 : index
    %440 = vector.load %arg8[%439, %c0_156, %c0_157] : memref<8x16x384xbf16, #tpu.memory_space<vmem>>, vector<1x16x384xbf16>
    %441 = vector.shape_cast %440 : vector<1x16x384xbf16> to vector<16x384xbf16>
    %442 = arith.extf %441 : vector<16x384xbf16> to vector<16x384xf32>
    %443 = arith.truncf %420 : vector<16x128xf32> to vector<16x128xbf16>
    %c1_158 = arith.constant 1 : index
    %c0_159 = arith.constant 0 : index
    %c0_160 = arith.constant 0 : index
    %444 = vector.load %arg3[%c1_158, %c0_159, %c0_160] : memref<2x128x384xbf16, #tpu.memory_space<vmem>>, vector<1x128x384xbf16>
    %445 = vector.shape_cast %444 : vector<1x128x384xbf16> to vector<128x384xbf16>
    %cst_161 = arith.constant dense<0.000000e+00> : vector<16x384xf32>
    %446 = tpu.matmul %443, %445, %cst_161 {dimension_numbers = #tpu.dot_dimension_numbers<[1], [0], [0], [1], [0, 0, 1, 1], [], []>} : vector<16x128xbf16>, vector<128x384xbf16>, vector<16x384xf32> -> vector<16x384xf32>
    %447 = arith.addf %442, %446 : vector<16x384xf32>
    %448 = vector.extract_strided_slice %438 {offsets = [0, 0], sizes = [16, 128], strides = [1, 1]} : vector<16x384xf32> to vector<16x128xf32>
    %449 = arith.negf %448 : vector<16x128xf32>
    %450 = math.exp %449 : vector<16x128xf32>
    %cst_162 = arith.constant 1.000000e+00 : f32
    %451 = vector.broadcast %cst_162 : f32 to vector<16x128xf32>
    %452 = arith.addf %451, %450 : vector<16x128xf32>
    %453 = arith.divf %451, %452 : vector<16x128xf32>
    %454 = vector.extract_strided_slice %438 {offsets = [0, 128], sizes = [16, 128], strides = [1, 1]} : vector<16x384xf32> to vector<16x128xf32>
    %455 = arith.negf %454 : vector<16x128xf32>
    %456 = math.exp %455 : vector<16x128xf32>
    %cst_163 = arith.constant 1.000000e+00 : f32
    %457 = vector.broadcast %cst_163 : f32 to vector<16x128xf32>
    %458 = arith.addf %457, %456 : vector<16x128xf32>
    %459 = arith.divf %457, %458 : vector<16x128xf32>
    %460 = vector.extract_strided_slice %438 {offsets = [0, 256], sizes = [16, 128], strides = [1, 1]} : vector<16x384xf32> to vector<16x128xf32>
    %461 = math.tanh %460 : vector<16x128xf32>
    %cst_164 = arith.constant 1.000000e+00 : f32
    %462 = vector.broadcast %cst_164 : f32 to vector<16x128xf32>
    %463 = arith.subf %462, %453 : vector<16x128xf32>
    %464 = arith.mulf %463, %397 : vector<16x128xf32>
    %465 = arith.mulf %453, %461 : vector<16x128xf32>
    %466 = arith.addf %464, %465 : vector<16x128xf32>
    %467 = math.tanh %466 : vector<16x128xf32>
    %468 = arith.mulf %459, %467 : vector<16x128xf32>
    %469 = vector.extract_strided_slice %447 {offsets = [0, 0], sizes = [16, 128], strides = [1, 1]} : vector<16x384xf32> to vector<16x128xf32>
    %470 = arith.negf %469 : vector<16x128xf32>
    %471 = math.exp %470 : vector<16x128xf32>
    %cst_165 = arith.constant 1.000000e+00 : f32
    %472 = vector.broadcast %cst_165 : f32 to vector<16x128xf32>
    %473 = arith.addf %472, %471 : vector<16x128xf32>
    %474 = arith.divf %472, %473 : vector<16x128xf32>
    %475 = vector.extract_strided_slice %447 {offsets = [0, 128], sizes = [16, 128], strides = [1, 1]} : vector<16x384xf32> to vector<16x128xf32>
    %476 = arith.negf %475 : vector<16x128xf32>
    %477 = math.exp %476 : vector<16x128xf32>
    %cst_166 = arith.constant 1.000000e+00 : f32
    %478 = vector.broadcast %cst_166 : f32 to vector<16x128xf32>
    %479 = arith.addf %478, %477 : vector<16x128xf32>
    %480 = arith.divf %478, %479 : vector<16x128xf32>
    %481 = vector.extract_strided_slice %447 {offsets = [0, 256], sizes = [16, 128], strides = [1, 1]} : vector<16x384xf32> to vector<16x128xf32>
    %482 = math.tanh %481 : vector<16x128xf32>
    %cst_167 = arith.constant 1.000000e+00 : f32
    %483 = vector.broadcast %cst_167 : f32 to vector<16x128xf32>
    %484 = arith.subf %483, %474 : vector<16x128xf32>
    %485 = arith.mulf %484, %418 : vector<16x128xf32>
    %486 = arith.mulf %474, %482 : vector<16x128xf32>
    %487 = arith.addf %485, %486 : vector<16x128xf32>
    %488 = math.tanh %487 : vector<16x128xf32>
    %489 = arith.mulf %480, %488 : vector<16x128xf32>
    %490 = arith.index_cast %c6_i32 : i32 to index
    %c0_168 = arith.constant 0 : index
    %c0_169 = arith.constant 0 : index
    %491 = vector.load %arg9[%490, %c0_168, %c0_169] : memref<8x16x128xf32, #tpu.memory_space<vmem>>, vector<1x16x128xf32>
    %492 = vector.shape_cast %491 : vector<1x16x128xf32> to vector<16x128xf32>
    %493 = vector.shape_cast %468 : vector<16x128xf32> to vector<1x16x128xf32>
    tpu.vector_store %arg9[%490, %c0_168, %c0_169], %493 {strides = array<i32>} : memref<8x16x128xf32, #tpu.memory_space<vmem>>, vector<1x16x128xf32>,
    %494 = arith.index_cast %429 : i32 to index
    %c0_170 = arith.constant 0 : index
    %c0_171 = arith.constant 0 : index
    %495 = vector.load %arg10[%494, %c0_170, %c0_171] : memref<8x16x128xf32, #tpu.memory_space<vmem>>, vector<1x16x128xf32>
    %496 = vector.shape_cast %495 : vector<1x16x128xf32> to vector<16x128xf32>
    %497 = vector.shape_cast %489 : vector<16x128xf32> to vector<1x16x128xf32>
    tpu.vector_store %arg10[%494, %c0_170, %c0_171], %497 {strides = array<i32>} : memref<8x16x128xf32, #tpu.memory_space<vmem>>, vector<1x16x128xf32>,
    %c7_i32_172 = arith.constant 7 : i32
    %c7_i32_173 = arith.constant 7 : i32
    %498 = arith.subi %c7_i32_173, %c7_i32_172 : i32
    %499 = arith.index_cast %c7_i32_172 : i32 to index
    %c0_174 = arith.constant 0 : index
    %c0_175 = arith.constant 0 : index
    %500 = vector.load %arg7[%499, %c0_174, %c0_175] : memref<8x16x384xbf16, #tpu.memory_space<vmem>>, vector<1x16x384xbf16>
    %501 = vector.shape_cast %500 : vector<1x16x384xbf16> to vector<16x384xbf16>
    %502 = arith.extf %501 : vector<16x384xbf16> to vector<16x384xf32>
    %503 = arith.truncf %468 : vector<16x128xf32> to vector<16x128xbf16>
    %c0_176 = arith.constant 0 : index
    %c0_177 = arith.constant 0 : index
    %c0_178 = arith.constant 0 : index
    %504 = vector.load %arg3[%c0_176, %c0_177, %c0_178] : memref<2x128x384xbf16, #tpu.memory_space<vmem>>, vector<1x128x384xbf16>
    %505 = vector.shape_cast %504 : vector<1x128x384xbf16> to vector<128x384xbf16>
    %cst_179 = arith.constant dense<0.000000e+00> : vector<16x384xf32>
    %506 = tpu.matmul %503, %505, %cst_179 {dimension_numbers = #tpu.dot_dimension_numbers<[1], [0], [0], [1], [0, 0, 1, 1], [], []>} : vector<16x128xbf16>, vector<128x384xbf16>, vector<16x384xf32> -> vector<16x384xf32>
    %507 = arith.addf %502, %506 : vector<16x384xf32>
    %508 = arith.index_cast %498 : i32 to index
    %c0_180 = arith.constant 0 : index
    %c0_181 = arith.constant 0 : index
    %509 = vector.load %arg8[%508, %c0_180, %c0_181] : memref<8x16x384xbf16, #tpu.memory_space<vmem>>, vector<1x16x384xbf16>
    %510 = vector.shape_cast %509 : vector<1x16x384xbf16> to vector<16x384xbf16>
    %511 = arith.extf %510 : vector<16x384xbf16> to vector<16x384xf32>
    %512 = arith.truncf %489 : vector<16x128xf32> to vector<16x128xbf16>
    %c1_182 = arith.constant 1 : index
    %c0_183 = arith.constant 0 : index
    %c0_184 = arith.constant 0 : index
    %513 = vector.load %arg3[%c1_182, %c0_183, %c0_184] : memref<2x128x384xbf16, #tpu.memory_space<vmem>>, vector<1x128x384xbf16>
    %514 = vector.shape_cast %513 : vector<1x128x384xbf16> to vector<128x384xbf16>
    %cst_185 = arith.constant dense<0.000000e+00> : vector<16x384xf32>
    %515 = tpu.matmul %512, %514, %cst_185 {dimension_numbers = #tpu.dot_dimension_numbers<[1], [0], [0], [1], [0, 0, 1, 1], [], []>} : vector<16x128xbf16>, vector<128x384xbf16>, vector<16x384xf32> -> vector<16x384xf32>
    %516 = arith.addf %511, %515 : vector<16x384xf32>
    %517 = vector.extract_strided_slice %507 {offsets = [0, 0], sizes = [16, 128], strides = [1, 1]} : vector<16x384xf32> to vector<16x128xf32>
    %518 = arith.negf %517 : vector<16x128xf32>
    %519 = math.exp %518 : vector<16x128xf32>
    %cst_186 = arith.constant 1.000000e+00 : f32
    %520 = vector.broadcast %cst_186 : f32 to vector<16x128xf32>
    %521 = arith.addf %520, %519 : vector<16x128xf32>
    %522 = arith.divf %520, %521 : vector<16x128xf32>
    %523 = vector.extract_strided_slice %507 {offsets = [0, 128], sizes = [16, 128], strides = [1, 1]} : vector<16x384xf32> to vector<16x128xf32>
    %524 = arith.negf %523 : vector<16x128xf32>
    %525 = math.exp %524 : vector<16x128xf32>
    %cst_187 = arith.constant 1.000000e+00 : f32
    %526 = vector.broadcast %cst_187 : f32 to vector<16x128xf32>
    %527 = arith.addf %526, %525 : vector<16x128xf32>
    %528 = arith.divf %526, %527 : vector<16x128xf32>
    %529 = vector.extract_strided_slice %507 {offsets = [0, 256], sizes = [16, 128], strides = [1, 1]} : vector<16x384xf32> to vector<16x128xf32>
    %530 = math.tanh %529 : vector<16x128xf32>
    %cst_188 = arith.constant 1.000000e+00 : f32
    %531 = vector.broadcast %cst_188 : f32 to vector<16x128xf32>
    %532 = arith.subf %531, %522 : vector<16x128xf32>
    %533 = arith.mulf %532, %466 : vector<16x128xf32>
    %534 = arith.mulf %522, %530 : vector<16x128xf32>
    %535 = arith.addf %533, %534 : vector<16x128xf32>
    %536 = math.tanh %535 : vector<16x128xf32>
    %537 = arith.mulf %528, %536 : vector<16x128xf32>
    %538 = vector.extract_strided_slice %516 {offsets = [0, 0], sizes = [16, 128], strides = [1, 1]} : vector<16x384xf32> to vector<16x128xf32>
    %539 = arith.negf %538 : vector<16x128xf32>
    %540 = math.exp %539 : vector<16x128xf32>
    %cst_189 = arith.constant 1.000000e+00 : f32
    %541 = vector.broadcast %cst_189 : f32 to vector<16x128xf32>
    %542 = arith.addf %541, %540 : vector<16x128xf32>
    %543 = arith.divf %541, %542 : vector<16x128xf32>
    %544 = vector.extract_strided_slice %516 {offsets = [0, 128], sizes = [16, 128], strides = [1, 1]} : vector<16x384xf32> to vector<16x128xf32>
    %545 = arith.negf %544 : vector<16x128xf32>
    %546 = math.exp %545 : vector<16x128xf32>
    %cst_190 = arith.constant 1.000000e+00 : f32
    %547 = vector.broadcast %cst_190 : f32 to vector<16x128xf32>
    %548 = arith.addf %547, %546 : vector<16x128xf32>
    %549 = arith.divf %547, %548 : vector<16x128xf32>
    %550 = vector.extract_strided_slice %516 {offsets = [0, 256], sizes = [16, 128], strides = [1, 1]} : vector<16x384xf32> to vector<16x128xf32>
    %551 = math.tanh %550 : vector<16x128xf32>
    %cst_191 = arith.constant 1.000000e+00 : f32
    %552 = vector.broadcast %cst_191 : f32 to vector<16x128xf32>
    %553 = arith.subf %552, %543 : vector<16x128xf32>
    %554 = arith.mulf %553, %487 : vector<16x128xf32>
    %555 = arith.mulf %543, %551 : vector<16x128xf32>
    %556 = arith.addf %554, %555 : vector<16x128xf32>
    %557 = math.tanh %556 : vector<16x128xf32>
    %558 = arith.mulf %549, %557 : vector<16x128xf32>
    %559 = arith.index_cast %c7_i32_172 : i32 to index
    %c0_192 = arith.constant 0 : index
    %c0_193 = arith.constant 0 : index
    %560 = vector.load %arg9[%559, %c0_192, %c0_193] : memref<8x16x128xf32, #tpu.memory_space<vmem>>, vector<1x16x128xf32>
    %561 = vector.shape_cast %560 : vector<1x16x128xf32> to vector<16x128xf32>
    %562 = vector.shape_cast %537 : vector<16x128xf32> to vector<1x16x128xf32>
    tpu.vector_store %arg9[%559, %c0_192, %c0_193], %562 {strides = array<i32>} : memref<8x16x128xf32, #tpu.memory_space<vmem>>, vector<1x16x128xf32>,
    %563 = arith.index_cast %498 : i32 to index
    %c0_194 = arith.constant 0 : index
    %c0_195 = arith.constant 0 : index
    %564 = vector.load %arg10[%563, %c0_194, %c0_195] : memref<8x16x128xf32, #tpu.memory_space<vmem>>, vector<1x16x128xf32>
    %565 = vector.shape_cast %564 : vector<1x16x128xf32> to vector<16x128xf32>
    %566 = vector.shape_cast %558 : vector<16x128xf32> to vector<1x16x128xf32>
    tpu.vector_store %arg10[%563, %c0_194, %c0_195], %566 {strides = array<i32>} : memref<8x16x128xf32, #tpu.memory_space<vmem>>, vector<1x16x128xf32>,
    %c8_i32 = arith.constant 8 : i32
    %c0_196 = arith.constant 0 : index
    %c0_197 = arith.constant 0 : index
    %c0_198 = arith.constant 0 : index
    %567 = vector.load %arg9[%c0_196, %c0_197, %c0_198] : memref<8x16x128xf32, #tpu.memory_space<vmem>>, vector<8x16x128xf32>
    %568 = vector.shape_cast %567 : vector<8x16x128xf32> to vector<128x128xf32>
    %569 = arith.truncf %568 : vector<128x128xf32> to vector<128x128xbf16>
    %c0_199 = arith.constant 0 : index
    %c0_200 = arith.constant 0 : index
    %c0_201 = arith.constant 0 : index
    %570 = vector.load %arg10[%c0_199, %c0_200, %c0_201] : memref<8x16x128xf32, #tpu.memory_space<vmem>>, vector<8x16x128xf32>
    %571 = vector.shape_cast %570 : vector<8x16x128xf32> to vector<128x128xf32>
    %572 = arith.truncf %571 : vector<128x128xf32> to vector<128x128xbf16>
    %c0_202 = arith.constant 0 : index
    %c0_203 = arith.constant 0 : index
    %c0_204 = arith.constant 0 : index
    %573 = vector.load %arg4[%c0_202, %c0_203, %c0_204] : memref<2x128x128xbf16, #tpu.memory_space<vmem>>, vector<1x128x128xbf16>
    %574 = vector.shape_cast %573 : vector<1x128x128xbf16> to vector<128x128xbf16>
    %cst_205 = arith.constant dense<0.000000e+00> : vector<128x128xf32>
    %575 = tpu.matmul %569, %574, %cst_205 {dimension_numbers = #tpu.dot_dimension_numbers<[1], [0], [0], [1], [0, 0, 1, 1], [], []>} : vector<128x128xbf16>, vector<128x128xbf16>, vector<128x128xf32> -> vector<128x128xf32>
    %c1_206 = arith.constant 1 : index
    %c0_207 = arith.constant 0 : index
    %c0_208 = arith.constant 0 : index
    %576 = vector.load %arg4[%c1_206, %c0_207, %c0_208] : memref<2x128x128xbf16, #tpu.memory_space<vmem>>, vector<1x128x128xbf16>
    %577 = vector.shape_cast %576 : vector<1x128x128xbf16> to vector<128x128xbf16>
    %cst_209 = arith.constant dense<0.000000e+00> : vector<128x128xf32>
    %578 = tpu.matmul %572, %577, %cst_209 {dimension_numbers = #tpu.dot_dimension_numbers<[1], [0], [0], [1], [0, 0, 1, 1], [], []>} : vector<128x128xbf16>, vector<128x128xbf16>, vector<128x128xf32> -> vector<128x128xf32>
    %579 = arith.addf %575, %578 : vector<128x128xf32>
    %c0_210 = arith.constant 0 : index
    %c0_211 = arith.constant 0 : index
    %580 = vector.load %arg5[%c0_210, %c0_211] : memref<1x128xf32, #tpu.memory_space<vmem>>, vector<1x128xf32>
    %581 = vector.broadcast %580 : vector<1x128xf32> to vector<128x128xf32>
    %582 = arith.addf %579, %581 : vector<128x128xf32>
    %583 = arith.truncf %582 : vector<128x128xf32> to vector<128x128xbf16>
    %584 = vector.shape_cast %583 : vector<128x128xbf16> to vector<8x16x128xbf16>
    %c0_212 = arith.constant 0 : index
    %c0_213 = arith.constant 0 : index
    %c0_214 = arith.constant 0 : index
    %585 = vector.load %arg6[%c0_212, %c0_213, %c0_214] : memref<8x16x128xbf16, #tpu.memory_space<vmem>>, vector<8x16x128xbf16>
    tpu.vector_store %arg6[%c0_212, %c0_213, %c0_214], %584 {strides = array<i32>} : memref<8x16x128xbf16, #tpu.memory_space<vmem>>, vector<8x16x128xbf16>,
    return
  }
}

</mosaic_0001>

<llo_original>
// kernel: lattice_forward.1
$region0: #{lattice_forward.1}
  #allocation0 [shape = 'u32[]', space=smem, size = 0x4, offset = 0x4, fixed_abs, tag = 'smem constant byte address 0x4 - core index']
  #allocation1 [shape = 'u32[144,128]{1,0:T(1,128)}', space=vmem, size = 0x12000, scoped, tag = 'internal scratch']
  #allocation2 [shape = 'bf16[8,16,384]{2,1,0:T(16,128)(2,1)}', space=vmem, size = 0x18000, scoped, tag = 'scratch operand']
  #allocation3 [shape = 'bf16[8,16,384]{2,1,0:T(16,128)(2,1)}', space=vmem, size = 0x18000, scoped, tag = 'scratch operand']
  #allocation4 [shape = 'f32[8,16,128]{2,1,0:T(8,128)}', space=vmem, size = 0x10000, scoped, tag = 'scratch operand']
  #allocation5 [shape = 'f32[8,16,128]{2,1,0:T(8,128)}', space=vmem, size = 0x10000, scoped, tag = 'scratch operand']
  %s0 = inlined_call_operand.vmem [shape: bf16[8,16,128], index: 0, kind: input, shape index: {}]
  %s1 = inlined_call_operand.vmem [shape: bf16[128,768], index: 1, kind: input, shape index: {}]
  %s2 = inlined_call_operand.vmem [shape: f32[1,768], index: 2, kind: input, shape index: {}]
  %s3 = inlined_call_operand.vmem [shape: bf16[2,128,384], index: 3, kind: input, shape index: {}]
  %s4 = inlined_call_operand.vmem [shape: bf16[2,128,128], index: 4, kind: input, shape index: {}]
  %s5 = inlined_call_operand.vmem [shape: f32[1,128], index: 5, kind: input, shape index: {}]
  %s6 = inlined_call_operand.vmem [shape: bf16[8,16,128], index: 6, kind: output, shape index: {}]
  %s7 = sld [smem:[#allocation0]]
  $region34: #{lattice_forward.1} parent=0
    _
  %s9 = ssub.s32 1, %s7
  %s10 = scalar_select 0, %s9, %s7
  // Predicated region
  $region2: #{lattice_forward.1} parent=0 // pred_check
    _
  $region3: #{lattice_forward.1} parent=0 // pred_check_branch
    %12 = sbr.rel (0) target = $region5
  $region4: #{lattice_forward.1} parent=0 // pred_region
    _
  $region5: #{lattice_forward.1} parent=0 // pred_fallthru
    _
  // Predicated region
  $region6: #{lattice_forward.1} parent=0 // pred_check
    _
  $region7: #{lattice_forward.1} parent=0 // pred_check_branch
    %14 = sbr.rel (0) target = $region9
  $region8: #{lattice_forward.1} parent=0 // pred_region
    _
  $region9: #{lattice_forward.1} parent=0 // pred_fallthru
    _
  // Predicated region
  $region10: #{lattice_forward.1} parent=0 // pred_check
    _
  $region11: #{lattice_forward.1} parent=0 // pred_check_branch
    %16 = sbr.rel (0) target = $region13
  $region12: #{lattice_forward.1} parent=0 // pred_region
    _
  $region13: #{lattice_forward.1} parent=0 // pred_fallthru
    _
  // Predicated region
  $region14: #{lattice_forward.1} parent=0 // pred_check
    _
  $region15: #{lattice_forward.1} parent=0 // pred_check_branch
    %18 = sbr.rel (0) target = $region17
  $region16: #{lattice_forward.1} parent=0 // pred_region
    _
  $region17: #{lattice_forward.1} parent=0 // pred_fallthru
    _
  // Predicated region
  $region18: #{lattice_forward.1} parent=0 // pred_check
    _
  $region19: #{lattice_forward.1} parent=0 // pred_check_branch
    %20 = sbr.rel (0) target = $region21
  $region20: #{lattice_forward.1} parent=0 // pred_region
    _
  $region21: #{lattice_forward.1} parent=0 // pred_fallthru
    _
  // Predicated region
  $region22: #{lattice_forward.1} parent=0 // pred_check
    _
  $region23: #{lattice_forward.1} parent=0 // pred_check_branch
    %22 = sbr.rel (0) target = $region25
  $region24: #{lattice_forward.1} parent=0 // pred_region
    _
  $region25: #{lattice_forward.1} parent=0 // pred_fallthru
    _
  %v24 = vld [vmem:[%s0] sm:$0xf]
  %v25 = vld [vmem:[%s0 + $0x4] sm:$0xf]
  %v26 = vld [vmem:[%s0 + $0x8] sm:$0xf]
  %v27 = vld [vmem:[%s0 + $0xc] sm:$0xf]
  %v28 = vld [vmem:[%s0 + $0x10] sm:$0xf]
  %v29 = vld [vmem:[%s0 + $0x14] sm:$0xf]
  %v30 = vld [vmem:[%s0 + $0x18] sm:$0xf]
  %v31 = vld [vmem:[%s0 + $0x1c] sm:$0xf]
  %v32 = vld [vmem:[%s0 + $0x20] sm:$0xf]
  %v33 = vld [vmem:[%s0 + $0x24] sm:$0xf]
  %v34 = vld [vmem:[%s0 + $0x28] sm:$0xf]
  %v35 = vld [vmem:[%s0 + $0x2c] sm:$0xf]
  %v36 = vld [vmem:[%s0 + $0x30] sm:$0xf]
  %v37 = vld [vmem:[%s0 + $0x34] sm:$0xf]
  %v38 = vld [vmem:[%s0 + $0x38] sm:$0xf]
  %v39 = vld [vmem:[%s0 + $0x3c] sm:$0xf]
  %v40 = vld [vmem:[%s1] sm:$0xff]
  %v41 = vld [vmem:[%s1 + $0x8] sm:$0xff]
  %v42 = vld [vmem:[%s1 + $0x10] sm:$0xff]
  %v43 = vld [vmem:[%s1 + $0x18] sm:$0xff]
  %v44 = vld [vmem:[%s1 + $0x20] sm:$0xff]
  %v45 = vld [vmem:[%s1 + $0x28] sm:$0xff]
  %v46 = vld [vmem:[%s1 + $0x30] sm:$0xff]
  %v47 = vld [vmem:[%s1 + $0x38] sm:$0xff]
  %v48 = vld [vmem:[%s1 + $0x40] sm:$0xff]
  %v49 = vld [vmem:[%s1 + $0x48] sm:$0xff]
  %v50 = vld [vmem:[%s1 + $0x50] sm:$0xff]
  %v51 = vld [vmem:[%s1 + $0x58] sm:$0xff]
  %v52 = vld [vmem:[%s1 + $0x60] sm:$0xff]
  %v53 = vld [vmem:[%s1 + $0x68] sm:$0xff]
  %v54 = vld [vmem:[%s1 + $0x70] sm:$0xff]
  %v55 = vld [vmem:[%s1 + $0x78] sm:$0xff]
  %v56 = vld [vmem:[%s1 + $0x80] sm:$0xff]
  %v57 = vld [vmem:[%s1 + $0x88] sm:$0xff]
  %v58 = vld [vmem:[%s1 + $0x90] sm:$0xff]
  %v59 = vld [vmem:[%s1 + $0x98] sm:$0xff]
  %v60 = vld [vmem:[%s1 + $0xa0] sm:$0xff]
  %v61 = vld [vmem:[%s1 + $0xa8] sm:$0xff]
  %v62 = vld [vmem:[%s1 + $0xb0] sm:$0xff]
  %v63 = vld [vmem:[%s1 + $0xb8] sm:$0xff]
  %v64 = vld [vmem:[%s1 + $0xc0] sm:$0xff]
  %v65 = vld [vmem:[%s1 + $0xc8] sm:$0xff]
  %v66 = vld [vmem:[%s1 + $0xd0] sm:$0xff]
  %v67 = vld [vmem:[%s1 + $0xd8] sm:$0xff]
  %v68 = vld [vmem:[%s1 + $0xe0] sm:$0xff]
  %v69 = vld [vmem:[%s1 + $0xe8] sm:$0xff]
  %v70 = vld [vmem:[%s1 + $0xf0] sm:$0xff]
  %v71 = vld [vmem:[%s1 + $0xf8] sm:$0xff]
  %v72 = vld [vmem:[%s1 + $0x100] sm:$0xff]
  %v73 = vld [vmem:[%s1 + $0x108] sm:$0xff]
  %v74 = vld [vmem:[%s1 + $0x110] sm:$0xff]
  %v75 = vld [vmem:[%s1 + $0x118] sm:$0xff]
  %v76 = vld [vmem:[%s1 + $0x120] sm:$0xff]
  %v77 = vld [vmem:[%s1 + $0x128] sm:$0xff]
  %v78 = vld [vmem:[%s1 + $0x130] sm:$0xff]
  %v79 = vld [vmem:[%s1 + $0x138] sm:$0xff]
  %v80 = vld [vmem:[%s1 + $0x140] sm:$0xff]
  %v81 = vld [vmem:[%s1 + $0x148] sm:$0xff]
  %v82 = vld [vmem:[%s1 + $0x150] sm:$0xff]
  %v83 = vld [vmem:[%s1 + $0x158] sm:$0xff]
  %v84 = vld [vmem:[%s1 + $0x160] sm:$0xff]
  %v85 = vld [vmem:[%s1 + $0x168] sm:$0xff]
  %v86 = vld [vmem:[%s1 + $0x170] sm:$0xff]
  %v87 = vld [vmem:[%s1 + $0x178] sm:$0xff]
  %v88 = vld [vmem:[%s2] sm:$0x3f]
  %v90 = vlaneseq
  %v91 = vshrl.u32 %v90, 7
  %v92 = vsub.s32 0, %v91
  %v93 = vrot.slane %v88, %v92
  %v94 = vlaneseq
  %v95 = vshrl.u32 %v94, 7
  %v96 = vsub.s32 1, %v95
  %v97 = vrot.slane %v88, %v96
  %v98 = vlaneseq
  %v99 = vshrl.u32 %v98, 7
  %v100 = vsub.s32 2, %v99
  %v101 = vrot.slane %v88, %v100
  %v102 = vlaneseq
  %v103 = vshrl.u32 %v102, 7
  %v104 = vsub.s32 3, %v103
  %v105 = vrot.slane %v88, %v104
  %v106 = vlaneseq
  %v107 = vshrl.u32 %v106, 7
  %v108 = vsub.s32 4, %v107
  %v109 = vrot.slane %v88, %v108
  %v110 = vlaneseq
  %v111 = vshrl.u32 %v110, 7
  %v112 = vsub.s32 5, %v111
  %v113 = vrot.slane %v88, %v112
  %v136 = vunpack.c.l.b16 %v24
  %v137 = vunpack.c.l.b16 %v25
  %v138 = vunpack.c.l.b16 %v26
  %v139 = vunpack.c.l.b16 %v27
  %v140 = vunpack.c.l.b16 %v28
  %v141 = vunpack.c.l.b16 %v29
  %v142 = vunpack.c.l.b16 %v30
  %v143 = vunpack.c.l.b16 %v31
  %v144 = vunpack.c.l.b16 %v32
  %v145 = vunpack.c.l.b16 %v33
  %v146 = vunpack.c.l.b16 %v34
  %v147 = vunpack.c.l.b16 %v35
  %v148 = vunpack.c.l.b16 %v36
  %v149 = vunpack.c.l.b16 %v37
  %v150 = vunpack.c.l.b16 %v38
  %v151 = vunpack.c.l.b16 %v39
  %v152 = vpack.c.b16 %v137, %v136
  %v153 = vpack.c.b16 %v139, %v138
  %v154 = vpack.c.b16 %v141, %v140
  %v155 = vpack.c.b16 %v143, %v142
  %v156 = vpack.c.b16 %v145, %v144
  %v157 = vpack.c.b16 %v147, %v146
  %v158 = vpack.c.b16 %v149, %v148
  %v159 = vpack.c.b16 %v151, %v150
  %v216 = vunpack.c.l.b16 %v40
  %v217 = vunpack.c.h.b16 %v40
  %v218 = vunpack.c.l.b16 %v41
  %v219 = vunpack.c.h.b16 %v41
  %v220 = vunpack.c.l.b16 %v42
  %v221 = vunpack.c.h.b16 %v42
  %v222 = vunpack.c.l.b16 %v43
  %v223 = vunpack.c.h.b16 %v43
  %v224 = vunpack.c.l.b16 %v44
  %v225 = vunpack.c.h.b16 %v44
  %v226 = vunpack.c.l.b16 %v45
  %v227 = vunpack.c.h.b16 %v45
  %v228 = vunpack.c.l.b16 %v46
  %v229 = vunpack.c.h.b16 %v46
  %v230 = vunpack.c.l.b16 %v47
  %v231 = vunpack.c.h.b16 %v47
  %v232 = vunpack.c.l.b16 %v48
  %v233 = vunpack.c.h.b16 %v48
  %v234 = vunpack.c.l.b16 %v49
  %v235 = vunpack.c.h.b16 %v49
  %v236 = vunpack.c.l.b16 %v50
  %v237 = vunpack.c.h.b16 %v50
  %v238 = vunpack.c.l.b16 %v51
  %v239 = vunpack.c.h.b16 %v51
  %v240 = vunpack.c.l.b16 %v52
  %v241 = vunpack.c.h.b16 %v52
  %v242 = vunpack.c.l.b16 %v53
  %v243 = vunpack.c.h.b16 %v53
  %v244 = vunpack.c.l.b16 %v54
  %v245 = vunpack.c.h.b16 %v54
  %v246 = vunpack.c.l.b16 %v55
  %v247 = vunpack.c.h.b16 %v55
  %v248 = vunpack.c.l.b16 %v56
  %v249 = vunpack.c.h.b16 %v56
  %v250 = vunpack.c.l.b16 %v57
  %v251 = vunpack.c.h.b16 %v57
  %v252 = vunpack.c.l.b16 %v58
  %v253 = vunpack.c.h.b16 %v58
  %v254 = vunpack.c.l.b16 %v59
  %v255 = vunpack.c.h.b16 %v59
  %v256 = vunpack.c.l.b16 %v60
  %v257 = vunpack.c.h.b16 %v60
  %v258 = vunpack.c.l.b16 %v61
  %v259 = vunpack.c.h.b16 %v61
  %v260 = vunpack.c.l.b16 %v62
  %v261 = vunpack.c.h.b16 %v62
  %v262 = vunpack.c.l.b16 %v63
  %v263 = vunpack.c.h.b16 %v63
  %v264 = vunpack.c.l.b16 %v64
  %v265 = vunpack.c.h.b16 %v64
  %v266 = vunpack.c.l.b16 %v65
  %v267 = vunpack.c.h.b16 %v65
  %v268 = vunpack.c.l.b16 %v66
  %v269 = vunpack.c.h.b16 %v66
  %v270 = vunpack.c.l.b16 %v67
  %v271 = vunpack.c.h.b16 %v67
  %v272 = vunpack.c.l.b16 %v68
  %v273 = vunpack.c.h.b16 %v68
  %v274 = vunpack.c.l.b16 %v69
  %v275 = vunpack.c.h.b16 %v69
  %v276 = vunpack.c.l.b16 %v70
  %v277 = vunpack.c.h.b16 %v70
  %v278 = vunpack.c.l.b16 %v71
  %v279 = vunpack.c.h.b16 %v71
  %v280 = vunpack.c.l.b16 %v72
  %v281 = vunpack.c.h.b16 %v72
  %v282 = vunpack.c.l.b16 %v73
  %v283 = vunpack.c.h.b16 %v73
  %v284 = vunpack.c.l.b16 %v74
  %v285 = vunpack.c.h.b16 %v74
  %v286 = vunpack.c.l.b16 %v75
  %v287 = vunpack.c.h.b16 %v75
  %v288 = vunpack.c.l.b16 %v76
  %v289 = vunpack.c.h.b16 %v76
  %v290 = vunpack.c.l.b16 %v77
  %v291 = vunpack.c.h.b16 %v77
  %v292 = vunpack.c.l.b16 %v78
  %v293 = vunpack.c.h.b16 %v78
  %v294 = vunpack.c.l.b16 %v79
  %v295 = vunpack.c.h.b16 %v79
  %v296 = vunpack.c.l.b16 %v80
  %v297 = vunpack.c.h.b16 %v80
  %v298 = vunpack.c.l.b16 %v81
  %v299 = vunpack.c.h.b16 %v81
  %v300 = vunpack.c.l.b16 %v82
  %v301 = vunpack.c.h.b16 %v82
  %v302 = vunpack.c.l.b16 %v83
  %v303 = vunpack.c.h.b16 %v83
  %v304 = vunpack.c.l.b16 %v84
  %v305 = vunpack.c.h.b16 %v84
  %v306 = vunpack.c.l.b16 %v85
  %v307 = vunpack.c.h.b16 %v85
  %v308 = vunpack.c.l.b16 %v86
  %v309 = vunpack.c.h.b16 %v86
  %v310 = vunpack.c.l.b16 %v87
  %v311 = vunpack.c.h.b16 %v87
  %v312 = vpack.c.b16 %v222, %v216
  %v313 = vpack.c.b16 %v223, %v217
  %v314 = vpack.c.b16 %v224, %v218
  %v315 = vpack.c.b16 %v225, %v219
  %v316 = vpack.c.b16 %v226, %v220
  %v317 = vpack.c.b16 %v227, %v221
  %v318 = vpack.c.b16 %v234, %v228
  %v319 = vpack.c.b16 %v235, %v229
  %v320 = vpack.c.b16 %v236, %v230
  %v321 = vpack.c.b16 %v237, %v231
  %v322 = vpack.c.b16 %v238, %v232
  %v323 = vpack.c.b16 %v239, %v233
  %v324 = vpack.c.b16 %v246, %v240
  %v325 = vpack.c.b16 %v247, %v241
  %v326 = vpack.c.b16 %v248, %v242
  %v327 = vpack.c.b16 %v249, %v243
  %v328 = vpack.c.b16 %v250, %v244
  %v329 = vpack.c.b16 %v251, %v245
  %v330 = vpack.c.b16 %v258, %v252
  %v331 = vpack.c.b16 %v259, %v253
  %v332 = vpack.c.b16 %v260, %v254
  %v333 = vpack.c.b16 %v261, %v255
  %v334 = vpack.c.b16 %v262, %v256
  %v335 = vpack.c.b16 %v263, %v257
  %v336 = vpack.c.b16 %v270, %v264
  %v337 = vpack.c.b16 %v271, %v265
  %v338 = vpack.c.b16 %v272, %v266
  %v339 = vpack.c.b16 %v273, %v267
  %v340 = vpack.c.b16 %v274, %v268
  %v341 = vpack.c.b16 %v275, %v269
  %v342 = vpack.c.b16 %v282, %v276
  %v343 = vpack.c.b16 %v283, %v277
  %v344 = vpack.c.b16 %v284, %v278
  %v345 = vpack.c.b16 %v285, %v279
  %v346 = vpack.c.b16 %v286, %v280
  %v347 = vpack.c.b16 %v287, %v281
  %v348 = vpack.c.b16 %v294, %v288
  %v349 = vpack.c.b16 %v295, %v289
  %v350 = vpack.c.b16 %v296, %v290
  %v351 = vpack.c.b16 %v297, %v291
  %v352 = vpack.c.b16 %v298, %v292
  %v353 = vpack.c.b16 %v299, %v293
  %v354 = vpack.c.b16 %v306, %v300
  %v355 = vpack.c.b16 %v307, %v301
  %v356 = vpack.c.b16 %v308, %v302
  %v357 = vpack.c.b16 %v309, %v303
  %v358 = vpack.c.b16 %v310, %v304
  %v359 = vpack.c.b16 %v311, %v305
  %408 = vmatprep.subr.bf16.mxu0 %v313
  %409 = vmatpush1.bf16.msra.mxu0 %v312
  %410 = vmatprep.subr.bf16.mxu0 %v319
  %411 = vmatpush1.bf16.msra.mxu0 %v318
  %412 = vmatprep.subr.bf16.mxu0 %v325
  %413 = vmatpush1.bf16.msra.mxu0 %v324
  %414 = vmatprep.subr.bf16.mxu0 %v331
  %415 = vmatpush1.bf16.msra.mxu0 %v330
  %416 = vmatprep.subr.bf16.mxu0 %v337
  %417 = vmatpush1.bf16.msra.mxu0 %v336
  %418 = vmatprep.subr.bf16.mxu0 %v343
  %419 = vmatpush1.bf16.msra.mxu0 %v342
  %420 = vmatprep.subr.bf16.mxu0 %v349
  %421 = vmatpush1.bf16.msra.mxu0 %v348
  %422 = vmatprep.subr.bf16.mxu0 %v355
  %423 = vmatpush1.bf16.msra.mxu0 %v354
  %424 = vmatprep.subr.bf16.mxu0 0
  %425 = vmatpush1.bf16.msra.mxu0 0
  %426 = vmatprep.subr.bf16.mxu0 0
  %427 = vmatpush1.bf16.msra.mxu0 0
  %428 = vmatprep.subr.bf16.mxu0 0
  %429 = vmatpush1.bf16.msra.mxu0 0
  %430 = vmatprep.subr.bf16.mxu0 0
  %431 = vmatpush1.bf16.msra.mxu0 0
  %432 = vmatprep.subr.bf16.mxu0 0
  %433 = vmatpush1.bf16.msra.mxu0 0
  %434 = vmatprep.subr.bf16.mxu0 0
  %435 = vmatpush1.bf16.msra.mxu0 0
  %436 = vmatprep.subr.bf16.mxu0 0
  %437 = vmatpush1.bf16.msra.mxu0 0
  %438 = vmatprep.subr.bf16.mxu0 0
  %439 = vmatpush1.bf16.msra.mxu0 0
  %440 = vmatprep.mubr.bf16.mxu0 0
  %441 = vmatmul.mubr.bf16.gmra.mrb[0].mxu0 %v152
  %v442 = vpop.f32.mrb[0].mxu0
  %v443 = vadd.f32 %v93, %v442
  %v444 = vpop.f32.mrb[0].mxu0
  %v445 = vadd.f32 %v97, %v444
  %v446 = vpop.f32.mrb[0].mxu0
  %v447 = vadd.f32 %v93, %v446
  %v448 = vpop.f32.mrb[0].mxu0
  %v449 = vadd.f32 %v97, %v448
  %450 = vmatprep.mubr.bf16.mxu0 0
  %451 = vmatmul.mubr.bf16.gmra.mrb[0].mxu0 %v153
  %v452 = vpop.f32.mrb[0].mxu0
  %v453 = vadd.f32 %v93, %v452
  %v454 = vpop.f32.mrb[0].mxu0
  %v455 = vadd.f32 %v97, %v454
  %v456 = vpop.f32.mrb[0].mxu0
  %v457 = vadd.f32 %v93, %v456
  %v458 = vpop.f32.mrb[0].mxu0
  %v459 = vadd.f32 %v97, %v458
  %460 = vmatprep.mubr.bf16.mxu0 0
  %461 = vmatmul.mubr.bf16.gmra.mrb[0].mxu0 %v154
  %v462 = vpop.f32.mrb[0].mxu0
  %v463 = vadd.f32 %v93, %v462
  %v464 = vpop.f32.mrb[0].mxu0
  %v465 = vadd.f32 %v97, %v464
  %v466 = vpop.f32.mrb[0].mxu0
  %v467 = vadd.f32 %v93, %v466
  %v468 = vpop.f32.mrb[0].mxu0
  %v469 = vadd.f32 %v97, %v468
  %470 = vmatprep.mubr.bf16.mxu0 0
  %471 = vmatmul.mubr.bf16.gmra.mrb[0].mxu0 %v155
  %v472 = vpop.f32.mrb[0].mxu0
  %v473 = vadd.f32 %v93, %v472
  %v474 = vpop.f32.mrb[0].mxu0
  %v475 = vadd.f32 %v97, %v474
  %v476 = vpop.f32.mrb[0].mxu0
  %v477 = vadd.f32 %v93, %v476
  %v478 = vpop.f32.mrb[0].mxu0
  %v479 = vadd.f32 %v97, %v478
  %480 = vmatprep.mubr.bf16.mxu0 0
  %481 = vmatmul.mubr.bf16.gmra.mrb[0].mxu0 %v156
  %v482 = vpop.f32.mrb[0].mxu0
  %v483 = vadd.f32 %v93, %v482
  %v484 = vpop.f32.mrb[0].mxu0
  %v485 = vadd.f32 %v97, %v484
  %v486 = vpop.f32.mrb[0].mxu0
  %v487 = vadd.f32 %v93, %v486
  %v488 = vpop.f32.mrb[0].mxu0
  %v489 = vadd.f32 %v97, %v488
  %490 = vmatprep.mubr.bf16.mxu0 0
  %491 = vmatmul.mubr.bf16.gmra.mrb[0].mxu0 %v157
  %v492 = vpop.f32.mrb[0].mxu0
  %v493 = vadd.f32 %v93, %v492
  %v494 = vpop.f32.mrb[0].mxu0
  %v495 = vadd.f32 %v97, %v494
  %v496 = vpop.f32.mrb[0].mxu0
  %v497 = vadd.f32 %v93, %v496
  %v498 = vpop.f32.mrb[0].mxu0
  %v499 = vadd.f32 %v97, %v498
  %500 = vmatprep.mubr.bf16.mxu0 0
  %501 = vmatmul.mubr.bf16.gmra.mrb[0].mxu0 %v158
  %v502 = vpop.f32.mrb[0].mxu0
  %v503 = vadd.f32 %v93, %v502
  %v504 = vpop.f32.mrb[0].mxu0
  %v505 = vadd.f32 %v97, %v504
  %v506 = vpop.f32.mrb[0].mxu0
  %v507 = vadd.f32 %v93, %v506
  %v508 = vpop.f32.mrb[0].mxu0
  %v509 = vadd.f32 %v97, %v508
  %510 = vmatprep.mubr.bf16.mxu0 0
  %511 = vmatmul.mubr.bf16.gmra.mrb[0].mxu0 %v159
  %v512 = vpop.f32.mrb[0].mxu0
  %v513 = vadd.f32 %v93, %v512
  %v514 = vpop.f32.mrb[0].mxu0
  %v515 = vadd.f32 %v97, %v514
  %v516 = vpop.f32.mrb[0].mxu0
  %v517 = vadd.f32 %v93, %v516
  %v518 = vpop.f32.mrb[0].mxu0
  %v519 = vadd.f32 %v97, %v518
  %520 = vdwg.mxu0
  %521 = vmatprep.subr.bf16.mxu0 %v315
  %522 = vmatpush1.bf16.msra.mxu0 %v314
  %523 = vmatprep.subr.bf16.mxu0 %v321
  %524 = vmatpush1.bf16.msra.mxu0 %v320
  %525 = vmatprep.subr.bf16.mxu0 %v327
  %526 = vmatpush1.bf16.msra.mxu0 %v326
  %527 = vmatprep.subr.bf16.mxu0 %v333
  %528 = vmatpush1.bf16.msra.mxu0 %v332
  %529 = vmatprep.subr.bf16.mxu0 %v339
  %530 = vmatpush1.bf16.msra.mxu0 %v338
  %531 = vmatprep.subr.bf16.mxu0 %v345
  %532 = vmatpush1.bf16.msra.mxu0 %v344
  %533 = vmatprep.subr.bf16.mxu0 %v351
  %534 = vmatpush1.bf16.msra.mxu0 %v350
  %535 = vmatprep.subr.bf16.mxu0 %v357
  %536 = vmatpush1.bf16.msra.mxu0 %v356
  %537 = vmatprep.subr.bf16.mxu0 0
  %538 = vmatpush1.bf16.msra.mxu0 0
  %539 = vmatprep.subr.bf16.mxu0 0
  %540 = vmatpush1.bf16.msra.mxu0 0
  %541 = vmatprep.subr.bf16.mxu0 0
  %542 = vmatpush1.bf16.msra.mxu0 0
  %543 = vmatprep.subr.bf16.mxu0 0
  %544 = vmatpush1.bf16.msra.mxu0 0
  %545 = vmatprep.subr.bf16.mxu0 0
  %546 = vmatpush1.bf16.msra.mxu0 0
  %547 = vmatprep.subr.bf16.mxu0 0
  %548 = vmatpush1.bf16.msra.mxu0 0
  %549 = vmatprep.subr.bf16.mxu0 0
  %550 = vmatpush1.bf16.msra.mxu0 0
  %551 = vmatprep.subr.bf16.mxu0 0
  %552 = vmatpush1.bf16.msra.mxu0 0
  %553 = vmatprep.mubr.bf16.mxu0 0
  %554 = vmatmul.mubr.bf16.gmra.mrb[0].mxu0 %v152
  %v555 = vpop.f32.mrb[0].mxu0
  %v556 = vadd.f32 %v101, %v555
  %v557 = vpop.f32.mrb[0].mxu0
  %v558 = vadd.f32 %v105, %v557
  %v559 = vpop.f32.mrb[0].mxu0
  %v560 = vadd.f32 %v101, %v559
  %v561 = vpop.f32.mrb[0].mxu0
  %v562 = vadd.f32 %v105, %v561
  %563 = vmatprep.mubr.bf16.mxu0 0
  %564 = vmatmul.mubr.bf16.gmra.mrb[0].mxu0 %v153
  %v565 = vpop.f32.mrb[0].mxu0
  %v566 = vadd.f32 %v101, %v565
  %v567 = vpop.f32.mrb[0].mxu0
  %v568 = vadd.f32 %v105, %v567
  %v569 = vpop.f32.mrb[0].mxu0
  %v570 = vadd.f32 %v101, %v569
  %v571 = vpop.f32.mrb[0].mxu0
  %v572 = vadd.f32 %v105, %v571
  %573 = vmatprep.mubr.bf16.mxu0 0
  %574 = vmatmul.mubr.bf16.gmra.mrb[0].mxu0 %v154
  %v575 = vpop.f32.mrb[0].mxu0
  %v576 = vadd.f32 %v101, %v575
  %v577 = vpop.f32.mrb[0].mxu0
  %v578 = vadd.f32 %v105, %v577
  %v579 = vpop.f32.mrb[0].mxu0
  %v580 = vadd.f32 %v101, %v579
  %v581 = vpop.f32.mrb[0].mxu0
  %v582 = vadd.f32 %v105, %v581
  %583 = vmatprep.mubr.bf16.mxu0 0
  %584 = vmatmul.mubr.bf16.gmra.mrb[0].mxu0 %v155
  %v585 = vpop.f32.mrb[0].mxu0
  %v586 = vadd.f32 %v101, %v585
  %v587 = vpop.f32.mrb[0].mxu0
  %v588 = vadd.f32 %v105, %v587
  %v589 = vpop.f32.mrb[0].mxu0
  %v590 = vadd.f32 %v101, %v589
  %v591 = vpop.f32.mrb[0].mxu0
  %v592 = vadd.f32 %v105, %v591
  %593 = vmatprep.mubr.bf16.mxu0 0
  %594 = vmatmul.mubr.bf16.gmra.mrb[0].mxu0 %v156
  %v595 = vpop.f32.mrb[0].mxu0
  %v596 = vadd.f32 %v101, %v595
  %v597 = vpop.f32.mrb[0].mxu0
  %v598 = vadd.f32 %v105, %v597
  %v599 = vpop.f32.mrb[0].mxu0
  %v600 = vadd.f32 %v101, %v599
  %v601 = vpop.f32.mrb[0].mxu0
  %v602 = vadd.f32 %v105, %v601
  %603 = vmatprep.mubr.bf16.mxu0 0
  %604 = vmatmul.mubr.bf16.gmra.mrb[0].mxu0 %v157
  %v605 = vpop.f32.mrb[0].mxu0
  %v606 = vadd.f32 %v101, %v605
  %v607 = vpop.f32.mrb[0].mxu0
  %v608 = vadd.f32 %v105, %v607
  %v609 = vpop.f32.mrb[0].mxu0
  %v610 = vadd.f32 %v101, %v609
  %v611 = vpop.f32.mrb[0].mxu0
  %v612 = vadd.f32 %v105, %v611
  %613 = vmatprep.mubr.bf16.mxu0 0
  %614 = vmatmul.mubr.bf16.gmra.mrb[0].mxu0 %v158
  %v615 = vpop.f32.mrb[0].mxu0
  %v616 = vadd.f32 %v101, %v615
  %v617 = vpop.f32.mrb[0].mxu0
  %v618 = vadd.f32 %v105, %v617
  %v619 = vpop.f32.mrb[0].mxu0
  %v620 = vadd.f32 %v101, %v619
  %v621 = vpop.f32.mrb[0].mxu0
  %v622 = vadd.f32 %v105, %v621
  %623 = vmatprep.mubr.bf16.mxu0 0
  %624 = vmatmul.mubr.bf16.gmra.mrb[0].mxu0 %v159
  %v625 = vpop.f32.mrb[0].mxu0
  %v626 = vadd.f32 %v101, %v625
  %v627 = vpop.f32.mrb[0].mxu0
  %v628 = vadd.f32 %v105, %v627
  %v629 = vpop.f32.mrb[0].mxu0
  %v630 = vadd.f32 %v101, %v629
  %v631 = vpop.f32.mrb[0].mxu0
  %v632 = vadd.f32 %v105, %v631
  %633 = vdwg.mxu0
  %634 = vmatprep.subr.bf16.mxu0 %v317
  %635 = vmatpush1.bf16.msra.mxu0 %v316
  %636 = vmatprep.subr.bf16.mxu0 %v323
  %637 = vmatpush1.bf16.msra.mxu0 %v322
  %638 = vmatprep.subr.bf16.mxu0 %v329
  %639 = vmatpush1.bf16.msra.mxu0 %v328
  %640 = vmatprep.subr.bf16.mxu0 %v335
  %641 = vmatpush1.bf16.msra.mxu0 %v334
  %642 = vmatprep.subr.bf16.mxu0 %v341
  %643 = vmatpush1.bf16.msra.mxu0 %v340
  %644 = vmatprep.subr.bf16.mxu0 %v347
  %645 = vmatpush1.bf16.msra.mxu0 %v346
  %646 = vmatprep.subr.bf16.mxu0 %v353
  %647 = vmatpush1.bf16.msra.mxu0 %v352
  %648 = vmatprep.subr.bf16.mxu0 %v359
  %649 = vmatpush1.bf16.msra.mxu0 %v358
  %650 = vmatprep.subr.bf16.mxu0 0
  %651 = vmatpush1.bf16.msra.mxu0 0
  %652 = vmatprep.subr.bf16.mxu0 0
  %653 = vmatpush1.bf16.msra.mxu0 0
  %654 = vmatprep.subr.bf16.mxu0 0
  %655 = vmatpush1.bf16.msra.mxu0 0
  %656 = vmatprep.subr.bf16.mxu0 0
  %657 = vmatpush1.bf16.msra.mxu0 0
  %658 = vmatprep.subr.bf16.mxu0 0
  %659 = vmatpush1.bf16.msra.mxu0 0
  %660 = vmatprep.subr.bf16.mxu0 0
  %661 = vmatpush1.bf16.msra.mxu0 0
  %662 = vmatprep.subr.bf16.mxu0 0
  %663 = vmatpush1.bf16.msra.mxu0 0
  %664 = vmatprep.subr.bf16.mxu0 0
  %665 = vmatpush1.bf16.msra.mxu0 0
  %666 = vmatprep.mubr.bf16.mxu0 0
  %667 = vmatmul.mubr.bf16.gmra.mrb[0].mxu0 %v152
  %v668 = vpop.f32.mrb[0].mxu0
  %v669 = vadd.f32 %v109, %v668
  %v670 = vpop.f32.mrb[0].mxu0
  %v671 = vadd.f32 %v113, %v670
  %v672 = vpop.f32.mrb[0].mxu0
  %v673 = vadd.f32 %v109, %v672
  %v674 = vpop.f32.mrb[0].mxu0
  %v675 = vadd.f32 %v113, %v674
  %676 = vmatprep.mubr.bf16.mxu0 0
  %677 = vmatmul.mubr.bf16.gmra.mrb[0].mxu0 %v153
  %v678 = vpop.f32.mrb[0].mxu0
  %v679 = vadd.f32 %v109, %v678
  %v680 = vpop.f32.mrb[0].mxu0
  %v681 = vadd.f32 %v113, %v680
  %v682 = vpop.f32.mrb[0].mxu0
  %v683 = vadd.f32 %v109, %v682
  %v684 = vpop.f32.mrb[0].mxu0
  %v685 = vadd.f32 %v113, %v684
  %686 = vmatprep.mubr.bf16.mxu0 0
  %687 = vmatmul.mubr.bf16.gmra.mrb[0].mxu0 %v154
  %v688 = vpop.f32.mrb[0].mxu0
  %v689 = vadd.f32 %v109, %v688
  %v690 = vpop.f32.mrb[0].mxu0
  %v691 = vadd.f32 %v113, %v690
  %v692 = vpop.f32.mrb[0].mxu0
  %v693 = vadd.f32 %v109, %v692
  %v694 = vpop.f32.mrb[0].mxu0
  %v695 = vadd.f32 %v113, %v694
  %696 = vmatprep.mubr.bf16.mxu0 0
  %697 = vmatmul.mubr.bf16.gmra.mrb[0].mxu0 %v155
  %v698 = vpop.f32.mrb[0].mxu0
  %v699 = vadd.f32 %v109, %v698
  %v700 = vpop.f32.mrb[0].mxu0
  %v701 = vadd.f32 %v113, %v700
  %v702 = vpop.f32.mrb[0].mxu0
  %v703 = vadd.f32 %v109, %v702
  %v704 = vpop.f32.mrb[0].mxu0
  %v705 = vadd.f32 %v113, %v704
  %706 = vmatprep.mubr.bf16.mxu0 0
  %707 = vmatmul.mubr.bf16.gmra.mrb[0].mxu0 %v156
  %v708 = vpop.f32.mrb[0].mxu0
  %v709 = vadd.f32 %v109, %v708
  %v710 = vpop.f32.mrb[0].mxu0
  %v711 = vadd.f32 %v113, %v710
  %v712 = vpop.f32.mrb[0].mxu0
  %v713 = vadd.f32 %v109, %v712
  %v714 = vpop.f32.mrb[0].mxu0
  %v715 = vadd.f32 %v113, %v714
  %716 = vmatprep.mubr.bf16.mxu0 0
  %717 = vmatmul.mubr.bf16.gmra.mrb[0].mxu0 %v157
  %v718 = vpop.f32.mrb[0].mxu0
  %v719 = vadd.f32 %v109, %v718
  %v720 = vpop.f32.mrb[0].mxu0
  %v721 = vadd.f32 %v113, %v720
  %v722 = vpop.f32.mrb[0].mxu0
  %v723 = vadd.f32 %v109, %v722
  %v724 = vpop.f32.mrb[0].mxu0
  %v725 = vadd.f32 %v113, %v724
  %726 = vmatprep.mubr.bf16.mxu0 0
  %727 = vmatmul.mubr.bf16.gmra.mrb[0].mxu0 %v158
  %v728 = vpop.f32.mrb[0].mxu0
  %v729 = vadd.f32 %v109, %v728
  %v730 = vpop.f32.mrb[0].mxu0
  %v731 = vadd.f32 %v113, %v730
  %v732 = vpop.f32.mrb[0].mxu0
  %v733 = vadd.f32 %v109, %v732
  %v734 = vpop.f32.mrb[0].mxu0
  %v735 = vadd.f32 %v113, %v734
  %736 = vmatprep.mubr.bf16.mxu0 0
  %737 = vmatmul.mubr.bf16.gmra.mrb[0].mxu0 %v159
  %v738 = vpop.f32.mrb[0].mxu0
  %v739 = vadd.f32 %v109, %v738
  %v740 = vpop.f32.mrb[0].mxu0
  %v741 = vadd.f32 %v113, %v740
  %v742 = vpop.f32.mrb[0].mxu0
  %v743 = vadd.f32 %v109, %v742
  %v744 = vpop.f32.mrb[0].mxu0
  %v745 = vadd.f32 %v113, %v744
  %746 = vdwg.mxu0
  %v747 = vpack.c.bf16 %v447, %v443
  %v748 = vpack.c.bf16 %v449, %v445
  %v749 = vpack.c.bf16 %v560, %v556
  %v750 = vpack.c.bf16 %v562, %v558
  %v751 = vpack.c.bf16 %v673, %v669
  %v752 = vpack.c.bf16 %v675, %v671
  %v753 = vpack.c.bf16 %v457, %v453
  %v754 = vpack.c.bf16 %v459, %v455
  %v755 = vpack.c.bf16 %v570, %v566
  %v756 = vpack.c.bf16 %v572, %v568
  %v757 = vpack.c.bf16 %v683, %v679
  %v758 = vpack.c.bf16 %v685, %v681
  %v759 = vpack.c.bf16 %v467, %v463
  %v760 = vpack.c.bf16 %v469, %v465
  %v761 = vpack.c.bf16 %v580, %v576
  %v762 = vpack.c.bf16 %v582, %v578
  %v763 = vpack.c.bf16 %v693, %v689
  %v764 = vpack.c.bf16 %v695, %v691
  %v765 = vpack.c.bf16 %v477, %v473
  %v766 = vpack.c.bf16 %v479, %v475
  %v767 = vpack.c.bf16 %v590, %v586
  %v768 = vpack.c.bf16 %v592, %v588
  %v769 = vpack.c.bf16 %v703, %v699
  %v770 = vpack.c.bf16 %v705, %v701
  %v771 = vpack.c.bf16 %v487, %v483
  %v772 = vpack.c.bf16 %v489, %v485
  %v773 = vpack.c.bf16 %v600, %v596
  %v774 = vpack.c.bf16 %v602, %v598
  %v775 = vpack.c.bf16 %v713, %v709
  %v776 = vpack.c.bf16 %v715, %v711
  %v777 = vpack.c.bf16 %v497, %v493
  %v778 = vpack.c.bf16 %v499, %v495
  %v779 = vpack.c.bf16 %v610, %v606
  %v780 = vpack.c.bf16 %v612, %v608
  %v781 = vpack.c.bf16 %v723, %v719
  %v782 = vpack.c.bf16 %v725, %v721
  %v783 = vpack.c.bf16 %v507, %v503
  %v784 = vpack.c.bf16 %v509, %v505
  %v785 = vpack.c.bf16 %v620, %v616
  %v786 = vpack.c.bf16 %v622, %v618
  %v787 = vpack.c.bf16 %v733, %v729
  %v788 = vpack.c.bf16 %v735, %v731
  %v789 = vpack.c.bf16 %v517, %v513
  %v790 = vpack.c.bf16 %v519, %v515
  %v791 = vpack.c.bf16 %v630, %v626
  %v792 = vpack.c.bf16 %v632, %v628
  %v793 = vpack.c.bf16 %v743, %v739
  %v794 = vpack.c.bf16 %v745, %v741
  %795 = vst [vmem:[#allocation2] sm:$0xff] %v747
  %796 = vst [vmem:[#allocation2 + $0x8] sm:$0xff] %v748
  %797 = vst [vmem:[#allocation2 + $0x10] sm:$0xff] %v749
  %798 = vst [vmem:[#allocation2 + $0x18] sm:$0xff] %v753
  %799 = vst [vmem:[#allocation2 + $0x20] sm:$0xff] %v754
  %800 = vst [vmem:[#allocation2 + $0x28] sm:$0xff] %v755
  %801 = vst [vmem:[#allocation2 + $0x30] sm:$0xff] %v759
  %802 = vst [vmem:[#allocation2 + $0x38] sm:$0xff] %v760
  %803 = vst [vmem:[#allocation2 + $0x40] sm:$0xff] %v761
  %804 = vst [vmem:[#allocation2 + $0x48] sm:$0xff] %v765
  %805 = vst [vmem:[#allocation2 + $0x50] sm:$0xff] %v766
  %806 = vst [vmem:[#allocation2 + $0x58] sm:$0xff] %v767
  %807 = vst [vmem:[#allocation2 + $0x60] sm:$0xff] %v771
  %808 = vst [vmem:[#allocation2 + $0x68] sm:$0xff] %v772
  %809 = vst [vmem:[#allocation2 + $0x70] sm:$0xff] %v773
  %810 = vst [vmem:[#allocation2 + $0x78] sm:$0xff] %v777
  %811 = vst [vmem:[#allocation2 + $0x80] sm:$0xff] %v778
  %812 = vst [vmem:[#allocation2 + $0x88] sm:$0xff] %v779
  %813 = vst [vmem:[#allocation2 + $0x90] sm:$0xff] %v783
  %814 = vst [vmem:[#allocation2 + $0x98] sm:$0xff] %v784
  %815 = vst [vmem:[#allocation2 + $0xa0] sm:$0xff] %v785
  %816 = vst [vmem:[#allocation2 + $0xa8] sm:$0xff] %v789
  %817 = vst [vmem:[#allocation2 + $0xb0] sm:$0xff] %v790
  %818 = vst [vmem:[#allocation2 + $0xb8] sm:$0xff] %v791
  %819 = vst [vmem:[#allocation3] sm:$0xff] %v750
  %820 = vst [vmem:[#allocation3 + $0x8] sm:$0xff] %v751
  %821 = vst [vmem:[#allocation3 + $0x10] sm:$0xff] %v752
  %822 = vst [vmem:[#allocation3 + $0x18] sm:$0xff] %v756
  %823 = vst [vmem:[#allocation3 + $0x20] sm:$0xff] %v757
  %824 = vst [vmem:[#allocation3 + $0x28] sm:$0xff] %v758
  %825 = vst [vmem:[#allocation3 + $0x30] sm:$0xff] %v762
  %826 = vst [vmem:[#allocation3 + $0x38] sm:$0xff] %v763
  %827 = vst [vmem:[#allocation3 + $0x40] sm:$0xff] %v764
  %828 = vst [vmem:[#allocation3 + $0x48] sm:$0xff] %v768
  %829 = vst [vmem:[#allocation3 + $0x50] sm:$0xff] %v769
  %830 = vst [vmem:[#allocation3 + $0x58] sm:$0xff] %v770
  %831 = vst [vmem:[#allocation3 + $0x60] sm:$0xff] %v774
  %832 = vst [vmem:[#allocation3 + $0x68] sm:$0xff] %v775
  %833 = vst [vmem:[#allocation3 + $0x70] sm:$0xff] %v776
  %834 = vst [vmem:[#allocation3 + $0x78] sm:$0xff] %v780
  %835 = vst [vmem:[#allocation3 + $0x80] sm:$0xff] %v781
  %836 = vst [vmem:[#allocation3 + $0x88] sm:$0xff] %v782
  %837 = vst [vmem:[#allocation3 + $0x90] sm:$0xff] %v786
  %838 = vst [vmem:[#allocation3 + $0x98] sm:$0xff] %v787
  %839 = vst [vmem:[#allocation3 + $0xa0] sm:$0xff] %v788
  %840 = vst [vmem:[#allocation3 + $0xa8] sm:$0xff] %v792
  %841 = vst [vmem:[#allocation3 + $0xb0] sm:$0xff] %v793
  %842 = vst [vmem:[#allocation3 + $0xb8] sm:$0xff] %v794
  %v843 = vld [vmem:[#allocation2] sm:$0xff]
  %v844 = vld [vmem:[#allocation2 + $0x8] sm:$0xff]
  %v845 = vld [vmem:[#allocation2 + $0x10] sm:$0xff]
  %v846 = vunpack.c.l.bf16 %v843
  %v847 = vunpack.c.l.bf16 %v844
  %v848 = vunpack.c.l.bf16 %v845
  %v849 = vunpack.c.h.bf16 %v843
  %v850 = vunpack.c.h.bf16 %v844
  %v851 = vunpack.c.h.bf16 %v845
  %v852 = vld [vmem:[%s3] sm:$0xff]
  %v853 = vld [vmem:[%s3 + $0x8] sm:$0xf]
  %v854 = vld [vmem:[%s3 + $0xc] sm:$0xff]
  %v855 = vld [vmem:[%s3 + $0x14] sm:$0xf]
  %v856 = vld [vmem:[%s3 + $0x18] sm:$0xff]
  %v857 = vld [vmem:[%s3 + $0x20] sm:$0xf]
  %v858 = vld [vmem:[%s3 + $0x24] sm:$0xff]
  %v859 = vld [vmem:[%s3 + $0x2c] sm:$0xf]
  %v860 = vld [vmem:[%s3 + $0x30] sm:$0xff]
  %v861 = vld [vmem:[%s3 + $0x38] sm:$0xf]
  %v862 = vld [vmem:[%s3 + $0x3c] sm:$0xff]
  %v863 = vld [vmem:[%s3 + $0x44] sm:$0xf]
  %v864 = vld [vmem:[%s3 + $0x48] sm:$0xff]
  %v865 = vld [vmem:[%s3 + $0x50] sm:$0xf]
  %v866 = vld [vmem:[%s3 + $0x54] sm:$0xff]
  %v867 = vld [vmem:[%s3 + $0x5c] sm:$0xf]
  %v868 = vld [vmem:[%s3 + $0x60] sm:$0xff]
  %v869 = vld [vmem:[%s3 + $0x68] sm:$0xf]
  %v870 = vld [vmem:[%s3 + $0x6c] sm:$0xff]
  %v871 = vld [vmem:[%s3 + $0x74] sm:$0xf]
  %v872 = vld [vmem:[%s3 + $0x78] sm:$0xff]
  %v873 = vld [vmem:[%s3 + $0x80] sm:$0xf]
  %v874 = vld [vmem:[%s3 + $0x84] sm:$0xff]
  %v875 = vld [vmem:[%s3 + $0x8c] sm:$0xf]
  %v876 = vld [vmem:[%s3 + $0x90] sm:$0xff]
  %v877 = vld [vmem:[%s3 + $0x98] sm:$0xf]
  %v878 = vld [vmem:[%s3 + $0x9c] sm:$0xff]
  %v879 = vld [vmem:[%s3 + $0xa4] sm:$0xf]
  %v880 = vld [vmem:[%s3 + $0xa8] sm:$0xff]
  %v881 = vld [vmem:[%s3 + $0xb0] sm:$0xf]
  %v882 = vld [vmem:[%s3 + $0xb4] sm:$0xff]
  %v883 = vld [vmem:[%s3 + $0xbc] sm:$0xf]
  %v916 = vunpack.c.l.b16 %v852
  %v917 = vunpack.c.h.b16 %v852
  %v918 = vunpack.c.l.b16 %v853
  %v919 = vunpack.c.l.b16 %v854
  %v920 = vunpack.c.h.b16 %v854
  %v921 = vunpack.c.l.b16 %v855
  %v922 = vunpack.c.l.b16 %v856
  %v923 = vunpack.c.h.b16 %v856
  %v924 = vunpack.c.l.b16 %v857
  %v925 = vunpack.c.l.b16 %v858
  %v926 = vunpack.c.h.b16 %v858
  %v927 = vunpack.c.l.b16 %v859
  %v928 = vunpack.c.l.b16 %v860
  %v929 = vunpack.c.h.b16 %v860
  %v930 = vunpack.c.l.b16 %v861
  %v931 = vunpack.c.l.b16 %v862
  %v932 = vunpack.c.h.b16 %v862
  %v933 = vunpack.c.l.b16 %v863
  %v934 = vunpack.c.l.b16 %v864
  %v935 = vunpack.c.h.b16 %v864
  %v936 = vunpack.c.l.b16 %v865
  %v937 = vunpack.c.l.b16 %v866
  %v938 = vunpack.c.h.b16 %v866
  %v939 = vunpack.c.l.b16 %v867
  %v940 = vunpack.c.l.b16 %v868
  %v941 = vunpack.c.h.b16 %v868
  %v942 = vunpack.c.l.b16 %v869
  %v943 = vunpack.c.l.b16 %v870
  %v944 = vunpack.c.h.b16 %v870
  %v945 = vunpack.c.l.b16 %v871
  %v946 = vunpack.c.l.b16 %v872
  %v947 = vunpack.c.h.b16 %v872
  %v948 = vunpack.c.l.b16 %v873
  %v949 = vunpack.c.l.b16 %v874
  %v950 = vunpack.c.h.b16 %v874
  %v951 = vunpack.c.l.b16 %v875
  %v952 = vunpack.c.l.b16 %v876
  %v953 = vunpack.c.h.b16 %v876
  %v954 = vunpack.c.l.b16 %v877
  %v955 = vunpack.c.l.b16 %v878
  %v956 = vunpack.c.h.b16 %v878
  %v957 = vunpack.c.l.b16 %v879
  %v958 = vunpack.c.l.b16 %v880
  %v959 = vunpack.c.h.b16 %v880
  %v960 = vunpack.c.l.b16 %v881
  %v961 = vunpack.c.l.b16 %v882
  %v962 = vunpack.c.h.b16 %v882
  %v963 = vunpack.c.l.b16 %v883
  %v964 = vpack.c.b16 %v919, %v916
  %v965 = vpack.c.b16 %v920, %v917
  %v966 = vpack.c.b16 %v921, %v918
  %v967 = vpack.c.b16 %v925, %v922
  %v968 = vpack.c.b16 %v926, %v923
  %v969 = vpack.c.b16 %v927, %v924
  %v970 = vpack.c.b16 %v931, %v928
  %v971 = vpack.c.b16 %v932, %v929
  %v972 = vpack.c.b16 %v933, %v930
  %v973 = vpack.c.b16 %v937, %v934
  %v974 = vpack.c.b16 %v938, %v935
  %v975 = vpack.c.b16 %v939, %v936
  %v976 = vpack.c.b16 %v943, %v940
  %v977 = vpack.c.b16 %v944, %v941
  %v978 = vpack.c.b16 %v945, %v942
  %v979 = vpack.c.b16 %v949, %v946
  %v980 = vpack.c.b16 %v950, %v947
  %v981 = vpack.c.b16 %v951, %v948
  %v982 = vpack.c.b16 %v955, %v952
  %v983 = vpack.c.b16 %v956, %v953
  %v984 = vpack.c.b16 %v957, %v954
  %v985 = vpack.c.b16 %v961, %v958
  %v986 = vpack.c.b16 %v962, %v959
  %v987 = vpack.c.b16 %v963, %v960
  %1012 = vmatprep.subr.bf16.mxu0 %v965
  %1013 = vmatpush1.bf16.msra.mxu0 %v964
  %1014 = vmatprep.subr.bf16.mxu0 %v968
  %1015 = vmatpush1.bf16.msra.mxu0 %v967
  %1016 = vmatprep.subr.bf16.mxu0 %v971
  %1017 = vmatpush1.bf16.msra.mxu0 %v970
  %1018 = vmatprep.subr.bf16.mxu0 %v974
  %1019 = vmatpush1.bf16.msra.mxu0 %v973
  %1020 = vmatprep.subr.bf16.mxu0 %v977
  %1021 = vmatpush1.bf16.msra.mxu0 %v976
  %1022 = vmatprep.subr.bf16.mxu0 %v980
  %1023 = vmatpush1.bf16.msra.mxu0 %v979
  %1024 = vmatprep.subr.bf16.mxu0 %v983
  %1025 = vmatpush1.bf16.msra.mxu0 %v982
  %1026 = vmatprep.subr.bf16.mxu0 %v986
  %1027 = vmatpush1.bf16.msra.mxu0 %v985
  %1028 = vmatprep.subr.bf16.mxu0 0
  %1029 = vmatpush1.bf16.msra.mxu0 0
  %1030 = vmatprep.subr.bf16.mxu0 0
  %1031 = vmatpush1.bf16.msra.mxu0 0
  %1032 = vmatprep.subr.bf16.mxu0 0
  %1033 = vmatpush1.bf16.msra.mxu0 0
  %1034 = vmatprep.subr.bf16.mxu0 0
  %1035 = vmatpush1.bf16.msra.mxu0 0
  %1036 = vmatprep.subr.bf16.mxu0 0
  %1037 = vmatpush1.bf16.msra.mxu0 0
  %1038 = vmatprep.subr.bf16.mxu0 0
  %1039 = vmatpush1.bf16.msra.mxu0 0
  %1040 = vmatprep.subr.bf16.mxu0 0
  %1041 = vmatpush1.bf16.msra.mxu0 0
  %1042 = vmatprep.subr.bf16.mxu0 0
  %1043 = vmatpush1.bf16.msra.mxu0 0
  %1044 = vmatprep.mubr.bf16.mxu0 0
  %1045 = vmatmul.mubr.bf16.gmra.mrb[0].mxu0 0
  %v1046 = vpop.f32.mrb[0].mxu0
  %v1047 = vadd.f32 0.0, %v1046
  %v1048 = vpop.f32.mrb[0].mxu0
  %v1049 = vadd.f32 0.0, %v1048
  %v1050 = vpop.f32.mrb[0].mxu0
  %v1051 = vadd.f32 0.0, %v1050
  %v1052 = vpop.f32.mrb[0].mxu0
  %v1053 = vadd.f32 0.0, %v1052
  %1054 = vdwg.mxu0
  %1055 = vmatprep.subr.bf16.mxu0 0
  %1056 = vmatpush1.bf16.msra.mxu0 %v966
  %1057 = vmatprep.subr.bf16.mxu0 0
  %1058 = vmatpush1.bf16.msra.mxu0 %v969
  %1059 = vmatprep.subr.bf16.mxu0 0
  %1060 = vmatpush1.bf16.msra.mxu0 %v972
  %1061 = vmatprep.subr.bf16.mxu0 0
  %1062 = vmatpush1.bf16.msra.mxu0 %v975
  %1063 = vmatprep.subr.bf16.mxu0 0
  %1064 = vmatpush1.bf16.msra.mxu0 %v978
  %1065 = vmatprep.subr.bf16.mxu0 0
  %1066 = vmatpush1.bf16.msra.mxu0 %v981
  %1067 = vmatprep.subr.bf16.mxu0 0
  %1068 = vmatpush1.bf16.msra.mxu0 %v984
  %1069 = vmatprep.subr.bf16.mxu0 0
  %1070 = vmatpush1.bf16.msra.mxu0 %v987
  %1071 = vmatprep.subr.bf16.mxu0 0
  %1072 = vmatpush1.bf16.msra.mxu0 0
  %1073 = vmatprep.subr.bf16.mxu0 0
  %1074 = vmatpush1.bf16.msra.mxu0 0
  %1075 = vmatprep.subr.bf16.mxu0 0
  %1076 = vmatpush1.bf16.msra.mxu0 0
  %1077 = vmatprep.subr.bf16.mxu0 0
  %1078 = vmatpush1.bf16.msra.mxu0 0
  %1079 = vmatprep.subr.bf16.mxu0 0
  %1080 = vmatpush1.bf16.msra.mxu0 0
  %1081 = vmatprep.subr.bf16.mxu0 0
  %1082 = vmatpush1.bf16.msra.mxu0 0
  %1083 = vmatprep.subr.bf16.mxu0 0
  %1084 = vmatpush1.bf16.msra.mxu0 0
  %1085 = vmatprep.subr.bf16.mxu0 0
  %1086 = vmatpush1.bf16.msra.mxu0 0
  %1087 = vmatprep.mubr.bf16.mxu0 0
  %1088 = vmatmul.mubr.bf16.gmra.mrb[0].mxu0 0
  %v1089 = vpop.f32.mrb[0].mxu0
  %v1090 = vadd.f32 0.0, %v1089
  %v1091 = vpop.f32.mrb[0].mxu0
  %v1092 = vpop.f32.mrb[0].mxu0
  %v1093 = vadd.f32 0.0, %v1092
  %v1094 = vpop.f32.mrb[0].mxu0
  %1095 = vdwg.mxu0
  %v1096 = vadd.f32 %v846, %v1047
  %v1097 = vadd.f32 %v847, %v1049
  %v1098 = vadd.f32 %v848, %v1090
  %v1099 = vadd.f32 %v849, %v1051
  %v1100 = vadd.f32 %v850, %v1053
  %v1101 = vadd.f32 %v851, %v1093
  %s1102 = scalar_lea.vmem [#allocation3], 168
  %v1103 = vld [vmem:[%s1102] sm:$0xff]
  %v1104 = vld [vmem:[%s1102 + $0x8] sm:$0xff]
  %v1105 = vld [vmem:[%s1102 + $0x10] sm:$0xff]
  %v1106 = vunpack.c.l.bf16 %v1103
  %v1107 = vunpack.c.l.bf16 %v1104
  %v1108 = vunpack.c.l.bf16 %v1105
  %v1109 = vunpack.c.h.bf16 %v1103
  %v1110 = vunpack.c.h.bf16 %v1104
  %v1111 = vunpack.c.h.bf16 %v1105
  %s1112 = scalar_lea.vmem %s3, 192
  %v1113 = vld [vmem:[%s1112] sm:$0xff]
  %v1114 = vld [vmem:[%s1112 + $0x8] sm:$0xf]
  %v1115 = vld [vmem:[%s1112 + $0xc] sm:$0xff]
  %v1116 = vld [vmem:[%s1112 + $0x14] sm:$0xf]
  %v1117 = vld [vmem:[%s1112 + $0x18] sm:$0xff]
  %v1118 = vld [vmem:[%s1112 + $0x20] sm:$0xf]
  %v1119 = vld [vmem:[%s1112 + $0x24] sm:$0xff]
  %v1120 = vld [vmem:[%s1112 + $0x2c] sm:$0xf]
  %v1121 = vld [vmem:[%s1112 + $0x30] sm:$0xff]
  %v1122 = vld [vmem:[%s1112 + $0x38] sm:$0xf]
  %v1123 = vld [vmem:[%s1112 + $0x3c] sm:$0xff]
  %v1124 = vld [vmem:[%s1112 + $0x44] sm:$0xf]
  %v1125 = vld [vmem:[%s1112 + $0x48] sm:$0xff]
  %v1126 = vld [vmem:[%s1112 + $0x50] sm:$0xf]
  %v1127 = vld [vmem:[%s1112 + $0x54] sm:$0xff]
  %v1128 = vld [vmem:[%s1112 + $0x5c] sm:$0xf]
  %v1129 = vld [vmem:[%s1112 + $0x60] sm:$0xff]
  %v1130 = vld [vmem:[%s1112 + $0x68] sm:$0xf]
  %v1131 = vld [vmem:[%s1112 + $0x6c] sm:$0xff]
  %v1132 = vld [vmem:[%s1112 + $0x74] sm:$0xf]
  %v1133 = vld [vmem:[%s1112 + $0x78] sm:$0xff]
  %v1134 = vld [vmem:[%s1112 + $0x80] sm:$0xf]
  %v1135 = vld [vmem:[%s1112 + $0x84] sm:$0xff]
  %v1136 = vld [vmem:[%s1112 + $0x8c] sm:$0xf]
  %v1137 = vld [vmem:[%s1112 + $0x90] sm:$0xff]
  %v1138 = vld [vmem:[%s1112 + $0x98] sm:$0xf]
  %v1139 = vld [vmem:[%s1112 + $0x9c] sm:$0xff]
  %v1140 = vld [vmem:[%s1112 + $0xa4] sm:$0xf]
  %v1141 = vld [vmem:[%s1112 + $0xa8] sm:$0xff]
  %v1142 = vld [vmem:[%s1112 + $0xb0] sm:$0xf]
  %v1143 = vld [vmem:[%s1112 + $0xb4] sm:$0xff]
  %v1144 = vld [vmem:[%s1112 + $0xbc] sm:$0xf]
  %v1177 = vunpack.c.l.b16 %v1113
  %v1178 = vunpack.c.h.b16 %v1113
  %v1179 = vunpack.c.l.b16 %v1114
  %v1180 = vunpack.c.l.b16 %v1115
  %v1181 = vunpack.c.h.b16 %v1115
  %v1182 = vunpack.c.l.b16 %v1116
  %v1183 = vunpack.c.l.b16 %v1117
  %v1184 = vunpack.c.h.b16 %v1117
  %v1185 = vunpack.c.l.b16 %v1118
  %v1186 = vunpack.c.l.b16 %v1119
  %v1187 = vunpack.c.h.b16 %v1119
  %v1188 = vunpack.c.l.b16 %v1120
  %v1189 = vunpack.c.l.b16 %v1121
  %v1190 = vunpack.c.h.b16 %v1121
  %v1191 = vunpack.c.l.b16 %v1122
  %v1192 = vunpack.c.l.b16 %v1123
  %v1193 = vunpack.c.h.b16 %v1123
  %v1194 = vunpack.c.l.b16 %v1124
  %v1195 = vunpack.c.l.b16 %v1125
  %v1196 = vunpack.c.h.b16 %v1125
  %v1197 = vunpack.c.l.b16 %v1126
  %v1198 = vunpack.c.l.b16 %v1127
  %v1199 = vunpack.c.h.b16 %v1127
  %v1200 = vunpack.c.l.b16 %v1128
  %v1201 = vunpack.c.l.b16 %v1129
  %v1202 = vunpack.c.h.b16 %v1129
  %v1203 = vunpack.c.l.b16 %v1130
  %v1204 = vunpack.c.l.b16 %v1131
  %v1205 = vunpack.c.h.b16 %v1131
  %v1206 = vunpack.c.l.b16 %v1132
  %v1207 = vunpack.c.l.b16 %v1133
  %v1208 = vunpack.c.h.b16 %v1133
  %v1209 = vunpack.c.l.b16 %v1134
  %v1210 = vunpack.c.l.b16 %v1135
  %v1211 = vunpack.c.h.b16 %v1135
  %v1212 = vunpack.c.l.b16 %v1136
  %v1213 = vunpack.c.l.b16 %v1137
  %v1214 = vunpack.c.h.b16 %v1137
  %v1215 = vunpack.c.l.b16 %v1138
  %v1216 = vunpack.c.l.b16 %v1139
  %v1217 = vunpack.c.h.b16 %v1139
  %v1218 = vunpack.c.l.b16 %v1140
  %v1219 = vunpack.c.l.b16 %v1141
  %v1220 = vunpack.c.h.b16 %v1141
  %v1221 = vunpack.c.l.b16 %v1142
  %v1222 = vunpack.c.l.b16 %v1143
  %v1223 = vunpack.c.h.b16 %v1143
  %v1224 = vunpack.c.l.b16 %v1144
  %v1225 = vpack.c.b16 %v1180, %v1177
  %v1226 = vpack.c.b16 %v1181, %v1178
  %v1227 = vpack.c.b16 %v1182, %v1179
  %v1228 = vpack.c.b16 %v1186, %v1183
  %v1229 = vpack.c.b16 %v1187, %v1184
  %v1230 = vpack.c.b16 %v1188, %v1185
  %v1231 = vpack.c.b16 %v1192, %v1189
  %v1232 = vpack.c.b16 %v1193, %v1190
  %v1233 = vpack.c.b16 %v1194, %v1191
  %v1234 = vpack.c.b16 %v1198, %v1195
  %v1235 = vpack.c.b16 %v1199, %v1196
  %v1236 = vpack.c.b16 %v1200, %v1197
  %v1237 = vpack.c.b16 %v1204, %v1201
  %v1238 = vpack.c.b16 %v1205, %v1202
  %v1239 = vpack.c.b16 %v1206, %v1203
  %v1240 = vpack.c.b16 %v1210, %v1207
  %v1241 = vpack.c.b16 %v1211, %v1208
  %v1242 = vpack.c.b16 %v1212, %v1209
  %v1243 = vpack.c.b16 %v1216, %v1213
  %v1244 = vpack.c.b16 %v1217, %v1214
  %v1245 = vpack.c.b16 %v1218, %v1215
  %v1246 = vpack.c.b16 %v1222, %v1219
  %v1247 = vpack.c.b16 %v1223, %v1220
  %v1248 = vpack.c.b16 %v1224, %v1221
  %1273 = vmatprep.subr.bf16.mxu0 %v1226
  %1274 = vmatpush1.bf16.msra.mxu0 %v1225
  %1275 = vmatprep.subr.bf16.mxu0 %v1229
  %1276 = vmatpush1.bf16.msra.mxu0 %v1228
  %1277 = vmatprep.subr.bf16.mxu0 %v1232
  %1278 = vmatpush1.bf16.msra.mxu0 %v1231
  %1279 = vmatprep.subr.bf16.mxu0 %v1235
  %1280 = vmatpush1.bf16.msra.mxu0 %v1234
  %1281 = vmatprep.subr.bf16.mxu0 %v1238
  %1282 = vmatpush1.bf16.msra.mxu0 %v1237
  %1283 = vmatprep.subr.bf16.mxu0 %v1241
  %1284 = vmatpush1.bf16.msra.mxu0 %v1240
  %1285 = vmatprep.subr.bf16.mxu0 %v1244
  %1286 = vmatpush1.bf16.msra.mxu0 %v1243
  %1287 = vmatprep.subr.bf16.mxu0 %v1247
  %1288 = vmatpush1.bf16.msra.mxu0 %v1246
  %1289 = vmatprep.subr.bf16.mxu0 0
  %1290 = vmatpush1.bf16.msra.mxu0 0
  %1291 = vmatprep.subr.bf16.mxu0 0
  %1292 = vmatpush1.bf16.msra.mxu0 0
  %1293 = vmatprep.subr.bf16.mxu0 0
  %1294 = vmatpush1.bf16.msra.mxu0 0
  %1295 = vmatprep.subr.bf16.mxu0 0
  %1296 = vmatpush1.bf16.msra.mxu0 0
  %1297 = vmatprep.subr.bf16.mxu0 0
  %1298 = vmatpush1.bf16.msra.mxu0 0
  %1299 = vmatprep.subr.bf16.mxu0 0
  %1300 = vmatpush1.bf16.msra.mxu0 0
  %1301 = vmatprep.subr.bf16.mxu0 0
  %1302 = vmatpush1.bf16.msra.mxu0 0
  %1303 = vmatprep.subr.bf16.mxu0 0
  %1304 = vmatpush1.bf16.msra.mxu0 0
  %1305 = vmatprep.mubr.bf16.mxu0 0
  %1306 = vmatmul.mubr.bf16.gmra.mrb[0].mxu0 0
  %v1307 = vpop.f32.mrb[0].mxu0
  %v1308 = vadd.f32 0.0, %v1307
  %v1309 = vpop.f32.mrb[0].mxu0
  %v1310 = vadd.f32 0.0, %v1309
  %v1311 = vpop.f32.mrb[0].mxu0
  %v1312 = vadd.f32 0.0, %v1311
  %v1313 = vpop.f32.mrb[0].mxu0
  %v1314 = vadd.f32 0.0, %v1313
  %1315 = vdwg.mxu0
  %1316 = vmatprep.subr.bf16.mxu0 0
  %1317 = vmatpush1.bf16.msra.mxu0 %v1227
  %1318 = vmatprep.subr.bf16.mxu0 0
  %1319 = vmatpush1.bf16.msra.mxu0 %v1230
  %1320 = vmatprep.subr.bf16.mxu0 0
  %1321 = vmatpush1.bf16.msra.mxu0 %v1233
  %1322 = vmatprep.subr.bf16.mxu0 0
  %1323 = vmatpush1.bf16.msra.mxu0 %v1236
  %1324 = vmatprep.subr.bf16.mxu0 0
  %1325 = vmatpush1.bf16.msra.mxu0 %v1239
  %1326 = vmatprep.subr.bf16.mxu0 0
  %1327 = vmatpush1.bf16.msra.mxu0 %v1242
  %1328 = vmatprep.subr.bf16.mxu0 0
  %1329 = vmatpush1.bf16.msra.mxu0 %v1245
  %1330 = vmatprep.subr.bf16.mxu0 0
  %1331 = vmatpush1.bf16.msra.mxu0 %v1248
  %1332 = vmatprep.subr.bf16.mxu0 0
  %1333 = vmatpush1.bf16.msra.mxu0 0
  %1334 = vmatprep.subr.bf16.mxu0 0
  %1335 = vmatpush1.bf16.msra.mxu0 0
  %1336 = vmatprep.subr.bf16.mxu0 0
  %1337 = vmatpush1.bf16.msra.mxu0 0
  %1338 = vmatprep.subr.bf16.mxu0 0
  %1339 = vmatpush1.bf16.msra.mxu0 0
  %1340 = vmatprep.subr.bf16.mxu0 0
  %1341 = vmatpush1.bf16.msra.mxu0 0
  %1342 = vmatprep.subr.bf16.mxu0 0
  %1343 = vmatpush1.bf16.msra.mxu0 0
  %1344 = vmatprep.subr.bf16.mxu0 0
  %1345 = vmatpush1.bf16.msra.mxu0 0
  %1346 = vmatprep.subr.bf16.mxu0 0
  %1347 = vmatpush1.bf16.msra.mxu0 0
  %1348 = vmatprep.mubr.bf16.mxu0 0
  %1349 = vmatmul.mubr.bf16.gmra.mrb[0].mxu0 0
  %v1350 = vpop.f32.mrb[0].mxu0
  %v1351 = vadd.f32 0.0, %v1350
  %v1352 = vpop.f32.mrb[0].mxu0
  %v1353 = vpop.f32.mrb[0].mxu0
  %v1354 = vadd.f32 0.0, %v1353
  %v1355 = vpop.f32.mrb[0].mxu0
  %1356 = vdwg.mxu0
  %v1357 = vadd.f32 %v1106, %v1308
  %v1358 = vadd.f32 %v1107, %v1310
  %v1359 = vadd.f32 %v1108, %v1351
  %v1360 = vadd.f32 %v1109, %v1312
  %v1361 = vadd.f32 %v1110, %v1314
  %v1362 = vadd.f32 %v1111, %v1354
  %v1363 = vxor.u32 %v1096, 2147483648
  %v1364 = vxor.u32 %v1099, 2147483648
  %v1365 = vmul.f32 %v1363, 1.442695
  %v1366 = vpow.pop %v1365
  %v1367 = vmul.f32 %v1364, 1.442695
  %v1368 = vpow.pop %v1367
  %v1369 = vadd.f32 %v1366, 1.0
  %v1370 = vadd.f32 %v1368, 1.0
  %v1371 = vrcp.pop %v1369
  %v1372 = vmul.f32 1.0, %v1371
  %v1373 = vrcp.pop %v1370
  %v1374 = vmul.f32 1.0, %v1373
  %v1375 = vxor.u32 %v1097, 2147483648
  %v1376 = vxor.u32 %v1100, 2147483648
  %v1377 = vmul.f32 %v1375, 1.442695
  %v1378 = vpow.pop %v1377
  %v1379 = vmul.f32 %v1376, 1.442695
  %v1380 = vpow.pop %v1379
  %v1381 = vadd.f32 %v1378, 1.0
  %v1382 = vadd.f32 %v1380, 1.0
  %v1383 = vrcp.pop %v1381
  %v1384 = vmul.f32 1.0, %v1383
  %v1385 = vrcp.pop %v1382
  %v1386 = vmul.f32 1.0, %v1385
  %v1387 = vtanh.pop %v1098
  %v1388 = vtanh.pop %v1101
  %v1389 = vsub.f32 1.0, %v1372
  %v1390 = vsub.f32 1.0, %v1374
  %v1391 = vmul.f32 %v1389, 0.0
  %v1392 = vmul.f32 %v1390, 0.0
  %v1393 = vmul.f32 %v1372, %v1387
  %v1394 = vmul.f32 %v1374, %v1388
  %v1395 = vadd.f32 %v1391, %v1393
  %v1396 = vadd.f32 %v1392, %v1394
  %v1397 = vtanh.pop %v1395
  %v1398 = vtanh.pop %v1396
  %v1399 = vmul.f32 %v1384, %v1397
  %v1400 = vmul.f32 %v1386, %v1398
  %v1401 = vxor.u32 %v1357, 2147483648
  %v1402 = vxor.u32 %v1360, 2147483648
  %v1403 = vmul.f32 %v1401, 1.442695
  %v1404 = vpow.pop %v1403
  %v1405 = vmul.f32 %v1402, 1.442695
  %v1406 = vpow.pop %v1405
  %v1407 = vadd.f32 %v1404, 1.0
  %v1408 = vadd.f32 %v1406, 1.0
  %v1409 = vrcp.pop %v1407
  %v1410 = vmul.f32 1.0, %v1409
  %v1411 = vrcp.pop %v1408
  %v1412 = vmul.f32 1.0, %v1411
  %v1413 = vxor.u32 %v1358, 2147483648
  %v1414 = vxor.u32 %v1361, 2147483648
  %v1415 = vmul.f32 %v1413, 1.442695
  %v1416 = vpow.pop %v1415
  %v1417 = vmul.f32 %v1414, 1.442695
  %v1418 = vpow.pop %v1417
  %v1419 = vadd.f32 %v1416, 1.0
  %v1420 = vadd.f32 %v1418, 1.0
  %v1421 = vrcp.pop %v1419
  %v1422 = vmul.f32 1.0, %v1421
  %v1423 = vrcp.pop %v1420
  %v1424 = vmul.f32 1.0, %v1423
  %v1425 = vtanh.pop %v1359
  %v1426 = vtanh.pop %v1362
  %v1427 = vsub.f32 1.0, %v1410
  %v1428 = vsub.f32 1.0, %v1412
  %v1429 = vmul.f32 %v1427, 0.0
  %v1430 = vmul.f32 %v1428, 0.0
  %v1431 = vmul.f32 %v1410, %v1425
  %v1432 = vmul.f32 %v1412, %v1426
  %v1433 = vadd.f32 %v1429, %v1431
  %v1434 = vadd.f32 %v1430, %v1432
  %v1435 = vtanh.pop %v1433
  %v1436 = vtanh.pop %v1434
  %v1437 = vmul.f32 %v1422, %v1435
  %v1438 = vmul.f32 %v1424, %v1436
  %1439 = vst [vmem:[#allocation4] sm:$0xff] %v1399
  %1440 = vst [vmem:[#allocation4 + $0x8] sm:$0xff] %v1400
  %s1441 = scalar_lea.vmem [#allocation5], 112
  %1442 = vst [vmem:[%s1441] sm:$0xff] %v1437
  %1443 = vst [vmem:[%s1441 + $0x8] sm:$0xff] %v1438
  %s1444 = scalar_lea.vmem [#allocation2], 24
  %v1445 = vld [vmem:[%s1444] sm:$0xff]
  %v1446 = vld [vmem:[%s1444 + $0x8] sm:$0xff]
  %v1447 = vld [vmem:[%s1444 + $0x10] sm:$0xff]
  %v1448 = vunpack.c.l.bf16 %v1445
  %v1449 = vunpack.c.l.bf16 %v1446
  %v1450 = vunpack.c.l.bf16 %v1447
  %v1451 = vunpack.c.h.bf16 %v1445
  %v1452 = vunpack.c.h.bf16 %v1446
  %v1453 = vunpack.c.h.bf16 %v1447
  %v1454 = vpack.c.bf16 %v1400, %v1399
  %v1455 = vld [vmem:[%s3] sm:$0xff]
  %v1456 = vld [vmem:[%s3 + $0x8] sm:$0xf]
  %v1457 = vld [vmem:[%s3 + $0xc] sm:$0xff]
  %v1458 = vld [vmem:[%s3 + $0x14] sm:$0xf]
  %v1459 = vld [vmem:[%s3 + $0x18] sm:$0xff]
  %v1460 = vld [vmem:[%s3 + $0x20] sm:$0xf]
  %v1461 = vld [vmem:[%s3 + $0x24] sm:$0xff]
  %v1462 = vld [vmem:[%s3 + $0x2c] sm:$0xf]
  %v1463 = vld [vmem:[%s3 + $0x30] sm:$0xff]
  %v1464 = vld [vmem:[%s3 + $0x38] sm:$0xf]
  %v1465 = vld [vmem:[%s3 + $0x3c] sm:$0xff]
  %v1466 = vld [vmem:[%s3 + $0x44] sm:$0xf]
  %v1467 = vld [vmem:[%s3 + $0x48] sm:$0xff]
  %v1468 = vld [vmem:[%s3 + $0x50] sm:$0xf]
  %v1469 = vld [vmem:[%s3 + $0x54] sm:$0xff]
  %v1470 = vld [vmem:[%s3 + $0x5c] sm:$0xf]
  %v1471 = vld [vmem:[%s3 + $0x60] sm:$0xff]
  %v1472 = vld [vmem:[%s3 + $0x68] sm:$0xf]
  %v1473 = vld [vmem:[%s3 + $0x6c] sm:$0xff]
  %v1474 = vld [vmem:[%s3 + $0x74] sm:$0xf]
  %v1475 = vld [vmem:[%s3 + $0x78] sm:$0xff]
  %v1476 = vld [vmem:[%s3 + $0x80] sm:$0xf]
  %v1477 = vld [vmem:[%s3 + $0x84] sm:$0xff]
  %v1478 = vld [vmem:[%s3 + $0x8c] sm:$0xf]
  %v1479 = vld [vmem:[%s3 + $0x90] sm:$0xff]
  %v1480 = vld [vmem:[%s3 + $0x98] sm:$0xf]
  %v1481 = vld [vmem:[%s3 + $0x9c] sm:$0xff]
  %v1482 = vld [vmem:[%s3 + $0xa4] sm:$0xf]
  %v1483 = vld [vmem:[%s3 + $0xa8] sm:$0xff]
  %v1484 = vld [vmem:[%s3 + $0xb0] sm:$0xf]
  %v1485 = vld [vmem:[%s3 + $0xb4] sm:$0xff]
  %v1486 = vld [vmem:[%s3 + $0xbc] sm:$0xf]
  %v1519 = vunpack.c.l.b16 %v1455
  %v1520 = vunpack.c.h.b16 %v1455
  %v1521 = vunpack.c.l.b16 %v1456
  %v1522 = vunpack.c.l.b16 %v1457
  %v1523 = vunpack.c.h.b16 %v1457
  %v1524 = vunpack.c.l.b16 %v1458
  %v1525 = vunpack.c.l.b16 %v1459
  %v1526 = vunpack.c.h.b16 %v1459
  %v1527 = vunpack.c.l.b16 %v1460
  %v1528 = vunpack.c.l.b16 %v1461
  %v1529 = vunpack.c.h.b16 %v1461
  %v1530 = vunpack.c.l.b16 %v1462
  %v1531 = vunpack.c.l.b16 %v1463
  %v1532 = vunpack.c.h.b16 %v1463
  %v1533 = vunpack.c.l.b16 %v1464
  %v1534 = vunpack.c.l.b16 %v1465
  %v1535 = vunpack.c.h.b16 %v1465
  %v1536 = vunpack.c.l.b16 %v1466
  %v1537 = vunpack.c.l.b16 %v1467
  %v1538 = vunpack.c.h.b16 %v1467
  %v1539 = vunpack.c.l.b16 %v1468
  %v1540 = vunpack.c.l.b16 %v1469
  %v1541 = vunpack.c.h.b16 %v1469
  %v1542 = vunpack.c.l.b16 %v1470
  %v1543 = vunpack.c.l.b16 %v1471
  %v1544 = vunpack.c.h.b16 %v1471
  %v1545 = vunpack.c.l.b16 %v1472
  %v1546 = vunpack.c.l.b16 %v1473
  %v1547 = vunpack.c.h.b16 %v1473
  %v1548 = vunpack.c.l.b16 %v1474
  %v1549 = vunpack.c.l.b16 %v1475
  %v1550 = vunpack.c.h.b16 %v1475
  %v1551 = vunpack.c.l.b16 %v1476
  %v1552 = vunpack.c.l.b16 %v1477
  %v1553 = vunpack.c.h.b16 %v1477
  %v1554 = vunpack.c.l.b16 %v1478
  %v1555 = vunpack.c.l.b16 %v1479
  %v1556 = vunpack.c.h.b16 %v1479
  %v1557 = vunpack.c.l.b16 %v1480
  %v1558 = vunpack.c.l.b16 %v1481
  %v1559 = vunpack.c.h.b16 %v1481
  %v1560 = vunpack.c.l.b16 %v1482
  %v1561 = vunpack.c.l.b16 %v1483
  %v1562 = vunpack.c.h.b16 %v1483
  %v1563 = vunpack.c.l.b16 %v1484
  %v1564 = vunpack.c.l.b16 %v1485
  %v1565 = vunpack.c.h.b16 %v1485
  %v1566 = vunpack.c.l.b16 %v1486
  %v1567 = vpack.c.b16 %v1522, %v1519
  %v1568 = vpack.c.b16 %v1523, %v1520
  %v1569 = vpack.c.b16 %v1524, %v1521
  %v1570 = vpack.c.b16 %v1528, %v1525
  %v1571 = vpack.c.b16 %v1529, %v1526
  %v1572 = vpack.c.b16 %v1530, %v1527
  %v1573 = vpack.c.b16 %v1534, %v1531
  %v1574 = vpack.c.b16 %v1535, %v1532
  %v1575 = vpack.c.b16 %v1536, %v1533
  %v1576 = vpack.c.b16 %v1540, %v1537
  %v1577 = vpack.c.b16 %v1541, %v1538
  %v1578 = vpack.c.b16 %v1542, %v1539
  %v1579 = vpack.c.b16 %v1546, %v1543
  %v1580 = vpack.c.b16 %v1547, %v1544
  %v1581 = vpack.c.b16 %v1548, %v1545
  %v1582 = vpack.c.b16 %v1552, %v1549
  %v1583 = vpack.c.b16 %v1553, %v1550
  %v1584 = vpack.c.b16 %v1554, %v1551
  %v1585 = vpack.c.b16 %v1558, %v1555
  %v1586 = vpack.c.b16 %v1559, %v1556
  %v1587 = vpack.c.b16 %v1560, %v1557
  %v1588 = vpack.c.b16 %v1564, %v1561
  %v1589 = vpack.c.b16 %v1565, %v1562
  %v1590 = vpack.c.b16 %v1566, %v1563
  %1615 = vmatprep.subr.bf16.mxu0 %v1568
  %1616 = vmatpush1.bf16.msra.mxu0 %v1567
  %1617 = vmatprep.subr.bf16.mxu0 %v1571
  %1618 = vmatpush1.bf16.msra.mxu0 %v1570
  %1619 = vmatprep.subr.bf16.mxu0 %v1574
  %1620 = vmatpush1.bf16.msra.mxu0 %v1573
  %1621 = vmatprep.subr.bf16.mxu0 %v1577
  %1622 = vmatpush1.bf16.msra.mxu0 %v1576
  %1623 = vmatprep.subr.bf16.mxu0 %v1580
  %1624 = vmatpush1.bf16.msra.mxu0 %v1579
  %1625 = vmatprep.subr.bf16.mxu0 %v1583
  %1626 = vmatpush1.bf16.msra.mxu0 %v1582
  %1627 = vmatprep.subr.bf16.mxu0 %v1586
  %1628 = vmatpush1.bf16.msra.mxu0 %v1585
  %1629 = vmatprep.subr.bf16.mxu0 %v1589
  %1630 = vmatpush1.bf16.msra.mxu0 %v1588
  %1631 = vmatprep.subr.bf16.mxu0 0
  %1632 = vmatpush1.bf16.msra.mxu0 0
  %1633 = vmatprep.subr.bf16.mxu0 0
  %1634 = vmatpush1.bf16.msra.mxu0 0
  %1635 = vmatprep.subr.bf16.mxu0 0
  %1636 = vmatpush1.bf16.msra.mxu0 0
  %1637 = vmatprep.subr.bf16.mxu0 0
  %1638 = vmatpush1.bf16.msra.mxu0 0
  %1639 = vmatprep.subr.bf16.mxu0 0
  %1640 = vmatpush1.bf16.msra.mxu0 0
  %1641 = vmatprep.subr.bf16.mxu0 0
  %1642 = vmatpush1.bf16.msra.mxu0 0
  %1643 = vmatprep.subr.bf16.mxu0 0
  %1644 = vmatpush1.bf16.msra.mxu0 0
  %1645 = vmatprep.subr.bf16.mxu0 0
  %1646 = vmatpush1.bf16.msra.mxu0 0
  %1647 = vmatprep.mubr.bf16.mxu0 0
  %1648 = vmatmul.mubr.bf16.gmra.mrb[0].mxu0 %v1454
  %v1649 = vpop.f32.mrb[0].mxu0
  %v1650 = vadd.f32 0.0, %v1649
  %v1651 = vpop.f32.mrb[0].mxu0
  %v1652 = vadd.f32 0.0, %v1651
  %v1653 = vpop.f32.mrb[0].mxu0
  %v1654 = vadd.f32 0.0, %v1653
  %v1655 = vpop.f32.mrb[0].mxu0
  %v1656 = vadd.f32 0.0, %v1655
  %1657 = vdwg.mxu0
  %1658 = vmatprep.subr.bf16.mxu0 0
  %1659 = vmatpush1.bf16.msra.mxu0 %v1569
  %1660 = vmatprep.subr.bf16.mxu0 0
  %1661 = vmatpush1.bf16.msra.mxu0 %v1572
  %1662 = vmatprep.subr.bf16.mxu0 0
  %1663 = vmatpush1.bf16.msra.mxu0 %v1575
  %1664 = vmatprep.subr.bf16.mxu0 0
  %1665 = vmatpush1.bf16.msra.mxu0 %v1578
  %1666 = vmatprep.subr.bf16.mxu0 0
  %1667 = vmatpush1.bf16.msra.mxu0 %v1581
  %1668 = vmatprep.subr.bf16.mxu0 0
  %1669 = vmatpush1.bf16.msra.mxu0 %v1584
  %1670 = vmatprep.subr.bf16.mxu0 0
  %1671 = vmatpush1.bf16.msra.mxu0 %v1587
  %1672 = vmatprep.subr.bf16.mxu0 0
  %1673 = vmatpush1.bf16.msra.mxu0 %v1590
  %1674 = vmatprep.subr.bf16.mxu0 0
  %1675 = vmatpush1.bf16.msra.mxu0 0
  %1676 = vmatprep.subr.bf16.mxu0 0
  %1677 = vmatpush1.bf16.msra.mxu0 0
  %1678 = vmatprep.subr.bf16.mxu0 0
  %1679 = vmatpush1.bf16.msra.mxu0 0
  %1680 = vmatprep.subr.bf16.mxu0 0
  %1681 = vmatpush1.bf16.msra.mxu0 0
  %1682 = vmatprep.subr.bf16.mxu0 0
  %1683 = vmatpush1.bf16.msra.mxu0 0
  %1684 = vmatprep.subr.bf16.mxu0 0
  %1685 = vmatpush1.bf16.msra.mxu0 0
  %1686 = vmatprep.subr.bf16.mxu0 0
  %1687 = vmatpush1.bf16.msra.mxu0 0
  %1688 = vmatprep.subr.bf16.mxu0 0
  %1689 = vmatpush1.bf16.msra.mxu0 0
  %1690 = vmatprep.mubr.bf16.mxu0 0
  %1691 = vmatmul.mubr.bf16.gmra.mrb[0].mxu0 %v1454
  %v1692 = vpop.f32.mrb[0].mxu0
  %v1693 = vadd.f32 0.0, %v1692
  %v1694 = vpop.f32.mrb[0].mxu0
  %v1695 = vpop.f32.mrb[0].mxu0
  %v1696 = vadd.f32 0.0, %v1695
  %v1697 = vpop.f32.mrb[0].mxu0
  %1698 = vdwg.mxu0
  %v1699 = vadd.f32 %v1448, %v1650
  %v1700 = vadd.f32 %v1449, %v1652
  %v1701 = vadd.f32 %v1450, %v1693
  %v1702 = vadd.f32 %v1451, %v1654
  %v1703 = vadd.f32 %v1452, %v1656
  %v1704 = vadd.f32 %v1453, %v1696
  %s1705 = scalar_lea.vmem [#allocation3], 144
  %v1706 = vld [vmem:[%s1705] sm:$0xff]
  %v1707 = vld [vmem:[%s1705 + $0x8] sm:$0xff]
  %v1708 = vld [vmem:[%s1705 + $0x10] sm:$0xff]
  %v1709 = vunpack.c.l.bf16 %v1706
  %v1710 = vunpack.c.l.bf16 %v1707
  %v1711 = vunpack.c.l.bf16 %v1708
  %v1712 = vunpack.c.h.bf16 %v1706
  %v1713 = vunpack.c.h.bf16 %v1707
  %v1714 = vunpack.c.h.bf16 %v1708
  %v1715 = vpack.c.bf16 %v1438, %v1437
  %v1716 = vld [vmem:[%s1112] sm:$0xff]
  %v1717 = vld [vmem:[%s1112 + $0x8] sm:$0xf]
  %v1718 = vld [vmem:[%s1112 + $0xc] sm:$0xff]
  %v1719 = vld [vmem:[%s1112 + $0x14] sm:$0xf]
  %v1720 = vld [vmem:[%s1112 + $0x18] sm:$0xff]
  %v1721 = vld [vmem:[%s1112 + $0x20] sm:$0xf]
  %v1722 = vld [vmem:[%s1112 + $0x24] sm:$0xff]
  %v1723 = vld [vmem:[%s1112 + $0x2c] sm:$0xf]
  %v1724 = vld [vmem:[%s1112 + $0x30] sm:$0xff]
  %v1725 = vld [vmem:[%s1112 + $0x38] sm:$0xf]
  %v1726 = vld [vmem:[%s1112 + $0x3c] sm:$0xff]
  %v1727 = vld [vmem:[%s1112 + $0x44] sm:$0xf]
  %v1728 = vld [vmem:[%s1112 + $0x48] sm:$0xff]
  %v1729 = vld [vmem:[%s1112 + $0x50] sm:$0xf]
  %v1730 = vld [vmem:[%s1112 + $0x54] sm:$0xff]
  %v1731 = vld [vmem:[%s1112 + $0x5c] sm:$0xf]
  %v1732 = vld [vmem:[%s1112 + $0x60] sm:$0xff]
  %v1733 = vld [vmem:[%s1112 + $0x68] sm:$0xf]
  %v1734 = vld [vmem:[%s1112 + $0x6c] sm:$0xff]
  %v1735 = vld [vmem:[%s1112 + $0x74] sm:$0xf]
  %v1736 = vld [vmem:[%s1112 + $0x78] sm:$0xff]
  %v1737 = vld [vmem:[%s1112 + $0x80] sm:$0xf]
  %v1738 = vld [vmem:[%s1112 + $0x84] sm:$0xff]
  %v1739 = vld [vmem:[%s1112 + $0x8c] sm:$0xf]
  %v1740 = vld [vmem:[%s1112 + $0x90] sm:$0xff]
  %v1741 = vld [vmem:[%s1112 + $0x98] sm:$0xf]
  %v1742 = vld [vmem:[%s1112 + $0x9c] sm:$0xff]
  %v1743 = vld [vmem:[%s1112 + $0xa4] sm:$0xf]
  %v1744 = vld [vmem:[%s1112 + $0xa8] sm:$0xff]
  %v1745 = vld [vmem:[%s1112 + $0xb0] sm:$0xf]
  %v1746 = vld [vmem:[%s1112 + $0xb4] sm:$0xff]
  %v1747 = vld [vmem:[%s1112 + $0xbc] sm:$0xf]
  %v1780 = vunpack.c.l.b16 %v1716
  %v1781 = vunpack.c.h.b16 %v1716
  %v1782 = vunpack.c.l.b16 %v1717
  %v1783 = vunpack.c.l.b16 %v1718
  %v1784 = vunpack.c.h.b16 %v1718
  %v1785 = vunpack.c.l.b16 %v1719
  %v1786 = vunpack.c.l.b16 %v1720
  %v1787 = vunpack.c.h.b16 %v1720
  %v1788 = vunpack.c.l.b16 %v1721
  %v1789 = vunpack.c.l.b16 %v1722
  %v1790 = vunpack.c.h.b16 %v1722
  %v1791 = vunpack.c.l.b16 %v1723
  %v1792 = vunpack.c.l.b16 %v1724
  %v1793 = vunpack.c.h.b16 %v1724
  %v1794 = vunpack.c.l.b16 %v1725
  %v1795 = vunpack.c.l.b16 %v1726
  %v1796 = vunpack.c.h.b16 %v1726
  %v1797 = vunpack.c.l.b16 %v1727
  %v1798 = vunpack.c.l.b16 %v1728
  %v1799 = vunpack.c.h.b16 %v1728
  %v1800 = vunpack.c.l.b16 %v1729
  %v1801 = vunpack.c.l.b16 %v1730
  %v1802 = vunpack.c.h.b16 %v1730
  %v1803 = vunpack.c.l.b16 %v1731
  %v1804 = vunpack.c.l.b16 %v1732
  %v1805 = vunpack.c.h.b16 %v1732
  %v1806 = vunpack.c.l.b16 %v1733
  %v1807 = vunpack.c.l.b16 %v1734
  %v1808 = vunpack.c.h.b16 %v1734
  %v1809 = vunpack.c.l.b16 %v1735
  %v1810 = vunpack.c.l.b16 %v1736
  %v1811 = vunpack.c.h.b16 %v1736
  %v1812 = vunpack.c.l.b16 %v1737
  %v1813 = vunpack.c.l.b16 %v1738
  %v1814 = vunpack.c.h.b16 %v1738
  %v1815 = vunpack.c.l.b16 %v1739
  %v1816 = vunpack.c.l.b16 %v1740
  %v1817 = vunpack.c.h.b16 %v1740
  %v1818 = vunpack.c.l.b16 %v1741
  %v1819 = vunpack.c.l.b16 %v1742
  %v1820 = vunpack.c.h.b16 %v1742
  %v1821 = vunpack.c.l.b16 %v1743
  %v1822 = vunpack.c.l.b16 %v1744
  %v1823 = vunpack.c.h.b16 %v1744
  %v1824 = vunpack.c.l.b16 %v1745
  %v1825 = vunpack.c.l.b16 %v1746
  %v1826 = vunpack.c.h.b16 %v1746
  %v1827 = vunpack.c.l.b16 %v1747
  %v1828 = vpack.c.b16 %v1783, %v1780
  %v1829 = vpack.c.b16 %v1784, %v1781
  %v1830 = vpack.c.b16 %v1785, %v1782
  %v1831 = vpack.c.b16 %v1789, %v1786
  %v1832 = vpack.c.b16 %v1790, %v1787
  %v1833 = vpack.c.b16 %v1791, %v1788
  %v1834 = vpack.c.b16 %v1795, %v1792
  %v1835 = vpack.c.b16 %v1796, %v1793
  %v1836 = vpack.c.b16 %v1797, %v1794
  %v1837 = vpack.c.b16 %v1801, %v1798
  %v1838 = vpack.c.b16 %v1802, %v1799
  %v1839 = vpack.c.b16 %v1803, %v1800
  %v1840 = vpack.c.b16 %v1807, %v1804
  %v1841 = vpack.c.b16 %v1808, %v1805
  %v1842 = vpack.c.b16 %v1809, %v1806
  %v1843 = vpack.c.b16 %v1813, %v1810
  %v1844 = vpack.c.b16 %v1814, %v1811
  %v1845 = vpack.c.b16 %v1815, %v1812
  %v1846 = vpack.c.b16 %v1819, %v1816
  %v1847 = vpack.c.b16 %v1820, %v1817
  %v1848 = vpack.c.b16 %v1821, %v1818
  %v1849 = vpack.c.b16 %v1825, %v1822
  %v1850 = vpack.c.b16 %v1826, %v1823
  %v1851 = vpack.c.b16 %v1827, %v1824
  %1876 = vmatprep.subr.bf16.mxu0 %v1829
  %1877 = vmatpush1.bf16.msra.mxu0 %v1828
  %1878 = vmatprep.subr.bf16.mxu0 %v1832
  %1879 = vmatpush1.bf16.msra.mxu0 %v1831
  %1880 = vmatprep.subr.bf16.mxu0 %v1835
  %1881 = vmatpush1.bf16.msra.mxu0 %v1834
  %1882 = vmatprep.subr.bf16.mxu0 %v1838
  %1883 = vmatpush1.bf16.msra.mxu0 %v1837
  %1884 = vmatprep.subr.bf16.mxu0 %v1841
  %1885 = vmatpush1.bf16.msra.mxu0 %v1840
  %1886 = vmatprep.subr.bf16.mxu0 %v1844
  %1887 = vmatpush1.bf16.msra.mxu0 %v1843
  %1888 = vmatprep.subr.bf16.mxu0 %v1847
  %1889 = vmatpush1.bf16.msra.mxu0 %v1846
  %1890 = vmatprep.subr.bf16.mxu0 %v1850
  %1891 = vmatpush1.bf16.msra.mxu0 %v1849
  %1892 = vmatprep.subr.bf16.mxu0 0
  %1893 = vmatpush1.bf16.msra.mxu0 0
  %1894 = vmatprep.subr.bf16.mxu0 0
  %1895 = vmatpush1.bf16.msra.mxu0 0
  %1896 = vmatprep.subr.bf16.mxu0 0
  %1897 = vmatpush1.bf16.msra.mxu0 0
  %1898 = vmatprep.subr.bf16.mxu0 0
  %1899 = vmatpush1.bf16.msra.mxu0 0
  %1900 = vmatprep.subr.bf16.mxu0 0
  %1901 = vmatpush1.bf16.msra.mxu0 0
  %1902 = vmatprep.subr.bf16.mxu0 0
  %1903 = vmatpush1.bf16.msra.mxu0 0
  %1904 = vmatprep.subr.bf16.mxu0 0
  %1905 = vmatpush1.bf16.msra.mxu0 0
  %1906 = vmatprep.subr.bf16.mxu0 0
  %1907 = vmatpush1.bf16.msra.mxu0 0
  %1908 = vmatprep.mubr.bf16.mxu0 0
  %1909 = vmatmul.mubr.bf16.gmra.mrb[0].mxu0 %v1715
  %v1910 = vpop.f32.mrb[0].mxu0
  %v1911 = vadd.f32 0.0, %v1910
  %v1912 = vpop.f32.mrb[0].mxu0
  %v1913 = vadd.f32 0.0, %v1912
  %v1914 = vpop.f32.mrb[0].mxu0
  %v1915 = vadd.f32 0.0, %v1914
  %v1916 = vpop.f32.mrb[0].mxu0
  %v1917 = vadd.f32 0.0, %v1916
  %1918 = vdwg.mxu0
  %1919 = vmatprep.subr.bf16.mxu0 0
  %1920 = vmatpush1.bf16.msra.mxu0 %v1830
  %1921 = vmatprep.subr.bf16.mxu0 0
  %1922 = vmatpush1.bf16.msra.mxu0 %v1833
  %1923 = vmatprep.subr.bf16.mxu0 0
  %1924 = vmatpush1.bf16.msra.mxu0 %v1836
  %1925 = vmatprep.subr.bf16.mxu0 0
  %1926 = vmatpush1.bf16.msra.mxu0 %v1839
  %1927 = vmatprep.subr.bf16.mxu0 0
  %1928 = vmatpush1.bf16.msra.mxu0 %v1842
  %1929 = vmatprep.subr.bf16.mxu0 0
  %1930 = vmatpush1.bf16.msra.mxu0 %v1845
  %1931 = vmatprep.subr.bf16.mxu0 0
  %1932 = vmatpush1.bf16.msra.mxu0 %v1848
  %1933 = vmatprep.subr.bf16.mxu0 0
  %1934 = vmatpush1.bf16.msra.mxu0 %v1851
  %1935 = vmatprep.subr.bf16.mxu0 0
  %1936 = vmatpush1.bf16.msra.mxu0 0
  %1937 = vmatprep.subr.bf16.mxu0 0
  %1938 = vmatpush1.bf16.msra.mxu0 0
  %1939 = vmatprep.subr.bf16.mxu0 0
  %1940 = vmatpush1.bf16.msra.mxu0 0
  %1941 = vmatprep.subr.bf16.mxu0 0
  %1942 = vmatpush1.bf16.msra.mxu0 0
  %1943 = vmatprep.subr.bf16.mxu0 0
  %1944 = vmatpush1.bf16.msra.mxu0 0
  %1945 = vmatprep.subr.bf16.mxu0 0
  %1946 = vmatpush1.bf16.msra.mxu0 0
  %1947 = vmatprep.subr.bf16.mxu0 0
  %1948 = vmatpush1.bf16.msra.mxu0 0
  %1949 = vmatprep.subr.bf16.mxu0 0
  %1950 = vmatpush1.bf16.msra.mxu0 0
  %1951 = vmatprep.mubr.bf16.mxu0 0
  %1952 = vmatmul.mubr.bf16.gmra.mrb[0].mxu0 %v1715
  %v1953 = vpop.f32.mrb[0].mxu0
  %v1954 = vadd.f32 0.0, %v1953
  %v1955 = vpop.f32.mrb[0].mxu0
  %v1956 = vpop.f32.mrb[0].mxu0
  %v1957 = vadd.f32 0.0, %v1956
  %v1958 = vpop.f32.mrb[0].mxu0
  %1959 = vdwg.mxu0
  %v1960 = vadd.f32 %v1709, %v1911
  %v1961 = vadd.f32 %v1710, %v1913
  %v1962 = vadd.f32 %v1711, %v1954
  %v1963 = vadd.f32 %v1712, %v1915
  %v1964 = vadd.f32 %v1713, %v1917
  %v1965 = vadd.f32 %v1714, %v1957
  %v1966 = vxor.u32 %v1699, 2147483648
  %v1967 = vxor.u32 %v1702, 2147483648
  %v1968 = vmul.f32 %v1966, 1.442695
  %v1969 = vpow.pop %v1968
  %v1970 = vmul.f32 %v1967, 1.442695
  %v1971 = vpow.pop %v1970
  %v1972 = vadd.f32 %v1969, 1.0
  %v1973 = vadd.f32 %v1971, 1.0
  %v1974 = vrcp.pop %v1972
  %v1975 = vmul.f32 1.0, %v1974
  %v1976 = vrcp.pop %v1973
  %v1977 = vmul.f32 1.0, %v1976
  %v1978 = vxor.u32 %v1700, 2147483648
  %v1979 = vxor.u32 %v1703, 2147483648
  %v1980 = vmul.f32 %v1978, 1.442695
  %v1981 = vpow.pop %v1980
  %v1982 = vmul.f32 %v1979, 1.442695
  %v1983 = vpow.pop %v1982
  %v1984 = vadd.f32 %v1981, 1.0
  %v1985 = vadd.f32 %v1983, 1.0
  %v1986 = vrcp.pop %v1984
  %v1987 = vmul.f32 1.0, %v1986
  %v1988 = vrcp.pop %v1985
  %v1989 = vmul.f32 1.0, %v1988
  %v1990 = vtanh.pop %v1701
  %v1991 = vtanh.pop %v1704
  %v1992 = vsub.f32 1.0, %v1975
  %v1993 = vsub.f32 1.0, %v1977
  %v1994 = vmul.f32 %v1992, %v1395
  %v1995 = vmul.f32 %v1993, %v1396
  %v1996 = vmul.f32 %v1975, %v1990
  %v1997 = vmul.f32 %v1977, %v1991
  %v1998 = vadd.f32 %v1994, %v1996
  %v1999 = vadd.f32 %v1995, %v1997
  %v2000 = vtanh.pop %v1998
  %v2001 = vtanh.pop %v1999
  %v2002 = vmul.f32 %v1987, %v2000
  %v2003 = vmul.f32 %v1989, %v2001
  %v2004 = vxor.u32 %v1960, 2147483648
  %v2005 = vxor.u32 %v1963, 2147483648
  %v2006 = vmul.f32 %v2004, 1.442695
  %v2007 = vpow.pop %v2006
  %v2008 = vmul.f32 %v2005, 1.442695
  %v2009 = vpow.pop %v2008
  %v2010 = vadd.f32 %v2007, 1.0
  %v2011 = vadd.f32 %v2009, 1.0
  %v2012 = vrcp.pop %v2010
  %v2013 = vmul.f32 1.0, %v2012
  %v2014 = vrcp.pop %v2011
  %v2015 = vmul.f32 1.0, %v2014
  %v2016 = vxor.u32 %v1961, 2147483648
  %v2017 = vxor.u32 %v1964, 2147483648
  %v2018 = vmul.f32 %v2016, 1.442695
  %v2019 = vpow.pop %v2018
  %v2020 = vmul.f32 %v2017, 1.442695
  %v2021 = vpow.pop %v2020
  %v2022 = vadd.f32 %v2019, 1.0
  %v2023 = vadd.f32 %v2021, 1.0
  %v2024 = vrcp.pop %v2022
  %v2025 = vmul.f32 1.0, %v2024
  %v2026 = vrcp.pop %v2023
  %v2027 = vmul.f32 1.0, %v2026
  %v2028 = vtanh.pop %v1962
  %v2029 = vtanh.pop %v1965
  %v2030 = vsub.f32 1.0, %v2013
  %v2031 = vsub.f32 1.0, %v2015
  %v2032 = vmul.f32 %v2030, %v1433
  %v2033 = vmul.f32 %v2031, %v1434
  %v2034 = vmul.f32 %v2013, %v2028
  %v2035 = vmul.f32 %v2015, %v2029
  %v2036 = vadd.f32 %v2032, %v2034
  %v2037 = vadd.f32 %v2033, %v2035
  %v2038 = vtanh.pop %v2036
  %v2039 = vtanh.pop %v2037
  %v2040 = vmul.f32 %v2025, %v2038
  %v2041 = vmul.f32 %v2027, %v2039
  %s2042 = scalar_lea.vmem [#allocation4], 16
  %2043 = vst [vmem:[%s2042] sm:$0xff] %v2002
  %2044 = vst [vmem:[%s2042 + $0x8] sm:$0xff] %v2003
  %s2045 = scalar_lea.vmem [#allocation5], 96
  %2046 = vst [vmem:[%s2045] sm:$0xff] %v2040
  %2047 = vst [vmem:[%s2045 + $0x8] sm:$0xff] %v2041
  %s2048 = scalar_lea.vmem [#allocation2], 48
  %v2049 = vld [vmem:[%s2048] sm:$0xff]
  %v2050 = vld [vmem:[%s2048 + $0x8] sm:$0xff]
  %v2051 = vld [vmem:[%s2048 + $0x10] sm:$0xff]
  %v2052 = vunpack.c.l.bf16 %v2049
  %v2053 = vunpack.c.l.bf16 %v2050
  %v2054 = vunpack.c.l.bf16 %v2051
  %v2055 = vunpack.c.h.bf16 %v2049
  %v2056 = vunpack.c.h.bf16 %v2050
  %v2057 = vunpack.c.h.bf16 %v2051
  %v2058 = vpack.c.bf16 %v2003, %v2002
  %v2059 = vld [vmem:[%s3] sm:$0xff]
  %v2060 = vld [vmem:[%s3 + $0x8] sm:$0xf]
  %v2061 = vld [vmem:[%s3 + $0xc] sm:$0xff]
  %v2062 = vld [vmem:[%s3 + $0x14] sm:$0xf]
  %v2063 = vld [vmem:[%s3 + $0x18] sm:$0xff]
  %v2064 = vld [vmem:[%s3 + $0x20] sm:$0xf]
  %v2065 = vld [vmem:[%s3 + $0x24] sm:$0xff]
  %v2066 = vld [vmem:[%s3 + $0x2c] sm:$0xf]
  %v2067 = vld [vmem:[%s3 + $0x30] sm:$0xff]
  %v2068 = vld [vmem:[%s3 + $0x38] sm:$0xf]
  %v2069 = vld [vmem:[%s3 + $0x3c] sm:$0xff]
  %v2070 = vld [vmem:[%s3 + $0x44] sm:$0xf]
  %v2071 = vld [vmem:[%s3 + $0x48] sm:$0xff]
  %v2072 = vld [vmem:[%s3 + $0x50] sm:$0xf]
  %v2073 = vld [vmem:[%s3 + $0x54] sm:$0xff]
  %v2074 = vld [vmem:[%s3 + $0x5c] sm:$0xf]
  %v2075 = vld [vmem:[%s3 + $0x60] sm:$0xff]
  %v2076 = vld [vmem:[%s3 + $0x68] sm:$0xf]
  %v2077 = vld [vmem:[%s3 + $0x6c] sm:$0xff]
  %v2078 = vld [vmem:[%s3 + $0x74] sm:$0xf]
  %v2079 = vld [vmem:[%s3 + $0x78] sm:$0xff]
  %v2080 = vld [vmem:[%s3 + $0x80] sm:$0xf]
  %v2081 = vld [vmem:[%s3 + $0x84] sm:$0xff]
  %v2082 = vld [vmem:[%s3 + $0x8c] sm:$0xf]
  %v2083 = vld [vmem:[%s3 + $0x90] sm:$0xff]
  %v2084 = vld [vmem:[%s3 + $0x98] sm:$0xf]
  %v2085 = vld [vmem:[%s3 + $0x9c] sm:$0xff]
  %v2086 = vld [vmem:[%s3 + $0xa4] sm:$0xf]
  %v2087 = vld [vmem:[%s3 + $0xa8] sm:$0xff]
  %v2088 = vld [vmem:[%s3 + $0xb0] sm:$0xf]
  %v2089 = vld [vmem:[%s3 + $0xb4] sm:$0xff]
  %v2090 = vld [vmem:[%s3 + $0xbc] sm:$0xf]
  %v2123 = vunpack.c.l.b16 %v2059
  %v2124 = vunpack.c.h.b16 %v2059
  %v2125 = vunpack.c.l.b16 %v2060
  %v2126 = vunpack.c.l.b16 %v2061
  %v2127 = vunpack.c.h.b16 %v2061
  %v2128 = vunpack.c.l.b16 %v2062
  %v2129 = vunpack.c.l.b16 %v2063
  %v2130 = vunpack.c.h.b16 %v2063
  %v2131 = vunpack.c.l.b16 %v2064
  %v2132 = vunpack.c.l.b16 %v2065
  %v2133 = vunpack.c.h.b16 %v2065
  %v2134 = vunpack.c.l.b16 %v2066
  %v2135 = vunpack.c.l.b16 %v2067
  %v2136 = vunpack.c.h.b16 %v2067
  %v2137 = vunpack.c.l.b16 %v2068
  %v2138 = vunpack.c.l.b16 %v2069
  %v2139 = vunpack.c.h.b16 %v2069
  %v2140 = vunpack.c.l.b16 %v2070
  %v2141 = vunpack.c.l.b16 %v2071
  %v2142 = vunpack.c.h.b16 %v2071
  %v2143 = vunpack.c.l.b16 %v2072
  %v2144 = vunpack.c.l.b16 %v2073
  %v2145 = vunpack.c.h.b16 %v2073
  %v2146 = vunpack.c.l.b16 %v2074
  %v2147 = vunpack.c.l.b16 %v2075
  %v2148 = vunpack.c.h.b16 %v2075
  %v2149 = vunpack.c.l.b16 %v2076
  %v2150 = vunpack.c.l.b16 %v2077
  %v2151 = vunpack.c.h.b16 %v2077
  %v2152 = vunpack.c.l.b16 %v2078
  %v2153 = vunpack.c.l.b16 %v2079
  %v2154 = vunpack.c.h.b16 %v2079
  %v2155 = vunpack.c.l.b16 %v2080
  %v2156 = vunpack.c.l.b16 %v2081
  %v2157 = vunpack.c.h.b16 %v2081
  %v2158 = vunpack.c.l.b16 %v2082
  %v2159 = vunpack.c.l.b16 %v2083
  %v2160 = vunpack.c.h.b16 %v2083
  %v2161 = vunpack.c.l.b16 %v2084
  %v2162 = vunpack.c.l.b16 %v2085
  %v2163 = vunpack.c.h.b16 %v2085
  %v2164 = vunpack.c.l.b16 %v2086
  %v2165 = vunpack.c.l.b16 %v2087
  %v2166 = vunpack.c.h.b16 %v2087
  %v2167 = vunpack.c.l.b16 %v2088
  %v2168 = vunpack.c.l.b16 %v2089
  %v2169 = vunpack.c.h.b16 %v2089
  %v2170 = vunpack.c.l.b16 %v2090
  %v2171 = vpack.c.b16 %v2126, %v2123
  %v2172 = vpack.c.b16 %v2127, %v2124
  %v2173 = vpack.c.b16 %v2128, %v2125
  %v2174 = vpack.c.b16 %v2132, %v2129
  %v2175 = vpack.c.b16 %v2133, %v2130
  %v2176 = vpack.c.b16 %v2134, %v2131
  %v2177 = vpack.c.b16 %v2138, %v2135
  %v2178 = vpack.c.b16 %v2139, %v2136
  %v2179 = vpack.c.b16 %v2140, %v2137
  %v2180 = vpack.c.b16 %v2144, %v2141
  %v2181 = vpack.c.b16 %v2145, %v2142
  %v2182 = vpack.c.b16 %v2146, %v2143
  %v2183 = vpack.c.b16 %v2150, %v2147
  %v2184 = vpack.c.b16 %v2151, %v2148
  %v2185 = vpack.c.b16 %v2152, %v2149
  %v2186 = vpack.c.b16 %v2156, %v2153
  %v2187 = vpack.c.b16 %v2157, %v2154
  %v2188 = vpack.c.b16 %v2158, %v2155
  %v2189 = vpack.c.b16 %v2162, %v2159
  %v2190 = vpack.c.b16 %v2163, %v2160
  %v2191 = vpack.c.b16 %v2164, %v2161
  %v2192 = vpack.c.b16 %v2168, %v2165
  %v2193 = vpack.c.b16 %v2169, %v2166
  %v2194 = vpack.c.b16 %v2170, %v2167
  %2219 = vmatprep.subr.bf16.mxu0 %v2172
  %2220 = vmatpush1.bf16.msra.mxu0 %v2171
  %2221 = vmatprep.subr.bf16.mxu0 %v2175
  %2222 = vmatpush1.bf16.msra.mxu0 %v2174
  %2223 = vmatprep.subr.bf16.mxu0 %v2178
  %2224 = vmatpush1.bf16.msra.mxu0 %v2177
  %2225 = vmatprep.subr.bf16.mxu0 %v2181
  %2226 = vmatpush1.bf16.msra.mxu0 %v2180
  %2227 = vmatprep.subr.bf16.mxu0 %v2184
  %2228 = vmatpush1.bf16.msra.mxu0 %v2183
  %2229 = vmatprep.subr.bf16.mxu0 %v2187
  %2230 = vmatpush1.bf16.msra.mxu0 %v2186
  %2231 = vmatprep.subr.bf16.mxu0 %v2190
  %2232 = vmatpush1.bf16.msra.mxu0 %v2189
  %2233 = vmatprep.subr.bf16.mxu0 %v2193
  %2234 = vmatpush1.bf16.msra.mxu0 %v2192
  %2235 = vmatprep.subr.bf16.mxu0 0
  %2236 = vmatpush1.bf16.msra.mxu0 0
  %2237 = vmatprep.subr.bf16.mxu0 0
  %2238 = vmatpush1.bf16.msra.mxu0 0
  %2239 = vmatprep.subr.bf16.mxu0 0
  %2240 = vmatpush1.bf16.msra.mxu0 0
  %2241 = vmatprep.subr.bf16.mxu0 0
  %2242 = vmatpush1.bf16.msra.mxu0 0
  %2243 = vmatprep.subr.bf16.mxu0 0
  %2244 = vmatpush1.bf16.msra.mxu0 0
  %2245 = vmatprep.subr.bf16.mxu0 0
  %2246 = vmatpush1.bf16.msra.mxu0 0
  %2247 = vmatprep.subr.bf16.mxu0 0
  %2248 = vmatpush1.bf16.msra.mxu0 0
  %2249 = vmatprep.subr.bf16.mxu0 0
  %2250 = vmatpush1.bf16.msra.mxu0 0
  %2251 = vmatprep.mubr.bf16.mxu0 0
  %2252 = vmatmul.mubr.bf16.gmra.mrb[0].mxu0 %v2058
  %v2253 = vpop.f32.mrb[0].mxu0
  %v2254 = vadd.f32 0.0, %v2253
  %v2255 = vpop.f32.mrb[0].mxu0
  %v2256 = vadd.f32 0.0, %v2255
  %v2257 = vpop.f32.mrb[0].mxu0
  %v2258 = vadd.f32 0.0, %v2257
  %v2259 = vpop.f32.mrb[0].mxu0
  %v2260 = vadd.f32 0.0, %v2259
  %2261 = vdwg.mxu0
  %2262 = vmatprep.subr.bf16.mxu0 0
  %2263 = vmatpush1.bf16.msra.mxu0 %v2173
  %2264 = vmatprep.subr.bf16.mxu0 0
  %2265 = vmatpush1.bf16.msra.mxu0 %v2176
  %2266 = vmatprep.subr.bf16.mxu0 0
  %2267 = vmatpush1.bf16.msra.mxu0 %v2179
  %2268 = vmatprep.subr.bf16.mxu0 0
  %2269 = vmatpush1.bf16.msra.mxu0 %v2182
  %2270 = vmatprep.subr.bf16.mxu0 0
  %2271 = vmatpush1.bf16.msra.mxu0 %v2185
  %2272 = vmatprep.subr.bf16.mxu0 0
  %2273 = vmatpush1.bf16.msra.mxu0 %v2188
  %2274 = vmatprep.subr.bf16.mxu0 0
  %2275 = vmatpush1.bf16.msra.mxu0 %v2191
  %2276 = vmatprep.subr.bf16.mxu0 0
  %2277 = vmatpush1.bf16.msra.mxu0 %v2194
  %2278 = vmatprep.subr.bf16.mxu0 0
  %2279 = vmatpush1.bf16.msra.mxu0 0
  %2280 = vmatprep.subr.bf16.mxu0 0
  %2281 = vmatpush1.bf16.msra.mxu0 0
  %2282 = vmatprep.subr.bf16.mxu0 0
  %2283 = vmatpush1.bf16.msra.mxu0 0
  %2284 = vmatprep.subr.bf16.mxu0 0
  %2285 = vmatpush1.bf16.msra.mxu0 0
  %2286 = vmatprep.subr.bf16.mxu0 0
  %2287 = vmatpush1.bf16.msra.mxu0 0
  %2288 = vmatprep.subr.bf16.mxu0 0
  %2289 = vmatpush1.bf16.msra.mxu0 0
  %2290 = vmatprep.subr.bf16.mxu0 0
  %2291 = vmatpush1.bf16.msra.mxu0 0
  %2292 = vmatprep.subr.bf16.mxu0 0
  %2293 = vmatpush1.bf16.msra.mxu0 0
  %2294 = vmatprep.mubr.bf16.mxu0 0
  %2295 = vmatmul.mubr.bf16.gmra.mrb[0].mxu0 %v2058
  %v2296 = vpop.f32.mrb[0].mxu0
  %v2297 = vadd.f32 0.0, %v2296
  %v2298 = vpop.f32.mrb[0].mxu0
  %v2299 = vpop.f32.mrb[0].mxu0
  %v2300 = vadd.f32 0.0, %v2299
  %v2301 = vpop.f32.mrb[0].mxu0
  %2302 = vdwg.mxu0
  %v2303 = vadd.f32 %v2052, %v2254
  %v2304 = vadd.f32 %v2053, %v2256
  %v2305 = vadd.f32 %v2054, %v2297
  %v2306 = vadd.f32 %v2055, %v2258
  %v2307 = vadd.f32 %v2056, %v2260
  %v2308 = vadd.f32 %v2057, %v2300
  %s2309 = scalar_lea.vmem [#allocation3], 120
  %v2310 = vld [vmem:[%s2309] sm:$0xff]
  %v2311 = vld [vmem:[%s2309 + $0x8] sm:$0xff]
  %v2312 = vld [vmem:[%s2309 + $0x10] sm:$0xff]
  %v2313 = vunpack.c.l.bf16 %v2310
  %v2314 = vunpack.c.l.bf16 %v2311
  %v2315 = vunpack.c.l.bf16 %v2312
  %v2316 = vunpack.c.h.bf16 %v2310
  %v2317 = vunpack.c.h.bf16 %v2311
  %v2318 = vunpack.c.h.bf16 %v2312
  %v2319 = vpack.c.bf16 %v2041, %v2040
  %v2320 = vld [vmem:[%s1112] sm:$0xff]
  %v2321 = vld [vmem:[%s1112 + $0x8] sm:$0xf]
  %v2322 = vld [vmem:[%s1112 + $0xc] sm:$0xff]
  %v2323 = vld [vmem:[%s1112 + $0x14] sm:$0xf]
  %v2324 = vld [vmem:[%s1112 + $0x18] sm:$0xff]
  %v2325 = vld [vmem:[%s1112 + $0x20] sm:$0xf]
  %v2326 = vld [vmem:[%s1112 + $0x24] sm:$0xff]
  %v2327 = vld [vmem:[%s1112 + $0x2c] sm:$0xf]
  %v2328 = vld [vmem:[%s1112 + $0x30] sm:$0xff]
  %v2329 = vld [vmem:[%s1112 + $0x38] sm:$0xf]
  %v2330 = vld [vmem:[%s1112 + $0x3c] sm:$0xff]
  %v2331 = vld [vmem:[%s1112 + $0x44] sm:$0xf]
  %v2332 = vld [vmem:[%s1112 + $0x48] sm:$0xff]
  %v2333 = vld [vmem:[%s1112 + $0x50] sm:$0xf]
  %v2334 = vld [vmem:[%s1112 + $0x54] sm:$0xff]
  %v2335 = vld [vmem:[%s1112 + $0x5c] sm:$0xf]
  %v2336 = vld [vmem:[%s1112 + $0x60] sm:$0xff]
  %v2337 = vld [vmem:[%s1112 + $0x68] sm:$0xf]
  %v2338 = vld [vmem:[%s1112 + $0x6c] sm:$0xff]
  %v2339 = vld [vmem:[%s1112 + $0x74] sm:$0xf]
  %v2340 = vld [vmem:[%s1112 + $0x78] sm:$0xff]
  %v2341 = vld [vmem:[%s1112 + $0x80] sm:$0xf]
  %v2342 = vld [vmem:[%s1112 + $0x84] sm:$0xff]
  %v2343 = vld [vmem:[%s1112 + $0x8c] sm:$0xf]
  %v2344 = vld [vmem:[%s1112 + $0x90] sm:$0xff]
  %v2345 = vld [vmem:[%s1112 + $0x98] sm:$0xf]
  %v2346 = vld [vmem:[%s1112 + $0x9c] sm:$0xff]
  %v2347 = vld [vmem:[%s1112 + $0xa4] sm:$0xf]
  %v2348 = vld [vmem:[%s1112 + $0xa8] sm:$0xff]
  %v2349 = vld [vmem:[%s1112 + $0xb0] sm:$0xf]
  %v2350 = vld [vmem:[%s1112 + $0xb4] sm:$0xff]
  %v2351 = vld [vmem:[%s1112 + $0xbc] sm:$0xf]
  %v2384 = vunpack.c.l.b16 %v2320
  %v2385 = vunpack.c.h.b16 %v2320
  %v2386 = vunpack.c.l.b16 %v2321
  %v2387 = vunpack.c.l.b16 %v2322
  %v2388 = vunpack.c.h.b16 %v2322
  %v2389 = vunpack.c.l.b16 %v2323
  %v2390 = vunpack.c.l.b16 %v2324
  %v2391 = vunpack.c.h.b16 %v2324
  %v2392 = vunpack.c.l.b16 %v2325
  %v2393 = vunpack.c.l.b16 %v2326
  %v2394 = vunpack.c.h.b16 %v2326
  %v2395 = vunpack.c.l.b16 %v2327
  %v2396 = vunpack.c.l.b16 %v2328
  %v2397 = vunpack.c.h.b16 %v2328
  %v2398 = vunpack.c.l.b16 %v2329
  %v2399 = vunpack.c.l.b16 %v2330
  %v2400 = vunpack.c.h.b16 %v2330
  %v2401 = vunpack.c.l.b16 %v2331
  %v2402 = vunpack.c.l.b16 %v2332
  %v2403 = vunpack.c.h.b16 %v2332
  %v2404 = vunpack.c.l.b16 %v2333
  %v2405 = vunpack.c.l.b16 %v2334
  %v2406 = vunpack.c.h.b16 %v2334
  %v2407 = vunpack.c.l.b16 %v2335
  %v2408 = vunpack.c.l.b16 %v2336
  %v2409 = vunpack.c.h.b16 %v2336
  %v2410 = vunpack.c.l.b16 %v2337
  %v2411 = vunpack.c.l.b16 %v2338
  %v2412 = vunpack.c.h.b16 %v2338
  %v2413 = vunpack.c.l.b16 %v2339
  %v2414 = vunpack.c.l.b16 %v2340
  %v2415 = vunpack.c.h.b16 %v2340
  %v2416 = vunpack.c.l.b16 %v2341
  %v2417 = vunpack.c.l.b16 %v2342
  %v2418 = vunpack.c.h.b16 %v2342
  %v2419 = vunpack.c.l.b16 %v2343
  %v2420 = vunpack.c.l.b16 %v2344
  %v2421 = vunpack.c.h.b16 %v2344
  %v2422 = vunpack.c.l.b16 %v2345
  %v2423 = vunpack.c.l.b16 %v2346
  %v2424 = vunpack.c.h.b16 %v2346
  %v2425 = vunpack.c.l.b16 %v2347
  %v2426 = vunpack.c.l.b16 %v2348
  %v2427 = vunpack.c.h.b16 %v2348
  %v2428 = vunpack.c.l.b16 %v2349
  %v2429 = vunpack.c.l.b16 %v2350
  %v2430 = vunpack.c.h.b16 %v2350
  %v2431 = vunpack.c.l.b16 %v2351
  %v2432 = vpack.c.b16 %v2387, %v2384
  %v2433 = vpack.c.b16 %v2388, %v2385
  %v2434 = vpack.c.b16 %v2389, %v2386
  %v2435 = vpack.c.b16 %v2393, %v2390
  %v2436 = vpack.c.b16 %v2394, %v2391
  %v2437 = vpack.c.b16 %v2395, %v2392
  %v2438 = vpack.c.b16 %v2399, %v2396
  %v2439 = vpack.c.b16 %v2400, %v2397
  %v2440 = vpack.c.b16 %v2401, %v2398
  %v2441 = vpack.c.b16 %v2405, %v2402
  %v2442 = vpack.c.b16 %v2406, %v2403
  %v2443 = vpack.c.b16 %v2407, %v2404
  %v2444 = vpack.c.b16 %v2411, %v2408
  %v2445 = vpack.c.b16 %v2412, %v2409
  %v2446 = vpack.c.b16 %v2413, %v2410
  %v2447 = vpack.c.b16 %v2417, %v2414
  %v2448 = vpack.c.b16 %v2418, %v2415
  %v2449 = vpack.c.b16 %v2419, %v2416
  %v2450 = vpack.c.b16 %v2423, %v2420
  %v2451 = vpack.c.b16 %v2424, %v2421
  %v2452 = vpack.c.b16 %v2425, %v2422
  %v2453 = vpack.c.b16 %v2429, %v2426
  %v2454 = vpack.c.b16 %v2430, %v2427
  %v2455 = vpack.c.b16 %v2431, %v2428
  %2480 = vmatprep.subr.bf16.mxu0 %v2433
  %2481 = vmatpush1.bf16.msra.mxu0 %v2432
  %2482 = vmatprep.subr.bf16.mxu0 %v2436
  %2483 = vmatpush1.bf16.msra.mxu0 %v2435
  %2484 = vmatprep.subr.bf16.mxu0 %v2439
  %2485 = vmatpush1.bf16.msra.mxu0 %v2438
  %2486 = vmatprep.subr.bf16.mxu0 %v2442
  %2487 = vmatpush1.bf16.msra.mxu0 %v2441
  %2488 = vmatprep.subr.bf16.mxu0 %v2445
  %2489 = vmatpush1.bf16.msra.mxu0 %v2444
  %2490 = vmatprep.subr.bf16.mxu0 %v2448
  %2491 = vmatpush1.bf16.msra.mxu0 %v2447
  %2492 = vmatprep.subr.bf16.mxu0 %v2451
  %2493 = vmatpush1.bf16.msra.mxu0 %v2450
  %2494 = vmatprep.subr.bf16.mxu0 %v2454
  %2495 = vmatpush1.bf16.msra.mxu0 %v2453
  %2496 = vmatprep.subr.bf16.mxu0 0
  %2497 = vmatpush1.bf16.msra.mxu0 0
  %2498 = vmatprep.subr.bf16.mxu0 0
  %2499 = vmatpush1.bf16.msra.mxu0 0
  %2500 = vmatprep.subr.bf16.mxu0 0
  %2501 = vmatpush1.bf16.msra.mxu0 0
  %2502 = vmatprep.subr.bf16.mxu0 0
  %2503 = vmatpush1.bf16.msra.mxu0 0
  %2504 = vmatprep.subr.bf16.mxu0 0
  %2505 = vmatpush1.bf16.msra.mxu0 0
  %2506 = vmatprep.subr.bf16.mxu0 0
  %2507 = vmatpush1.bf16.msra.mxu0 0
  %2508 = vmatprep.subr.bf16.mxu0 0
  %2509 = vmatpush1.bf16.msra.mxu0 0
  %2510 = vmatprep.subr.bf16.mxu0 0
  %2511 = vmatpush1.bf16.msra.mxu0 0
  %2512 = vmatprep.mubr.bf16.mxu0 0
  %2513 = vmatmul.mubr.bf16.gmra.mrb[0].mxu0 %v2319
  %v2514 = vpop.f32.mrb[0].mxu0
  %v2515 = vadd.f32 0.0, %v2514
  %v2516 = vpop.f32.mrb[0].mxu0
  %v2517 = vadd.f32 0.0, %v2516
  %v2518 = vpop.f32.mrb[0].mxu0
  %v2519 = vadd.f32 0.0, %v2518
  %v2520 = vpop.f32.mrb[0].mxu0
  %v2521 = vadd.f32 0.0, %v2520
  %2522 = vdwg.mxu0
  %2523 = vmatprep.subr.bf16.mxu0 0
  %2524 = vmatpush1.bf16.msra.mxu0 %v2434
  %2525 = vmatprep.subr.bf16.mxu0 0
  %2526 = vmatpush1.bf16.msra.mxu0 %v2437
  %2527 = vmatprep.subr.bf16.mxu0 0
  %2528 = vmatpush1.bf16.msra.mxu0 %v2440
  %2529 = vmatprep.subr.bf16.mxu0 0
  %2530 = vmatpush1.bf16.msra.mxu0 %v2443
  %2531 = vmatprep.subr.bf16.mxu0 0
  %2532 = vmatpush1.bf16.msra.mxu0 %v2446
  %2533 = vmatprep.subr.bf16.mxu0 0
  %2534 = vmatpush1.bf16.msra.mxu0 %v2449
  %2535 = vmatprep.subr.bf16.mxu0 0
  %2536 = vmatpush1.bf16.msra.mxu0 %v2452
  %2537 = vmatprep.subr.bf16.mxu0 0
  %2538 = vmatpush1.bf16.msra.mxu0 %v2455
  %2539 = vmatprep.subr.bf16.mxu0 0
  %2540 = vmatpush1.bf16.msra.mxu0 0
  %2541 = vmatprep.subr.bf16.mxu0 0
  %2542 = vmatpush1.bf16.msra.mxu0 0
  %2543 = vmatprep.subr.bf16.mxu0 0
  %2544 = vmatpush1.bf16.msra.mxu0 0
  %2545 = vmatprep.subr.bf16.mxu0 0
  %2546 = vmatpush1.bf16.msra.mxu0 0
  %2547 = vmatprep.subr.bf16.mxu0 0
  %2548 = vmatpush1.bf16.msra.mxu0 0
  %2549 = vmatprep.subr.bf16.mxu0 0
  %2550 = vmatpush1.bf16.msra.mxu0 0
  %2551 = vmatprep.subr.bf16.mxu0 0
  %2552 = vmatpush1.bf16.msra.mxu0 0
  %2553 = vmatprep.subr.bf16.mxu0 0
  %2554 = vmatpush1.bf16.msra.mxu0 0
  %2555 = vmatprep.mubr.bf16.mxu0 0
  %2556 = vmatmul.mubr.bf16.gmra.mrb[0].mxu0 %v2319
  %v2557 = vpop.f32.mrb[0].mxu0
  %v2558 = vadd.f32 0.0, %v2557
  %v2559 = vpop.f32.mrb[0].mxu0
  %v2560 = vpop.f32.mrb[0].mxu0
  %v2561 = vadd.f32 0.0, %v2560
  %v2562 = vpop.f32.mrb[0].mxu0
  %2563 = vdwg.mxu0
  %v2564 = vadd.f32 %v2313, %v2515
  %v2565 = vadd.f32 %v2314, %v2517
  %v2566 = vadd.f32 %v2315, %v2558
  %v2567 = vadd.f32 %v2316, %v2519
  %v2568 = vadd.f32 %v2317, %v2521
  %v2569 = vadd.f32 %v2318, %v2561
  %v2570 = vxor.u32 %v2303, 2147483648
  %v2571 = vxor.u32 %v2306, 2147483648
  %v2572 = vmul.f32 %v2570, 1.442695
  %v2573 = vpow.pop %v2572
  %v2574 = vmul.f32 %v2571, 1.442695
  %v2575 = vpow.pop %v2574
  %v2576 = vadd.f32 %v2573, 1.0
  %v2577 = vadd.f32 %v2575, 1.0
  %v2578 = vrcp.pop %v2576
  %v2579 = vmul.f32 1.0, %v2578
  %v2580 = vrcp.pop %v2577
  %v2581 = vmul.f32 1.0, %v2580
  %v2582 = vxor.u32 %v2304, 2147483648
  %v2583 = vxor.u32 %v2307, 2147483648
  %v2584 = vmul.f32 %v2582, 1.442695
  %v2585 = vpow.pop %v2584
  %v2586 = vmul.f32 %v2583, 1.442695
  %v2587 = vpow.pop %v2586
  %v2588 = vadd.f32 %v2585, 1.0
  %v2589 = vadd.f32 %v2587, 1.0
  %v2590 = vrcp.pop %v2588
  %v2591 = vmul.f32 1.0, %v2590
  %v2592 = vrcp.pop %v2589
  %v2593 = vmul.f32 1.0, %v2592
  %v2594 = vtanh.pop %v2305
  %v2595 = vtanh.pop %v2308
  %v2596 = vsub.f32 1.0, %v2579
  %v2597 = vsub.f32 1.0, %v2581
  %v2598 = vmul.f32 %v2596, %v1998
  %v2599 = vmul.f32 %v2597, %v1999
  %v2600 = vmul.f32 %v2579, %v2594
  %v2601 = vmul.f32 %v2581, %v2595
  %v2602 = vadd.f32 %v2598, %v2600
  %v2603 = vadd.f32 %v2599, %v2601
  %v2604 = vtanh.pop %v2602
  %v2605 = vtanh.pop %v2603
  %v2606 = vmul.f32 %v2591, %v2604
  %v2607 = vmul.f32 %v2593, %v2605
  %v2608 = vxor.u32 %v2564, 2147483648
  %v2609 = vxor.u32 %v2567, 2147483648
  %v2610 = vmul.f32 %v2608, 1.442695
  %v2611 = vpow.pop %v2610
  %v2612 = vmul.f32 %v2609, 1.442695
  %v2613 = vpow.pop %v2612
  %v2614 = vadd.f32 %v2611, 1.0
  %v2615 = vadd.f32 %v2613, 1.0
  %v2616 = vrcp.pop %v2614
  %v2617 = vmul.f32 1.0, %v2616
  %v2618 = vrcp.pop %v2615
  %v2619 = vmul.f32 1.0, %v2618
  %v2620 = vxor.u32 %v2565, 2147483648
  %v2621 = vxor.u32 %v2568, 2147483648
  %v2622 = vmul.f32 %v2620, 1.442695
  %v2623 = vpow.pop %v2622
  %v2624 = vmul.f32 %v2621, 1.442695
  %v2625 = vpow.pop %v2624
  %v2626 = vadd.f32 %v2623, 1.0
  %v2627 = vadd.f32 %v2625, 1.0
  %v2628 = vrcp.pop %v2626
  %v2629 = vmul.f32 1.0, %v2628
  %v2630 = vrcp.pop %v2627
  %v2631 = vmul.f32 1.0, %v2630
  %v2632 = vtanh.pop %v2566
  %v2633 = vtanh.pop %v2569
  %v2634 = vsub.f32 1.0, %v2617
  %v2635 = vsub.f32 1.0, %v2619
  %v2636 = vmul.f32 %v2634, %v2036
  %v2637 = vmul.f32 %v2635, %v2037
  %v2638 = vmul.f32 %v2617, %v2632
  %v2639 = vmul.f32 %v2619, %v2633
  %v2640 = vadd.f32 %v2636, %v2638
  %v2641 = vadd.f32 %v2637, %v2639
  %v2642 = vtanh.pop %v2640
  %v2643 = vtanh.pop %v2641
  %v2644 = vmul.f32 %v2629, %v2642
  %v2645 = vmul.f32 %v2631, %v2643
  %s2646 = scalar_lea.vmem [#allocation4], 32
  %2647 = vst [vmem:[%s2646] sm:$0xff] %v2606
  %2648 = vst [vmem:[%s2646 + $0x8] sm:$0xff] %v2607
  %s2649 = scalar_lea.vmem [#allocation5], 80
  %2650 = vst [vmem:[%s2649] sm:$0xff] %v2644
  %2651 = vst [vmem:[%s2649 + $0x8] sm:$0xff] %v2645
  %s2652 = scalar_lea.vmem [#allocation2], 72
  %v2653 = vld [vmem:[%s2652] sm:$0xff]
  %v2654 = vld [vmem:[%s2652 + $0x8] sm:$0xff]
  %v2655 = vld [vmem:[%s2652 + $0x10] sm:$0xff]
  %v2656 = vunpack.c.l.bf16 %v2653
  %v2657 = vunpack.c.l.bf16 %v2654
  %v2658 = vunpack.c.l.bf16 %v2655
  %v2659 = vunpack.c.h.bf16 %v2653
  %v2660 = vunpack.c.h.bf16 %v2654
  %v2661 = vunpack.c.h.bf16 %v2655
  %v2662 = vpack.c.bf16 %v2607, %v2606
  %v2663 = vld [vmem:[%s3] sm:$0xff]
  %v2664 = vld [vmem:[%s3 + $0x8] sm:$0xf]
  %v2665 = vld [vmem:[%s3 + $0xc] sm:$0xff]
  %v2666 = vld [vmem:[%s3 + $0x14] sm:$0xf]
  %v2667 = vld [vmem:[%s3 + $0x18] sm:$0xff]
  %v2668 = vld [vmem:[%s3 + $0x20] sm:$0xf]
  %v2669 = vld [vmem:[%s3 + $0x24] sm:$0xff]
  %v2670 = vld [vmem:[%s3 + $0x2c] sm:$0xf]
  %v2671 = vld [vmem:[%s3 + $0x30] sm:$0xff]
  %v2672 = vld [vmem:[%s3 + $0x38] sm:$0xf]
  %v2673 = vld [vmem:[%s3 + $0x3c] sm:$0xff]
  %v2674 = vld [vmem:[%s3 + $0x44] sm:$0xf]
  %v2675 = vld [vmem:[%s3 + $0x48] sm:$0xff]
  %v2676 = vld [vmem:[%s3 + $0x50] sm:$0xf]
  %v2677 = vld [vmem:[%s3 + $0x54] sm:$0xff]
  %v2678 = vld [vmem:[%s3 + $0x5c] sm:$0xf]
  %v2679 = vld [vmem:[%s3 + $0x60] sm:$0xff]
  %v2680 = vld [vmem:[%s3 + $0x68] sm:$0xf]
  %v2681 = vld [vmem:[%s3 + $0x6c] sm:$0xff]
  %v2682 = vld [vmem:[%s3 + $0x74] sm:$0xf]
  %v2683 = vld [vmem:[%s3 + $0x78] sm:$0xff]
  %v2684 = vld [vmem:[%s3 + $0x80] sm:$0xf]
  %v2685 = vld [vmem:[%s3 + $0x84] sm:$0xff]
  %v2686 = vld [vmem:[%s3 + $0x8c] sm:$0xf]
  %v2687 = vld [vmem:[%s3 + $0x90] sm:$0xff]
  %v2688 = vld [vmem:[%s3 + $0x98] sm:$0xf]
  %v2689 = vld [vmem:[%s3 + $0x9c] sm:$0xff]
  %v2690 = vld [vmem:[%s3 + $0xa4] sm:$0xf]
  %v2691 = vld [vmem:[%s3 + $0xa8] sm:$0xff]
  %v2692 = vld [vmem:[%s3 + $0xb0] sm:$0xf]
  %v2693 = vld [vmem:[%s3 + $0xb4] sm:$0xff]
  %v2694 = vld [vmem:[%s3 + $0xbc] sm:$0xf]
  %v2727 = vunpack.c.l.b16 %v2663
  %v2728 = vunpack.c.h.b16 %v2663
  %v2729 = vunpack.c.l.b16 %v2664
  %v2730 = vunpack.c.l.b16 %v2665
  %v2731 = vunpack.c.h.b16 %v2665
  %v2732 = vunpack.c.l.b16 %v2666
  %v2733 = vunpack.c.l.b16 %v2667
  %v2734 = vunpack.c.h.b16 %v2667
  %v2735 = vunpack.c.l.b16 %v2668
  %v2736 = vunpack.c.l.b16 %v2669
  %v2737 = vunpack.c.h.b16 %v2669
  %v2738 = vunpack.c.l.b16 %v2670
  %v2739 = vunpack.c.l.b16 %v2671
  %v2740 = vunpack.c.h.b16 %v2671
  %v2741 = vunpack.c.l.b16 %v2672
  %v2742 = vunpack.c.l.b16 %v2673
  %v2743 = vunpack.c.h.b16 %v2673
  %v2744 = vunpack.c.l.b16 %v2674
  %v2745 = vunpack.c.l.b16 %v2675
  %v2746 = vunpack.c.h.b16 %v2675
  %v2747 = vunpack.c.l.b16 %v2676
  %v2748 = vunpack.c.l.b16 %v2677
  %v2749 = vunpack.c.h.b16 %v2677
  %v2750 = vunpack.c.l.b16 %v2678
  %v2751 = vunpack.c.l.b16 %v2679
  %v2752 = vunpack.c.h.b16 %v2679
  %v2753 = vunpack.c.l.b16 %v2680
  %v2754 = vunpack.c.l.b16 %v2681
  %v2755 = vunpack.c.h.b16 %v2681
  %v2756 = vunpack.c.l.b16 %v2682
  %v2757 = vunpack.c.l.b16 %v2683
  %v2758 = vunpack.c.h.b16 %v2683
  %v2759 = vunpack.c.l.b16 %v2684
  %v2760 = vunpack.c.l.b16 %v2685
  %v2761 = vunpack.c.h.b16 %v2685
  %v2762 = vunpack.c.l.b16 %v2686
  %v2763 = vunpack.c.l.b16 %v2687
  %v2764 = vunpack.c.h.b16 %v2687
  %v2765 = vunpack.c.l.b16 %v2688
  %v2766 = vunpack.c.l.b16 %v2689
  %v2767 = vunpack.c.h.b16 %v2689
  %v2768 = vunpack.c.l.b16 %v2690
  %v2769 = vunpack.c.l.b16 %v2691
  %v2770 = vunpack.c.h.b16 %v2691
  %v2771 = vunpack.c.l.b16 %v2692
  %v2772 = vunpack.c.l.b16 %v2693
  %v2773 = vunpack.c.h.b16 %v2693
  %v2774 = vunpack.c.l.b16 %v2694
  %v2775 = vpack.c.b16 %v2730, %v2727
  %v2776 = vpack.c.b16 %v2731, %v2728
  %v2777 = vpack.c.b16 %v2732, %v2729
  %v2778 = vpack.c.b16 %v2736, %v2733
  %v2779 = vpack.c.b16 %v2737, %v2734
  %v2780 = vpack.c.b16 %v2738, %v2735
  %v2781 = vpack.c.b16 %v2742, %v2739
  %v2782 = vpack.c.b16 %v2743, %v2740
  %v2783 = vpack.c.b16 %v2744, %v2741
  %v2784 = vpack.c.b16 %v2748, %v2745
  %v2785 = vpack.c.b16 %v2749, %v2746
  %v2786 = vpack.c.b16 %v2750, %v2747
  %v2787 = vpack.c.b16 %v2754, %v2751
  %v2788 = vpack.c.b16 %v2755, %v2752
  %v2789 = vpack.c.b16 %v2756, %v2753
  %v2790 = vpack.c.b16 %v2760, %v2757
  %v2791 = vpack.c.b16 %v2761, %v2758
  %v2792 = vpack.c.b16 %v2762, %v2759
  %v2793 = vpack.c.b16 %v2766, %v2763
  %v2794 = vpack.c.b16 %v2767, %v2764
  %v2795 = vpack.c.b16 %v2768, %v2765
  %v2796 = vpack.c.b16 %v2772, %v2769
  %v2797 = vpack.c.b16 %v2773, %v2770
  %v2798 = vpack.c.b16 %v2774, %v2771
  %2823 = vmatprep.subr.bf16.mxu0 %v2776
  %2824 = vmatpush1.bf16.msra.mxu0 %v2775
  %2825 = vmatprep.subr.bf16.mxu0 %v2779
  %2826 = vmatpush1.bf16.msra.mxu0 %v2778
  %2827 = vmatprep.subr.bf16.mxu0 %v2782
  %2828 = vmatpush1.bf16.msra.mxu0 %v2781
  %2829 = vmatprep.subr.bf16.mxu0 %v2785
  %2830 = vmatpush1.bf16.msra.mxu0 %v2784
  %2831 = vmatprep.subr.bf16.mxu0 %v2788
  %2832 = vmatpush1.bf16.msra.mxu0 %v2787
  %2833 = vmatprep.subr.bf16.mxu0 %v2791
  %2834 = vmatpush1.bf16.msra.mxu0 %v2790
  %2835 = vmatprep.subr.bf16.mxu0 %v2794
  %2836 = vmatpush1.bf16.msra.mxu0 %v2793
  %2837 = vmatprep.subr.bf16.mxu0 %v2797
  %2838 = vmatpush1.bf16.msra.mxu0 %v2796
  %2839 = vmatprep.subr.bf16.mxu0 0
  %2840 = vmatpush1.bf16.msra.mxu0 0
  %2841 = vmatprep.subr.bf16.mxu0 0
  %2842 = vmatpush1.bf16.msra.mxu0 0
  %2843 = vmatprep.subr.bf16.mxu0 0
  %2844 = vmatpush1.bf16.msra.mxu0 0
  %2845 = vmatprep.subr.bf16.mxu0 0
  %2846 = vmatpush1.bf16.msra.mxu0 0
  %2847 = vmatprep.subr.bf16.mxu0 0
  %2848 = vmatpush1.bf16.msra.mxu0 0
  %2849 = vmatprep.subr.bf16.mxu0 0
  %2850 = vmatpush1.bf16.msra.mxu0 0
  %2851 = vmatprep.subr.bf16.mxu0 0
  %2852 = vmatpush1.bf16.msra.mxu0 0
  %2853 = vmatprep.subr.bf16.mxu0 0
  %2854 = vmatpush1.bf16.msra.mxu0 0
  %2855 = vmatprep.mubr.bf16.mxu0 0
  %2856 = vmatmul.mubr.bf16.gmra.mrb[0].mxu0 %v2662
  %v2857 = vpop.f32.mrb[0].mxu0
  %v2858 = vadd.f32 0.0, %v2857
  %v2859 = vpop.f32.mrb[0].mxu0
  %v2860 = vadd.f32 0.0, %v2859
  %v2861 = vpop.f32.mrb[0].mxu0
  %v2862 = vadd.f32 0.0, %v2861
  %v2863 = vpop.f32.mrb[0].mxu0
  %v2864 = vadd.f32 0.0, %v2863
  %2865 = vdwg.mxu0
  %2866 = vmatprep.subr.bf16.mxu0 0
  %2867 = vmatpush1.bf16.msra.mxu0 %v2777
  %2868 = vmatprep.subr.bf16.mxu0 0
  %2869 = vmatpush1.bf16.msra.mxu0 %v2780
  %2870 = vmatprep.subr.bf16.mxu0 0
  %2871 = vmatpush1.bf16.msra.mxu0 %v2783
  %2872 = vmatprep.subr.bf16.mxu0 0
  %2873 = vmatpush1.bf16.msra.mxu0 %v2786
  %2874 = vmatprep.subr.bf16.mxu0 0
  %2875 = vmatpush1.bf16.msra.mxu0 %v2789
  %2876 = vmatprep.subr.bf16.mxu0 0
  %2877 = vmatpush1.bf16.msra.mxu0 %v2792
  %2878 = vmatprep.subr.bf16.mxu0 0
  %2879 = vmatpush1.bf16.msra.mxu0 %v2795
  %2880 = vmatprep.subr.bf16.mxu0 0
  %2881 = vmatpush1.bf16.msra.mxu0 %v2798
  %2882 = vmatprep.subr.bf16.mxu0 0
  %2883 = vmatpush1.bf16.msra.mxu0 0
  %2884 = vmatprep.subr.bf16.mxu0 0
  %2885 = vmatpush1.bf16.msra.mxu0 0
  %2886 = vmatprep.subr.bf16.mxu0 0
  %2887 = vmatpush1.bf16.msra.mxu0 0
  %2888 = vmatprep.subr.bf16.mxu0 0
  %2889 = vmatpush1.bf16.msra.mxu0 0
  %2890 = vmatprep.subr.bf16.mxu0 0
  %2891 = vmatpush1.bf16.msra.mxu0 0
  %2892 = vmatprep.subr.bf16.mxu0 0
  %2893 = vmatpush1.bf16.msra.mxu0 0
  %2894 = vmatprep.subr.bf16.mxu0 0
  %2895 = vmatpush1.bf16.msra.mxu0 0
  %2896 = vmatprep.subr.bf16.mxu0 0
  %2897 = vmatpush1.bf16.msra.mxu0 0
  %2898 = vmatprep.mubr.bf16.mxu0 0
  %2899 = vmatmul.mubr.bf16.gmra.mrb[0].mxu0 %v2662
  %v2900 = vpop.f32.mrb[0].mxu0
  %v2901 = vadd.f32 0.0, %v2900
  %v2902 = vpop.f32.mrb[0].mxu0
  %v2903 = vpop.f32.mrb[0].mxu0
  %v2904 = vadd.f32 0.0, %v2903
  %v2905 = vpop.f32.mrb[0].mxu0
  %2906 = vdwg.mxu0
  %v2907 = vadd.f32 %v2656, %v2858
  %v2908 = vadd.f32 %v2657, %v2860
  %v2909 = vadd.f32 %v2658, %v2901
  %v2910 = vadd.f32 %v2659, %v2862
  %v2911 = vadd.f32 %v2660, %v2864
  %v2912 = vadd.f32 %v2661, %v2904
  %s2913 = scalar_lea.vmem [#allocation3], 96
  %v2914 = vld [vmem:[%s2913] sm:$0xff]
  %v2915 = vld [vmem:[%s2913 + $0x8] sm:$0xff]
  %v2916 = vld [vmem:[%s2913 + $0x10] sm:$0xff]
  %v2917 = vunpack.c.l.bf16 %v2914
  %v2918 = vunpack.c.l.bf16 %v2915
  %v2919 = vunpack.c.l.bf16 %v2916
  %v2920 = vunpack.c.h.bf16 %v2914
  %v2921 = vunpack.c.h.bf16 %v2915
  %v2922 = vunpack.c.h.bf16 %v2916
  %v2923 = vpack.c.bf16 %v2645, %v2644
  %v2924 = vld [vmem:[%s1112] sm:$0xff]
  %v2925 = vld [vmem:[%s1112 + $0x8] sm:$0xf]
  %v2926 = vld [vmem:[%s1112 + $0xc] sm:$0xff]
  %v2927 = vld [vmem:[%s1112 + $0x14] sm:$0xf]
  %v2928 = vld [vmem:[%s1112 + $0x18] sm:$0xff]
  %v2929 = vld [vmem:[%s1112 + $0x20] sm:$0xf]
  %v2930 = vld [vmem:[%s1112 + $0x24] sm:$0xff]
  %v2931 = vld [vmem:[%s1112 + $0x2c] sm:$0xf]
  %v2932 = vld [vmem:[%s1112 + $0x30] sm:$0xff]
  %v2933 = vld [vmem:[%s1112 + $0x38] sm:$0xf]
  %v2934 = vld [vmem:[%s1112 + $0x3c] sm:$0xff]
  %v2935 = vld [vmem:[%s1112 + $0x44] sm:$0xf]
  %v2936 = vld [vmem:[%s1112 + $0x48] sm:$0xff]
  %v2937 = vld [vmem:[%s1112 + $0x50] sm:$0xf]
  %v2938 = vld [vmem:[%s1112 + $0x54] sm:$0xff]
  %v2939 = vld [vmem:[%s1112 + $0x5c] sm:$0xf]
  %v2940 = vld [vmem:[%s1112 + $0x60] sm:$0xff]
  %v2941 = vld [vmem:[%s1112 + $0x68] sm:$0xf]
  %v2942 = vld [vmem:[%s1112 + $0x6c] sm:$0xff]
  %v2943 = vld [vmem:[%s1112 + $0x74] sm:$0xf]
  %v2944 = vld [vmem:[%s1112 + $0x78] sm:$0xff]
  %v2945 = vld [vmem:[%s1112 + $0x80] sm:$0xf]
  %v2946 = vld [vmem:[%s1112 + $0x84] sm:$0xff]
  %v2947 = vld [vmem:[%s1112 + $0x8c] sm:$0xf]
  %v2948 = vld [vmem:[%s1112 + $0x90] sm:$0xff]
  %v2949 = vld [vmem:[%s1112 + $0x98] sm:$0xf]
  %v2950 = vld [vmem:[%s1112 + $0x9c] sm:$0xff]
  %v2951 = vld [vmem:[%s1112 + $0xa4] sm:$0xf]
  %v2952 = vld [vmem:[%s1112 + $0xa8] sm:$0xff]
  %v2953 = vld [vmem:[%s1112 + $0xb0] sm:$0xf]
  %v2954 = vld [vmem:[%s1112 + $0xb4] sm:$0xff]
  %v2955 = vld [vmem:[%s1112 + $0xbc] sm:$0xf]
  %v2988 = vunpack.c.l.b16 %v2924
  %v2989 = vunpack.c.h.b16 %v2924
  %v2990 = vunpack.c.l.b16 %v2925
  %v2991 = vunpack.c.l.b16 %v2926
  %v2992 = vunpack.c.h.b16 %v2926
  %v2993 = vunpack.c.l.b16 %v2927
  %v2994 = vunpack.c.l.b16 %v2928
  %v2995 = vunpack.c.h.b16 %v2928
  %v2996 = vunpack.c.l.b16 %v2929
  %v2997 = vunpack.c.l.b16 %v2930
  %v2998 = vunpack.c.h.b16 %v2930
  %v2999 = vunpack.c.l.b16 %v2931
  %v3000 = vunpack.c.l.b16 %v2932
  %v3001 = vunpack.c.h.b16 %v2932
  %v3002 = vunpack.c.l.b16 %v2933
  %v3003 = vunpack.c.l.b16 %v2934
  %v3004 = vunpack.c.h.b16 %v2934
  %v3005 = vunpack.c.l.b16 %v2935
  %v3006 = vunpack.c.l.b16 %v2936
  %v3007 = vunpack.c.h.b16 %v2936
  %v3008 = vunpack.c.l.b16 %v2937
  %v3009 = vunpack.c.l.b16 %v2938
  %v3010 = vunpack.c.h.b16 %v2938
  %v3011 = vunpack.c.l.b16 %v2939
  %v3012 = vunpack.c.l.b16 %v2940
  %v3013 = vunpack.c.h.b16 %v2940
  %v3014 = vunpack.c.l.b16 %v2941
  %v3015 = vunpack.c.l.b16 %v2942
  %v3016 = vunpack.c.h.b16 %v2942
  %v3017 = vunpack.c.l.b16 %v2943
  %v3018 = vunpack.c.l.b16 %v2944
  %v3019 = vunpack.c.h.b16 %v2944
  %v3020 = vunpack.c.l.b16 %v2945
  %v3021 = vunpack.c.l.b16 %v2946
  %v3022 = vunpack.c.h.b16 %v2946
  %v3023 = vunpack.c.l.b16 %v2947
  %v3024 = vunpack.c.l.b16 %v2948
  %v3025 = vunpack.c.h.b16 %v2948
  %v3026 = vunpack.c.l.b16 %v2949
  %v3027 = vunpack.c.l.b16 %v2950
  %v3028 = vunpack.c.h.b16 %v2950
  %v3029 = vunpack.c.l.b16 %v2951
  %v3030 = vunpack.c.l.b16 %v2952
  %v3031 = vunpack.c.h.b16 %v2952
  %v3032 = vunpack.c.l.b16 %v2953
  %v3033 = vunpack.c.l.b16 %v2954
  %v3034 = vunpack.c.h.b16 %v2954
  %v3035 = vunpack.c.l.b16 %v2955
  %v3036 = vpack.c.b16 %v2991, %v2988
  %v3037 = vpack.c.b16 %v2992, %v2989
  %v3038 = vpack.c.b16 %v2993, %v2990
  %v3039 = vpack.c.b16 %v2997, %v2994
  %v3040 = vpack.c.b16 %v2998, %v2995
  %v3041 = vpack.c.b16 %v2999, %v2996
  %v3042 = vpack.c.b16 %v3003, %v3000
  %v3043 = vpack.c.b16 %v3004, %v3001
  %v3044 = vpack.c.b16 %v3005, %v3002
  %v3045 = vpack.c.b16 %v3009, %v3006
  %v3046 = vpack.c.b16 %v3010, %v3007
  %v3047 = vpack.c.b16 %v3011, %v3008
  %v3048 = vpack.c.b16 %v3015, %v3012
  %v3049 = vpack.c.b16 %v3016, %v3013
  %v3050 = vpack.c.b16 %v3017, %v3014
  %v3051 = vpack.c.b16 %v3021, %v3018
  %v3052 = vpack.c.b16 %v3022, %v3019
  %v3053 = vpack.c.b16 %v3023, %v3020
  %v3054 = vpack.c.b16 %v3027, %v3024
  %v3055 = vpack.c.b16 %v3028, %v3025
  %v3056 = vpack.c.b16 %v3029, %v3026
  %v3057 = vpack.c.b16 %v3033, %v3030
  %v3058 = vpack.c.b16 %v3034, %v3031
  %v3059 = vpack.c.b16 %v3035, %v3032
  %3084 = vmatprep.subr.bf16.mxu0 %v3037
  %3085 = vmatpush1.bf16.msra.mxu0 %v3036
  %3086 = vmatprep.subr.bf16.mxu0 %v3040
  %3087 = vmatpush1.bf16.msra.mxu0 %v3039
  %3088 = vmatprep.subr.bf16.mxu0 %v3043
  %3089 = vmatpush1.bf16.msra.mxu0 %v3042
  %3090 = vmatprep.subr.bf16.mxu0 %v3046
  %3091 = vmatpush1.bf16.msra.mxu0 %v3045
  %3092 = vmatprep.subr.bf16.mxu0 %v3049
  %3093 = vmatpush1.bf16.msra.mxu0 %v3048
  %3094 = vmatprep.subr.bf16.mxu0 %v3052
  %3095 = vmatpush1.bf16.msra.mxu0 %v3051
  %3096 = vmatprep.subr.bf16.mxu0 %v3055
  %3097 = vmatpush1.bf16.msra.mxu0 %v3054
  %3098 = vmatprep.subr.bf16.mxu0 %v3058
  %3099 = vmatpush1.bf16.msra.mxu0 %v3057
  %3100 = vmatprep.subr.bf16.mxu0 0
  %3101 = vmatpush1.bf16.msra.mxu0 0
  %3102 = vmatprep.subr.bf16.mxu0 0
  %3103 = vmatpush1.bf16.msra.mxu0 0
  %3104 = vmatprep.subr.bf16.mxu0 0
  %3105 = vmatpush1.bf16.msra.mxu0 0
  %3106 = vmatprep.subr.bf16.mxu0 0
  %3107 = vmatpush1.bf16.msra.mxu0 0
  %3108 = vmatprep.subr.bf16.mxu0 0
  %3109 = vmatpush1.bf16.msra.mxu0 0
  %3110 = vmatprep.subr.bf16.mxu0 0
  %3111 = vmatpush1.bf16.msra.mxu0 0
  %3112 = vmatprep.subr.bf16.mxu0 0
  %3113 = vmatpush1.bf16.msra.mxu0 0
  %3114 = vmatprep.subr.bf16.mxu0 0
  %3115 = vmatpush1.bf16.msra.mxu0 0
  %3116 = vmatprep.mubr.bf16.mxu0 0
  %3117 = vmatmul.mubr.bf16.gmra.mrb[0].mxu0 %v2923
  %v3118 = vpop.f32.mrb[0].mxu0
  %v3119 = vadd.f32 0.0, %v3118
  %v3120 = vpop.f32.mrb[0].mxu0
  %v3121 = vadd.f32 0.0, %v3120
  %v3122 = vpop.f32.mrb[0].mxu0
  %v3123 = vadd.f32 0.0, %v3122
  %v3124 = vpop.f32.mrb[0].mxu0
  %v3125 = vadd.f32 0.0, %v3124
  %3126 = vdwg.mxu0
  %3127 = vmatprep.subr.bf16.mxu0 0
  %3128 = vmatpush1.bf16.msra.mxu0 %v3038
  %3129 = vmatprep.subr.bf16.mxu0 0
  %3130 = vmatpush1.bf16.msra.mxu0 %v3041
  %3131 = vmatprep.subr.bf16.mxu0 0
  %3132 = vmatpush1.bf16.msra.mxu0 %v3044
  %3133 = vmatprep.subr.bf16.mxu0 0
  %3134 = vmatpush1.bf16.msra.mxu0 %v3047
  %3135 = vmatprep.subr.bf16.mxu0 0
  %3136 = vmatpush1.bf16.msra.mxu0 %v3050
  %3137 = vmatprep.subr.bf16.mxu0 0
  %3138 = vmatpush1.bf16.msra.mxu0 %v3053
  %3139 = vmatprep.subr.bf16.mxu0 0
  %3140 = vmatpush1.bf16.msra.mxu0 %v3056
  %3141 = vmatprep.subr.bf16.mxu0 0
  %3142 = vmatpush1.bf16.msra.mxu0 %v3059
  %3143 = vmatprep.subr.bf16.mxu0 0
  %3144 = vmatpush1.bf16.msra.mxu0 0
  %3145 = vmatprep.subr.bf16.mxu0 0
  %3146 = vmatpush1.bf16.msra.mxu0 0
  %3147 = vmatprep.subr.bf16.mxu0 0
  %3148 = vmatpush1.bf16.msra.mxu0 0
  %3149 = vmatprep.subr.bf16.mxu0 0
  %3150 = vmatpush1.bf16.msra.mxu0 0
  %3151 = vmatprep.subr.bf16.mxu0 0
  %3152 = vmatpush1.bf16.msra.mxu0 0
  %3153 = vmatprep.subr.bf16.mxu0 0
  %3154 = vmatpush1.bf16.msra.mxu0 0
  %3155 = vmatprep.subr.bf16.mxu0 0
  %3156 = vmatpush1.bf16.msra.mxu0 0
  %3157 = vmatprep.subr.bf16.mxu0 0
  %3158 = vmatpush1.bf16.msra.mxu0 0
  %3159 = vmatprep.mubr.bf16.mxu0 0
  %3160 = vmatmul.mubr.bf16.gmra.mrb[0].mxu0 %v2923
  %v3161 = vpop.f32.mrb[0].mxu0
  %v3162 = vadd.f32 0.0, %v3161
  %v3163 = vpop.f32.mrb[0].mxu0
  %v3164 = vpop.f32.mrb[0].mxu0
  %v3165 = vadd.f32 0.0, %v3164
  %v3166 = vpop.f32.mrb[0].mxu0
  %3167 = vdwg.mxu0
  %v3168 = vadd.f32 %v2917, %v3119
  %v3169 = vadd.f32 %v2918, %v3121
  %v3170 = vadd.f32 %v2919, %v3162
  %v3171 = vadd.f32 %v2920, %v3123
  %v3172 = vadd.f32 %v2921, %v3125
  %v3173 = vadd.f32 %v2922, %v3165
  %v3174 = vxor.u32 %v2907, 2147483648
  %v3175 = vxor.u32 %v2910, 2147483648
  %v3176 = vmul.f32 %v3174, 1.442695
  %v3177 = vpow.pop %v3176
  %v3178 = vmul.f32 %v3175, 1.442695
  %v3179 = vpow.pop %v3178
  %v3180 = vadd.f32 %v3177, 1.0
  %v3181 = vadd.f32 %v3179, 1.0
  %v3182 = vrcp.pop %v3180
  %v3183 = vmul.f32 1.0, %v3182
  %v3184 = vrcp.pop %v3181
  %v3185 = vmul.f32 1.0, %v3184
  %v3186 = vxor.u32 %v2908, 2147483648
  %v3187 = vxor.u32 %v2911, 2147483648
  %v3188 = vmul.f32 %v3186, 1.442695
  %v3189 = vpow.pop %v3188
  %v3190 = vmul.f32 %v3187, 1.442695
  %v3191 = vpow.pop %v3190
  %v3192 = vadd.f32 %v3189, 1.0
  %v3193 = vadd.f32 %v3191, 1.0
  %v3194 = vrcp.pop %v3192
  %v3195 = vmul.f32 1.0, %v3194
  %v3196 = vrcp.pop %v3193
  %v3197 = vmul.f32 1.0, %v3196
  %v3198 = vtanh.pop %v2909
  %v3199 = vtanh.pop %v2912
  %v3200 = vsub.f32 1.0, %v3183
  %v3201 = vsub.f32 1.0, %v3185
  %v3202 = vmul.f32 %v3200, %v2602
  %v3203 = vmul.f32 %v3201, %v2603
  %v3204 = vmul.f32 %v3183, %v3198
  %v3205 = vmul.f32 %v3185, %v3199
  %v3206 = vadd.f32 %v3202, %v3204
  %v3207 = vadd.f32 %v3203, %v3205
  %v3208 = vtanh.pop %v3206
  %v3209 = vtanh.pop %v3207
  %v3210 = vmul.f32 %v3195, %v3208
  %v3211 = vmul.f32 %v3197, %v3209
  %v3212 = vxor.u32 %v3168, 2147483648
  %v3213 = vxor.u32 %v3171, 2147483648
  %v3214 = vmul.f32 %v3212, 1.442695
  %v3215 = vpow.pop %v3214
  %v3216 = vmul.f32 %v3213, 1.442695
  %v3217 = vpow.pop %v3216
  %v3218 = vadd.f32 %v3215, 1.0
  %v3219 = vadd.f32 %v3217, 1.0
  %v3220 = vrcp.pop %v3218
  %v3221 = vmul.f32 1.0, %v3220
  %v3222 = vrcp.pop %v3219
  %v3223 = vmul.f32 1.0, %v3222
  %v3224 = vxor.u32 %v3169, 2147483648
  %v3225 = vxor.u32 %v3172, 2147483648
  %v3226 = vmul.f32 %v3224, 1.442695
  %v3227 = vpow.pop %v3226
  %v3228 = vmul.f32 %v3225, 1.442695
  %v3229 = vpow.pop %v3228
  %v3230 = vadd.f32 %v3227, 1.0
  %v3231 = vadd.f32 %v3229, 1.0
  %v3232 = vrcp.pop %v3230
  %v3233 = vmul.f32 1.0, %v3232
  %v3234 = vrcp.pop %v3231
  %v3235 = vmul.f32 1.0, %v3234
  %v3236 = vtanh.pop %v3170
  %v3237 = vtanh.pop %v3173
  %v3238 = vsub.f32 1.0, %v3221
  %v3239 = vsub.f32 1.0, %v3223
  %v3240 = vmul.f32 %v3238, %v2640
  %v3241 = vmul.f32 %v3239, %v2641
  %v3242 = vmul.f32 %v3221, %v3236
  %v3243 = vmul.f32 %v3223, %v3237
  %v3244 = vadd.f32 %v3240, %v3242
  %v3245 = vadd.f32 %v3241, %v3243
  %v3246 = vtanh.pop %v3244
  %v3247 = vtanh.pop %v3245
  %v3248 = vmul.f32 %v3233, %v3246
  %v3249 = vmul.f32 %v3235, %v3247
  %s3250 = scalar_lea.vmem [#allocation4], 48
  %3251 = vst [vmem:[%s3250] sm:$0xff] %v3210
  %3252 = vst [vmem:[%s3250 + $0x8] sm:$0xff] %v3211
  %s3253 = scalar_lea.vmem [#allocation5], 64
  %3254 = vst [vmem:[%s3253] sm:$0xff] %v3248
  %3255 = vst [vmem:[%s3253 + $0x8] sm:$0xff] %v3249
  %s3256 = scalar_lea.vmem [#allocation2], 96
  %v3257 = vld [vmem:[%s3256] sm:$0xff]
  %v3258 = vld [vmem:[%s3256 + $0x8] sm:$0xff]
  %v3259 = vld [vmem:[%s3256 + $0x10] sm:$0xff]
  %v3260 = vunpack.c.l.bf16 %v3257
  %v3261 = vunpack.c.l.bf16 %v3258
  %v3262 = vunpack.c.l.bf16 %v3259
  %v3263 = vunpack.c.h.bf16 %v3257
  %v3264 = vunpack.c.h.bf16 %v3258
  %v3265 = vunpack.c.h.bf16 %v3259
  %v3266 = vpack.c.bf16 %v3211, %v3210
  %v3267 = vld [vmem:[%s3] sm:$0xff]
  %v3268 = vld [vmem:[%s3 + $0x8] sm:$0xf]
  %v3269 = vld [vmem:[%s3 + $0xc] sm:$0xff]
  %v3270 = vld [vmem:[%s3 + $0x14] sm:$0xf]
  %v3271 = vld [vmem:[%s3 + $0x18] sm:$0xff]
  %v3272 = vld [vmem:[%s3 + $0x20] sm:$0xf]
  %v3273 = vld [vmem:[%s3 + $0x24] sm:$0xff]
  %v3274 = vld [vmem:[%s3 + $0x2c] sm:$0xf]
  %v3275 = vld [vmem:[%s3 + $0x30] sm:$0xff]
  %v3276 = vld [vmem:[%s3 + $0x38] sm:$0xf]
  %v3277 = vld [vmem:[%s3 + $0x3c] sm:$0xff]
  %v3278 = vld [vmem:[%s3 + $0x44] sm:$0xf]
  %v3279 = vld [vmem:[%s3 + $0x48] sm:$0xff]
  %v3280 = vld [vmem:[%s3 + $0x50] sm:$0xf]
  %v3281 = vld [vmem:[%s3 + $0x54] sm:$0xff]
  %v3282 = vld [vmem:[%s3 + $0x5c] sm:$0xf]
  %v3283 = vld [vmem:[%s3 + $0x60] sm:$0xff]
  %v3284 = vld [vmem:[%s3 + $0x68] sm:$0xf]
  %v3285 = vld [vmem:[%s3 + $0x6c] sm:$0xff]
  %v3286 = vld [vmem:[%s3 + $0x74] sm:$0xf]
  %v3287 = vld [vmem:[%s3 + $0x78] sm:$0xff]
  %v3288 = vld [vmem:[%s3 + $0x80] sm:$0xf]
  %v3289 = vld [vmem:[%s3 + $0x84] sm:$0xff]
  %v3290 = vld [vmem:[%s3 + $0x8c] sm:$0xf]
  %v3291 = vld [vmem:[%s3 + $0x90] sm:$0xff]
  %v3292 = vld [vmem:[%s3 + $0x98] sm:$0xf]
  %v3293 = vld [vmem:[%s3 + $0x9c] sm:$0xff]
  %v3294 = vld [vmem:[%s3 + $0xa4] sm:$0xf]
  %v3295 = vld [vmem:[%s3 + $0xa8] sm:$0xff]
  %v3296 = vld [vmem:[%s3 + $0xb0] sm:$0xf]
  %v3297 = vld [vmem:[%s3 + $0xb4] sm:$0xff]
  %v3298 = vld [vmem:[%s3 + $0xbc] sm:$0xf]
  %v3331 = vunpack.c.l.b16 %v3267
  %v3332 = vunpack.c.h.b16 %v3267
  %v3333 = vunpack.c.l.b16 %v3268
  %v3334 = vunpack.c.l.b16 %v3269
  %v3335 = vunpack.c.h.b16 %v3269
  %v3336 = vunpack.c.l.b16 %v3270
  %v3337 = vunpack.c.l.b16 %v3271
  %v3338 = vunpack.c.h.b16 %v3271
  %v3339 = vunpack.c.l.b16 %v3272
  %v3340 = vunpack.c.l.b16 %v3273
  %v3341 = vunpack.c.h.b16 %v3273
  %v3342 = vunpack.c.l.b16 %v3274
  %v3343 = vunpack.c.l.b16 %v3275
  %v3344 = vunpack.c.h.b16 %v3275
  %v3345 = vunpack.c.l.b16 %v3276
  %v3346 = vunpack.c.l.b16 %v3277
  %v3347 = vunpack.c.h.b16 %v3277
  %v3348 = vunpack.c.l.b16 %v3278
  %v3349 = vunpack.c.l.b16 %v3279
  %v3350 = vunpack.c.h.b16 %v3279
  %v3351 = vunpack.c.l.b16 %v3280
  %v3352 = vunpack.c.l.b16 %v3281
  %v3353 = vunpack.c.h.b16 %v3281
  %v3354 = vunpack.c.l.b16 %v3282
  %v3355 = vunpack.c.l.b16 %v3283
  %v3356 = vunpack.c.h.b16 %v3283
  %v3357 = vunpack.c.l.b16 %v3284
  %v3358 = vunpack.c.l.b16 %v3285
  %v3359 = vunpack.c.h.b16 %v3285
  %v3360 = vunpack.c.l.b16 %v3286
  %v3361 = vunpack.c.l.b16 %v3287
  %v3362 = vunpack.c.h.b16 %v3287
  %v3363 = vunpack.c.l.b16 %v3288
  %v3364 = vunpack.c.l.b16 %v3289
  %v3365 = vunpack.c.h.b16 %v3289
  %v3366 = vunpack.c.l.b16 %v3290
  %v3367 = vunpack.c.l.b16 %v3291
  %v3368 = vunpack.c.h.b16 %v3291
  %v3369 = vunpack.c.l.b16 %v3292
  %v3370 = vunpack.c.l.b16 %v3293
  %v3371 = vunpack.c.h.b16 %v3293
  %v3372 = vunpack.c.l.b16 %v3294
  %v3373 = vunpack.c.l.b16 %v3295
  %v3374 = vunpack.c.h.b16 %v3295
  %v3375 = vunpack.c.l.b16 %v3296
  %v3376 = vunpack.c.l.b16 %v3297
  %v3377 = vunpack.c.h.b16 %v3297
  %v3378 = vunpack.c.l.b16 %v3298
  %v3379 = vpack.c.b16 %v3334, %v3331
  %v3380 = vpack.c.b16 %v3335, %v3332
  %v3381 = vpack.c.b16 %v3336, %v3333
  %v3382 = vpack.c.b16 %v3340, %v3337
  %v3383 = vpack.c.b16 %v3341, %v3338
  %v3384 = vpack.c.b16 %v3342, %v3339
  %v3385 = vpack.c.b16 %v3346, %v3343
  %v3386 = vpack.c.b16 %v3347, %v3344
  %v3387 = vpack.c.b16 %v3348, %v3345
  %v3388 = vpack.c.b16 %v3352, %v3349
  %v3389 = vpack.c.b16 %v3353, %v3350
  %v3390 = vpack.c.b16 %v3354, %v3351
  %v3391 = vpack.c.b16 %v3358, %v3355
  %v3392 = vpack.c.b16 %v3359, %v3356
  %v3393 = vpack.c.b16 %v3360, %v3357
  %v3394 = vpack.c.b16 %v3364, %v3361
  %v3395 = vpack.c.b16 %v3365, %v3362
  %v3396 = vpack.c.b16 %v3366, %v3363
  %v3397 = vpack.c.b16 %v3370, %v3367
  %v3398 = vpack.c.b16 %v3371, %v3368
  %v3399 = vpack.c.b16 %v3372, %v3369
  %v3400 = vpack.c.b16 %v3376, %v3373
  %v3401 = vpack.c.b16 %v3377, %v3374
  %v3402 = vpack.c.b16 %v3378, %v3375
  %3427 = vmatprep.subr.bf16.mxu0 %v3380
  %3428 = vmatpush1.bf16.msra.mxu0 %v3379
  %3429 = vmatprep.subr.bf16.mxu0 %v3383
  %3430 = vmatpush1.bf16.msra.mxu0 %v3382
  %3431 = vmatprep.subr.bf16.mxu0 %v3386
  %3432 = vmatpush1.bf16.msra.mxu0 %v3385
  %3433 = vmatprep.subr.bf16.mxu0 %v3389
  %3434 = vmatpush1.bf16.msra.mxu0 %v3388
  %3435 = vmatprep.subr.bf16.mxu0 %v3392
  %3436 = vmatpush1.bf16.msra.mxu0 %v3391
  %3437 = vmatprep.subr.bf16.mxu0 %v3395
  %3438 = vmatpush1.bf16.msra.mxu0 %v3394
  %3439 = vmatprep.subr.bf16.mxu0 %v3398
  %3440 = vmatpush1.bf16.msra.mxu0 %v3397
  %3441 = vmatprep.subr.bf16.mxu0 %v3401
  %3442 = vmatpush1.bf16.msra.mxu0 %v3400
  %3443 = vmatprep.subr.bf16.mxu0 0
  %3444 = vmatpush1.bf16.msra.mxu0 0
  %3445 = vmatprep.subr.bf16.mxu0 0
  %3446 = vmatpush1.bf16.msra.mxu0 0
  %3447 = vmatprep.subr.bf16.mxu0 0
  %3448 = vmatpush1.bf16.msra.mxu0 0
  %3449 = vmatprep.subr.bf16.mxu0 0
  %3450 = vmatpush1.bf16.msra.mxu0 0
  %3451 = vmatprep.subr.bf16.mxu0 0
  %3452 = vmatpush1.bf16.msra.mxu0 0
  %3453 = vmatprep.subr.bf16.mxu0 0
  %3454 = vmatpush1.bf16.msra.mxu0 0
  %3455 = vmatprep.subr.bf16.mxu0 0
  %3456 = vmatpush1.bf16.msra.mxu0 0
  %3457 = vmatprep.subr.bf16.mxu0 0
  %3458 = vmatpush1.bf16.msra.mxu0 0
  %3459 = vmatprep.mubr.bf16.mxu0 0
  %3460 = vmatmul.mubr.bf16.gmra.mrb[0].mxu0 %v3266
  %v3461 = vpop.f32.mrb[0].mxu0
  %v3462 = vadd.f32 0.0, %v3461
  %v3463 = vpop.f32.mrb[0].mxu0
  %v3464 = vadd.f32 0.0, %v3463
  %v3465 = vpop.f32.mrb[0].mxu0
  %v3466 = vadd.f32 0.0, %v3465
  %v3467 = vpop.f32.mrb[0].mxu0
  %v3468 = vadd.f32 0.0, %v3467
  %3469 = vdwg.mxu0
  %3470 = vmatprep.subr.bf16.mxu0 0
  %3471 = vmatpush1.bf16.msra.mxu0 %v3381
  %3472 = vmatprep.subr.bf16.mxu0 0
  %3473 = vmatpush1.bf16.msra.mxu0 %v3384
  %3474 = vmatprep.subr.bf16.mxu0 0
  %3475 = vmatpush1.bf16.msra.mxu0 %v3387
  %3476 = vmatprep.subr.bf16.mxu0 0
  %3477 = vmatpush1.bf16.msra.mxu0 %v3390
  %3478 = vmatprep.subr.bf16.mxu0 0
  %3479 = vmatpush1.bf16.msra.mxu0 %v3393
  %3480 = vmatprep.subr.bf16.mxu0 0
  %3481 = vmatpush1.bf16.msra.mxu0 %v3396
  %3482 = vmatprep.subr.bf16.mxu0 0
  %3483 = vmatpush1.bf16.msra.mxu0 %v3399
  %3484 = vmatprep.subr.bf16.mxu0 0
  %3485 = vmatpush1.bf16.msra.mxu0 %v3402
  %3486 = vmatprep.subr.bf16.mxu0 0
  %3487 = vmatpush1.bf16.msra.mxu0 0
  %3488 = vmatprep.subr.bf16.mxu0 0
  %3489 = vmatpush1.bf16.msra.mxu0 0
  %3490 = vmatprep.subr.bf16.mxu0 0
  %3491 = vmatpush1.bf16.msra.mxu0 0
  %3492 = vmatprep.subr.bf16.mxu0 0
  %3493 = vmatpush1.bf16.msra.mxu0 0
  %3494 = vmatprep.subr.bf16.mxu0 0
  %3495 = vmatpush1.bf16.msra.mxu0 0
  %3496 = vmatprep.subr.bf16.mxu0 0
  %3497 = vmatpush1.bf16.msra.mxu0 0
  %3498 = vmatprep.subr.bf16.mxu0 0
  %3499 = vmatpush1.bf16.msra.mxu0 0
  %3500 = vmatprep.subr.bf16.mxu0 0
  %3501 = vmatpush1.bf16.msra.mxu0 0
  %3502 = vmatprep.mubr.bf16.mxu0 0
  %3503 = vmatmul.mubr.bf16.gmra.mrb[0].mxu0 %v3266
  %v3504 = vpop.f32.mrb[0].mxu0
  %v3505 = vadd.f32 0.0, %v3504
  %v3506 = vpop.f32.mrb[0].mxu0
  %v3507 = vpop.f32.mrb[0].mxu0
  %v3508 = vadd.f32 0.0, %v3507
  %v3509 = vpop.f32.mrb[0].mxu0
  %3510 = vdwg.mxu0
  %v3511 = vadd.f32 %v3260, %v3462
  %v3512 = vadd.f32 %v3261, %v3464
  %v3513 = vadd.f32 %v3262, %v3505
  %v3514 = vadd.f32 %v3263, %v3466
  %v3515 = vadd.f32 %v3264, %v3468
  %v3516 = vadd.f32 %v3265, %v3508
  %s3517 = scalar_lea.vmem [#allocation3], 72
  %v3518 = vld [vmem:[%s3517] sm:$0xff]
  %v3519 = vld [vmem:[%s3517 + $0x8] sm:$0xff]
  %v3520 = vld [vmem:[%s3517 + $0x10] sm:$0xff]
  %v3521 = vunpack.c.l.bf16 %v3518
  %v3522 = vunpack.c.l.bf16 %v3519
  %v3523 = vunpack.c.l.bf16 %v3520
  %v3524 = vunpack.c.h.bf16 %v3518
  %v3525 = vunpack.c.h.bf16 %v3519
  %v3526 = vunpack.c.h.bf16 %v3520
  %v3527 = vpack.c.bf16 %v3249, %v3248
  %v3528 = vld [vmem:[%s1112] sm:$0xff]
  %v3529 = vld [vmem:[%s1112 + $0x8] sm:$0xf]
  %v3530 = vld [vmem:[%s1112 + $0xc] sm:$0xff]
  %v3531 = vld [vmem:[%s1112 + $0x14] sm:$0xf]
  %v3532 = vld [vmem:[%s1112 + $0x18] sm:$0xff]
  %v3533 = vld [vmem:[%s1112 + $0x20] sm:$0xf]
  %v3534 = vld [vmem:[%s1112 + $0x24] sm:$0xff]
  %v3535 = vld [vmem:[%s1112 + $0x2c] sm:$0xf]
  %v3536 = vld [vmem:[%s1112 + $0x30] sm:$0xff]
  %v3537 = vld [vmem:[%s1112 + $0x38] sm:$0xf]
  %v3538 = vld [vmem:[%s1112 + $0x3c] sm:$0xff]
  %v3539 = vld [vmem:[%s1112 + $0x44] sm:$0xf]
  %v3540 = vld [vmem:[%s1112 + $0x48] sm:$0xff]
  %v3541 = vld [vmem:[%s1112 + $0x50] sm:$0xf]
  %v3542 = vld [vmem:[%s1112 + $0x54] sm:$0xff]
  %v3543 = vld [vmem:[%s1112 + $0x5c] sm:$0xf]
  %v3544 = vld [vmem:[%s1112 + $0x60] sm:$0xff]
  %v3545 = vld [vmem:[%s1112 + $0x68] sm:$0xf]
  %v3546 = vld [vmem:[%s1112 + $0x6c] sm:$0xff]
  %v3547 = vld [vmem:[%s1112 + $0x74] sm:$0xf]
  %v3548 = vld [vmem:[%s1112 + $0x78] sm:$0xff]
  %v3549 = vld [vmem:[%s1112 + $0x80] sm:$0xf]
  %v3550 = vld [vmem:[%s1112 + $0x84] sm:$0xff]
  %v3551 = vld [vmem:[%s1112 + $0x8c] sm:$0xf]
  %v3552 = vld [vmem:[%s1112 + $0x90] sm:$0xff]
  %v3553 = vld [vmem:[%s1112 + $0x98] sm:$0xf]
  %v3554 = vld [vmem:[%s1112 + $0x9c] sm:$0xff]
  %v3555 = vld [vmem:[%s1112 + $0xa4] sm:$0xf]
  %v3556 = vld [vmem:[%s1112 + $0xa8] sm:$0xff]
  %v3557 = vld [vmem:[%s1112 + $0xb0] sm:$0xf]
  %v3558 = vld [vmem:[%s1112 + $0xb4] sm:$0xff]
  %v3559 = vld [vmem:[%s1112 + $0xbc] sm:$0xf]
  %v3592 = vunpack.c.l.b16 %v3528
  %v3593 = vunpack.c.h.b16 %v3528
  %v3594 = vunpack.c.l.b16 %v3529
  %v3595 = vunpack.c.l.b16 %v3530
  %v3596 = vunpack.c.h.b16 %v3530
  %v3597 = vunpack.c.l.b16 %v3531
  %v3598 = vunpack.c.l.b16 %v3532
  %v3599 = vunpack.c.h.b16 %v3532
  %v3600 = vunpack.c.l.b16 %v3533
  %v3601 = vunpack.c.l.b16 %v3534
  %v3602 = vunpack.c.h.b16 %v3534
  %v3603 = vunpack.c.l.b16 %v3535
  %v3604 = vunpack.c.l.b16 %v3536
  %v3605 = vunpack.c.h.b16 %v3536
  %v3606 = vunpack.c.l.b16 %v3537
  %v3607 = vunpack.c.l.b16 %v3538
  %v3608 = vunpack.c.h.b16 %v3538
  %v3609 = vunpack.c.l.b16 %v3539
  %v3610 = vunpack.c.l.b16 %v3540
  %v3611 = vunpack.c.h.b16 %v3540
  %v3612 = vunpack.c.l.b16 %v3541
  %v3613 = vunpack.c.l.b16 %v3542
  %v3614 = vunpack.c.h.b16 %v3542
  %v3615 = vunpack.c.l.b16 %v3543
  %v3616 = vunpack.c.l.b16 %v3544
  %v3617 = vunpack.c.h.b16 %v3544
  %v3618 = vunpack.c.l.b16 %v3545
  %v3619 = vunpack.c.l.b16 %v3546
  %v3620 = vunpack.c.h.b16 %v3546
  %v3621 = vunpack.c.l.b16 %v3547
  %v3622 = vunpack.c.l.b16 %v3548
  %v3623 = vunpack.c.h.b16 %v3548
  %v3624 = vunpack.c.l.b16 %v3549
  %v3625 = vunpack.c.l.b16 %v3550
  %v3626 = vunpack.c.h.b16 %v3550
  %v3627 = vunpack.c.l.b16 %v3551
  %v3628 = vunpack.c.l.b16 %v3552
  %v3629 = vunpack.c.h.b16 %v3552
  %v3630 = vunpack.c.l.b16 %v3553
  %v3631 = vunpack.c.l.b16 %v3554
  %v3632 = vunpack.c.h.b16 %v3554
  %v3633 = vunpack.c.l.b16 %v3555
  %v3634 = vunpack.c.l.b16 %v3556
  %v3635 = vunpack.c.h.b16 %v3556
  %v3636 = vunpack.c.l.b16 %v3557
  %v3637 = vunpack.c.l.b16 %v3558
  %v3638 = vunpack.c.h.b16 %v3558
  %v3639 = vunpack.c.l.b16 %v3559
  %v3640 = vpack.c.b16 %v3595, %v3592
  %v3641 = vpack.c.b16 %v3596, %v3593
  %v3642 = vpack.c.b16 %v3597, %v3594
  %v3643 = vpack.c.b16 %v3601, %v3598
  %v3644 = vpack.c.b16 %v3602, %v3599
  %v3645 = vpack.c.b16 %v3603, %v3600
  %v3646 = vpack.c.b16 %v3607, %v3604
  %v3647 = vpack.c.b16 %v3608, %v3605
  %v3648 = vpack.c.b16 %v3609, %v3606
  %v3649 = vpack.c.b16 %v3613, %v3610
  %v3650 = vpack.c.b16 %v3614, %v3611
  %v3651 = vpack.c.b16 %v3615, %v3612
  %v3652 = vpack.c.b16 %v3619, %v3616
  %v3653 = vpack.c.b16 %v3620, %v3617
  %v3654 = vpack.c.b16 %v3621, %v3618
  %v3655 = vpack.c.b16 %v3625, %v3622
  %v3656 = vpack.c.b16 %v3626, %v3623
  %v3657 = vpack.c.b16 %v3627, %v3624
  %v3658 = vpack.c.b16 %v3631, %v3628
  %v3659 = vpack.c.b16 %v3632, %v3629
  %v3660 = vpack.c.b16 %v3633, %v3630
  %v3661 = vpack.c.b16 %v3637, %v3634
  %v3662 = vpack.c.b16 %v3638, %v3635
  %v3663 = vpack.c.b16 %v3639, %v3636
  %3688 = vmatprep.subr.bf16.mxu0 %v3641
  %3689 = vmatpush1.bf16.msra.mxu0 %v3640
  %3690 = vmatprep.subr.bf16.mxu0 %v3644
  %3691 = vmatpush1.bf16.msra.mxu0 %v3643
  %3692 = vmatprep.subr.bf16.mxu0 %v3647
  %3693 = vmatpush1.bf16.msra.mxu0 %v3646
  %3694 = vmatprep.subr.bf16.mxu0 %v3650
  %3695 = vmatpush1.bf16.msra.mxu0 %v3649
  %3696 = vmatprep.subr.bf16.mxu0 %v3653
  %3697 = vmatpush1.bf16.msra.mxu0 %v3652
  %3698 = vmatprep.subr.bf16.mxu0 %v3656
  %3699 = vmatpush1.bf16.msra.mxu0 %v3655
  %3700 = vmatprep.subr.bf16.mxu0 %v3659
  %3701 = vmatpush1.bf16.msra.mxu0 %v3658
  %3702 = vmatprep.subr.bf16.mxu0 %v3662
  %3703 = vmatpush1.bf16.msra.mxu0 %v3661
  %3704 = vmatprep.subr.bf16.mxu0 0
  %3705 = vmatpush1.bf16.msra.mxu0 0
  %3706 = vmatprep.subr.bf16.mxu0 0
  %3707 = vmatpush1.bf16.msra.mxu0 0
  %3708 = vmatprep.subr.bf16.mxu0 0
  %3709 = vmatpush1.bf16.msra.mxu0 0
  %3710 = vmatprep.subr.bf16.mxu0 0
  %3711 = vmatpush1.bf16.msra.mxu0 0
  %3712 = vmatprep.subr.bf16.mxu0 0
  %3713 = vmatpush1.bf16.msra.mxu0 0
  %3714 = vmatprep.subr.bf16.mxu0 0
  %3715 = vmatpush1.bf16.msra.mxu0 0
  %3716 = vmatprep.subr.bf16.mxu0 0
  %3717 = vmatpush1.bf16.msra.mxu0 0
  %3718 = vmatprep.subr.bf16.mxu0 0
  %3719 = vmatpush1.bf16.msra.mxu0 0
  %3720 = vmatprep.mubr.bf16.mxu0 0
  %3721 = vmatmul.mubr.bf16.gmra.mrb[0].mxu0 %v3527
  %v3722 = vpop.f32.mrb[0].mxu0
  %v3723 = vadd.f32 0.0, %v3722
  %v3724 = vpop.f32.mrb[0].mxu0
  %v3725 = vadd.f32 0.0, %v3724
  %v3726 = vpop.f32.mrb[0].mxu0
  %v3727 = vadd.f32 0.0, %v3726
  %v3728 = vpop.f32.mrb[0].mxu0
  %v3729 = vadd.f32 0.0, %v3728
  %3730 = vdwg.mxu0
  %3731 = vmatprep.subr.bf16.mxu0 0
  %3732 = vmatpush1.bf16.msra.mxu0 %v3642
  %3733 = vmatprep.subr.bf16.mxu0 0
  %3734 = vmatpush1.bf16.msra.mxu0 %v3645
  %3735 = vmatprep.subr.bf16.mxu0 0
  %3736 = vmatpush1.bf16.msra.mxu0 %v3648
  %3737 = vmatprep.subr.bf16.mxu0 0
  %3738 = vmatpush1.bf16.msra.mxu0 %v3651
  %3739 = vmatprep.subr.bf16.mxu0 0
  %3740 = vmatpush1.bf16.msra.mxu0 %v3654
  %3741 = vmatprep.subr.bf16.mxu0 0
  %3742 = vmatpush1.bf16.msra.mxu0 %v3657
  %3743 = vmatprep.subr.bf16.mxu0 0
  %3744 = vmatpush1.bf16.msra.mxu0 %v3660
  %3745 = vmatprep.subr.bf16.mxu0 0
  %3746 = vmatpush1.bf16.msra.mxu0 %v3663
  %3747 = vmatprep.subr.bf16.mxu0 0
  %3748 = vmatpush1.bf16.msra.mxu0 0
  %3749 = vmatprep.subr.bf16.mxu0 0
  %3750 = vmatpush1.bf16.msra.mxu0 0
  %3751 = vmatprep.subr.bf16.mxu0 0
  %3752 = vmatpush1.bf16.msra.mxu0 0
  %3753 = vmatprep.subr.bf16.mxu0 0
  %3754 = vmatpush1.bf16.msra.mxu0 0
  %3755 = vmatprep.subr.bf16.mxu0 0
  %3756 = vmatpush1.bf16.msra.mxu0 0
  %3757 = vmatprep.subr.bf16.mxu0 0
  %3758 = vmatpush1.bf16.msra.mxu0 0
  %3759 = vmatprep.subr.bf16.mxu0 0
  %3760 = vmatpush1.bf16.msra.mxu0 0
  %3761 = vmatprep.subr.bf16.mxu0 0
  %3762 = vmatpush1.bf16.msra.mxu0 0
  %3763 = vmatprep.mubr.bf16.mxu0 0
  %3764 = vmatmul.mubr.bf16.gmra.mrb[0].mxu0 %v3527
  %v3765 = vpop.f32.mrb[0].mxu0
  %v3766 = vadd.f32 0.0, %v3765
  %v3767 = vpop.f32.mrb[0].mxu0
  %v3768 = vpop.f32.mrb[0].mxu0
  %v3769 = vadd.f32 0.0, %v3768
  %v3770 = vpop.f32.mrb[0].mxu0
  %3771 = vdwg.mxu0
  %v3772 = vadd.f32 %v3521, %v3723
  %v3773 = vadd.f32 %v3522, %v3725
  %v3774 = vadd.f32 %v3523, %v3766
  %v3775 = vadd.f32 %v3524, %v3727
  %v3776 = vadd.f32 %v3525, %v3729
  %v3777 = vadd.f32 %v3526, %v3769
  %v3778 = vxor.u32 %v3511, 2147483648
  %v3779 = vxor.u32 %v3514, 2147483648
  %v3780 = vmul.f32 %v3778, 1.442695
  %v3781 = vpow.pop %v3780
  %v3782 = vmul.f32 %v3779, 1.442695
  %v3783 = vpow.pop %v3782
  %v3784 = vadd.f32 %v3781, 1.0
  %v3785 = vadd.f32 %v3783, 1.0
  %v3786 = vrcp.pop %v3784
  %v3787 = vmul.f32 1.0, %v3786
  %v3788 = vrcp.pop %v3785
  %v3789 = vmul.f32 1.0, %v3788
  %v3790 = vxor.u32 %v3512, 2147483648
  %v3791 = vxor.u32 %v3515, 2147483648
  %v3792 = vmul.f32 %v3790, 1.442695
  %v3793 = vpow.pop %v3792
  %v3794 = vmul.f32 %v3791, 1.442695
  %v3795 = vpow.pop %v3794
  %v3796 = vadd.f32 %v3793, 1.0
  %v3797 = vadd.f32 %v3795, 1.0
  %v3798 = vrcp.pop %v3796
  %v3799 = vmul.f32 1.0, %v3798
  %v3800 = vrcp.pop %v3797
  %v3801 = vmul.f32 1.0, %v3800
  %v3802 = vtanh.pop %v3513
  %v3803 = vtanh.pop %v3516
  %v3804 = vsub.f32 1.0, %v3787
  %v3805 = vsub.f32 1.0, %v3789
  %v3806 = vmul.f32 %v3804, %v3206
  %v3807 = vmul.f32 %v3805, %v3207
  %v3808 = vmul.f32 %v3787, %v3802
  %v3809 = vmul.f32 %v3789, %v3803
  %v3810 = vadd.f32 %v3806, %v3808
  %v3811 = vadd.f32 %v3807, %v3809
  %v3812 = vtanh.pop %v3810
  %v3813 = vtanh.pop %v3811
  %v3814 = vmul.f32 %v3799, %v3812
  %v3815 = vmul.f32 %v3801, %v3813
  %v3816 = vxor.u32 %v3772, 2147483648
  %v3817 = vxor.u32 %v3775, 2147483648
  %v3818 = vmul.f32 %v3816, 1.442695
  %v3819 = vpow.pop %v3818
  %v3820 = vmul.f32 %v3817, 1.442695
  %v3821 = vpow.pop %v3820
  %v3822 = vadd.f32 %v3819, 1.0
  %v3823 = vadd.f32 %v3821, 1.0
  %v3824 = vrcp.pop %v3822
  %v3825 = vmul.f32 1.0, %v3824
  %v3826 = vrcp.pop %v3823
  %v3827 = vmul.f32 1.0, %v3826
  %v3828 = vxor.u32 %v3773, 2147483648
  %v3829 = vxor.u32 %v3776, 2147483648
  %v3830 = vmul.f32 %v3828, 1.442695
  %v3831 = vpow.pop %v3830
  %v3832 = vmul.f32 %v3829, 1.442695
  %v3833 = vpow.pop %v3832
  %v3834 = vadd.f32 %v3831, 1.0
  %v3835 = vadd.f32 %v3833, 1.0
  %v3836 = vrcp.pop %v3834
  %v3837 = vmul.f32 1.0, %v3836
  %v3838 = vrcp.pop %v3835
  %v3839 = vmul.f32 1.0, %v3838
  %v3840 = vtanh.pop %v3774
  %v3841 = vtanh.pop %v3777
  %v3842 = vsub.f32 1.0, %v3825
  %v3843 = vsub.f32 1.0, %v3827
  %v3844 = vmul.f32 %v3842, %v3244
  %v3845 = vmul.f32 %v3843, %v3245
  %v3846 = vmul.f32 %v3825, %v3840
  %v3847 = vmul.f32 %v3827, %v3841
  %v3848 = vadd.f32 %v3844, %v3846
  %v3849 = vadd.f32 %v3845, %v3847
  %v3850 = vtanh.pop %v3848
  %v3851 = vtanh.pop %v3849
  %v3852 = vmul.f32 %v3837, %v3850
  %v3853 = vmul.f32 %v3839, %v3851
  %s3854 = scalar_lea.vmem [#allocation4], 64
  %3855 = vst [vmem:[%s3854] sm:$0xff] %v3814
  %3856 = vst [vmem:[%s3854 + $0x8] sm:$0xff] %v3815
  %s3857 = scalar_lea.vmem [#allocation5], 48
  %3858 = vst [vmem:[%s3857] sm:$0xff] %v3852
  %3859 = vst [vmem:[%s3857 + $0x8] sm:$0xff] %v3853
  %s3860 = scalar_lea.vmem [#allocation2], 120
  %v3861 = vld [vmem:[%s3860] sm:$0xff]
  %v3862 = vld [vmem:[%s3860 + $0x8] sm:$0xff]
  %v3863 = vld [vmem:[%s3860 + $0x10] sm:$0xff]
  %v3864 = vunpack.c.l.bf16 %v3861
  %v3865 = vunpack.c.l.bf16 %v3862
  %v3866 = vunpack.c.l.bf16 %v3863
  %v3867 = vunpack.c.h.bf16 %v3861
  %v3868 = vunpack.c.h.bf16 %v3862
  %v3869 = vunpack.c.h.bf16 %v3863
  %v3870 = vpack.c.bf16 %v3815, %v3814
  %v3871 = vld [vmem:[%s3] sm:$0xff]
  %v3872 = vld [vmem:[%s3 + $0x8] sm:$0xf]
  %v3873 = vld [vmem:[%s3 + $0xc] sm:$0xff]
  %v3874 = vld [vmem:[%s3 + $0x14] sm:$0xf]
  %v3875 = vld [vmem:[%s3 + $0x18] sm:$0xff]
  %v3876 = vld [vmem:[%s3 + $0x20] sm:$0xf]
  %v3877 = vld [vmem:[%s3 + $0x24] sm:$0xff]
  %v3878 = vld [vmem:[%s3 + $0x2c] sm:$0xf]
  %v3879 = vld [vmem:[%s3 + $0x30] sm:$0xff]
  %v3880 = vld [vmem:[%s3 + $0x38] sm:$0xf]
  %v3881 = vld [vmem:[%s3 + $0x3c] sm:$0xff]
  %v3882 = vld [vmem:[%s3 + $0x44] sm:$0xf]
  %v3883 = vld [vmem:[%s3 + $0x48] sm:$0xff]
  %v3884 = vld [vmem:[%s3 + $0x50] sm:$0xf]
  %v3885 = vld [vmem:[%s3 + $0x54] sm:$0xff]
  %v3886 = vld [vmem:[%s3 + $0x5c] sm:$0xf]
  %v3887 = vld [vmem:[%s3 + $0x60] sm:$0xff]
  %v3888 = vld [vmem:[%s3 + $0x68] sm:$0xf]
  %v3889 = vld [vmem:[%s3 + $0x6c] sm:$0xff]
  %v3890 = vld [vmem:[%s3 + $0x74] sm:$0xf]
  %v3891 = vld [vmem:[%s3 + $0x78] sm:$0xff]
  %v3892 = vld [vmem:[%s3 + $0x80] sm:$0xf]
  %v3893 = vld [vmem:[%s3 + $0x84] sm:$0xff]
  %v3894 = vld [vmem:[%s3 + $0x8c] sm:$0xf]
  %v3895 = vld [vmem:[%s3 + $0x90] sm:$0xff]
  %v3896 = vld [vmem:[%s3 + $0x98] sm:$0xf]
  %v3897 = vld [vmem:[%s3 + $0x9c] sm:$0xff]
  %v3898 = vld [vmem:[%s3 + $0xa4] sm:$0xf]
  %v3899 = vld [vmem:[%s3 + $0xa8] sm:$0xff]
  %v3900 = vld [vmem:[%s3 + $0xb0] sm:$0xf]
  %v3901 = vld [vmem:[%s3 + $0xb4] sm:$0xff]
  %v3902 = vld [vmem:[%s3 + $0xbc] sm:$0xf]
  %v3935 = vunpack.c.l.b16 %v3871
  %v3936 = vunpack.c.h.b16 %v3871
  %v3937 = vunpack.c.l.b16 %v3872
  %v3938 = vunpack.c.l.b16 %v3873
  %v3939 = vunpack.c.h.b16 %v3873
  %v3940 = vunpack.c.l.b16 %v3874
  %v3941 = vunpack.c.l.b16 %v3875
  %v3942 = vunpack.c.h.b16 %v3875
  %v3943 = vunpack.c.l.b16 %v3876
  %v3944 = vunpack.c.l.b16 %v3877
  %v3945 = vunpack.c.h.b16 %v3877
  %v3946 = vunpack.c.l.b16 %v3878
  %v3947 = vunpack.c.l.b16 %v3879
  %v3948 = vunpack.c.h.b16 %v3879
  %v3949 = vunpack.c.l.b16 %v3880
  %v3950 = vunpack.c.l.b16 %v3881
  %v3951 = vunpack.c.h.b16 %v3881
  %v3952 = vunpack.c.l.b16 %v3882
  %v3953 = vunpack.c.l.b16 %v3883
  %v3954 = vunpack.c.h.b16 %v3883
  %v3955 = vunpack.c.l.b16 %v3884
  %v3956 = vunpack.c.l.b16 %v3885
  %v3957 = vunpack.c.h.b16 %v3885
  %v3958 = vunpack.c.l.b16 %v3886
  %v3959 = vunpack.c.l.b16 %v3887
  %v3960 = vunpack.c.h.b16 %v3887
  %v3961 = vunpack.c.l.b16 %v3888
  %v3962 = vunpack.c.l.b16 %v3889
  %v3963 = vunpack.c.h.b16 %v3889
  %v3964 = vunpack.c.l.b16 %v3890
  %v3965 = vunpack.c.l.b16 %v3891
  %v3966 = vunpack.c.h.b16 %v3891
  %v3967 = vunpack.c.l.b16 %v3892
  %v3968 = vunpack.c.l.b16 %v3893
  %v3969 = vunpack.c.h.b16 %v3893
  %v3970 = vunpack.c.l.b16 %v3894
  %v3971 = vunpack.c.l.b16 %v3895
  %v3972 = vunpack.c.h.b16 %v3895
  %v3973 = vunpack.c.l.b16 %v3896
  %v3974 = vunpack.c.l.b16 %v3897
  %v3975 = vunpack.c.h.b16 %v3897
  %v3976 = vunpack.c.l.b16 %v3898
  %v3977 = vunpack.c.l.b16 %v3899
  %v3978 = vunpack.c.h.b16 %v3899
  %v3979 = vunpack.c.l.b16 %v3900
  %v3980 = vunpack.c.l.b16 %v3901
  %v3981 = vunpack.c.h.b16 %v3901
  %v3982 = vunpack.c.l.b16 %v3902
  %v3983 = vpack.c.b16 %v3938, %v3935
  %v3984 = vpack.c.b16 %v3939, %v3936
  %v3985 = vpack.c.b16 %v3940, %v3937
  %v3986 = vpack.c.b16 %v3944, %v3941
  %v3987 = vpack.c.b16 %v3945, %v3942
  %v3988 = vpack.c.b16 %v3946, %v3943
  %v3989 = vpack.c.b16 %v3950, %v3947
  %v3990 = vpack.c.b16 %v3951, %v3948
  %v3991 = vpack.c.b16 %v3952, %v3949
  %v3992 = vpack.c.b16 %v3956, %v3953
  %v3993 = vpack.c.b16 %v3957, %v3954
  %v3994 = vpack.c.b16 %v3958, %v3955
  %v3995 = vpack.c.b16 %v3962, %v3959
  %v3996 = vpack.c.b16 %v3963, %v3960
  %v3997 = vpack.c.b16 %v3964, %v3961
  %v3998 = vpack.c.b16 %v3968, %v3965
  %v3999 = vpack.c.b16 %v3969, %v3966
  %v4000 = vpack.c.b16 %v3970, %v3967
  %v4001 = vpack.c.b16 %v3974, %v3971
  %v4002 = vpack.c.b16 %v3975, %v3972
  %v4003 = vpack.c.b16 %v3976, %v3973
  %v4004 = vpack.c.b16 %v3980, %v3977
  %v4005 = vpack.c.b16 %v3981, %v3978
  %v4006 = vpack.c.b16 %v3982, %v3979
  %4031 = vmatprep.subr.bf16.mxu0 %v3984
  %4032 = vmatpush1.bf16.msra.mxu0 %v3983
  %4033 = vmatprep.subr.bf16.mxu0 %v3987
  %4034 = vmatpush1.bf16.msra.mxu0 %v3986
  %4035 = vmatprep.subr.bf16.mxu0 %v3990
  %4036 = vmatpush1.bf16.msra.mxu0 %v3989
  %4037 = vmatprep.subr.bf16.mxu0 %v3993
  %4038 = vmatpush1.bf16.msra.mxu0 %v3992
  %4039 = vmatprep.subr.bf16.mxu0 %v3996
  %4040 = vmatpush1.bf16.msra.mxu0 %v3995
  %4041 = vmatprep.subr.bf16.mxu0 %v3999
  %4042 = vmatpush1.bf16.msra.mxu0 %v3998
  %4043 = vmatprep.subr.bf16.mxu0 %v4002
  %4044 = vmatpush1.bf16.msra.mxu0 %v4001
  %4045 = vmatprep.subr.bf16.mxu0 %v4005
  %4046 = vmatpush1.bf16.msra.mxu0 %v4004
  %4047 = vmatprep.subr.bf16.mxu0 0
  %4048 = vmatpush1.bf16.msra.mxu0 0
  %4049 = vmatprep.subr.bf16.mxu0 0
  %4050 = vmatpush1.bf16.msra.mxu0 0
  %4051 = vmatprep.subr.bf16.mxu0 0
  %4052 = vmatpush1.bf16.msra.mxu0 0
  %4053 = vmatprep.subr.bf16.mxu0 0
  %4054 = vmatpush1.bf16.msra.mxu0 0
  %4055 = vmatprep.subr.bf16.mxu0 0
  %4056 = vmatpush1.bf16.msra.mxu0 0
  %4057 = vmatprep.subr.bf16.mxu0 0
  %4058 = vmatpush1.bf16.msra.mxu0 0
  %4059 = vmatprep.subr.bf16.mxu0 0
  %4060 = vmatpush1.bf16.msra.mxu0 0
  %4061 = vmatprep.subr.bf16.mxu0 0
  %4062 = vmatpush1.bf16.msra.mxu0 0
  %4063 = vmatprep.mubr.bf16.mxu0 0
  %4064 = vmatmul.mubr.bf16.gmra.mrb[0].mxu0 %v3870
  %v4065 = vpop.f32.mrb[0].mxu0
  %v4066 = vadd.f32 0.0, %v4065
  %v4067 = vpop.f32.mrb[0].mxu0
  %v4068 = vadd.f32 0.0, %v4067
  %v4069 = vpop.f32.mrb[0].mxu0
  %v4070 = vadd.f32 0.0, %v4069
  %v4071 = vpop.f32.mrb[0].mxu0
  %v4072 = vadd.f32 0.0, %v4071
  %4073 = vdwg.mxu0
  %4074 = vmatprep.subr.bf16.mxu0 0
  %4075 = vmatpush1.bf16.msra.mxu0 %v3985
  %4076 = vmatprep.subr.bf16.mxu0 0
  %4077 = vmatpush1.bf16.msra.mxu0 %v3988
  %4078 = vmatprep.subr.bf16.mxu0 0
  %4079 = vmatpush1.bf16.msra.mxu0 %v3991
  %4080 = vmatprep.subr.bf16.mxu0 0
  %4081 = vmatpush1.bf16.msra.mxu0 %v3994
  %4082 = vmatprep.subr.bf16.mxu0 0
  %4083 = vmatpush1.bf16.msra.mxu0 %v3997
  %4084 = vmatprep.subr.bf16.mxu0 0
  %4085 = vmatpush1.bf16.msra.mxu0 %v4000
  %4086 = vmatprep.subr.bf16.mxu0 0
  %4087 = vmatpush1.bf16.msra.mxu0 %v4003
  %4088 = vmatprep.subr.bf16.mxu0 0
  %4089 = vmatpush1.bf16.msra.mxu0 %v4006
  %4090 = vmatprep.subr.bf16.mxu0 0
  %4091 = vmatpush1.bf16.msra.mxu0 0
  %4092 = vmatprep.subr.bf16.mxu0 0
  %4093 = vmatpush1.bf16.msra.mxu0 0
  %4094 = vmatprep.subr.bf16.mxu0 0
  %4095 = vmatpush1.bf16.msra.mxu0 0
  %4096 = vmatprep.subr.bf16.mxu0 0
  %4097 = vmatpush1.bf16.msra.mxu0 0
  %4098 = vmatprep.subr.bf16.mxu0 0
  %4099 = vmatpush1.bf16.msra.mxu0 0
  %4100 = vmatprep.subr.bf16.mxu0 0
  %4101 = vmatpush1.bf16.msra.mxu0 0
  %4102 = vmatprep.subr.bf16.mxu0 0
  %4103 = vmatpush1.bf16.msra.mxu0 0
  %4104 = vmatprep.subr.bf16.mxu0 0
  %4105 = vmatpush1.bf16.msra.mxu0 0
  %4106 = vmatprep.mubr.bf16.mxu0 0
  %4107 = vmatmul.mubr.bf16.gmra.mrb[0].mxu0 %v3870
  %v4108 = vpop.f32.mrb[0].mxu0
  %v4109 = vadd.f32 0.0, %v4108
  %v4110 = vpop.f32.mrb[0].mxu0
  %v4111 = vpop.f32.mrb[0].mxu0
  %v4112 = vadd.f32 0.0, %v4111
  %v4113 = vpop.f32.mrb[0].mxu0
  %4114 = vdwg.mxu0
  %v4115 = vadd.f32 %v3864, %v4066
  %v4116 = vadd.f32 %v3865, %v4068
  %v4117 = vadd.f32 %v3866, %v4109
  %v4118 = vadd.f32 %v3867, %v4070
  %v4119 = vadd.f32 %v3868, %v4072
  %v4120 = vadd.f32 %v3869, %v4112
  %s4121 = scalar_lea.vmem [#allocation3], 48
  %v4122 = vld [vmem:[%s4121] sm:$0xff]
  %v4123 = vld [vmem:[%s4121 + $0x8] sm:$0xff]
  %v4124 = vld [vmem:[%s4121 + $0x10] sm:$0xff]
  %v4125 = vunpack.c.l.bf16 %v4122
  %v4126 = vunpack.c.l.bf16 %v4123
  %v4127 = vunpack.c.l.bf16 %v4124
  %v4128 = vunpack.c.h.bf16 %v4122
  %v4129 = vunpack.c.h.bf16 %v4123
  %v4130 = vunpack.c.h.bf16 %v4124
  %v4131 = vpack.c.bf16 %v3853, %v3852
  %v4132 = vld [vmem:[%s1112] sm:$0xff]
  %v4133 = vld [vmem:[%s1112 + $0x8] sm:$0xf]
  %v4134 = vld [vmem:[%s1112 + $0xc] sm:$0xff]
  %v4135 = vld [vmem:[%s1112 + $0x14] sm:$0xf]
  %v4136 = vld [vmem:[%s1112 + $0x18] sm:$0xff]
  %v4137 = vld [vmem:[%s1112 + $0x20] sm:$0xf]
  %v4138 = vld [vmem:[%s1112 + $0x24] sm:$0xff]
  %v4139 = vld [vmem:[%s1112 + $0x2c] sm:$0xf]
  %v4140 = vld [vmem:[%s1112 + $0x30] sm:$0xff]
  %v4141 = vld [vmem:[%s1112 + $0x38] sm:$0xf]
  %v4142 = vld [vmem:[%s1112 + $0x3c] sm:$0xff]
  %v4143 = vld [vmem:[%s1112 + $0x44] sm:$0xf]
  %v4144 = vld [vmem:[%s1112 + $0x48] sm:$0xff]
  %v4145 = vld [vmem:[%s1112 + $0x50] sm:$0xf]
  %v4146 = vld [vmem:[%s1112 + $0x54] sm:$0xff]
  %v4147 = vld [vmem:[%s1112 + $0x5c] sm:$0xf]
  %v4148 = vld [vmem:[%s1112 + $0x60] sm:$0xff]
  %v4149 = vld [vmem:[%s1112 + $0x68] sm:$0xf]
  %v4150 = vld [vmem:[%s1112 + $0x6c] sm:$0xff]
  %v4151 = vld [vmem:[%s1112 + $0x74] sm:$0xf]
  %v4152 = vld [vmem:[%s1112 + $0x78] sm:$0xff]
  %v4153 = vld [vmem:[%s1112 + $0x80] sm:$0xf]
  %v4154 = vld [vmem:[%s1112 + $0x84] sm:$0xff]
  %v4155 = vld [vmem:[%s1112 + $0x8c] sm:$0xf]
  %v4156 = vld [vmem:[%s1112 + $0x90] sm:$0xff]
  %v4157 = vld [vmem:[%s1112 + $0x98] sm:$0xf]
  %v4158 = vld [vmem:[%s1112 + $0x9c] sm:$0xff]
  %v4159 = vld [vmem:[%s1112 + $0xa4] sm:$0xf]
  %v4160 = vld [vmem:[%s1112 + $0xa8] sm:$0xff]
  %v4161 = vld [vmem:[%s1112 + $0xb0] sm:$0xf]
  %v4162 = vld [vmem:[%s1112 + $0xb4] sm:$0xff]
  %v4163 = vld [vmem:[%s1112 + $0xbc] sm:$0xf]
  %v4196 = vunpack.c.l.b16 %v4132
  %v4197 = vunpack.c.h.b16 %v4132
  %v4198 = vunpack.c.l.b16 %v4133
  %v4199 = vunpack.c.l.b16 %v4134
  %v4200 = vunpack.c.h.b16 %v4134
  %v4201 = vunpack.c.l.b16 %v4135
  %v4202 = vunpack.c.l.b16 %v4136
  %v4203 = vunpack.c.h.b16 %v4136
  %v4204 = vunpack.c.l.b16 %v4137
  %v4205 = vunpack.c.l.b16 %v4138
  %v4206 = vunpack.c.h.b16 %v4138
  %v4207 = vunpack.c.l.b16 %v4139
  %v4208 = vunpack.c.l.b16 %v4140
  %v4209 = vunpack.c.h.b16 %v4140
  %v4210 = vunpack.c.l.b16 %v4141
  %v4211 = vunpack.c.l.b16 %v4142
  %v4212 = vunpack.c.h.b16 %v4142
  %v4213 = vunpack.c.l.b16 %v4143
  %v4214 = vunpack.c.l.b16 %v4144
  %v4215 = vunpack.c.h.b16 %v4144
  %v4216 = vunpack.c.l.b16 %v4145
  %v4217 = vunpack.c.l.b16 %v4146
  %v4218 = vunpack.c.h.b16 %v4146
  %v4219 = vunpack.c.l.b16 %v4147
  %v4220 = vunpack.c.l.b16 %v4148
  %v4221 = vunpack.c.h.b16 %v4148
  %v4222 = vunpack.c.l.b16 %v4149
  %v4223 = vunpack.c.l.b16 %v4150
  %v4224 = vunpack.c.h.b16 %v4150
  %v4225 = vunpack.c.l.b16 %v4151
  %v4226 = vunpack.c.l.b16 %v4152
  %v4227 = vunpack.c.h.b16 %v4152
  %v4228 = vunpack.c.l.b16 %v4153
  %v4229 = vunpack.c.l.b16 %v4154
  %v4230 = vunpack.c.h.b16 %v4154
  %v4231 = vunpack.c.l.b16 %v4155
  %v4232 = vunpack.c.l.b16 %v4156
  %v4233 = vunpack.c.h.b16 %v4156
  %v4234 = vunpack.c.l.b16 %v4157
  %v4235 = vunpack.c.l.b16 %v4158
  %v4236 = vunpack.c.h.b16 %v4158
  %v4237 = vunpack.c.l.b16 %v4159
  %v4238 = vunpack.c.l.b16 %v4160
  %v4239 = vunpack.c.h.b16 %v4160
  %v4240 = vunpack.c.l.b16 %v4161
  %v4241 = vunpack.c.l.b16 %v4162
  %v4242 = vunpack.c.h.b16 %v4162
  %v4243 = vunpack.c.l.b16 %v4163
  %v4244 = vpack.c.b16 %v4199, %v4196
  %v4245 = vpack.c.b16 %v4200, %v4197
  %v4246 = vpack.c.b16 %v4201, %v4198
  %v4247 = vpack.c.b16 %v4205, %v4202
  %v4248 = vpack.c.b16 %v4206, %v4203
  %v4249 = vpack.c.b16 %v4207, %v4204
  %v4250 = vpack.c.b16 %v4211, %v4208
  %v4251 = vpack.c.b16 %v4212, %v4209
  %v4252 = vpack.c.b16 %v4213, %v4210
  %v4253 = vpack.c.b16 %v4217, %v4214
  %v4254 = vpack.c.b16 %v4218, %v4215
  %v4255 = vpack.c.b16 %v4219, %v4216
  %v4256 = vpack.c.b16 %v4223, %v4220
  %v4257 = vpack.c.b16 %v4224, %v4221
  %v4258 = vpack.c.b16 %v4225, %v4222
  %v4259 = vpack.c.b16 %v4229, %v4226
  %v4260 = vpack.c.b16 %v4230, %v4227
  %v4261 = vpack.c.b16 %v4231, %v4228
  %v4262 = vpack.c.b16 %v4235, %v4232
  %v4263 = vpack.c.b16 %v4236, %v4233
  %v4264 = vpack.c.b16 %v4237, %v4234
  %v4265 = vpack.c.b16 %v4241, %v4238
  %v4266 = vpack.c.b16 %v4242, %v4239
  %v4267 = vpack.c.b16 %v4243, %v4240
  %4292 = vmatprep.subr.bf16.mxu0 %v4245
  %4293 = vmatpush1.bf16.msra.mxu0 %v4244
  %4294 = vmatprep.subr.bf16.mxu0 %v4248
  %4295 = vmatpush1.bf16.msra.mxu0 %v4247
  %4296 = vmatprep.subr.bf16.mxu0 %v4251
  %4297 = vmatpush1.bf16.msra.mxu0 %v4250
  %4298 = vmatprep.subr.bf16.mxu0 %v4254
  %4299 = vmatpush1.bf16.msra.mxu0 %v4253
  %4300 = vmatprep.subr.bf16.mxu0 %v4257
  %4301 = vmatpush1.bf16.msra.mxu0 %v4256
  %4302 = vmatprep.subr.bf16.mxu0 %v4260
  %4303 = vmatpush1.bf16.msra.mxu0 %v4259
  %4304 = vmatprep.subr.bf16.mxu0 %v4263
  %4305 = vmatpush1.bf16.msra.mxu0 %v4262
  %4306 = vmatprep.subr.bf16.mxu0 %v4266
  %4307 = vmatpush1.bf16.msra.mxu0 %v4265
  %4308 = vmatprep.subr.bf16.mxu0 0
  %4309 = vmatpush1.bf16.msra.mxu0 0
  %4310 = vmatprep.subr.bf16.mxu0 0
  %4311 = vmatpush1.bf16.msra.mxu0 0
  %4312 = vmatprep.subr.bf16.mxu0 0
  %4313 = vmatpush1.bf16.msra.mxu0 0
  %4314 = vmatprep.subr.bf16.mxu0 0
  %4315 = vmatpush1.bf16.msra.mxu0 0
  %4316 = vmatprep.subr.bf16.mxu0 0
  %4317 = vmatpush1.bf16.msra.mxu0 0
  %4318 = vmatprep.subr.bf16.mxu0 0
  %4319 = vmatpush1.bf16.msra.mxu0 0
  %4320 = vmatprep.subr.bf16.mxu0 0
  %4321 = vmatpush1.bf16.msra.mxu0 0
  %4322 = vmatprep.subr.bf16.mxu0 0
  %4323 = vmatpush1.bf16.msra.mxu0 0
  %4324 = vmatprep.mubr.bf16.mxu0 0
  %4325 = vmatmul.mubr.bf16.gmra.mrb[0].mxu0 %v4131
  %v4326 = vpop.f32.mrb[0].mxu0
  %v4327 = vadd.f32 0.0, %v4326
  %v4328 = vpop.f32.mrb[0].mxu0
  %v4329 = vadd.f32 0.0, %v4328
  %v4330 = vpop.f32.mrb[0].mxu0
  %v4331 = vadd.f32 0.0, %v4330
  %v4332 = vpop.f32.mrb[0].mxu0
  %v4333 = vadd.f32 0.0, %v4332
  %4334 = vdwg.mxu0
  %4335 = vmatprep.subr.bf16.mxu0 0
  %4336 = vmatpush1.bf16.msra.mxu0 %v4246
  %4337 = vmatprep.subr.bf16.mxu0 0
  %4338 = vmatpush1.bf16.msra.mxu0 %v4249
  %4339 = vmatprep.subr.bf16.mxu0 0
  %4340 = vmatpush1.bf16.msra.mxu0 %v4252
  %4341 = vmatprep.subr.bf16.mxu0 0
  %4342 = vmatpush1.bf16.msra.mxu0 %v4255
  %4343 = vmatprep.subr.bf16.mxu0 0
  %4344 = vmatpush1.bf16.msra.mxu0 %v4258
  %4345 = vmatprep.subr.bf16.mxu0 0
  %4346 = vmatpush1.bf16.msra.mxu0 %v4261
  %4347 = vmatprep.subr.bf16.mxu0 0
  %4348 = vmatpush1.bf16.msra.mxu0 %v4264
  %4349 = vmatprep.subr.bf16.mxu0 0
  %4350 = vmatpush1.bf16.msra.mxu0 %v4267
  %4351 = vmatprep.subr.bf16.mxu0 0
  %4352 = vmatpush1.bf16.msra.mxu0 0
  %4353 = vmatprep.subr.bf16.mxu0 0
  %4354 = vmatpush1.bf16.msra.mxu0 0
  %4355 = vmatprep.subr.bf16.mxu0 0
  %4356 = vmatpush1.bf16.msra.mxu0 0
  %4357 = vmatprep.subr.bf16.mxu0 0
  %4358 = vmatpush1.bf16.msra.mxu0 0
  %4359 = vmatprep.subr.bf16.mxu0 0
  %4360 = vmatpush1.bf16.msra.mxu0 0
  %4361 = vmatprep.subr.bf16.mxu0 0
  %4362 = vmatpush1.bf16.msra.mxu0 0
  %4363 = vmatprep.subr.bf16.mxu0 0
  %4364 = vmatpush1.bf16.msra.mxu0 0
  %4365 = vmatprep.subr.bf16.mxu0 0
  %4366 = vmatpush1.bf16.msra.mxu0 0
  %4367 = vmatprep.mubr.bf16.mxu0 0
  %4368 = vmatmul.mubr.bf16.gmra.mrb[0].mxu0 %v4131
  %v4369 = vpop.f32.mrb[0].mxu0
  %v4370 = vadd.f32 0.0, %v4369
  %v4371 = vpop.f32.mrb[0].mxu0
  %v4372 = vpop.f32.mrb[0].mxu0
  %v4373 = vadd.f32 0.0, %v4372
  %v4374 = vpop.f32.mrb[0].mxu0
  %4375 = vdwg.mxu0
  %v4376 = vadd.f32 %v4125, %v4327
  %v4377 = vadd.f32 %v4126, %v4329
  %v4378 = vadd.f32 %v4127, %v4370
  %v4379 = vadd.f32 %v4128, %v4331
  %v4380 = vadd.f32 %v4129, %v4333
  %v4381 = vadd.f32 %v4130, %v4373
  %v4382 = vxor.u32 %v4115, 2147483648
  %v4383 = vxor.u32 %v4118, 2147483648
  %v4384 = vmul.f32 %v4382, 1.442695
  %v4385 = vpow.pop %v4384
  %v4386 = vmul.f32 %v4383, 1.442695
  %v4387 = vpow.pop %v4386
  %v4388 = vadd.f32 %v4385, 1.0
  %v4389 = vadd.f32 %v4387, 1.0
  %v4390 = vrcp.pop %v4388
  %v4391 = vmul.f32 1.0, %v4390
  %v4392 = vrcp.pop %v4389
  %v4393 = vmul.f32 1.0, %v4392
  %v4394 = vxor.u32 %v4116, 2147483648
  %v4395 = vxor.u32 %v4119, 2147483648
  %v4396 = vmul.f32 %v4394, 1.442695
  %v4397 = vpow.pop %v4396
  %v4398 = vmul.f32 %v4395, 1.442695
  %v4399 = vpow.pop %v4398
  %v4400 = vadd.f32 %v4397, 1.0
  %v4401 = vadd.f32 %v4399, 1.0
  %v4402 = vrcp.pop %v4400
  %v4403 = vmul.f32 1.0, %v4402
  %v4404 = vrcp.pop %v4401
  %v4405 = vmul.f32 1.0, %v4404
  %v4406 = vtanh.pop %v4117
  %v4407 = vtanh.pop %v4120
  %v4408 = vsub.f32 1.0, %v4391
  %v4409 = vsub.f32 1.0, %v4393
  %v4410 = vmul.f32 %v4408, %v3810
  %v4411 = vmul.f32 %v4409, %v3811
  %v4412 = vmul.f32 %v4391, %v4406
  %v4413 = vmul.f32 %v4393, %v4407
  %v4414 = vadd.f32 %v4410, %v4412
  %v4415 = vadd.f32 %v4411, %v4413
  %v4416 = vtanh.pop %v4414
  %v4417 = vtanh.pop %v4415
  %v4418 = vmul.f32 %v4403, %v4416
  %v4419 = vmul.f32 %v4405, %v4417
  %v4420 = vxor.u32 %v4376, 2147483648
  %v4421 = vxor.u32 %v4379, 2147483648
  %v4422 = vmul.f32 %v4420, 1.442695
  %v4423 = vpow.pop %v4422
  %v4424 = vmul.f32 %v4421, 1.442695
  %v4425 = vpow.pop %v4424
  %v4426 = vadd.f32 %v4423, 1.0
  %v4427 = vadd.f32 %v4425, 1.0
  %v4428 = vrcp.pop %v4426
  %v4429 = vmul.f32 1.0, %v4428
  %v4430 = vrcp.pop %v4427
  %v4431 = vmul.f32 1.0, %v4430
  %v4432 = vxor.u32 %v4377, 2147483648
  %v4433 = vxor.u32 %v4380, 2147483648
  %v4434 = vmul.f32 %v4432, 1.442695
  %v4435 = vpow.pop %v4434
  %v4436 = vmul.f32 %v4433, 1.442695
  %v4437 = vpow.pop %v4436
  %v4438 = vadd.f32 %v4435, 1.0
  %v4439 = vadd.f32 %v4437, 1.0
  %v4440 = vrcp.pop %v4438
  %v4441 = vmul.f32 1.0, %v4440
  %v4442 = vrcp.pop %v4439
  %v4443 = vmul.f32 1.0, %v4442
  %v4444 = vtanh.pop %v4378
  %v4445 = vtanh.pop %v4381
  %v4446 = vsub.f32 1.0, %v4429
  %v4447 = vsub.f32 1.0, %v4431
  %v4448 = vmul.f32 %v4446, %v3848
  %v4449 = vmul.f32 %v4447, %v3849
  %v4450 = vmul.f32 %v4429, %v4444
  %v4451 = vmul.f32 %v4431, %v4445
  %v4452 = vadd.f32 %v4448, %v4450
  %v4453 = vadd.f32 %v4449, %v4451
  %v4454 = vtanh.pop %v4452
  %v4455 = vtanh.pop %v4453
  %v4456 = vmul.f32 %v4441, %v4454
  %v4457 = vmul.f32 %v4443, %v4455
  %s4458 = scalar_lea.vmem [#allocation4], 80
  %4459 = vst [vmem:[%s4458] sm:$0xff] %v4418
  %4460 = vst [vmem:[%s4458 + $0x8] sm:$0xff] %v4419
  %s4461 = scalar_lea.vmem [#allocation5], 32
  %4462 = vst [vmem:[%s4461] sm:$0xff] %v4456
  %4463 = vst [vmem:[%s4461 + $0x8] sm:$0xff] %v4457
  %s4464 = scalar_lea.vmem [#allocation2], 144
  %v4465 = vld [vmem:[%s4464] sm:$0xff]
  %v4466 = vld [vmem:[%s4464 + $0x8] sm:$0xff]
  %v4467 = vld [vmem:[%s4464 + $0x10] sm:$0xff]
  %v4468 = vunpack.c.l.bf16 %v4465
  %v4469 = vunpack.c.l.bf16 %v4466
  %v4470 = vunpack.c.l.bf16 %v4467
  %v4471 = vunpack.c.h.bf16 %v4465
  %v4472 = vunpack.c.h.bf16 %v4466
  %v4473 = vunpack.c.h.bf16 %v4467
  %v4474 = vpack.c.bf16 %v4419, %v4418
  %v4475 = vld [vmem:[%s3] sm:$0xff]
  %v4476 = vld [vmem:[%s3 + $0x8] sm:$0xf]
  %v4477 = vld [vmem:[%s3 + $0xc] sm:$0xff]
  %v4478 = vld [vmem:[%s3 + $0x14] sm:$0xf]
  %v4479 = vld [vmem:[%s3 + $0x18] sm:$0xff]
  %v4480 = vld [vmem:[%s3 + $0x20] sm:$0xf]
  %v4481 = vld [vmem:[%s3 + $0x24] sm:$0xff]
  %v4482 = vld [vmem:[%s3 + $0x2c] sm:$0xf]
  %v4483 = vld [vmem:[%s3 + $0x30] sm:$0xff]
  %v4484 = vld [vmem:[%s3 + $0x38] sm:$0xf]
  %v4485 = vld [vmem:[%s3 + $0x3c] sm:$0xff]
  %v4486 = vld [vmem:[%s3 + $0x44] sm:$0xf]
  %v4487 = vld [vmem:[%s3 + $0x48] sm:$0xff]
  %v4488 = vld [vmem:[%s3 + $0x50] sm:$0xf]
  %v4489 = vld [vmem:[%s3 + $0x54] sm:$0xff]
  %v4490 = vld [vmem:[%s3 + $0x5c] sm:$0xf]
  %v4491 = vld [vmem:[%s3 + $0x60] sm:$0xff]
  %v4492 = vld [vmem:[%s3 + $0x68] sm:$0xf]
  %v4493 = vld [vmem:[%s3 + $0x6c] sm:$0xff]
  %v4494 = vld [vmem:[%s3 + $0x74] sm:$0xf]
  %v4495 = vld [vmem:[%s3 + $0x78] sm:$0xff]
  %v4496 = vld [vmem:[%s3 + $0x80] sm:$0xf]
  %v4497 = vld [vmem:[%s3 + $0x84] sm:$0xff]
  %v4498 = vld [vmem:[%s3 + $0x8c] sm:$0xf]
  %v4499 = vld [vmem:[%s3 + $0x90] sm:$0xff]
  %v4500 = vld [vmem:[%s3 + $0x98] sm:$0xf]
  %v4501 = vld [vmem:[%s3 + $0x9c] sm:$0xff]
  %v4502 = vld [vmem:[%s3 + $0xa4] sm:$0xf]
  %v4503 = vld [vmem:[%s3 + $0xa8] sm:$0xff]
  %v4504 = vld [vmem:[%s3 + $0xb0] sm:$0xf]
  %v4505 = vld [vmem:[%s3 + $0xb4] sm:$0xff]
  %v4506 = vld [vmem:[%s3 + $0xbc] sm:$0xf]
  %v4539 = vunpack.c.l.b16 %v4475
  %v4540 = vunpack.c.h.b16 %v4475
  %v4541 = vunpack.c.l.b16 %v4476
  %v4542 = vunpack.c.l.b16 %v4477
  %v4543 = vunpack.c.h.b16 %v4477
  %v4544 = vunpack.c.l.b16 %v4478
  %v4545 = vunpack.c.l.b16 %v4479
  %v4546 = vunpack.c.h.b16 %v4479
  %v4547 = vunpack.c.l.b16 %v4480
  %v4548 = vunpack.c.l.b16 %v4481
  %v4549 = vunpack.c.h.b16 %v4481
  %v4550 = vunpack.c.l.b16 %v4482
  %v4551 = vunpack.c.l.b16 %v4483
  %v4552 = vunpack.c.h.b16 %v4483
  %v4553 = vunpack.c.l.b16 %v4484
  %v4554 = vunpack.c.l.b16 %v4485
  %v4555 = vunpack.c.h.b16 %v4485
  %v4556 = vunpack.c.l.b16 %v4486
  %v4557 = vunpack.c.l.b16 %v4487
  %v4558 = vunpack.c.h.b16 %v4487
  %v4559 = vunpack.c.l.b16 %v4488
  %v4560 = vunpack.c.l.b16 %v4489
  %v4561 = vunpack.c.h.b16 %v4489
  %v4562 = vunpack.c.l.b16 %v4490
  %v4563 = vunpack.c.l.b16 %v4491
  %v4564 = vunpack.c.h.b16 %v4491
  %v4565 = vunpack.c.l.b16 %v4492
  %v4566 = vunpack.c.l.b16 %v4493
  %v4567 = vunpack.c.h.b16 %v4493
  %v4568 = vunpack.c.l.b16 %v4494
  %v4569 = vunpack.c.l.b16 %v4495
  %v4570 = vunpack.c.h.b16 %v4495
  %v4571 = vunpack.c.l.b16 %v4496
  %v4572 = vunpack.c.l.b16 %v4497
  %v4573 = vunpack.c.h.b16 %v4497
  %v4574 = vunpack.c.l.b16 %v4498
  %v4575 = vunpack.c.l.b16 %v4499
  %v4576 = vunpack.c.h.b16 %v4499
  %v4577 = vunpack.c.l.b16 %v4500
  %v4578 = vunpack.c.l.b16 %v4501
  %v4579 = vunpack.c.h.b16 %v4501
  %v4580 = vunpack.c.l.b16 %v4502
  %v4581 = vunpack.c.l.b16 %v4503
  %v4582 = vunpack.c.h.b16 %v4503
  %v4583 = vunpack.c.l.b16 %v4504
  %v4584 = vunpack.c.l.b16 %v4505
  %v4585 = vunpack.c.h.b16 %v4505
  %v4586 = vunpack.c.l.b16 %v4506
  %v4587 = vpack.c.b16 %v4542, %v4539
  %v4588 = vpack.c.b16 %v4543, %v4540
  %v4589 = vpack.c.b16 %v4544, %v4541
  %v4590 = vpack.c.b16 %v4548, %v4545
  %v4591 = vpack.c.b16 %v4549, %v4546
  %v4592 = vpack.c.b16 %v4550, %v4547
  %v4593 = vpack.c.b16 %v4554, %v4551
  %v4594 = vpack.c.b16 %v4555, %v4552
  %v4595 = vpack.c.b16 %v4556, %v4553
  %v4596 = vpack.c.b16 %v4560, %v4557
  %v4597 = vpack.c.b16 %v4561, %v4558
  %v4598 = vpack.c.b16 %v4562, %v4559
  %v4599 = vpack.c.b16 %v4566, %v4563
  %v4600 = vpack.c.b16 %v4567, %v4564
  %v4601 = vpack.c.b16 %v4568, %v4565
  %v4602 = vpack.c.b16 %v4572, %v4569
  %v4603 = vpack.c.b16 %v4573, %v4570
  %v4604 = vpack.c.b16 %v4574, %v4571
  %v4605 = vpack.c.b16 %v4578, %v4575
  %v4606 = vpack.c.b16 %v4579, %v4576
  %v4607 = vpack.c.b16 %v4580, %v4577
  %v4608 = vpack.c.b16 %v4584, %v4581
  %v4609 = vpack.c.b16 %v4585, %v4582
  %v4610 = vpack.c.b16 %v4586, %v4583
  %4635 = vmatprep.subr.bf16.mxu0 %v4588
  %4636 = vmatpush1.bf16.msra.mxu0 %v4587
  %4637 = vmatprep.subr.bf16.mxu0 %v4591
  %4638 = vmatpush1.bf16.msra.mxu0 %v4590
  %4639 = vmatprep.subr.bf16.mxu0 %v4594
  %4640 = vmatpush1.bf16.msra.mxu0 %v4593
  %4641 = vmatprep.subr.bf16.mxu0 %v4597
  %4642 = vmatpush1.bf16.msra.mxu0 %v4596
  %4643 = vmatprep.subr.bf16.mxu0 %v4600
  %4644 = vmatpush1.bf16.msra.mxu0 %v4599
  %4645 = vmatprep.subr.bf16.mxu0 %v4603
  %4646 = vmatpush1.bf16.msra.mxu0 %v4602
  %4647 = vmatprep.subr.bf16.mxu0 %v4606
  %4648 = vmatpush1.bf16.msra.mxu0 %v4605
  %4649 = vmatprep.subr.bf16.mxu0 %v4609
  %4650 = vmatpush1.bf16.msra.mxu0 %v4608
  %4651 = vmatprep.subr.bf16.mxu0 0
  %4652 = vmatpush1.bf16.msra.mxu0 0
  %4653 = vmatprep.subr.bf16.mxu0 0
  %4654 = vmatpush1.bf16.msra.mxu0 0
  %4655 = vmatprep.subr.bf16.mxu0 0
  %4656 = vmatpush1.bf16.msra.mxu0 0
  %4657 = vmatprep.subr.bf16.mxu0 0
  %4658 = vmatpush1.bf16.msra.mxu0 0
  %4659 = vmatprep.subr.bf16.mxu0 0
  %4660 = vmatpush1.bf16.msra.mxu0 0
  %4661 = vmatprep.subr.bf16.mxu0 0
  %4662 = vmatpush1.bf16.msra.mxu0 0
  %4663 = vmatprep.subr.bf16.mxu0 0
  %4664 = vmatpush1.bf16.msra.mxu0 0
  %4665 = vmatprep.subr.bf16.mxu0 0
  %4666 = vmatpush1.bf16.msra.mxu0 0
  %4667 = vmatprep.mubr.bf16.mxu0 0
  %4668 = vmatmul.mubr.bf16.gmra.mrb[0].mxu0 %v4474
  %v4669 = vpop.f32.mrb[0].mxu0
  %v4670 = vadd.f32 0.0, %v4669
  %v4671 = vpop.f32.mrb[0].mxu0
  %v4672 = vadd.f32 0.0, %v4671
  %v4673 = vpop.f32.mrb[0].mxu0
  %v4674 = vadd.f32 0.0, %v4673
  %v4675 = vpop.f32.mrb[0].mxu0
  %v4676 = vadd.f32 0.0, %v4675
  %4677 = vdwg.mxu0
  %4678 = vmatprep.subr.bf16.mxu0 0
  %4679 = vmatpush1.bf16.msra.mxu0 %v4589
  %4680 = vmatprep.subr.bf16.mxu0 0
  %4681 = vmatpush1.bf16.msra.mxu0 %v4592
  %4682 = vmatprep.subr.bf16.mxu0 0
  %4683 = vmatpush1.bf16.msra.mxu0 %v4595
  %4684 = vmatprep.subr.bf16.mxu0 0
  %4685 = vmatpush1.bf16.msra.mxu0 %v4598
  %4686 = vmatprep.subr.bf16.mxu0 0
  %4687 = vmatpush1.bf16.msra.mxu0 %v4601
  %4688 = vmatprep.subr.bf16.mxu0 0
  %4689 = vmatpush1.bf16.msra.mxu0 %v4604
  %4690 = vmatprep.subr.bf16.mxu0 0
  %4691 = vmatpush1.bf16.msra.mxu0 %v4607
  %4692 = vmatprep.subr.bf16.mxu0 0
  %4693 = vmatpush1.bf16.msra.mxu0 %v4610
  %4694 = vmatprep.subr.bf16.mxu0 0
  %4695 = vmatpush1.bf16.msra.mxu0 0
  %4696 = vmatprep.subr.bf16.mxu0 0
  %4697 = vmatpush1.bf16.msra.mxu0 0
  %4698 = vmatprep.subr.bf16.mxu0 0
  %4699 = vmatpush1.bf16.msra.mxu0 0
  %4700 = vmatprep.subr.bf16.mxu0 0
  %4701 = vmatpush1.bf16.msra.mxu0 0
  %4702 = vmatprep.subr.bf16.mxu0 0
  %4703 = vmatpush1.bf16.msra.mxu0 0
  %4704 = vmatprep.subr.bf16.mxu0 0
  %4705 = vmatpush1.bf16.msra.mxu0 0
  %4706 = vmatprep.subr.bf16.mxu0 0
  %4707 = vmatpush1.bf16.msra.mxu0 0
  %4708 = vmatprep.subr.bf16.mxu0 0
  %4709 = vmatpush1.bf16.msra.mxu0 0
  %4710 = vmatprep.mubr.bf16.mxu0 0
  %4711 = vmatmul.mubr.bf16.gmra.mrb[0].mxu0 %v4474
  %v4712 = vpop.f32.mrb[0].mxu0
  %v4713 = vadd.f32 0.0, %v4712
  %v4714 = vpop.f32.mrb[0].mxu0
  %v4715 = vpop.f32.mrb[0].mxu0
  %v4716 = vadd.f32 0.0, %v4715
  %v4717 = vpop.f32.mrb[0].mxu0
  %4718 = vdwg.mxu0
  %v4719 = vadd.f32 %v4468, %v4670
  %v4720 = vadd.f32 %v4469, %v4672
  %v4721 = vadd.f32 %v4470, %v4713
  %v4722 = vadd.f32 %v4471, %v4674
  %v4723 = vadd.f32 %v4472, %v4676
  %v4724 = vadd.f32 %v4473, %v4716
  %s4725 = scalar_lea.vmem [#allocation3], 24
  %v4726 = vld [vmem:[%s4725] sm:$0xff]
  %v4727 = vld [vmem:[%s4725 + $0x8] sm:$0xff]
  %v4728 = vld [vmem:[%s4725 + $0x10] sm:$0xff]
  %v4729 = vunpack.c.l.bf16 %v4726
  %v4730 = vunpack.c.l.bf16 %v4727
  %v4731 = vunpack.c.l.bf16 %v4728
  %v4732 = vunpack.c.h.bf16 %v4726
  %v4733 = vunpack.c.h.bf16 %v4727
  %v4734 = vunpack.c.h.bf16 %v4728
  %v4735 = vpack.c.bf16 %v4457, %v4456
  %v4736 = vld [vmem:[%s1112] sm:$0xff]
  %v4737 = vld [vmem:[%s1112 + $0x8] sm:$0xf]
  %v4738 = vld [vmem:[%s1112 + $0xc] sm:$0xff]
  %v4739 = vld [vmem:[%s1112 + $0x14] sm:$0xf]
  %v4740 = vld [vmem:[%s1112 + $0x18] sm:$0xff]
  %v4741 = vld [vmem:[%s1112 + $0x20] sm:$0xf]
  %v4742 = vld [vmem:[%s1112 + $0x24] sm:$0xff]
  %v4743 = vld [vmem:[%s1112 + $0x2c] sm:$0xf]
  %v4744 = vld [vmem:[%s1112 + $0x30] sm:$0xff]
  %v4745 = vld [vmem:[%s1112 + $0x38] sm:$0xf]
  %v4746 = vld [vmem:[%s1112 + $0x3c] sm:$0xff]
  %v4747 = vld [vmem:[%s1112 + $0x44] sm:$0xf]
  %v4748 = vld [vmem:[%s1112 + $0x48] sm:$0xff]
  %v4749 = vld [vmem:[%s1112 + $0x50] sm:$0xf]
  %v4750 = vld [vmem:[%s1112 + $0x54] sm:$0xff]
  %v4751 = vld [vmem:[%s1112 + $0x5c] sm:$0xf]
  %v4752 = vld [vmem:[%s1112 + $0x60] sm:$0xff]
  %v4753 = vld [vmem:[%s1112 + $0x68] sm:$0xf]
  %v4754 = vld [vmem:[%s1112 + $0x6c] sm:$0xff]
  %v4755 = vld [vmem:[%s1112 + $0x74] sm:$0xf]
  %v4756 = vld [vmem:[%s1112 + $0x78] sm:$0xff]
  %v4757 = vld [vmem:[%s1112 + $0x80] sm:$0xf]
  %v4758 = vld [vmem:[%s1112 + $0x84] sm:$0xff]
  %v4759 = vld [vmem:[%s1112 + $0x8c] sm:$0xf]
  %v4760 = vld [vmem:[%s1112 + $0x90] sm:$0xff]
  %v4761 = vld [vmem:[%s1112 + $0x98] sm:$0xf]
  %v4762 = vld [vmem:[%s1112 + $0x9c] sm:$0xff]
  %v4763 = vld [vmem:[%s1112 + $0xa4] sm:$0xf]
  %v4764 = vld [vmem:[%s1112 + $0xa8] sm:$0xff]
  %v4765 = vld [vmem:[%s1112 + $0xb0] sm:$0xf]
  %v4766 = vld [vmem:[%s1112 + $0xb4] sm:$0xff]
  %v4767 = vld [vmem:[%s1112 + $0xbc] sm:$0xf]
  %v4800 = vunpack.c.l.b16 %v4736
  %v4801 = vunpack.c.h.b16 %v4736
  %v4802 = vunpack.c.l.b16 %v4737
  %v4803 = vunpack.c.l.b16 %v4738
  %v4804 = vunpack.c.h.b16 %v4738
  %v4805 = vunpack.c.l.b16 %v4739
  %v4806 = vunpack.c.l.b16 %v4740
  %v4807 = vunpack.c.h.b16 %v4740
  %v4808 = vunpack.c.l.b16 %v4741
  %v4809 = vunpack.c.l.b16 %v4742
  %v4810 = vunpack.c.h.b16 %v4742
  %v4811 = vunpack.c.l.b16 %v4743
  %v4812 = vunpack.c.l.b16 %v4744
  %v4813 = vunpack.c.h.b16 %v4744
  %v4814 = vunpack.c.l.b16 %v4745
  %v4815 = vunpack.c.l.b16 %v4746
  %v4816 = vunpack.c.h.b16 %v4746
  %v4817 = vunpack.c.l.b16 %v4747
  %v4818 = vunpack.c.l.b16 %v4748
  %v4819 = vunpack.c.h.b16 %v4748
  %v4820 = vunpack.c.l.b16 %v4749
  %v4821 = vunpack.c.l.b16 %v4750
  %v4822 = vunpack.c.h.b16 %v4750
  %v4823 = vunpack.c.l.b16 %v4751
  %v4824 = vunpack.c.l.b16 %v4752
  %v4825 = vunpack.c.h.b16 %v4752
  %v4826 = vunpack.c.l.b16 %v4753
  %v4827 = vunpack.c.l.b16 %v4754
  %v4828 = vunpack.c.h.b16 %v4754
  %v4829 = vunpack.c.l.b16 %v4755
  %v4830 = vunpack.c.l.b16 %v4756
  %v4831 = vunpack.c.h.b16 %v4756
  %v4832 = vunpack.c.l.b16 %v4757
  %v4833 = vunpack.c.l.b16 %v4758
  %v4834 = vunpack.c.h.b16 %v4758
  %v4835 = vunpack.c.l.b16 %v4759
  %v4836 = vunpack.c.l.b16 %v4760
  %v4837 = vunpack.c.h.b16 %v4760
  %v4838 = vunpack.c.l.b16 %v4761
  %v4839 = vunpack.c.l.b16 %v4762
  %v4840 = vunpack.c.h.b16 %v4762
  %v4841 = vunpack.c.l.b16 %v4763
  %v4842 = vunpack.c.l.b16 %v4764
  %v4843 = vunpack.c.h.b16 %v4764
  %v4844 = vunpack.c.l.b16 %v4765
  %v4845 = vunpack.c.l.b16 %v4766
  %v4846 = vunpack.c.h.b16 %v4766
  %v4847 = vunpack.c.l.b16 %v4767
  %v4848 = vpack.c.b16 %v4803, %v4800
  %v4849 = vpack.c.b16 %v4804, %v4801
  %v4850 = vpack.c.b16 %v4805, %v4802
  %v4851 = vpack.c.b16 %v4809, %v4806
  %v4852 = vpack.c.b16 %v4810, %v4807
  %v4853 = vpack.c.b16 %v4811, %v4808
  %v4854 = vpack.c.b16 %v4815, %v4812
  %v4855 = vpack.c.b16 %v4816, %v4813
  %v4856 = vpack.c.b16 %v4817, %v4814
  %v4857 = vpack.c.b16 %v4821, %v4818
  %v4858 = vpack.c.b16 %v4822, %v4819
  %v4859 = vpack.c.b16 %v4823, %v4820
  %v4860 = vpack.c.b16 %v4827, %v4824
  %v4861 = vpack.c.b16 %v4828, %v4825
  %v4862 = vpack.c.b16 %v4829, %v4826
  %v4863 = vpack.c.b16 %v4833, %v4830
  %v4864 = vpack.c.b16 %v4834, %v4831
  %v4865 = vpack.c.b16 %v4835, %v4832
  %v4866 = vpack.c.b16 %v4839, %v4836
  %v4867 = vpack.c.b16 %v4840, %v4837
  %v4868 = vpack.c.b16 %v4841, %v4838
  %v4869 = vpack.c.b16 %v4845, %v4842
  %v4870 = vpack.c.b16 %v4846, %v4843
  %v4871 = vpack.c.b16 %v4847, %v4844
  %4896 = vmatprep.subr.bf16.mxu0 %v4849
  %4897 = vmatpush1.bf16.msra.mxu0 %v4848
  %4898 = vmatprep.subr.bf16.mxu0 %v4852
  %4899 = vmatpush1.bf16.msra.mxu0 %v4851
  %4900 = vmatprep.subr.bf16.mxu0 %v4855
  %4901 = vmatpush1.bf16.msra.mxu0 %v4854
  %4902 = vmatprep.subr.bf16.mxu0 %v4858
  %4903 = vmatpush1.bf16.msra.mxu0 %v4857
  %4904 = vmatprep.subr.bf16.mxu0 %v4861
  %4905 = vmatpush1.bf16.msra.mxu0 %v4860
  %4906 = vmatprep.subr.bf16.mxu0 %v4864
  %4907 = vmatpush1.bf16.msra.mxu0 %v4863
  %4908 = vmatprep.subr.bf16.mxu0 %v4867
  %4909 = vmatpush1.bf16.msra.mxu0 %v4866
  %4910 = vmatprep.subr.bf16.mxu0 %v4870
  %4911 = vmatpush1.bf16.msra.mxu0 %v4869
  %4912 = vmatprep.subr.bf16.mxu0 0
  %4913 = vmatpush1.bf16.msra.mxu0 0
  %4914 = vmatprep.subr.bf16.mxu0 0
  %4915 = vmatpush1.bf16.msra.mxu0 0
  %4916 = vmatprep.subr.bf16.mxu0 0
  %4917 = vmatpush1.bf16.msra.mxu0 0
  %4918 = vmatprep.subr.bf16.mxu0 0
  %4919 = vmatpush1.bf16.msra.mxu0 0
  %4920 = vmatprep.subr.bf16.mxu0 0
  %4921 = vmatpush1.bf16.msra.mxu0 0
  %4922 = vmatprep.subr.bf16.mxu0 0
  %4923 = vmatpush1.bf16.msra.mxu0 0
  %4924 = vmatprep.subr.bf16.mxu0 0
  %4925 = vmatpush1.bf16.msra.mxu0 0
  %4926 = vmatprep.subr.bf16.mxu0 0
  %4927 = vmatpush1.bf16.msra.mxu0 0
  %4928 = vmatprep.mubr.bf16.mxu0 0
  %4929 = vmatmul.mubr.bf16.gmra.mrb[0].mxu0 %v4735
  %v4930 = vpop.f32.mrb[0].mxu0
  %v4931 = vadd.f32 0.0, %v4930
  %v4932 = vpop.f32.mrb[0].mxu0
  %v4933 = vadd.f32 0.0, %v4932
  %v4934 = vpop.f32.mrb[0].mxu0
  %v4935 = vadd.f32 0.0, %v4934
  %v4936 = vpop.f32.mrb[0].mxu0
  %v4937 = vadd.f32 0.0, %v4936
  %4938 = vdwg.mxu0
  %4939 = vmatprep.subr.bf16.mxu0 0
  %4940 = vmatpush1.bf16.msra.mxu0 %v4850
  %4941 = vmatprep.subr.bf16.mxu0 0
  %4942 = vmatpush1.bf16.msra.mxu0 %v4853
  %4943 = vmatprep.subr.bf16.mxu0 0
  %4944 = vmatpush1.bf16.msra.mxu0 %v4856
  %4945 = vmatprep.subr.bf16.mxu0 0
  %4946 = vmatpush1.bf16.msra.mxu0 %v4859
  %4947 = vmatprep.subr.bf16.mxu0 0
  %4948 = vmatpush1.bf16.msra.mxu0 %v4862
  %4949 = vmatprep.subr.bf16.mxu0 0
  %4950 = vmatpush1.bf16.msra.mxu0 %v4865
  %4951 = vmatprep.subr.bf16.mxu0 0
  %4952 = vmatpush1.bf16.msra.mxu0 %v4868
  %4953 = vmatprep.subr.bf16.mxu0 0
  %4954 = vmatpush1.bf16.msra.mxu0 %v4871
  %4955 = vmatprep.subr.bf16.mxu0 0
  %4956 = vmatpush1.bf16.msra.mxu0 0
  %4957 = vmatprep.subr.bf16.mxu0 0
  %4958 = vmatpush1.bf16.msra.mxu0 0
  %4959 = vmatprep.subr.bf16.mxu0 0
  %4960 = vmatpush1.bf16.msra.mxu0 0
  %4961 = vmatprep.subr.bf16.mxu0 0
  %4962 = vmatpush1.bf16.msra.mxu0 0
  %4963 = vmatprep.subr.bf16.mxu0 0
  %4964 = vmatpush1.bf16.msra.mxu0 0
  %4965 = vmatprep.subr.bf16.mxu0 0
  %4966 = vmatpush1.bf16.msra.mxu0 0
  %4967 = vmatprep.subr.bf16.mxu0 0
  %4968 = vmatpush1.bf16.msra.mxu0 0
  %4969 = vmatprep.subr.bf16.mxu0 0
  %4970 = vmatpush1.bf16.msra.mxu0 0
  %4971 = vmatprep.mubr.bf16.mxu0 0
  %4972 = vmatmul.mubr.bf16.gmra.mrb[0].mxu0 %v4735
  %v4973 = vpop.f32.mrb[0].mxu0
  %v4974 = vadd.f32 0.0, %v4973
  %v4975 = vpop.f32.mrb[0].mxu0
  %v4976 = vpop.f32.mrb[0].mxu0
  %v4977 = vadd.f32 0.0, %v4976
  %v4978 = vpop.f32.mrb[0].mxu0
  %4979 = vdwg.mxu0
  %v4980 = vadd.f32 %v4729, %v4931
  %v4981 = vadd.f32 %v4730, %v4933
  %v4982 = vadd.f32 %v4731, %v4974
  %v4983 = vadd.f32 %v4732, %v4935
  %v4984 = vadd.f32 %v4733, %v4937
  %v4985 = vadd.f32 %v4734, %v4977
  %v4986 = vxor.u32 %v4719, 2147483648
  %v4987 = vxor.u32 %v4722, 2147483648
  %v4988 = vmul.f32 %v4986, 1.442695
  %v4989 = vpow.pop %v4988
  %v4990 = vmul.f32 %v4987, 1.442695
  %v4991 = vpow.pop %v4990
  %v4992 = vadd.f32 %v4989, 1.0
  %v4993 = vadd.f32 %v4991, 1.0
  %v4994 = vrcp.pop %v4992
  %v4995 = vmul.f32 1.0, %v4994
  %v4996 = vrcp.pop %v4993
  %v4997 = vmul.f32 1.0, %v4996
  %v4998 = vxor.u32 %v4720, 2147483648
  %v4999 = vxor.u32 %v4723, 2147483648
  %v5000 = vmul.f32 %v4998, 1.442695
  %v5001 = vpow.pop %v5000
  %v5002 = vmul.f32 %v4999, 1.442695
  %v5003 = vpow.pop %v5002
  %v5004 = vadd.f32 %v5001, 1.0
  %v5005 = vadd.f32 %v5003, 1.0
  %v5006 = vrcp.pop %v5004
  %v5007 = vmul.f32 1.0, %v5006
  %v5008 = vrcp.pop %v5005
  %v5009 = vmul.f32 1.0, %v5008
  %v5010 = vtanh.pop %v4721
  %v5011 = vtanh.pop %v4724
  %v5012 = vsub.f32 1.0, %v4995
  %v5013 = vsub.f32 1.0, %v4997
  %v5014 = vmul.f32 %v5012, %v4414
  %v5015 = vmul.f32 %v5013, %v4415
  %v5016 = vmul.f32 %v4995, %v5010
  %v5017 = vmul.f32 %v4997, %v5011
  %v5018 = vadd.f32 %v5014, %v5016
  %v5019 = vadd.f32 %v5015, %v5017
  %v5020 = vtanh.pop %v5018
  %v5021 = vtanh.pop %v5019
  %v5022 = vmul.f32 %v5007, %v5020
  %v5023 = vmul.f32 %v5009, %v5021
  %v5024 = vxor.u32 %v4980, 2147483648
  %v5025 = vxor.u32 %v4983, 2147483648
  %v5026 = vmul.f32 %v5024, 1.442695
  %v5027 = vpow.pop %v5026
  %v5028 = vmul.f32 %v5025, 1.442695
  %v5029 = vpow.pop %v5028
  %v5030 = vadd.f32 %v5027, 1.0
  %v5031 = vadd.f32 %v5029, 1.0
  %v5032 = vrcp.pop %v5030
  %v5033 = vmul.f32 1.0, %v5032
  %v5034 = vrcp.pop %v5031
  %v5035 = vmul.f32 1.0, %v5034
  %v5036 = vxor.u32 %v4981, 2147483648
  %v5037 = vxor.u32 %v4984, 2147483648
  %v5038 = vmul.f32 %v5036, 1.442695
  %v5039 = vpow.pop %v5038
  %v5040 = vmul.f32 %v5037, 1.442695
  %v5041 = vpow.pop %v5040
  %v5042 = vadd.f32 %v5039, 1.0
  %v5043 = vadd.f32 %v5041, 1.0
  %v5044 = vrcp.pop %v5042
  %v5045 = vmul.f32 1.0, %v5044
  %v5046 = vrcp.pop %v5043
  %v5047 = vmul.f32 1.0, %v5046
  %v5048 = vtanh.pop %v4982
  %v5049 = vtanh.pop %v4985
  %v5050 = vsub.f32 1.0, %v5033
  %v5051 = vsub.f32 1.0, %v5035
  %v5052 = vmul.f32 %v5050, %v4452
  %v5053 = vmul.f32 %v5051, %v4453
  %v5054 = vmul.f32 %v5033, %v5048
  %v5055 = vmul.f32 %v5035, %v5049
  %v5056 = vadd.f32 %v5052, %v5054
  %v5057 = vadd.f32 %v5053, %v5055
  %v5058 = vtanh.pop %v5056
  %v5059 = vtanh.pop %v5057
  %v5060 = vmul.f32 %v5045, %v5058
  %v5061 = vmul.f32 %v5047, %v5059
  %s5062 = scalar_lea.vmem [#allocation4], 96
  %5063 = vst [vmem:[%s5062] sm:$0xff] %v5022
  %5064 = vst [vmem:[%s5062 + $0x8] sm:$0xff] %v5023
  %s5065 = scalar_lea.vmem [#allocation5], 16
  %5066 = vst [vmem:[%s5065] sm:$0xff] %v5060
  %5067 = vst [vmem:[%s5065 + $0x8] sm:$0xff] %v5061
  %s5068 = scalar_lea.vmem [#allocation2], 168
  %v5069 = vld [vmem:[%s5068] sm:$0xff]
  %v5070 = vld [vmem:[%s5068 + $0x8] sm:$0xff]
  %v5071 = vld [vmem:[%s5068 + $0x10] sm:$0xff]
  %v5072 = vunpack.c.l.bf16 %v5069
  %v5073 = vunpack.c.l.bf16 %v5070
  %v5074 = vunpack.c.l.bf16 %v5071
  %v5075 = vunpack.c.h.bf16 %v5069
  %v5076 = vunpack.c.h.bf16 %v5070
  %v5077 = vunpack.c.h.bf16 %v5071
  %v5078 = vpack.c.bf16 %v5023, %v5022
  %v5079 = vld [vmem:[%s3] sm:$0xff]
  %v5080 = vld [vmem:[%s3 + $0x8] sm:$0xf]
  %v5081 = vld [vmem:[%s3 + $0xc] sm:$0xff]
  %v5082 = vld [vmem:[%s3 + $0x14] sm:$0xf]
  %v5083 = vld [vmem:[%s3 + $0x18] sm:$0xff]
  %v5084 = vld [vmem:[%s3 + $0x20] sm:$0xf]
  %v5085 = vld [vmem:[%s3 + $0x24] sm:$0xff]
  %v5086 = vld [vmem:[%s3 + $0x2c] sm:$0xf]
  %v5087 = vld [vmem:[%s3 + $0x30] sm:$0xff]
  %v5088 = vld [vmem:[%s3 + $0x38] sm:$0xf]
  %v5089 = vld [vmem:[%s3 + $0x3c] sm:$0xff]
  %v5090 = vld [vmem:[%s3 + $0x44] sm:$0xf]
  %v5091 = vld [vmem:[%s3 + $0x48] sm:$0xff]
  %v5092 = vld [vmem:[%s3 + $0x50] sm:$0xf]
  %v5093 = vld [vmem:[%s3 + $0x54] sm:$0xff]
  %v5094 = vld [vmem:[%s3 + $0x5c] sm:$0xf]
  %v5095 = vld [vmem:[%s3 + $0x60] sm:$0xff]
  %v5096 = vld [vmem:[%s3 + $0x68] sm:$0xf]
  %v5097 = vld [vmem:[%s3 + $0x6c] sm:$0xff]
  %v5098 = vld [vmem:[%s3 + $0x74] sm:$0xf]
  %v5099 = vld [vmem:[%s3 + $0x78] sm:$0xff]
  %v5100 = vld [vmem:[%s3 + $0x80] sm:$0xf]
  %v5101 = vld [vmem:[%s3 + $0x84] sm:$0xff]
  %v5102 = vld [vmem:[%s3 + $0x8c] sm:$0xf]
  %v5103 = vld [vmem:[%s3 + $0x90] sm:$0xff]
  %v5104 = vld [vmem:[%s3 + $0x98] sm:$0xf]
  %v5105 = vld [vmem:[%s3 + $0x9c] sm:$0xff]
  %v5106 = vld [vmem:[%s3 + $0xa4] sm:$0xf]
  %v5107 = vld [vmem:[%s3 + $0xa8] sm:$0xff]
  %v5108 = vld [vmem:[%s3 + $0xb0] sm:$0xf]
  %v5109 = vld [vmem:[%s3 + $0xb4] sm:$0xff]
  %v5110 = vld [vmem:[%s3 + $0xbc] sm:$0xf]
  %v5143 = vunpack.c.l.b16 %v5079
  %v5144 = vunpack.c.h.b16 %v5079
  %v5145 = vunpack.c.l.b16 %v5080
  %v5146 = vunpack.c.l.b16 %v5081
  %v5147 = vunpack.c.h.b16 %v5081
  %v5148 = vunpack.c.l.b16 %v5082
  %v5149 = vunpack.c.l.b16 %v5083
  %v5150 = vunpack.c.h.b16 %v5083
  %v5151 = vunpack.c.l.b16 %v5084
  %v5152 = vunpack.c.l.b16 %v5085
  %v5153 = vunpack.c.h.b16 %v5085
  %v5154 = vunpack.c.l.b16 %v5086
  %v5155 = vunpack.c.l.b16 %v5087
  %v5156 = vunpack.c.h.b16 %v5087
  %v5157 = vunpack.c.l.b16 %v5088
  %v5158 = vunpack.c.l.b16 %v5089
  %v5159 = vunpack.c.h.b16 %v5089
  %v5160 = vunpack.c.l.b16 %v5090
  %v5161 = vunpack.c.l.b16 %v5091
  %v5162 = vunpack.c.h.b16 %v5091
  %v5163 = vunpack.c.l.b16 %v5092
  %v5164 = vunpack.c.l.b16 %v5093
  %v5165 = vunpack.c.h.b16 %v5093
  %v5166 = vunpack.c.l.b16 %v5094
  %v5167 = vunpack.c.l.b16 %v5095
  %v5168 = vunpack.c.h.b16 %v5095
  %v5169 = vunpack.c.l.b16 %v5096
  %v5170 = vunpack.c.l.b16 %v5097
  %v5171 = vunpack.c.h.b16 %v5097
  %v5172 = vunpack.c.l.b16 %v5098
  %v5173 = vunpack.c.l.b16 %v5099
  %v5174 = vunpack.c.h.b16 %v5099
  %v5175 = vunpack.c.l.b16 %v5100
  %v5176 = vunpack.c.l.b16 %v5101
  %v5177 = vunpack.c.h.b16 %v5101
  %v5178 = vunpack.c.l.b16 %v5102
  %v5179 = vunpack.c.l.b16 %v5103
  %v5180 = vunpack.c.h.b16 %v5103
  %v5181 = vunpack.c.l.b16 %v5104
  %v5182 = vunpack.c.l.b16 %v5105
  %v5183 = vunpack.c.h.b16 %v5105
  %v5184 = vunpack.c.l.b16 %v5106
  %v5185 = vunpack.c.l.b16 %v5107
  %v5186 = vunpack.c.h.b16 %v5107
  %v5187 = vunpack.c.l.b16 %v5108
  %v5188 = vunpack.c.l.b16 %v5109
  %v5189 = vunpack.c.h.b16 %v5109
  %v5190 = vunpack.c.l.b16 %v5110
  %v5191 = vpack.c.b16 %v5146, %v5143
  %v5192 = vpack.c.b16 %v5147, %v5144
  %v5193 = vpack.c.b16 %v5148, %v5145
  %v5194 = vpack.c.b16 %v5152, %v5149
  %v5195 = vpack.c.b16 %v5153, %v5150
  %v5196 = vpack.c.b16 %v5154, %v5151
  %v5197 = vpack.c.b16 %v5158, %v5155
  %v5198 = vpack.c.b16 %v5159, %v5156
  %v5199 = vpack.c.b16 %v5160, %v5157
  %v5200 = vpack.c.b16 %v5164, %v5161
  %v5201 = vpack.c.b16 %v5165, %v5162
  %v5202 = vpack.c.b16 %v5166, %v5163
  %v5203 = vpack.c.b16 %v5170, %v5167
  %v5204 = vpack.c.b16 %v5171, %v5168
  %v5205 = vpack.c.b16 %v5172, %v5169
  %v5206 = vpack.c.b16 %v5176, %v5173
  %v5207 = vpack.c.b16 %v5177, %v5174
  %v5208 = vpack.c.b16 %v5178, %v5175
  %v5209 = vpack.c.b16 %v5182, %v5179
  %v5210 = vpack.c.b16 %v5183, %v5180
  %v5211 = vpack.c.b16 %v5184, %v5181
  %v5212 = vpack.c.b16 %v5188, %v5185
  %v5213 = vpack.c.b16 %v5189, %v5186
  %v5214 = vpack.c.b16 %v5190, %v5187
  %5239 = vmatprep.subr.bf16.mxu0 %v5192
  %5240 = vmatpush1.bf16.msra.mxu0 %v5191
  %5241 = vmatprep.subr.bf16.mxu0 %v5195
  %5242 = vmatpush1.bf16.msra.mxu0 %v5194
  %5243 = vmatprep.subr.bf16.mxu0 %v5198
  %5244 = vmatpush1.bf16.msra.mxu0 %v5197
  %5245 = vmatprep.subr.bf16.mxu0 %v5201
  %5246 = vmatpush1.bf16.msra.mxu0 %v5200
  %5247 = vmatprep.subr.bf16.mxu0 %v5204
  %5248 = vmatpush1.bf16.msra.mxu0 %v5203
  %5249 = vmatprep.subr.bf16.mxu0 %v5207
  %5250 = vmatpush1.bf16.msra.mxu0 %v5206
  %5251 = vmatprep.subr.bf16.mxu0 %v5210
  %5252 = vmatpush1.bf16.msra.mxu0 %v5209
  %5253 = vmatprep.subr.bf16.mxu0 %v5213
  %5254 = vmatpush1.bf16.msra.mxu0 %v5212
  %5255 = vmatprep.subr.bf16.mxu0 0
  %5256 = vmatpush1.bf16.msra.mxu0 0
  %5257 = vmatprep.subr.bf16.mxu0 0
  %5258 = vmatpush1.bf16.msra.mxu0 0
  %5259 = vmatprep.subr.bf16.mxu0 0
  %5260 = vmatpush1.bf16.msra.mxu0 0
  %5261 = vmatprep.subr.bf16.mxu0 0
  %5262 = vmatpush1.bf16.msra.mxu0 0
  %5263 = vmatprep.subr.bf16.mxu0 0
  %5264 = vmatpush1.bf16.msra.mxu0 0
  %5265 = vmatprep.subr.bf16.mxu0 0
  %5266 = vmatpush1.bf16.msra.mxu0 0
  %5267 = vmatprep.subr.bf16.mxu0 0
  %5268 = vmatpush1.bf16.msra.mxu0 0
  %5269 = vmatprep.subr.bf16.mxu0 0
  %5270 = vmatpush1.bf16.msra.mxu0 0
  %5271 = vmatprep.mubr.bf16.mxu0 0
  %5272 = vmatmul.mubr.bf16.gmra.mrb[0].mxu0 %v5078
  %v5273 = vpop.f32.mrb[0].mxu0
  %v5274 = vadd.f32 0.0, %v5273
  %v5275 = vpop.f32.mrb[0].mxu0
  %v5276 = vadd.f32 0.0, %v5275
  %v5277 = vpop.f32.mrb[0].mxu0
  %v5278 = vadd.f32 0.0, %v5277
  %v5279 = vpop.f32.mrb[0].mxu0
  %v5280 = vadd.f32 0.0, %v5279
  %5281 = vdwg.mxu0
  %5282 = vmatprep.subr.bf16.mxu0 0
  %5283 = vmatpush1.bf16.msra.mxu0 %v5193
  %5284 = vmatprep.subr.bf16.mxu0 0
  %5285 = vmatpush1.bf16.msra.mxu0 %v5196
  %5286 = vmatprep.subr.bf16.mxu0 0
  %5287 = vmatpush1.bf16.msra.mxu0 %v5199
  %5288 = vmatprep.subr.bf16.mxu0 0
  %5289 = vmatpush1.bf16.msra.mxu0 %v5202
  %5290 = vmatprep.subr.bf16.mxu0 0
  %5291 = vmatpush1.bf16.msra.mxu0 %v5205
  %5292 = vmatprep.subr.bf16.mxu0 0
  %5293 = vmatpush1.bf16.msra.mxu0 %v5208
  %5294 = vmatprep.subr.bf16.mxu0 0
  %5295 = vmatpush1.bf16.msra.mxu0 %v5211
  %5296 = vmatprep.subr.bf16.mxu0 0
  %5297 = vmatpush1.bf16.msra.mxu0 %v5214
  %5298 = vmatprep.subr.bf16.mxu0 0
  %5299 = vmatpush1.bf16.msra.mxu0 0
  %5300 = vmatprep.subr.bf16.mxu0 0
  %5301 = vmatpush1.bf16.msra.mxu0 0
  %5302 = vmatprep.subr.bf16.mxu0 0
  %5303 = vmatpush1.bf16.msra.mxu0 0
  %5304 = vmatprep.subr.bf16.mxu0 0
  %5305 = vmatpush1.bf16.msra.mxu0 0
  %5306 = vmatprep.subr.bf16.mxu0 0
  %5307 = vmatpush1.bf16.msra.mxu0 0
  %5308 = vmatprep.subr.bf16.mxu0 0
  %5309 = vmatpush1.bf16.msra.mxu0 0
  %5310 = vmatprep.subr.bf16.mxu0 0
  %5311 = vmatpush1.bf16.msra.mxu0 0
  %5312 = vmatprep.subr.bf16.mxu0 0
  %5313 = vmatpush1.bf16.msra.mxu0 0
  %5314 = vmatprep.mubr.bf16.mxu0 0
  %5315 = vmatmul.mubr.bf16.gmra.mrb[0].mxu0 %v5078
  %v5316 = vpop.f32.mrb[0].mxu0
  %v5317 = vadd.f32 0.0, %v5316
  %v5318 = vpop.f32.mrb[0].mxu0
  %v5319 = vpop.f32.mrb[0].mxu0
  %v5320 = vadd.f32 0.0, %v5319
  %v5321 = vpop.f32.mrb[0].mxu0
  %5322 = vdwg.mxu0
  %v5323 = vadd.f32 %v5072, %v5274
  %v5324 = vadd.f32 %v5073, %v5276
  %v5325 = vadd.f32 %v5074, %v5317
  %v5326 = vadd.f32 %v5075, %v5278
  %v5327 = vadd.f32 %v5076, %v5280
  %v5328 = vadd.f32 %v5077, %v5320
  %v5329 = vld [vmem:[#allocation3] sm:$0xff]
  %v5330 = vld [vmem:[#allocation3 + $0x8] sm:$0xff]
  %v5331 = vld [vmem:[#allocation3 + $0x10] sm:$0xff]
  %v5332 = vunpack.c.l.bf16 %v5329
  %v5333 = vunpack.c.l.bf16 %v5330
  %v5334 = vunpack.c.l.bf16 %v5331
  %v5335 = vunpack.c.h.bf16 %v5329
  %v5336 = vunpack.c.h.bf16 %v5330
  %v5337 = vunpack.c.h.bf16 %v5331
  %v5338 = vpack.c.bf16 %v5061, %v5060
  %v5339 = vld [vmem:[%s1112] sm:$0xff]
  %v5340 = vld [vmem:[%s1112 + $0x8] sm:$0xf]
  %v5341 = vld [vmem:[%s1112 + $0xc] sm:$0xff]
  %v5342 = vld [vmem:[%s1112 + $0x14] sm:$0xf]
  %v5343 = vld [vmem:[%s1112 + $0x18] sm:$0xff]
  %v5344 = vld [vmem:[%s1112 + $0x20] sm:$0xf]
  %v5345 = vld [vmem:[%s1112 + $0x24] sm:$0xff]
  %v5346 = vld [vmem:[%s1112 + $0x2c] sm:$0xf]
  %v5347 = vld [vmem:[%s1112 + $0x30] sm:$0xff]
  %v5348 = vld [vmem:[%s1112 + $0x38] sm:$0xf]
  %v5349 = vld [vmem:[%s1112 + $0x3c] sm:$0xff]
  %v5350 = vld [vmem:[%s1112 + $0x44] sm:$0xf]
  %v5351 = vld [vmem:[%s1112 + $0x48] sm:$0xff]
  %v5352 = vld [vmem:[%s1112 + $0x50] sm:$0xf]
  %v5353 = vld [vmem:[%s1112 + $0x54] sm:$0xff]
  %v5354 = vld [vmem:[%s1112 + $0x5c] sm:$0xf]
  %v5355 = vld [vmem:[%s1112 + $0x60] sm:$0xff]
  %v5356 = vld [vmem:[%s1112 + $0x68] sm:$0xf]
  %v5357 = vld [vmem:[%s1112 + $0x6c] sm:$0xff]
  %v5358 = vld [vmem:[%s1112 + $0x74] sm:$0xf]
  %v5359 = vld [vmem:[%s1112 + $0x78] sm:$0xff]
  %v5360 = vld [vmem:[%s1112 + $0x80] sm:$0xf]
  %v5361 = vld [vmem:[%s1112 + $0x84] sm:$0xff]
  %v5362 = vld [vmem:[%s1112 + $0x8c] sm:$0xf]
  %v5363 = vld [vmem:[%s1112 + $0x90] sm:$0xff]
  %v5364 = vld [vmem:[%s1112 + $0x98] sm:$0xf]
  %v5365 = vld [vmem:[%s1112 + $0x9c] sm:$0xff]
  %v5366 = vld [vmem:[%s1112 + $0xa4] sm:$0xf]
  %v5367 = vld [vmem:[%s1112 + $0xa8] sm:$0xff]
  %v5368 = vld [vmem:[%s1112 + $0xb0] sm:$0xf]
  %v5369 = vld [vmem:[%s1112 + $0xb4] sm:$0xff]
  %v5370 = vld [vmem:[%s1112 + $0xbc] sm:$0xf]
  %v5403 = vunpack.c.l.b16 %v5339
  %v5404 = vunpack.c.h.b16 %v5339
  %v5405 = vunpack.c.l.b16 %v5340
  %v5406 = vunpack.c.l.b16 %v5341
  %v5407 = vunpack.c.h.b16 %v5341
  %v5408 = vunpack.c.l.b16 %v5342
  %v5409 = vunpack.c.l.b16 %v5343
  %v5410 = vunpack.c.h.b16 %v5343
  %v5411 = vunpack.c.l.b16 %v5344
  %v5412 = vunpack.c.l.b16 %v5345
  %v5413 = vunpack.c.h.b16 %v5345
  %v5414 = vunpack.c.l.b16 %v5346
  %v5415 = vunpack.c.l.b16 %v5347
  %v5416 = vunpack.c.h.b16 %v5347
  %v5417 = vunpack.c.l.b16 %v5348
  %v5418 = vunpack.c.l.b16 %v5349
  %v5419 = vunpack.c.h.b16 %v5349
  %v5420 = vunpack.c.l.b16 %v5350
  %v5421 = vunpack.c.l.b16 %v5351
  %v5422 = vunpack.c.h.b16 %v5351
  %v5423 = vunpack.c.l.b16 %v5352
  %v5424 = vunpack.c.l.b16 %v5353
  %v5425 = vunpack.c.h.b16 %v5353
  %v5426 = vunpack.c.l.b16 %v5354
  %v5427 = vunpack.c.l.b16 %v5355
  %v5428 = vunpack.c.h.b16 %v5355
  %v5429 = vunpack.c.l.b16 %v5356
  %v5430 = vunpack.c.l.b16 %v5357
  %v5431 = vunpack.c.h.b16 %v5357
  %v5432 = vunpack.c.l.b16 %v5358
  %v5433 = vunpack.c.l.b16 %v5359
  %v5434 = vunpack.c.h.b16 %v5359
  %v5435 = vunpack.c.l.b16 %v5360
  %v5436 = vunpack.c.l.b16 %v5361
  %v5437 = vunpack.c.h.b16 %v5361
  %v5438 = vunpack.c.l.b16 %v5362
  %v5439 = vunpack.c.l.b16 %v5363
  %v5440 = vunpack.c.h.b16 %v5363
  %v5441 = vunpack.c.l.b16 %v5364
  %v5442 = vunpack.c.l.b16 %v5365
  %v5443 = vunpack.c.h.b16 %v5365
  %v5444 = vunpack.c.l.b16 %v5366
  %v5445 = vunpack.c.l.b16 %v5367
  %v5446 = vunpack.c.h.b16 %v5367
  %v5447 = vunpack.c.l.b16 %v5368
  %v5448 = vunpack.c.l.b16 %v5369
  %v5449 = vunpack.c.h.b16 %v5369
  %v5450 = vunpack.c.l.b16 %v5370
  %v5451 = vpack.c.b16 %v5406, %v5403
  %v5452 = vpack.c.b16 %v5407, %v5404
  %v5453 = vpack.c.b16 %v5408, %v5405
  %v5454 = vpack.c.b16 %v5412, %v5409
  %v5455 = vpack.c.b16 %v5413, %v5410
  %v5456 = vpack.c.b16 %v5414, %v5411
  %v5457 = vpack.c.b16 %v5418, %v5415
  %v5458 = vpack.c.b16 %v5419, %v5416
  %v5459 = vpack.c.b16 %v5420, %v5417
  %v5460 = vpack.c.b16 %v5424, %v5421
  %v5461 = vpack.c.b16 %v5425, %v5422
  %v5462 = vpack.c.b16 %v5426, %v5423
  %v5463 = vpack.c.b16 %v5430, %v5427
  %v5464 = vpack.c.b16 %v5431, %v5428
  %v5465 = vpack.c.b16 %v5432, %v5429
  %v5466 = vpack.c.b16 %v5436, %v5433
  %v5467 = vpack.c.b16 %v5437, %v5434
  %v5468 = vpack.c.b16 %v5438, %v5435
  %v5469 = vpack.c.b16 %v5442, %v5439
  %v5470 = vpack.c.b16 %v5443, %v5440
  %v5471 = vpack.c.b16 %v5444, %v5441
  %v5472 = vpack.c.b16 %v5448, %v5445
  %v5473 = vpack.c.b16 %v5449, %v5446
  %v5474 = vpack.c.b16 %v5450, %v5447
  %5499 = vmatprep.subr.bf16.mxu0 %v5452
  %5500 = vmatpush1.bf16.msra.mxu0 %v5451
  %5501 = vmatprep.subr.bf16.mxu0 %v5455
  %5502 = vmatpush1.bf16.msra.mxu0 %v5454
  %5503 = vmatprep.subr.bf16.mxu0 %v5458
  %5504 = vmatpush1.bf16.msra.mxu0 %v5457
  %5505 = vmatprep.subr.bf16.mxu0 %v5461
  %5506 = vmatpush1.bf16.msra.mxu0 %v5460
  %5507 = vmatprep.subr.bf16.mxu0 %v5464
  %5508 = vmatpush1.bf16.msra.mxu0 %v5463
  %5509 = vmatprep.subr.bf16.mxu0 %v5467
  %5510 = vmatpush1.bf16.msra.mxu0 %v5466
  %5511 = vmatprep.subr.bf16.mxu0 %v5470
  %5512 = vmatpush1.bf16.msra.mxu0 %v5469
  %5513 = vmatprep.subr.bf16.mxu0 %v5473
  %5514 = vmatpush1.bf16.msra.mxu0 %v5472
  %5515 = vmatprep.subr.bf16.mxu0 0
  %5516 = vmatpush1.bf16.msra.mxu0 0
  %5517 = vmatprep.subr.bf16.mxu0 0
  %5518 = vmatpush1.bf16.msra.mxu0 0
  %5519 = vmatprep.subr.bf16.mxu0 0
  %5520 = vmatpush1.bf16.msra.mxu0 0
  %5521 = vmatprep.subr.bf16.mxu0 0
  %5522 = vmatpush1.bf16.msra.mxu0 0
  %5523 = vmatprep.subr.bf16.mxu0 0
  %5524 = vmatpush1.bf16.msra.mxu0 0
  %5525 = vmatprep.subr.bf16.mxu0 0
  %5526 = vmatpush1.bf16.msra.mxu0 0
  %5527 = vmatprep.subr.bf16.mxu0 0
  %5528 = vmatpush1.bf16.msra.mxu0 0
  %5529 = vmatprep.subr.bf16.mxu0 0
  %5530 = vmatpush1.bf16.msra.mxu0 0
  %5531 = vmatprep.mubr.bf16.mxu0 0
  %5532 = vmatmul.mubr.bf16.gmra.mrb[0].mxu0 %v5338
  %v5533 = vpop.f32.mrb[0].mxu0
  %v5534 = vadd.f32 0.0, %v5533
  %v5535 = vpop.f32.mrb[0].mxu0
  %v5536 = vadd.f32 0.0, %v5535
  %v5537 = vpop.f32.mrb[0].mxu0
  %v5538 = vadd.f32 0.0, %v5537
  %v5539 = vpop.f32.mrb[0].mxu0
  %v5540 = vadd.f32 0.0, %v5539
  %5541 = vdwg.mxu0
  %5542 = vmatprep.subr.bf16.mxu0 0
  %5543 = vmatpush1.bf16.msra.mxu0 %v5453
  %5544 = vmatprep.subr.bf16.mxu0 0
  %5545 = vmatpush1.bf16.msra.mxu0 %v5456
  %5546 = vmatprep.subr.bf16.mxu0 0
  %5547 = vmatpush1.bf16.msra.mxu0 %v5459
  %5548 = vmatprep.subr.bf16.mxu0 0
  %5549 = vmatpush1.bf16.msra.mxu0 %v5462
  %5550 = vmatprep.subr.bf16.mxu0 0
  %5551 = vmatpush1.bf16.msra.mxu0 %v5465
  %5552 = vmatprep.subr.bf16.mxu0 0
  %5553 = vmatpush1.bf16.msra.mxu0 %v5468
  %5554 = vmatprep.subr.bf16.mxu0 0
  %5555 = vmatpush1.bf16.msra.mxu0 %v5471
  %5556 = vmatprep.subr.bf16.mxu0 0
  %5557 = vmatpush1.bf16.msra.mxu0 %v5474
  %5558 = vmatprep.subr.bf16.mxu0 0
  %5559 = vmatpush1.bf16.msra.mxu0 0
  %5560 = vmatprep.subr.bf16.mxu0 0
  %5561 = vmatpush1.bf16.msra.mxu0 0
  %5562 = vmatprep.subr.bf16.mxu0 0
  %5563 = vmatpush1.bf16.msra.mxu0 0
  %5564 = vmatprep.subr.bf16.mxu0 0
  %5565 = vmatpush1.bf16.msra.mxu0 0
  %5566 = vmatprep.subr.bf16.mxu0 0
  %5567 = vmatpush1.bf16.msra.mxu0 0
  %5568 = vmatprep.subr.bf16.mxu0 0
  %5569 = vmatpush1.bf16.msra.mxu0 0
  %5570 = vmatprep.subr.bf16.mxu0 0
  %5571 = vmatpush1.bf16.msra.mxu0 0
  %5572 = vmatprep.subr.bf16.mxu0 0
  %5573 = vmatpush1.bf16.msra.mxu0 0
  %5574 = vmatprep.mubr.bf16.mxu0 0
  %5575 = vmatmul.mubr.bf16.gmra.mrb[0].mxu0 %v5338
  %v5576 = vpop.f32.mrb[0].mxu0
  %v5577 = vadd.f32 0.0, %v5576
  %v5578 = vpop.f32.mrb[0].mxu0
  %v5579 = vpop.f32.mrb[0].mxu0
  %v5580 = vadd.f32 0.0, %v5579
  %v5581 = vpop.f32.mrb[0].mxu0
  %5582 = vdwg.mxu0
  %v5583 = vadd.f32 %v5332, %v5534
  %v5584 = vadd.f32 %v5333, %v5536
  %v5585 = vadd.f32 %v5334, %v5577
  %v5586 = vadd.f32 %v5335, %v5538
  %v5587 = vadd.f32 %v5336, %v5540
  %v5588 = vadd.f32 %v5337, %v5580
  %v5589 = vxor.u32 %v5323, 2147483648
  %v5590 = vxor.u32 %v5326, 2147483648
  %v5591 = vmul.f32 %v5589, 1.442695
  %v5592 = vpow.pop %v5591
  %v5593 = vmul.f32 %v5590, 1.442695
  %v5594 = vpow.pop %v5593
  %v5595 = vadd.f32 %v5592, 1.0
  %v5596 = vadd.f32 %v5594, 1.0
  %v5597 = vrcp.pop %v5595
  %v5598 = vmul.f32 1.0, %v5597
  %v5599 = vrcp.pop %v5596
  %v5600 = vmul.f32 1.0, %v5599
  %v5601 = vxor.u32 %v5324, 2147483648
  %v5602 = vxor.u32 %v5327, 2147483648
  %v5603 = vmul.f32 %v5601, 1.442695
  %v5604 = vpow.pop %v5603
  %v5605 = vmul.f32 %v5602, 1.442695
  %v5606 = vpow.pop %v5605
  %v5607 = vadd.f32 %v5604, 1.0
  %v5608 = vadd.f32 %v5606, 1.0
  %v5609 = vrcp.pop %v5607
  %v5610 = vmul.f32 1.0, %v5609
  %v5611 = vrcp.pop %v5608
  %v5612 = vmul.f32 1.0, %v5611
  %v5613 = vtanh.pop %v5325
  %v5614 = vtanh.pop %v5328
  %v5615 = vsub.f32 1.0, %v5598
  %v5616 = vsub.f32 1.0, %v5600
  %v5617 = vmul.f32 %v5615, %v5018
  %v5618 = vmul.f32 %v5616, %v5019
  %v5619 = vmul.f32 %v5598, %v5613
  %v5620 = vmul.f32 %v5600, %v5614
  %v5621 = vadd.f32 %v5617, %v5619
  %v5622 = vadd.f32 %v5618, %v5620
  %v5623 = vtanh.pop %v5621
  %v5624 = vtanh.pop %v5622
  %v5625 = vmul.f32 %v5610, %v5623
  %v5626 = vmul.f32 %v5612, %v5624
  %v5627 = vxor.u32 %v5583, 2147483648
  %v5628 = vxor.u32 %v5586, 2147483648
  %v5629 = vmul.f32 %v5627, 1.442695
  %v5630 = vpow.pop %v5629
  %v5631 = vmul.f32 %v5628, 1.442695
  %v5632 = vpow.pop %v5631
  %v5633 = vadd.f32 %v5630, 1.0
  %v5634 = vadd.f32 %v5632, 1.0
  %v5635 = vrcp.pop %v5633
  %v5636 = vmul.f32 1.0, %v5635
  %v5637 = vrcp.pop %v5634
  %v5638 = vmul.f32 1.0, %v5637
  %v5639 = vxor.u32 %v5584, 2147483648
  %v5640 = vxor.u32 %v5587, 2147483648
  %v5641 = vmul.f32 %v5639, 1.442695
  %v5642 = vpow.pop %v5641
  %v5643 = vmul.f32 %v5640, 1.442695
  %v5644 = vpow.pop %v5643
  %v5645 = vadd.f32 %v5642, 1.0
  %v5646 = vadd.f32 %v5644, 1.0
  %v5647 = vrcp.pop %v5645
  %v5648 = vmul.f32 1.0, %v5647
  %v5649 = vrcp.pop %v5646
  %v5650 = vmul.f32 1.0, %v5649
  %v5651 = vtanh.pop %v5585
  %v5652 = vtanh.pop %v5588
  %v5653 = vsub.f32 1.0, %v5636
  %v5654 = vsub.f32 1.0, %v5638
  %v5655 = vmul.f32 %v5653, %v5056
  %v5656 = vmul.f32 %v5654, %v5057
  %v5657 = vmul.f32 %v5636, %v5651
  %v5658 = vmul.f32 %v5638, %v5652
  %v5659 = vadd.f32 %v5655, %v5657
  %v5660 = vadd.f32 %v5656, %v5658
  %v5661 = vtanh.pop %v5659
  %v5662 = vtanh.pop %v5660
  %v5663 = vmul.f32 %v5648, %v5661
  %v5664 = vmul.f32 %v5650, %v5662
  %s5665 = scalar_lea.vmem [#allocation4], 112
  %5666 = vst [vmem:[%s5665] sm:$0xff] %v5625
  %5667 = vst [vmem:[%s5665 + $0x8] sm:$0xff] %v5626
  %5668 = vst [vmem:[#allocation5] sm:$0xff] %v5663
  %5669 = vst [vmem:[#allocation5 + $0x8] sm:$0xff] %v5664
  %v5670 = vld [vmem:[#allocation4] sm:$0xff]
  %v5671 = vld [vmem:[#allocation4 + $0x8] sm:$0xff]
  %v5672 = vld [vmem:[#allocation4 + $0x10] sm:$0xff]
  %v5673 = vld [vmem:[#allocation4 + $0x18] sm:$0xff]
  %v5674 = vld [vmem:[#allocation4 + $0x20] sm:$0xff]
  %v5675 = vld [vmem:[#allocation4 + $0x28] sm:$0xff]
  %v5676 = vld [vmem:[#allocation4 + $0x30] sm:$0xff]
  %v5677 = vld [vmem:[#allocation4 + $0x38] sm:$0xff]
  %v5678 = vld [vmem:[#allocation4 + $0x40] sm:$0xff]
  %v5679 = vld [vmem:[#allocation4 + $0x48] sm:$0xff]
  %v5680 = vld [vmem:[#allocation4 + $0x50] sm:$0xff]
  %v5681 = vld [vmem:[#allocation4 + $0x58] sm:$0xff]
  %v5682 = vld [vmem:[#allocation4 + $0x60] sm:$0xff]
  %v5683 = vld [vmem:[#allocation4 + $0x68] sm:$0xff]
  %v5684 = vld [vmem:[#allocation4 + $0x70] sm:$0xff]
  %v5685 = vld [vmem:[#allocation4 + $0x78] sm:$0xff]
  %v5686 = vpack.c.bf16 %v5671, %v5670
  %v5687 = vpack.c.bf16 %v5673, %v5672
  %v5688 = vpack.c.bf16 %v5675, %v5674
  %v5689 = vpack.c.bf16 %v5677, %v5676
  %v5690 = vpack.c.bf16 %v5679, %v5678
  %v5691 = vpack.c.bf16 %v5681, %v5680
  %v5692 = vpack.c.bf16 %v5683, %v5682
  %v5693 = vpack.c.bf16 %v5685, %v5684
  %v5694 = vld [vmem:[#allocation5] sm:$0xff]
  %v5695 = vld [vmem:[#allocation5 + $0x8] sm:$0xff]
  %v5696 = vld [vmem:[#allocation5 + $0x10] sm:$0xff]
  %v5697 = vld [vmem:[#allocation5 + $0x18] sm:$0xff]
  %v5698 = vld [vmem:[#allocation5 + $0x20] sm:$0xff]
  %v5699 = vld [vmem:[#allocation5 + $0x28] sm:$0xff]
  %v5700 = vld [vmem:[#allocation5 + $0x30] sm:$0xff]
  %v5701 = vld [vmem:[#allocation5 + $0x38] sm:$0xff]
  %v5702 = vld [vmem:[#allocation5 + $0x40] sm:$0xff]
  %v5703 = vld [vmem:[#allocation5 + $0x48] sm:$0xff]
  %v5704 = vld [vmem:[#allocation5 + $0x50] sm:$0xff]
  %v5705 = vld [vmem:[#allocation5 + $0x58] sm:$0xff]
  %v5706 = vld [vmem:[#allocation5 + $0x60] sm:$0xff]
  %v5707 = vld [vmem:[#allocation5 + $0x68] sm:$0xff]
  %v5708 = vld [vmem:[#allocation5 + $0x70] sm:$0xff]
  %v5709 = vld [vmem:[#allocation5 + $0x78] sm:$0xff]
  %v5710 = vpack.c.bf16 %v5695, %v5694
  %v5711 = vpack.c.bf16 %v5697, %v5696
  %v5712 = vpack.c.bf16 %v5699, %v5698
  %v5713 = vpack.c.bf16 %v5701, %v5700
  %v5714 = vpack.c.bf16 %v5703, %v5702
  %v5715 = vpack.c.bf16 %v5705, %v5704
  %v5716 = vpack.c.bf16 %v5707, %v5706
  %v5717 = vpack.c.bf16 %v5709, %v5708
  %v5718 = vld [vmem:[%s4] sm:$0xf]
  %v5719 = vld [vmem:[%s4 + $0x4] sm:$0xf]
  %v5720 = vld [vmem:[%s4 + $0x8] sm:$0xf]
  %v5721 = vld [vmem:[%s4 + $0xc] sm:$0xf]
  %v5722 = vld [vmem:[%s4 + $0x10] sm:$0xf]
  %v5723 = vld [vmem:[%s4 + $0x14] sm:$0xf]
  %v5724 = vld [vmem:[%s4 + $0x18] sm:$0xf]
  %v5725 = vld [vmem:[%s4 + $0x1c] sm:$0xf]
  %v5726 = vld [vmem:[%s4 + $0x20] sm:$0xf]
  %v5727 = vld [vmem:[%s4 + $0x24] sm:$0xf]
  %v5728 = vld [vmem:[%s4 + $0x28] sm:$0xf]
  %v5729 = vld [vmem:[%s4 + $0x2c] sm:$0xf]
  %v5730 = vld [vmem:[%s4 + $0x30] sm:$0xf]
  %v5731 = vld [vmem:[%s4 + $0x34] sm:$0xf]
  %v5732 = vld [vmem:[%s4 + $0x38] sm:$0xf]
  %v5733 = vld [vmem:[%s4 + $0x3c] sm:$0xf]
  %s5734 = scalar_lea.vmem %s4, 64
  %v5735 = vld [vmem:[%s5734] sm:$0xf]
  %v5736 = vld [vmem:[%s5734 + $0x4] sm:$0xf]
  %v5737 = vld [vmem:[%s5734 + $0x8] sm:$0xf]
  %v5738 = vld [vmem:[%s5734 + $0xc] sm:$0xf]
  %v5739 = vld [vmem:[%s5734 + $0x10] sm:$0xf]
  %v5740 = vld [vmem:[%s5734 + $0x14] sm:$0xf]
  %v5741 = vld [vmem:[%s5734 + $0x18] sm:$0xf]
  %v5742 = vld [vmem:[%s5734 + $0x1c] sm:$0xf]
  %v5743 = vld [vmem:[%s5734 + $0x20] sm:$0xf]
  %v5744 = vld [vmem:[%s5734 + $0x24] sm:$0xf]
  %v5745 = vld [vmem:[%s5734 + $0x28] sm:$0xf]
  %v5746 = vld [vmem:[%s5734 + $0x2c] sm:$0xf]
  %v5747 = vld [vmem:[%s5734 + $0x30] sm:$0xf]
  %v5748 = vld [vmem:[%s5734 + $0x34] sm:$0xf]
  %v5749 = vld [vmem:[%s5734 + $0x38] sm:$0xf]
  %v5750 = vld [vmem:[%s5734 + $0x3c] sm:$0xf]
  %v5767 = vunpack.c.l.b16 %v5735
  %v5768 = vunpack.c.l.b16 %v5736
  %v5769 = vunpack.c.l.b16 %v5737
  %v5770 = vunpack.c.l.b16 %v5738
  %v5771 = vunpack.c.l.b16 %v5739
  %v5772 = vunpack.c.l.b16 %v5740
  %v5773 = vunpack.c.l.b16 %v5741
  %v5774 = vunpack.c.l.b16 %v5742
  %v5775 = vunpack.c.l.b16 %v5743
  %v5776 = vunpack.c.l.b16 %v5744
  %v5777 = vunpack.c.l.b16 %v5745
  %v5778 = vunpack.c.l.b16 %v5746
  %v5779 = vunpack.c.l.b16 %v5747
  %v5780 = vunpack.c.l.b16 %v5748
  %v5781 = vunpack.c.l.b16 %v5749
  %v5782 = vunpack.c.l.b16 %v5750
  %v5783 = vpack.c.b16 %v5768, %v5767
  %v5784 = vpack.c.b16 %v5770, %v5769
  %v5785 = vpack.c.b16 %v5772, %v5771
  %v5786 = vpack.c.b16 %v5774, %v5773
  %v5787 = vpack.c.b16 %v5776, %v5775
  %v5788 = vpack.c.b16 %v5778, %v5777
  %v5789 = vpack.c.b16 %v5780, %v5779
  %v5790 = vpack.c.b16 %v5782, %v5781
  %5799 = vmatprep.subr.bf16.mxu0 0
  %5800 = vmatpush1.bf16.msra.mxu0 %v5783
  %5801 = vmatprep.subr.bf16.mxu0 0
  %5802 = vmatpush1.bf16.msra.mxu0 %v5784
  %5803 = vmatprep.subr.bf16.mxu0 0
  %5804 = vmatpush1.bf16.msra.mxu0 %v5785
  %5805 = vmatprep.subr.bf16.mxu0 0
  %5806 = vmatpush1.bf16.msra.mxu0 %v5786
  %5807 = vmatprep.subr.bf16.mxu0 0
  %5808 = vmatpush1.bf16.msra.mxu0 %v5787
  %5809 = vmatprep.subr.bf16.mxu0 0
  %5810 = vmatpush1.bf16.msra.mxu0 %v5788
  %5811 = vmatprep.subr.bf16.mxu0 0
  %5812 = vmatpush1.bf16.msra.mxu0 %v5789
  %5813 = vmatprep.subr.bf16.mxu0 0
  %5814 = vmatpush1.bf16.msra.mxu0 %v5790
  %5815 = vmatprep.subr.bf16.mxu0 0
  %5816 = vmatpush1.bf16.msra.mxu0 0
  %5817 = vmatprep.subr.bf16.mxu0 0
  %5818 = vmatpush1.bf16.msra.mxu0 0
  %5819 = vmatprep.subr.bf16.mxu0 0
  %5820 = vmatpush1.bf16.msra.mxu0 0
  %5821 = vmatprep.subr.bf16.mxu0 0
  %5822 = vmatpush1.bf16.msra.mxu0 0
  %5823 = vmatprep.subr.bf16.mxu0 0
  %5824 = vmatpush1.bf16.msra.mxu0 0
  %5825 = vmatprep.subr.bf16.mxu0 0
  %5826 = vmatpush1.bf16.msra.mxu0 0
  %5827 = vmatprep.subr.bf16.mxu0 0
  %5828 = vmatpush1.bf16.msra.mxu0 0
  %5829 = vmatprep.subr.bf16.mxu0 0
  %5830 = vmatpush1.bf16.msra.mxu0 0
  %5831 = vmatprep.mubr.bf16.mxu0 0
  %5832 = vmatmul.mubr.bf16.gmra.mrb[0].mxu0 %v5710
  %v5833 = vpop.f32.mrb[0].mxu0
  %v5834 = vadd.f32 0.0, %v5833
  %v5835 = vpop.f32.mrb[0].mxu0
  %v5836 = vpop.f32.mrb[0].mxu0
  %v5837 = vadd.f32 0.0, %v5836
  %v5838 = vpop.f32.mrb[0].mxu0
  %5839 = vmatprep.mubr.bf16.mxu0 0
  %5840 = vmatmul.mubr.bf16.gmra.mrb[0].mxu0 %v5711
  %v5841 = vpop.f32.mrb[0].mxu0
  %v5842 = vadd.f32 0.0, %v5841
  %v5843 = vpop.f32.mrb[0].mxu0
  %v5844 = vpop.f32.mrb[0].mxu0
  %v5845 = vadd.f32 0.0, %v5844
  %v5846 = vpop.f32.mrb[0].mxu0
  %5847 = vmatprep.mubr.bf16.mxu0 0
  %5848 = vmatmul.mubr.bf16.gmra.mrb[0].mxu0 %v5712
  %v5849 = vpop.f32.mrb[0].mxu0
  %v5850 = vadd.f32 0.0, %v5849
  %v5851 = vpop.f32.mrb[0].mxu0
  %v5852 = vpop.f32.mrb[0].mxu0
  %v5853 = vadd.f32 0.0, %v5852
  %v5854 = vpop.f32.mrb[0].mxu0
  %5855 = vmatprep.mubr.bf16.mxu0 0
  %5856 = vmatmul.mubr.bf16.gmra.mrb[0].mxu0 %v5713
  %v5857 = vpop.f32.mrb[0].mxu0
  %v5858 = vadd.f32 0.0, %v5857
  %v5859 = vpop.f32.mrb[0].mxu0
  %v5860 = vpop.f32.mrb[0].mxu0
  %v5861 = vadd.f32 0.0, %v5860
  %v5862 = vpop.f32.mrb[0].mxu0
  %5863 = vmatprep.mubr.bf16.mxu0 0
  %5864 = vmatmul.mubr.bf16.gmra.mrb[0].mxu0 %v5714
  %v5865 = vpop.f32.mrb[0].mxu0
  %v5866 = vadd.f32 0.0, %v5865
  %v5867 = vpop.f32.mrb[0].mxu0
  %v5868 = vpop.f32.mrb[0].mxu0
  %v5869 = vadd.f32 0.0, %v5868
  %v5870 = vpop.f32.mrb[0].mxu0
  %5871 = vmatprep.mubr.bf16.mxu0 0
  %5872 = vmatmul.mubr.bf16.gmra.mrb[0].mxu0 %v5715
  %v5873 = vpop.f32.mrb[0].mxu0
  %v5874 = vadd.f32 0.0, %v5873
  %v5875 = vpop.f32.mrb[0].mxu0
  %v5876 = vpop.f32.mrb[0].mxu0
  %v5877 = vadd.f32 0.0, %v5876
  %v5878 = vpop.f32.mrb[0].mxu0
  %5879 = vmatprep.mubr.bf16.mxu0 0
  %5880 = vmatmul.mubr.bf16.gmra.mrb[0].mxu0 %v5716
  %v5881 = vpop.f32.mrb[0].mxu0
  %v5882 = vadd.f32 0.0, %v5881
  %v5883 = vpop.f32.mrb[0].mxu0
  %v5884 = vpop.f32.mrb[0].mxu0
  %v5885 = vadd.f32 0.0, %v5884
  %v5886 = vpop.f32.mrb[0].mxu0
  %5887 = vmatprep.mubr.bf16.mxu0 0
  %5888 = vmatmul.mubr.bf16.gmra.mrb[0].mxu0 %v5717
  %v5889 = vpop.f32.mrb[0].mxu0
  %v5890 = vadd.f32 0.0, %v5889
  %v5891 = vpop.f32.mrb[0].mxu0
  %v5892 = vpop.f32.mrb[0].mxu0
  %v5893 = vadd.f32 0.0, %v5892
  %v5894 = vpop.f32.mrb[0].mxu0
  %5895 = vdwg.mxu0
  %v5912 = vunpack.c.l.b16 %v5718
  %v5913 = vunpack.c.l.b16 %v5719
  %v5914 = vunpack.c.l.b16 %v5720
  %v5915 = vunpack.c.l.b16 %v5721
  %v5916 = vunpack.c.l.b16 %v5722
  %v5917 = vunpack.c.l.b16 %v5723
  %v5918 = vunpack.c.l.b16 %v5724
  %v5919 = vunpack.c.l.b16 %v5725
  %v5920 = vunpack.c.l.b16 %v5726
  %v5921 = vunpack.c.l.b16 %v5727
  %v5922 = vunpack.c.l.b16 %v5728
  %v5923 = vunpack.c.l.b16 %v5729
  %v5924 = vunpack.c.l.b16 %v5730
  %v5925 = vunpack.c.l.b16 %v5731
  %v5926 = vunpack.c.l.b16 %v5732
  %v5927 = vunpack.c.l.b16 %v5733
  %v5928 = vpack.c.b16 %v5913, %v5912
  %v5929 = vpack.c.b16 %v5915, %v5914
  %v5930 = vpack.c.b16 %v5917, %v5916
  %v5931 = vpack.c.b16 %v5919, %v5918
  %v5932 = vpack.c.b16 %v5921, %v5920
  %v5933 = vpack.c.b16 %v5923, %v5922
  %v5934 = vpack.c.b16 %v5925, %v5924
  %v5935 = vpack.c.b16 %v5927, %v5926
  %5944 = vmatprep.subr.bf16.mxu0 0
  %5945 = vmatpush1.bf16.msra.mxu0 %v5928
  %5946 = vmatprep.subr.bf16.mxu0 0
  %5947 = vmatpush1.bf16.msra.mxu0 %v5929
  %5948 = vmatprep.subr.bf16.mxu0 0
  %5949 = vmatpush1.bf16.msra.mxu0 %v5930
  %5950 = vmatprep.subr.bf16.mxu0 0
  %5951 = vmatpush1.bf16.msra.mxu0 %v5931
  %5952 = vmatprep.subr.bf16.mxu0 0
  %5953 = vmatpush1.bf16.msra.mxu0 %v5932
  %5954 = vmatprep.subr.bf16.mxu0 0
  %5955 = vmatpush1.bf16.msra.mxu0 %v5933
  %5956 = vmatprep.subr.bf16.mxu0 0
  %5957 = vmatpush1.bf16.msra.mxu0 %v5934
  %5958 = vmatprep.subr.bf16.mxu0 0
  %5959 = vmatpush1.bf16.msra.mxu0 %v5935
  %5960 = vmatprep.subr.bf16.mxu0 0
  %5961 = vmatpush1.bf16.msra.mxu0 0
  %5962 = vmatprep.subr.bf16.mxu0 0
  %5963 = vmatpush1.bf16.msra.mxu0 0
  %5964 = vmatprep.subr.bf16.mxu0 0
  %5965 = vmatpush1.bf16.msra.mxu0 0
  %5966 = vmatprep.subr.bf16.mxu0 0
  %5967 = vmatpush1.bf16.msra.mxu0 0
  %5968 = vmatprep.subr.bf16.mxu0 0
  %5969 = vmatpush1.bf16.msra.mxu0 0
  %5970 = vmatprep.subr.bf16.mxu0 0
  %5971 = vmatpush1.bf16.msra.mxu0 0
  %5972 = vmatprep.subr.bf16.mxu0 0
  %5973 = vmatpush1.bf16.msra.mxu0 0
  %5974 = vmatprep.subr.bf16.mxu0 0
  %5975 = vmatpush1.bf16.msra.mxu0 0
  %5976 = vmatprep.mubr.bf16.mxu0 0
  %5977 = vmatmul.mubr.bf16.gmra.mrb[0].mxu0 %v5686
  %v5978 = vpop.f32.mrb[0].mxu0
  %v5979 = vadd.f32 %v5834, %v5978
  %v5980 = vpop.f32.mrb[0].mxu0
  %v5981 = vpop.f32.mrb[0].mxu0
  %v5982 = vadd.f32 %v5837, %v5981
  %v5983 = vpop.f32.mrb[0].mxu0
  %5984 = vmatprep.mubr.bf16.mxu0 0
  %5985 = vmatmul.mubr.bf16.gmra.mrb[0].mxu0 %v5687
  %v5986 = vpop.f32.mrb[0].mxu0
  %v5987 = vadd.f32 %v5842, %v5986
  %v5988 = vpop.f32.mrb[0].mxu0
  %v5989 = vpop.f32.mrb[0].mxu0
  %v5990 = vadd.f32 %v5845, %v5989
  %v5991 = vpop.f32.mrb[0].mxu0
  %5992 = vmatprep.mubr.bf16.mxu0 0
  %5993 = vmatmul.mubr.bf16.gmra.mrb[0].mxu0 %v5688
  %v5994 = vpop.f32.mrb[0].mxu0
  %v5995 = vadd.f32 %v5850, %v5994
  %v5996 = vpop.f32.mrb[0].mxu0
  %v5997 = vpop.f32.mrb[0].mxu0
  %v5998 = vadd.f32 %v5853, %v5997
  %v5999 = vpop.f32.mrb[0].mxu0
  %6000 = vmatprep.mubr.bf16.mxu0 0
  %6001 = vmatmul.mubr.bf16.gmra.mrb[0].mxu0 %v5689
  %v6002 = vpop.f32.mrb[0].mxu0
  %v6003 = vadd.f32 %v5858, %v6002
  %v6004 = vpop.f32.mrb[0].mxu0
  %v6005 = vpop.f32.mrb[0].mxu0
  %v6006 = vadd.f32 %v5861, %v6005
  %v6007 = vpop.f32.mrb[0].mxu0
  %6008 = vmatprep.mubr.bf16.mxu0 0
  %6009 = vmatmul.mubr.bf16.gmra.mrb[0].mxu0 %v5690
  %v6010 = vpop.f32.mrb[0].mxu0
  %v6011 = vadd.f32 %v5866, %v6010
  %v6012 = vpop.f32.mrb[0].mxu0
  %v6013 = vpop.f32.mrb[0].mxu0
  %v6014 = vadd.f32 %v5869, %v6013
  %v6015 = vpop.f32.mrb[0].mxu0
  %6016 = vmatprep.mubr.bf16.mxu0 0
  %6017 = vmatmul.mubr.bf16.gmra.mrb[0].mxu0 %v5691
  %v6018 = vpop.f32.mrb[0].mxu0
  %v6019 = vadd.f32 %v5874, %v6018
  %v6020 = vpop.f32.mrb[0].mxu0
  %v6021 = vpop.f32.mrb[0].mxu0
  %v6022 = vadd.f32 %v5877, %v6021
  %v6023 = vpop.f32.mrb[0].mxu0
  %6024 = vmatprep.mubr.bf16.mxu0 0
  %6025 = vmatmul.mubr.bf16.gmra.mrb[0].mxu0 %v5692
  %v6026 = vpop.f32.mrb[0].mxu0
  %v6027 = vadd.f32 %v5882, %v6026
  %v6028 = vpop.f32.mrb[0].mxu0
  %v6029 = vpop.f32.mrb[0].mxu0
  %v6030 = vadd.f32 %v5885, %v6029
  %v6031 = vpop.f32.mrb[0].mxu0
  %6032 = vmatprep.mubr.bf16.mxu0 0
  %6033 = vmatmul.mubr.bf16.gmra.mrb[0].mxu0 %v5693
  %v6034 = vpop.f32.mrb[0].mxu0
  %v6035 = vadd.f32 %v5890, %v6034
  %v6036 = vpop.f32.mrb[0].mxu0
  %v6037 = vpop.f32.mrb[0].mxu0
  %v6038 = vadd.f32 %v5893, %v6037
  %v6039 = vpop.f32.mrb[0].mxu0
  %6040 = vdwg.mxu0
  %v6041 = vld [vmem:[%s5] sm:$0x1]
  %v6043 = vlaneseq
  %v6044 = vshrl.u32 %v6043, 7
  %v6045 = vsub.s32 0, %v6044
  %v6046 = vrot.slane %v6041, %v6045
  %v6048 = vadd.f32 %v5979, %v6046
  %v6049 = vadd.f32 %v5982, %v6046
  %v6050 = vadd.f32 %v5987, %v6046
  %v6051 = vadd.f32 %v5990, %v6046
  %v6052 = vadd.f32 %v5995, %v6046
  %v6053 = vadd.f32 %v5998, %v6046
  %v6054 = vadd.f32 %v6003, %v6046
  %v6055 = vadd.f32 %v6006, %v6046
  %v6056 = vadd.f32 %v6011, %v6046
  %v6057 = vadd.f32 %v6014, %v6046
  %v6058 = vadd.f32 %v6019, %v6046
  %v6059 = vadd.f32 %v6022, %v6046
  %v6060 = vadd.f32 %v6027, %v6046
  %v6061 = vadd.f32 %v6030, %v6046
  %v6062 = vadd.f32 %v6035, %v6046
  %v6063 = vadd.f32 %v6038, %v6046
  %v6064 = vpack.c.bf16 %v6049, %v6048
  %v6065 = vpack.c.bf16 %v6051, %v6050
  %v6066 = vpack.c.bf16 %v6053, %v6052
  %v6067 = vpack.c.bf16 %v6055, %v6054
  %v6068 = vpack.c.bf16 %v6057, %v6056
  %v6069 = vpack.c.bf16 %v6059, %v6058
  %v6070 = vpack.c.bf16 %v6061, %v6060
  %v6071 = vpack.c.bf16 %v6063, %v6062
  %v6080 = vunpack.c.l.b16 %v6064
  %v6081 = vunpack.c.h.b16 %v6064
  %v6082 = vunpack.c.l.b16 %v6065
  %v6083 = vunpack.c.h.b16 %v6065
  %v6084 = vunpack.c.l.b16 %v6066
  %v6085 = vunpack.c.h.b16 %v6066
  %v6086 = vunpack.c.l.b16 %v6067
  %v6087 = vunpack.c.h.b16 %v6067
  %v6088 = vunpack.c.l.b16 %v6068
  %v6089 = vunpack.c.h.b16 %v6068
  %v6090 = vunpack.c.l.b16 %v6069
  %v6091 = vunpack.c.h.b16 %v6069
  %v6092 = vunpack.c.l.b16 %v6070
  %v6093 = vunpack.c.h.b16 %v6070
  %v6094 = vunpack.c.l.b16 %v6071
  %v6095 = vunpack.c.h.b16 %v6071
  %v6096 = vpack.c.b16 %v6080, %v6080
  %v6097 = vpack.c.b16 %v6081, %v6081
  %v6098 = vpack.c.b16 %v6082, %v6082
  %v6099 = vpack.c.b16 %v6083, %v6083
  %v6100 = vpack.c.b16 %v6084, %v6084
  %v6101 = vpack.c.b16 %v6085, %v6085
  %v6102 = vpack.c.b16 %v6086, %v6086
  %v6103 = vpack.c.b16 %v6087, %v6087
  %v6104 = vpack.c.b16 %v6088, %v6088
  %v6105 = vpack.c.b16 %v6089, %v6089
  %v6106 = vpack.c.b16 %v6090, %v6090
  %v6107 = vpack.c.b16 %v6091, %v6091
  %v6108 = vpack.c.b16 %v6092, %v6092
  %v6109 = vpack.c.b16 %v6093, %v6093
  %v6110 = vpack.c.b16 %v6094, %v6094
  %v6111 = vpack.c.b16 %v6095, %v6095
  %6128 = vst [vmem:[%s6] sm:$0xf] %v6096
  %6129 = vst [vmem:[%s6 + $0x4] sm:$0xf] %v6097
  %6130 = vst [vmem:[%s6 + $0x8] sm:$0xf] %v6098
  %6131 = vst [vmem:[%s6 + $0xc] sm:$0xf] %v6099
  %6132 = vst [vmem:[%s6 + $0x10] sm:$0xf] %v6100
  %6133 = vst [vmem:[%s6 + $0x14] sm:$0xf] %v6101
  %6134 = vst [vmem:[%s6 + $0x18] sm:$0xf] %v6102
  %6135 = vst [vmem:[%s6 + $0x1c] sm:$0xf] %v6103
  %6136 = vst [vmem:[%s6 + $0x20] sm:$0xf] %v6104
  %6137 = vst [vmem:[%s6 + $0x24] sm:$0xf] %v6105
  %6138 = vst [vmem:[%s6 + $0x28] sm:$0xf] %v6106
  %6139 = vst [vmem:[%s6 + $0x2c] sm:$0xf] %v6107
  %6140 = vst [vmem:[%s6 + $0x30] sm:$0xf] %v6108
  %6141 = vst [vmem:[%s6 + $0x34] sm:$0xf] %v6109
  %6142 = vst [vmem:[%s6 + $0x38] sm:$0xf] %v6110
  %6143 = vst [vmem:[%s6 + $0x3c] sm:$0xf] %v6111
  // Predicated region
  $region26: #{lattice_forward.1} parent=0 // pred_check
    _
  $region27: #{lattice_forward.1} parent=0 // pred_check_branch
    %6145 = sbr.rel (0) target = $region29
  $region28: #{lattice_forward.1} parent=0 // pred_region
    _
  $region29: #{lattice_forward.1} parent=0 // pred_fallthru
    _
  // Predicated region
  $region30: #{lattice_forward.1} parent=0 // pred_check
    _
  $region31: #{lattice_forward.1} parent=0 // pred_check_branch
    %6147 = sbr.rel (0) target = $region33
  $region32: #{lattice_forward.1} parent=0 // pred_region
    _
  $region33: #{lattice_forward.1} parent=0 // pred_fallthru
    _

</llo_original>
